<compile_context>
chip_gen: v7x
topology: tpu7x:2x2x1
jax: 0.10.0
libtpu: 0.0.40
codegen_flags: <defaults>
</compile_context>

<pallas_src>
import functools

import numpy as np

import jax
import jax.numpy as jnp
from jax.experimental import pallas as pl
from jax.experimental.pallas import tpu as pltpu

_VMEM = pl.BlockSpec(memory_space=pltpu.MemorySpace.VMEM)
_BN_EPS = 1e-5


# ----------------------------------------------------------------------------
# Static helpers (run at prepare / trace time, produce constants only).
# ----------------------------------------------------------------------------
def _round_up(x, m):
    return (x + m - 1) // m * m


def _tap_groups(cin_pad):
    """Partition the 9 taps so each stacked-K chunk is <= 128 (v5e MXU K)."""
    per = max(1, 128 // cin_pad)
    n_groups = -(-9 // per)
    base, rem = divmod(9, n_groups)
    groups, t = [], 0
    for g in range(n_groups):
        cnt = base + (1 if g < rem else 0)
        groups.append(tuple(range(t, t + cnt)))
        t += cnt
    return tuple(groups)


def _conv_w_groups(w, cin_pad):
    """PyTorch (Cout, Cin, 3, 3) weight -> tuple of (Cout, ntaps*Cin_pad) bf16
    tap-stacked weight chunks (tap-major, then channel), one per K group."""
    cout, cin = w.shape[:2]
    if cin_pad > cin:
        w = jnp.pad(w, ((0, 0), (0, cin_pad - cin), (0, 0), (0, 0)))
    wt = jnp.transpose(w, (0, 2, 3, 1)).reshape(cout, 9, cin_pad)
    return tuple(
        wt[:, g[0]:g[-1] + 1, :].reshape(cout, len(g) * cin_pad).astype(jnp.bfloat16)
        for g in _tap_groups(cin_pad))


def _bn_vec(v):
    return v.reshape(-1, 1).astype(jnp.float32)


def _std_tap_info(N, h, w):
    """Masks/shifts for a stride-1 3x3 conv on a (C, N*h*w) lane-dense slab."""
    m = N * h * w
    y = (np.arange(m) // w) % h
    x = np.arange(m) % w
    masks = np.zeros((9, 1, m), np.float32)
    taps = []
    for kh in range(3):
        for kw in range(3):
            dh, dw = kh - 1, kw - 1
            valid = (y + dh >= 0) & (y + dh < h) & (x + dw >= 0) & (x + dw < w)
            masks[kh * 3 + kw, 0] = valid
            taps.append((None, (-(dh * w + dw)) % m))   # (phase=None, lane roll)
    return masks, tuple(taps)


def _strided_tap_info(N, h_in, w_in, s):
    """Masks + (phase, shift) per tap for a stride-s conv computed directly on
    the output lanes from a phase-split (s*s, C, N*Ho*Wo) input."""
    ho, wo = h_in // s, w_in // s
    mo = N * ho * wo
    oy = (np.arange(mo) // wo) % ho
    ox = np.arange(mo) % wo
    masks = np.zeros((9, 1, mo), np.float32)
    taps = []
    for kh in range(3):
        for kw in range(3):
            dh, dw = kh - 1, kw - 1
            valid = ((s * oy + dh >= 0) & (s * oy + dh < h_in) &
                     (s * ox + dw >= 0) & (s * ox + dw < w_in))
            masks[kh * 3 + kw, 0] = valid
            ph, pw = dh % s, dw % s
            sh_, sw_ = (dh - ph) // s, (dw - pw) // s
            taps.append((ph * s + pw, (-(sh_ * wo + sw_)) % mo))
    return masks, tuple(taps)


def _pool_matrix_np(N, h, w):
    """(M, N) matrix implementing the global average pool (1/(h*w) exact in bf16)."""
    m = N * h * w
    pool = np.zeros((m, N), np.float32)
    pool[np.arange(m), np.arange(m) // (h * w)] = 1.0 / (h * w)
    return pool


def _phase_split(x, N, h, w, s):
    """(C, N*h*w) -> (s*s, C, N*(h/s)*(w/s)) phase slabs (cheap XLA relayout)."""
    C = x.shape[0]
    ho, wo = h // s, w // s
    x6 = x.reshape(C, N, ho, s, wo, s)
    return jnp.transpose(x6, (3, 5, 0, 1, 2, 4)).reshape(s * s, C, N * ho * wo)


# ----------------------------------------------------------------------------
# Fused Pallas kernels.
# ----------------------------------------------------------------------------
def _segment_kernel(*refs, plan):
    """One fused segment: [stem conv+BN+ReLU] + a run of residual blocks, where
    only the first block of the segment may be strided (phase-split input)."""
    o_ref = refs[-1]

    def val(idx):
        return refs[idx][...]

    def build_taps(src, desc):
        # src: (C, M) f32 (stride 1) or (s*s, C, Mo) f32 (phase-split input).
        masks = val(desc["mask_idx"])                     # (9, 1, M) f32, hoisted
        stacks = []
        for grp in desc["groups"]:
            parts = []
            for t in grp:
                ph, sh = desc["taps"][t]
                base = src if ph is None else src[ph]
                shifted = base if sh == 0 else pltpu.roll(base, shift=sh, axis=1)
                parts.append(shifted * masks[t])          # mask fused, f32 VALU
            stack = parts[0] if len(parts) == 1 else jnp.concatenate(parts, axis=0)
            stacks.append(stack.astype(jnp.bfloat16))     # single cast per chunk
        return stacks

    def apply_conv(stacks, desc):
        acc = None
        for widx, a in zip(desc["w_idx"], stacks):
            d = jnp.dot(val(widx), a, preferred_element_type=jnp.float32)
            acc = d if acc is None else acc + d
        return acc

    m_out = plan["m_out"]
    ones_m = jnp.ones((m_out, 1), jnp.float32)            # hoisted, reused by all BNs
    inv_m = 1.0 / m_out

    def batchnorm(x, bn_idx, relu):
        # Training-mode BN over all N*H*W sites; two-pass variance; both lane
        # reductions done on the MXU (matvec vs ones) to relieve the XLU.
        gamma = val(bn_idx[0])
        beta = val(bn_idx[1])
        mean = jnp.dot(x, ones_m, preferred_element_type=jnp.float32) * inv_m
        xc = x - mean
        var = jnp.dot(xc * xc, ones_m, preferred_element_type=jnp.float32) * inv_m
        y = xc * (jax.lax.rsqrt(var + _BN_EPS) * gamma) + beta
        return jnp.maximum(y, 0.0) if relu else y

    cur = refs[0][...].astype(jnp.float32)                # single upcast of the input

    if plan["stem"] is not None:
        cdesc, bidx = plan["stem"]
        cur = batchnorm(apply_conv(build_taps(cur, cdesc), cdesc), bidx, relu=True)

    for bp in plan["blocks"]:
        taps1 = build_taps(cur, bp["conv1"])              # reused by the downsample conv
        out = batchnorm(apply_conv(taps1, bp["conv1"]), bp["bn1"], relu=True)
        out = batchnorm(apply_conv(build_taps(out, bp["conv2"]), bp["conv2"]),
                        bp["bn2"], relu=False)
        if bp["down"] is not None:
            res = batchnorm(apply_conv(taps1, bp["down"]), bp["bnd"], relu=False)
        else:
            res = cur
        cur = jnp.maximum(out + res, 0.0)

    o_ref[...] = cur.astype(o_ref.dtype)                  # bf16 inter-segment store


def _head_kernel(x_ref, pool_ref, wfc_ref, bfc_ref, o_ref):
    """Fused global average pool (bf16 pooling matmul) + fully-connected layer."""
    pooled = jnp.dot(x_ref[...], pool_ref[...],
                     preferred_element_type=jnp.float32)              # (C, N) f32
    o_ref[...] = (jnp.dot(wfc_ref[...], pooled.astype(jnp.bfloat16),
                          preferred_element_type=jnp.float32)
                  + bfc_ref[...])                                      # (2K, N)


# ----------------------------------------------------------------------------
# One-time parameter re-layout (outside the forward path).
# ----------------------------------------------------------------------------
def prepare_params(params):
    """Re-layout the PyTorch-style params into tap-stacked bf16 weight chunks.

    Conv biases are intentionally dropped: every conv is followed by a
    training-mode BatchNorm whose batch-mean subtraction cancels them exactly.
    TODO(synk): channel counts that are not multiples of 8 (and eval-mode BN
    with running stats / restored biases) are not handled here.
    """
    cin0 = params["conv"]["w"].shape[1]
    cin0_pad = _round_up(cin0, 8)
    prep = {
        "cin0_pad": cin0_pad,
        "stem": {
            "w": _conv_w_groups(params["conv"]["w"], cin0_pad),
            "groups": _tap_groups(cin0_pad),
            "gamma": _bn_vec(params["bn"]["gamma"]),
            "beta": _bn_vec(params["bn"]["beta"]),
            "cout": int(params["conv"]["w"].shape[0]),
        },
        "blocks": [],
        "fc_w": params["fc"]["w"].astype(jnp.bfloat16),
        "fc_b": params["fc"]["b"].reshape(-1, 1).astype(jnp.float32),
    }
    for layer in ("layer1", "layer2", "layer3"):
        for p in params[layer]:
            cin = int(p["conv1"]["w"].shape[1])
            cout = int(p["conv1"]["w"].shape[0])
            blk = {
                "stride": int(p["stride"]), "cin": cin, "cout": cout,
                "w1": _conv_w_groups(p["conv1"]["w"], cin), "groups1": _tap_groups(cin),
                "g1": _bn_vec(p["bn1"]["gamma"]), "b1": _bn_vec(p["bn1"]["beta"]),
                "w2": _conv_w_groups(p["conv2"]["w"], cout), "groups2": _tap_groups(cout),
                "g2": _bn_vec(p["bn2"]["gamma"]), "b2": _bn_vec(p["bn2"]["beta"]),
            }
            if "down_conv" in p:
                blk["wd"] = _conv_w_groups(p["down_conv"]["w"], cin)
                blk["gd"] = _bn_vec(p["down_bn"]["gamma"])
                blk["bd"] = _bn_vec(p["down_bn"]["beta"])
            prep["blocks"].append(blk)
    return prep


# ----------------------------------------------------------------------------
# Forward pass (wrapper around the fused kernels).
# ----------------------------------------------------------------------------
def _run_segment(seg, x_in, prep, N, h_in, w_in):
    s = seg["stride"]
    h_out, w_out = h_in // s, w_in // s
    m_out = N * h_out * w_out

    args = []

    def add(a):
        args.append(a)
        return len(args)                 # refs[0] is the activation/phase input

    std_masks, std_taps = _std_tap_info(N, h_out, w_out)
    std_mask_idx = add(jnp.asarray(std_masks))
    str_mask_idx, str_taps = None, None
    if s != 1:
        str_masks, str_taps = _strided_tap_info(N, h_in, w_in, s)
        str_mask_idx = add(jnp.asarray(str_masks))

    def conv_desc(w_groups, groups, strided):
        return {
            "w_idx": tuple(add(wg) for wg in w_groups),
            "mask_idx": str_mask_idx if strided else std_mask_idx,
            "groups": groups,
            "taps": str_taps if strided else std_taps,
        }

    def bn_desc(g, b):
        return (add(g), add(b))

    plan = {"m_out": m_out, "stem": None, "blocks": []}
    cout = None
    if seg["stem"]:
        st = prep["stem"]
        plan["stem"] = (conv_desc(st["w"], st["groups"], False),
                        bn_desc(st["gamma"], st["beta"]))
        cout = st["cout"]

    for bi, blk in enumerate(seg["blocks"]):
        first_strided = (s != 1) and (bi == 0)
        if first_strided:
            assert "wd" in blk, "strided block must carry a downsample branch"
        bp = {
            "conv1": conv_desc(blk["w1"], blk["groups1"], first_strided),
            "bn1": bn_desc(blk["g1"], blk["b1"]),
            "conv2": conv_desc(blk["w2"], blk["groups2"], False),
            "bn2": bn_desc(blk["g2"], blk["b2"]),
            "down": None, "bnd": None,
        }
        if "wd" in blk:
            bp["down"] = conv_desc(blk["wd"], blk["groups1"], first_strided)
            bp["bnd"] = bn_desc(blk["gd"], blk["bd"])
        plan["blocks"].append(bp)
        cout = blk["cout"]
    plan["blocks"] = tuple(plan["blocks"])

    out = pl.pallas_call(
        functools.partial(_segment_kernel, plan=plan),
        out_shape=jax.ShapeDtypeStruct((cout, m_out), jnp.bfloat16),
        in_specs=[_VMEM] * (1 + len(args)),
        out_specs=_VMEM,
    )(x_in, *args)
    return out, h_out, w_out


def resnet101_forward(prep, x_nchw, *, num_classes):
    """Config: FWHM=False, norm='no', p=0 (branches disabled as in PyTorch)."""
    N, Cin, H, W = x_nchw.shape
    # NCHW -> (C, N*H*W): channels in sublanes, all spatial sites in lanes.
    x = jnp.transpose(x_nchw, (1, 0, 2, 3)).reshape(Cin, N * H * W)
    if prep["cin0_pad"] > Cin:
        x = jnp.pad(x, ((0, prep["cin0_pad"] - Cin), (0, 0)))
    x = x.astype(jnp.bfloat16)

    # Segmentation: stem + consecutive stride-1 blocks fuse into one call;
    # each strided block starts a new segment fed by the phase-split input.
    segments = []
    cur_seg = {"stem": True, "blocks": [], "stride": 1}
    for blk in prep["blocks"]:
        if blk["stride"] != 1:
            segments.append(cur_seg)
            cur_seg = {"stem": False, "blocks": [blk], "stride": blk["stride"]}
        else:
            cur_seg["blocks"].append(blk)
    segments.append(cur_seg)

    out, h, w = x, H, W
    for seg in segments:
        s = seg["stride"]
        if s != 1:
            # TODO(synk): general strides with H % s != 0 (ragged phase slabs) unsupported.
            assert h % s == 0 and w % s == 0, "phase-split conv needs H, W divisible by stride"
            out = _phase_split(out, N, h, w, s)
        out, h, w = _run_segment(seg, out, prep, N, h, w)

    # AvgPool2d(8) is a global pool for this configuration (final H = W = 8).
    assert h == 8 and w == 8, "fused head assumes AvgPool2d(8) is global"
    # TODO(synk): non-global AvgPool2d (pooled spatial > 1x1) is not fused here.
    pool = jnp.asarray(_pool_matrix_np(N, h, w)).astype(jnp.bfloat16)
    logits_t = pl.pallas_call(
        _head_kernel,
        out_shape=jax.ShapeDtypeStruct((prep["fc_w"].shape[0], N), jnp.float32),
        in_specs=[_VMEM] * 4,
        out_specs=_VMEM,
    )(out, pool, prep["fc_w"], prep["fc_b"])

    logits = logits_t.T                                   # (N, 2*num_classes)
    mean = logits[:, :num_classes]
    std = jnp.maximum(logits[:, num_classes:], 1e-4)      # torch.clamp(min=0.0001)
    # TODO(synk): torch.distributions.Normal has no Pallas equivalent; return (mean, std).
    return mean, std


# ----------------------------------------------------------------------------
# Parameter construction (deterministic, synthetic, PyTorch-style layout).
# ----------------------------------------------------------------------------
def init_params(key, filter_amount, neurons, layers, num_classes, stride, subfactor):
    keys = iter(jax.random.split(key, 128))

    def conv_p(cin, cout):
        fan_in = cin * 9
        w = jax.random.normal(next(keys), (cout, cin, 3, 3), jnp.float32) * (2.0 / fan_in) ** 0.5
        b = jax.random.normal(next(keys), (cout,), jnp.float32) * 0.01
        return {"w": w, "b": b}

    def bn_p(c):
        return {"gamma": jnp.ones((c,), jnp.float32), "beta": jnp.zeros((c,), jnp.float32)}

    def block_p(cin, cout, s):
        d = {"stride": s,
             "conv1": conv_p(cin, cout), "bn1": bn_p(cout),
             "conv2": conv_p(cout, cout), "bn2": bn_p(cout)}
        if s != 1 or cin != cout:
            d["down_conv"] = conv_p(cin, cout)
            d["down_bn"] = bn_p(cout)
        return d

    params = {"conv": conv_p(filter_amount, neurons[0]), "bn": bn_p(neurons[0])}
    in_c = neurons[0]
    for li, (out_c, nblk, s) in enumerate(zip(neurons[1:4], layers, stride), start=1):
        blocks = [block_p(in_c, out_c, s)]
        in_c = out_c
        for _ in range(1, nblk):
            blocks.append(block_p(out_c, out_c, 1))
        params["layer%d" % li] = blocks

    prod_stride = 1
    for s in stride:
        prod_stride *= s
    fc_in = neurons[3] * int(8 / prod_stride * subfactor) ** 2   # PyTorch formula (FWHM=False)
    fc_out = 2 * num_classes
    params["fc"] = {
        "w": jax.random.normal(next(keys), (fc_out, fc_in), jnp.float32) * (1.0 / fc_in) ** 0.5,
        "b": jax.random.normal(next(keys), (fc_out,), jnp.float32) * 0.01,
    }
    return params


# ----------------------------------------------------------------------------
# Independent pure-JAX reference (no Pallas) for validation.
# ----------------------------------------------------------------------------
def reference_forward(params, x_nchw, *, num_classes):
    def conv(x, w, b, s):
        y = jax.lax.conv_general_dilated(
            x.astype(jnp.bfloat16),
            jnp.transpose(w, (2, 3, 1, 0)).astype(jnp.bfloat16),   # HWIO
            window_strides=(s, s), padding=((1, 1), (1, 1)),
            dimension_numbers=("NHWC", "HWIO", "NHWC"),
            preferred_element_type=jnp.float32)
        return y + b.reshape(1, 1, 1, -1)

    def bn(x, gamma, beta, relu):
        m = jnp.mean(x, axis=(0, 1, 2), keepdims=True)
        v = jnp.mean(jnp.square(x - m), axis=(0, 1, 2), keepdims=True)
        y = ((x - m) * jax.lax.rsqrt(v + _BN_EPS) * gamma.reshape(1, 1, 1, -1)
             + beta.reshape(1, 1, 1, -1))
        return jnp.maximum(y, 0.0) if relu else y

    x = jnp.transpose(x_nchw, (0, 2, 3, 1)).astype(jnp.float32)
    out = bn(conv(x, params["conv"]["w"], params["conv"]["b"], 1),
             params["bn"]["gamma"], params["bn"]["beta"], relu=True)
    for layer in ("layer1", "layer2", "layer3"):
        for p in params[layer]:
            s = p["stride"]
            y = bn(conv(out, p["conv1"]["w"], p["conv1"]["b"], s),
                   p["bn1"]["gamma"], p["bn1"]["beta"], relu=True)
            y = bn(conv(y, p["conv2"]["w"], p["conv2"]["b"], 1),
                   p["bn2"]["gamma"], p["bn2"]["beta"], relu=False)
            if "down_conv" in p:
                r = bn(conv(out, p["down_conv"]["w"], p["down_conv"]["b"], s),
                       p["down_bn"]["gamma"], p["down_bn"]["beta"], relu=False)
            else:
                r = out
            out = jnp.maximum(y + r, 0.0)
    pooled = jnp.mean(out, axis=(1, 2))                    # AvgPool2d(8) + view(N, -1)
    logits = pooled @ params["fc"]["w"].T + params["fc"]["b"]
    return logits[:, :num_classes], jnp.maximum(logits[:, num_classes:], 1e-4)


if __name__ == "__main__":
    key = jax.random.PRNGKey(0)
    k_param, k_x = jax.random.split(key)

    # Small, shape-consistent config.
    filter_amount = 4            # input image channels
    neurons = [8, 8, 16, 16]
    layers = [1, 1, 1]
    stride = [1, 1, 2]
    subfactor = 0.25             # makes the fc in-features formula consistent with 16x16 input
    num_classes = 3

    params = init_params(k_param, filter_amount, neurons, layers, num_classes, stride, subfactor)
    prep = prepare_params(params)   # one-time weight re-layout / tap stacking / bf16 cast

    x = jax.random.normal(k_x, (2, filter_amount, 16, 16), jnp.float32)   # NCHW like PyTorch

    fwd = jax.jit(lambda inp: resnet101_forward(prep, inp, num_classes=num_classes))
    mean, std = fwd(x)
    jax.block_until_ready((mean, std))

    assert mean.shape == (2, num_classes) and std.shape == (2, num_classes)
    assert bool(jnp.all(std >= 1e-4))

    # Validate the fused Pallas path against an independent pure-JAX reference
    # (loose tolerance to absorb bf16-MXU / bf16 inter-segment activation rounding).
    ref_mean, ref_std = reference_forward(params, x, num_classes=num_classes)
    assert jnp.allclose(mean, ref_mean, rtol=1e-1, atol=1e-1), "mean mismatch vs reference"
    assert jnp.allclose(std, ref_std, rtol=1e-1, atol=1e-1), "std mismatch vs reference"

    print("KERNEL_OK")
</pallas_src>

<mosaic_0001>
module attributes {stable_mosaic.version = 11 : i64} {
  func.func @_segment_kernel(%arg0: memref<8x512xbf16, #tpu.memory_space<vmem>>, %arg1: memref<9x1x512xf32, #tpu.memory_space<vmem>>, %arg2: memref<8x72xbf16, #tpu.memory_space<vmem>>, %arg3: memref<8x1xf32, #tpu.memory_space<vmem>>, %arg4: memref<8x1xf32, #tpu.memory_space<vmem>>, %arg5: memref<8x72xbf16, #tpu.memory_space<vmem>>, %arg6: memref<8x1xf32, #tpu.memory_space<vmem>>, %arg7: memref<8x1xf32, #tpu.memory_space<vmem>>, %arg8: memref<8x72xbf16, #tpu.memory_space<vmem>>, %arg9: memref<8x1xf32, #tpu.memory_space<vmem>>, %arg10: memref<8x1xf32, #tpu.memory_space<vmem>>, %arg11: memref<16x72xbf16, #tpu.memory_space<vmem>>, %arg12: memref<16x1xf32, #tpu.memory_space<vmem>>, %arg13: memref<16x1xf32, #tpu.memory_space<vmem>>, %arg14: memref<16x80xbf16, #tpu.memory_space<vmem>>, %arg15: memref<16x64xbf16, #tpu.memory_space<vmem>>, %arg16: memref<16x1xf32, #tpu.memory_space<vmem>>, %arg17: memref<16x1xf32, #tpu.memory_space<vmem>>, %arg18: memref<16x72xbf16, #tpu.memory_space<vmem>>, %arg19: memref<16x1xf32, #tpu.memory_space<vmem>>, %arg20: memref<16x1xf32, #tpu.memory_space<vmem>>, %arg21: memref<16x512xbf16, #tpu.memory_space<vmem>>) attributes {dimension_semantics = [], scalar_prefetch = 0 : i64, scratch_operands = 0 : i64, tpu.core_type = #tpu.core_type<tc>} {
    %cst = arith.constant 1.000000e+00 : f32
    %0 = vector.broadcast %cst : f32 to vector<512x1xf32>
    %c0 = arith.constant 0 : index
    %c0_0 = arith.constant 0 : index
    %1 = vector.load %arg0[%c0, %c0_0] : memref<8x512xbf16, #tpu.memory_space<vmem>>, vector<8x512xbf16>
    %2 = arith.extf %1 : vector<8x512xbf16> to vector<8x512xf32>
    %c0_1 = arith.constant 0 : index
    %c0_2 = arith.constant 0 : index
    %c0_3 = arith.constant 0 : index
    %3 = vector.load %arg1[%c0_1, %c0_2, %c0_3] : memref<9x1x512xf32, #tpu.memory_space<vmem>>, vector<9x1x512xf32>
    %c17_i32 = arith.constant 17 : i32
    %4 = tpu.dynamic_rotate %2 by %c17_i32 dim 1 : vector<8x512xf32>, i32 -> vector<8x512xf32>
    %5 = vector.extract_strided_slice %3 {offsets = [0, 0, 0], sizes = [1, 1, 512], strides = [1, 1, 1]} : vector<9x1x512xf32> to vector<1x1x512xf32>
    %6 = vector.shape_cast %5 : vector<1x1x512xf32> to vector<1x512xf32>
    %7 = vector.broadcast %6 : vector<1x512xf32> to vector<8x512xf32>
    %8 = arith.mulf %4, %7 : vector<8x512xf32>
    %c16_i32 = arith.constant 16 : i32
    %9 = tpu.dynamic_rotate %2 by %c16_i32 dim 1 : vector<8x512xf32>, i32 -> vector<8x512xf32>
    %10 = vector.extract_strided_slice %3 {offsets = [1, 0, 0], sizes = [1, 1, 512], strides = [1, 1, 1]} : vector<9x1x512xf32> to vector<1x1x512xf32>
    %11 = vector.shape_cast %10 : vector<1x1x512xf32> to vector<1x512xf32>
    %12 = vector.broadcast %11 : vector<1x512xf32> to vector<8x512xf32>
    %13 = arith.mulf %9, %12 : vector<8x512xf32>
    %c15_i32 = arith.constant 15 : i32
    %14 = tpu.dynamic_rotate %2 by %c15_i32 dim 1 : vector<8x512xf32>, i32 -> vector<8x512xf32>
    %15 = vector.extract_strided_slice %3 {offsets = [2, 0, 0], sizes = [1, 1, 512], strides = [1, 1, 1]} : vector<9x1x512xf32> to vector<1x1x512xf32>
    %16 = vector.shape_cast %15 : vector<1x1x512xf32> to vector<1x512xf32>
    %17 = vector.broadcast %16 : vector<1x512xf32> to vector<8x512xf32>
    %18 = arith.mulf %14, %17 : vector<8x512xf32>
    %c1_i32 = arith.constant 1 : i32
    %19 = tpu.dynamic_rotate %2 by %c1_i32 dim 1 : vector<8x512xf32>, i32 -> vector<8x512xf32>
    %20 = vector.extract_strided_slice %3 {offsets = [3, 0, 0], sizes = [1, 1, 512], strides = [1, 1, 1]} : vector<9x1x512xf32> to vector<1x1x512xf32>
    %21 = vector.shape_cast %20 : vector<1x1x512xf32> to vector<1x512xf32>
    %22 = vector.broadcast %21 : vector<1x512xf32> to vector<8x512xf32>
    %23 = arith.mulf %19, %22 : vector<8x512xf32>
    %24 = vector.extract_strided_slice %3 {offsets = [4, 0, 0], sizes = [1, 1, 512], strides = [1, 1, 1]} : vector<9x1x512xf32> to vector<1x1x512xf32>
    %25 = vector.shape_cast %24 : vector<1x1x512xf32> to vector<1x512xf32>
    %26 = vector.broadcast %25 : vector<1x512xf32> to vector<8x512xf32>
    %27 = arith.mulf %2, %26 : vector<8x512xf32>
    %c511_i32 = arith.constant 511 : i32
    %28 = tpu.dynamic_rotate %2 by %c511_i32 dim 1 : vector<8x512xf32>, i32 -> vector<8x512xf32>
    %29 = vector.extract_strided_slice %3 {offsets = [5, 0, 0], sizes = [1, 1, 512], strides = [1, 1, 1]} : vector<9x1x512xf32> to vector<1x1x512xf32>
    %30 = vector.shape_cast %29 : vector<1x1x512xf32> to vector<1x512xf32>
    %31 = vector.broadcast %30 : vector<1x512xf32> to vector<8x512xf32>
    %32 = arith.mulf %28, %31 : vector<8x512xf32>
    %c497_i32 = arith.constant 497 : i32
    %33 = tpu.dynamic_rotate %2 by %c497_i32 dim 1 : vector<8x512xf32>, i32 -> vector<8x512xf32>
    %34 = vector.extract_strided_slice %3 {offsets = [6, 0, 0], sizes = [1, 1, 512], strides = [1, 1, 1]} : vector<9x1x512xf32> to vector<1x1x512xf32>
    %35 = vector.shape_cast %34 : vector<1x1x512xf32> to vector<1x512xf32>
    %36 = vector.broadcast %35 : vector<1x512xf32> to vector<8x512xf32>
    %37 = arith.mulf %33, %36 : vector<8x512xf32>
    %c496_i32 = arith.constant 496 : i32
    %38 = tpu.dynamic_rotate %2 by %c496_i32 dim 1 : vector<8x512xf32>, i32 -> vector<8x512xf32>
    %39 = vector.extract_strided_slice %3 {offsets = [7, 0, 0], sizes = [1, 1, 512], strides = [1, 1, 1]} : vector<9x1x512xf32> to vector<1x1x512xf32>
    %40 = vector.shape_cast %39 : vector<1x1x512xf32> to vector<1x512xf32>
    %41 = vector.broadcast %40 : vector<1x512xf32> to vector<8x512xf32>
    %42 = arith.mulf %38, %41 : vector<8x512xf32>
    %c495_i32 = arith.constant 495 : i32
    %43 = tpu.dynamic_rotate %2 by %c495_i32 dim 1 : vector<8x512xf32>, i32 -> vector<8x512xf32>
    %44 = vector.extract_strided_slice %3 {offsets = [8, 0, 0], sizes = [1, 1, 512], strides = [1, 1, 1]} : vector<9x1x512xf32> to vector<1x1x512xf32>
    %45 = vector.shape_cast %44 : vector<1x1x512xf32> to vector<1x512xf32>
    %46 = vector.broadcast %45 : vector<1x512xf32> to vector<8x512xf32>
    %47 = arith.mulf %43, %46 : vector<8x512xf32>
    %48 = tpu.concatenate %8, %13, %18, %23, %27, %32, %37, %42, %47 in 0 : vector<8x512xf32>, vector<8x512xf32>, vector<8x512xf32>, vector<8x512xf32>, vector<8x512xf32>, vector<8x512xf32>, vector<8x512xf32>, vector<8x512xf32>, vector<8x512xf32> -> vector<72x512xf32>
    %49 = arith.truncf %48 : vector<72x512xf32> to vector<72x512xbf16>
    %c0_4 = arith.constant 0 : index
    %c0_5 = arith.constant 0 : index
    %50 = vector.load %arg2[%c0_4, %c0_5] : memref<8x72xbf16, #tpu.memory_space<vmem>>, vector<8x72xbf16>
    %cst_6 = arith.constant dense<0.000000e+00> : vector<8x512xf32>
    %51 = tpu.matmul %50, %49, %cst_6 {dimension_numbers = #tpu.dot_dimension_numbers<[1], [0], [0], [1], [0, 0, 1, 1], [], []>} : vector<8x72xbf16>, vector<72x512xbf16>, vector<8x512xf32> -> vector<8x512xf32>
    %c0_7 = arith.constant 0 : index
    %c0_8 = arith.constant 0 : index
    %52 = vector.load %arg3[%c0_7, %c0_8] : memref<8x1xf32, #tpu.memory_space<vmem>>, vector<8x1xf32>
    %c0_9 = arith.constant 0 : index
    %c0_10 = arith.constant 0 : index
    %53 = vector.load %arg4[%c0_9, %c0_10] : memref<8x1xf32, #tpu.memory_space<vmem>>, vector<8x1xf32>
    %cst_11 = arith.constant dense<0.000000e+00> : vector<8x1xf32>
    %54 = tpu.matmul %51, %0, %cst_11 {dimension_numbers = #tpu.dot_dimension_numbers<[1], [0], [0], [1], [0, 0, 1, 1], [], []>} : vector<8x512xf32>, vector<512x1xf32>, vector<8x1xf32> -> vector<8x1xf32>
    %cst_12 = arith.constant 0.001953125 : f32
    %55 = vector.broadcast %cst_12 : f32 to vector<8x1xf32>
    %56 = arith.mulf %54, %55 : vector<8x1xf32>
    %57 = vector.broadcast %56 : vector<8x1xf32> to vector<8x512xf32>
    %58 = arith.subf %51, %57 : vector<8x512xf32>
    %59 = arith.mulf %58, %58 : vector<8x512xf32>
    %cst_13 = arith.constant dense<0.000000e+00> : vector<8x1xf32>
    %60 = tpu.matmul %59, %0, %cst_13 {dimension_numbers = #tpu.dot_dimension_numbers<[1], [0], [0], [1], [0, 0, 1, 1], [], []>} : vector<8x512xf32>, vector<512x1xf32>, vector<8x1xf32> -> vector<8x1xf32>
    %cst_14 = arith.constant 0.001953125 : f32
    %61 = vector.broadcast %cst_14 : f32 to vector<8x1xf32>
    %62 = arith.mulf %60, %61 : vector<8x1xf32>
    %cst_15 = arith.constant 9.99999974E-6 : f32
    %63 = vector.broadcast %cst_15 : f32 to vector<8x1xf32>
    %64 = arith.addf %62, %63 : vector<8x1xf32>
    %65 = math.rsqrt %64 : vector<8x1xf32>
    %66 = arith.mulf %65, %52 : vector<8x1xf32>
    %67 = vector.broadcast %66 : vector<8x1xf32> to vector<8x512xf32>
    %68 = arith.mulf %58, %67 : vector<8x512xf32>
    %69 = vector.broadcast %53 : vector<8x1xf32> to vector<8x512xf32>
    %70 = arith.addf %68, %69 : vector<8x512xf32>
    %cst_16 = arith.constant 0.000000e+00 : f32
    %71 = vector.broadcast %cst_16 : f32 to vector<8x512xf32>
    %72 = arith.maximumf %70, %71 : vector<8x512xf32>
    %c0_17 = arith.constant 0 : index
    %c0_18 = arith.constant 0 : index
    %c0_19 = arith.constant 0 : index
    %73 = vector.load %arg1[%c0_17, %c0_18, %c0_19] : memref<9x1x512xf32, #tpu.memory_space<vmem>>, vector<9x1x512xf32>
    %c17_i32_20 = arith.constant 17 : i32
    %74 = tpu.dynamic_rotate %72 by %c17_i32_20 dim 1 : vector<8x512xf32>, i32 -> vector<8x512xf32>
    %75 = vector.extract_strided_slice %73 {offsets = [0, 0, 0], sizes = [1, 1, 512], strides = [1, 1, 1]} : vector<9x1x512xf32> to vector<1x1x512xf32>
    %76 = vector.shape_cast %75 : vector<1x1x512xf32> to vector<1x512xf32>
    %77 = vector.broadcast %76 : vector<1x512xf32> to vector<8x512xf32>
    %78 = arith.mulf %74, %77 : vector<8x512xf32>
    %c16_i32_21 = arith.constant 16 : i32
    %79 = tpu.dynamic_rotate %72 by %c16_i32_21 dim 1 : vector<8x512xf32>, i32 -> vector<8x512xf32>
    %80 = vector.extract_strided_slice %73 {offsets = [1, 0, 0], sizes = [1, 1, 512], strides = [1, 1, 1]} : vector<9x1x512xf32> to vector<1x1x512xf32>
    %81 = vector.shape_cast %80 : vector<1x1x512xf32> to vector<1x512xf32>
    %82 = vector.broadcast %81 : vector<1x512xf32> to vector<8x512xf32>
    %83 = arith.mulf %79, %82 : vector<8x512xf32>
    %c15_i32_22 = arith.constant 15 : i32
    %84 = tpu.dynamic_rotate %72 by %c15_i32_22 dim 1 : vector<8x512xf32>, i32 -> vector<8x512xf32>
    %85 = vector.extract_strided_slice %73 {offsets = [2, 0, 0], sizes = [1, 1, 512], strides = [1, 1, 1]} : vector<9x1x512xf32> to vector<1x1x512xf32>
    %86 = vector.shape_cast %85 : vector<1x1x512xf32> to vector<1x512xf32>
    %87 = vector.broadcast %86 : vector<1x512xf32> to vector<8x512xf32>
    %88 = arith.mulf %84, %87 : vector<8x512xf32>
    %c1_i32_23 = arith.constant 1 : i32
    %89 = tpu.dynamic_rotate %72 by %c1_i32_23 dim 1 : vector<8x512xf32>, i32 -> vector<8x512xf32>
    %90 = vector.extract_strided_slice %73 {offsets = [3, 0, 0], sizes = [1, 1, 512], strides = [1, 1, 1]} : vector<9x1x512xf32> to vector<1x1x512xf32>
    %91 = vector.shape_cast %90 : vector<1x1x512xf32> to vector<1x512xf32>
    %92 = vector.broadcast %91 : vector<1x512xf32> to vector<8x512xf32>
    %93 = arith.mulf %89, %92 : vector<8x512xf32>
    %94 = vector.extract_strided_slice %73 {offsets = [4, 0, 0], sizes = [1, 1, 512], strides = [1, 1, 1]} : vector<9x1x512xf32> to vector<1x1x512xf32>
    %95 = vector.shape_cast %94 : vector<1x1x512xf32> to vector<1x512xf32>
    %96 = vector.broadcast %95 : vector<1x512xf32> to vector<8x512xf32>
    %97 = arith.mulf %72, %96 : vector<8x512xf32>
    %c511_i32_24 = arith.constant 511 : i32
    %98 = tpu.dynamic_rotate %72 by %c511_i32_24 dim 1 : vector<8x512xf32>, i32 -> vector<8x512xf32>
    %99 = vector.extract_strided_slice %73 {offsets = [5, 0, 0], sizes = [1, 1, 512], strides = [1, 1, 1]} : vector<9x1x512xf32> to vector<1x1x512xf32>
    %100 = vector.shape_cast %99 : vector<1x1x512xf32> to vector<1x512xf32>
    %101 = vector.broadcast %100 : vector<1x512xf32> to vector<8x512xf32>
    %102 = arith.mulf %98, %101 : vector<8x512xf32>
    %c497_i32_25 = arith.constant 497 : i32
    %103 = tpu.dynamic_rotate %72 by %c497_i32_25 dim 1 : vector<8x512xf32>, i32 -> vector<8x512xf32>
    %104 = vector.extract_strided_slice %73 {offsets = [6, 0, 0], sizes = [1, 1, 512], strides = [1, 1, 1]} : vector<9x1x512xf32> to vector<1x1x512xf32>
    %105 = vector.shape_cast %104 : vector<1x1x512xf32> to vector<1x512xf32>
    %106 = vector.broadcast %105 : vector<1x512xf32> to vector<8x512xf32>
    %107 = arith.mulf %103, %106 : vector<8x512xf32>
    %c496_i32_26 = arith.constant 496 : i32
    %108 = tpu.dynamic_rotate %72 by %c496_i32_26 dim 1 : vector<8x512xf32>, i32 -> vector<8x512xf32>
    %109 = vector.extract_strided_slice %73 {offsets = [7, 0, 0], sizes = [1, 1, 512], strides = [1, 1, 1]} : vector<9x1x512xf32> to vector<1x1x512xf32>
    %110 = vector.shape_cast %109 : vector<1x1x512xf32> to vector<1x512xf32>
    %111 = vector.broadcast %110 : vector<1x512xf32> to vector<8x512xf32>
    %112 = arith.mulf %108, %111 : vector<8x512xf32>
    %c495_i32_27 = arith.constant 495 : i32
    %113 = tpu.dynamic_rotate %72 by %c495_i32_27 dim 1 : vector<8x512xf32>, i32 -> vector<8x512xf32>
    %114 = vector.extract_strided_slice %73 {offsets = [8, 0, 0], sizes = [1, 1, 512], strides = [1, 1, 1]} : vector<9x1x512xf32> to vector<1x1x512xf32>
    %115 = vector.shape_cast %114 : vector<1x1x512xf32> to vector<1x512xf32>
    %116 = vector.broadcast %115 : vector<1x512xf32> to vector<8x512xf32>
    %117 = arith.mulf %113, %116 : vector<8x512xf32>
    %118 = tpu.concatenate %78, %83, %88, %93, %97, %102, %107, %112, %117 in 0 : vector<8x512xf32>, vector<8x512xf32>, vector<8x512xf32>, vector<8x512xf32>, vector<8x512xf32>, vector<8x512xf32>, vector<8x512xf32>, vector<8x512xf32>, vector<8x512xf32> -> vector<72x512xf32>
    %119 = arith.truncf %118 : vector<72x512xf32> to vector<72x512xbf16>
    %c0_28 = arith.constant 0 : index
    %c0_29 = arith.constant 0 : index
    %120 = vector.load %arg5[%c0_28, %c0_29] : memref<8x72xbf16, #tpu.memory_space<vmem>>, vector<8x72xbf16>
    %cst_30 = arith.constant dense<0.000000e+00> : vector<8x512xf32>
    %121 = tpu.matmul %120, %119, %cst_30 {dimension_numbers = #tpu.dot_dimension_numbers<[1], [0], [0], [1], [0, 0, 1, 1], [], []>} : vector<8x72xbf16>, vector<72x512xbf16>, vector<8x512xf32> -> vector<8x512xf32>
    %c0_31 = arith.constant 0 : index
    %c0_32 = arith.constant 0 : index
    %122 = vector.load %arg6[%c0_31, %c0_32] : memref<8x1xf32, #tpu.memory_space<vmem>>, vector<8x1xf32>
    %c0_33 = arith.constant 0 : index
    %c0_34 = arith.constant 0 : index
    %123 = vector.load %arg7[%c0_33, %c0_34] : memref<8x1xf32, #tpu.memory_space<vmem>>, vector<8x1xf32>
    %cst_35 = arith.constant dense<0.000000e+00> : vector<8x1xf32>
    %124 = tpu.matmul %121, %0, %cst_35 {dimension_numbers = #tpu.dot_dimension_numbers<[1], [0], [0], [1], [0, 0, 1, 1], [], []>} : vector<8x512xf32>, vector<512x1xf32>, vector<8x1xf32> -> vector<8x1xf32>
    %cst_36 = arith.constant 0.001953125 : f32
    %125 = vector.broadcast %cst_36 : f32 to vector<8x1xf32>
    %126 = arith.mulf %124, %125 : vector<8x1xf32>
    %127 = vector.broadcast %126 : vector<8x1xf32> to vector<8x512xf32>
    %128 = arith.subf %121, %127 : vector<8x512xf32>
    %129 = arith.mulf %128, %128 : vector<8x512xf32>
    %cst_37 = arith.constant dense<0.000000e+00> : vector<8x1xf32>
    %130 = tpu.matmul %129, %0, %cst_37 {dimension_numbers = #tpu.dot_dimension_numbers<[1], [0], [0], [1], [0, 0, 1, 1], [], []>} : vector<8x512xf32>, vector<512x1xf32>, vector<8x1xf32> -> vector<8x1xf32>
    %cst_38 = arith.constant 0.001953125 : f32
    %131 = vector.broadcast %cst_38 : f32 to vector<8x1xf32>
    %132 = arith.mulf %130, %131 : vector<8x1xf32>
    %cst_39 = arith.constant 9.99999974E-6 : f32
    %133 = vector.broadcast %cst_39 : f32 to vector<8x1xf32>
    %134 = arith.addf %132, %133 : vector<8x1xf32>
    %135 = math.rsqrt %134 : vector<8x1xf32>
    %136 = arith.mulf %135, %122 : vector<8x1xf32>
    %137 = vector.broadcast %136 : vector<8x1xf32> to vector<8x512xf32>
    %138 = arith.mulf %128, %137 : vector<8x512xf32>
    %139 = vector.broadcast %123 : vector<8x1xf32> to vector<8x512xf32>
    %140 = arith.addf %138, %139 : vector<8x512xf32>
    %cst_40 = arith.constant 0.000000e+00 : f32
    %141 = vector.broadcast %cst_40 : f32 to vector<8x512xf32>
    %142 = arith.maximumf %140, %141 : vector<8x512xf32>
    %c0_41 = arith.constant 0 : index
    %c0_42 = arith.constant 0 : index
    %c0_43 = arith.constant 0 : index
    %143 = vector.load %arg1[%c0_41, %c0_42, %c0_43] : memref<9x1x512xf32, #tpu.memory_space<vmem>>, vector<9x1x512xf32>
    %c17_i32_44 = arith.constant 17 : i32
    %144 = tpu.dynamic_rotate %142 by %c17_i32_44 dim 1 : vector<8x512xf32>, i32 -> vector<8x512xf32>
    %145 = vector.extract_strided_slice %143 {offsets = [0, 0, 0], sizes = [1, 1, 512], strides = [1, 1, 1]} : vector<9x1x512xf32> to vector<1x1x512xf32>
    %146 = vector.shape_cast %145 : vector<1x1x512xf32> to vector<1x512xf32>
    %147 = vector.broadcast %146 : vector<1x512xf32> to vector<8x512xf32>
    %148 = arith.mulf %144, %147 : vector<8x512xf32>
    %c16_i32_45 = arith.constant 16 : i32
    %149 = tpu.dynamic_rotate %142 by %c16_i32_45 dim 1 : vector<8x512xf32>, i32 -> vector<8x512xf32>
    %150 = vector.extract_strided_slice %143 {offsets = [1, 0, 0], sizes = [1, 1, 512], strides = [1, 1, 1]} : vector<9x1x512xf32> to vector<1x1x512xf32>
    %151 = vector.shape_cast %150 : vector<1x1x512xf32> to vector<1x512xf32>
    %152 = vector.broadcast %151 : vector<1x512xf32> to vector<8x512xf32>
    %153 = arith.mulf %149, %152 : vector<8x512xf32>
    %c15_i32_46 = arith.constant 15 : i32
    %154 = tpu.dynamic_rotate %142 by %c15_i32_46 dim 1 : vector<8x512xf32>, i32 -> vector<8x512xf32>
    %155 = vector.extract_strided_slice %143 {offsets = [2, 0, 0], sizes = [1, 1, 512], strides = [1, 1, 1]} : vector<9x1x512xf32> to vector<1x1x512xf32>
    %156 = vector.shape_cast %155 : vector<1x1x512xf32> to vector<1x512xf32>
    %157 = vector.broadcast %156 : vector<1x512xf32> to vector<8x512xf32>
    %158 = arith.mulf %154, %157 : vector<8x512xf32>
    %c1_i32_47 = arith.constant 1 : i32
    %159 = tpu.dynamic_rotate %142 by %c1_i32_47 dim 1 : vector<8x512xf32>, i32 -> vector<8x512xf32>
    %160 = vector.extract_strided_slice %143 {offsets = [3, 0, 0], sizes = [1, 1, 512], strides = [1, 1, 1]} : vector<9x1x512xf32> to vector<1x1x512xf32>
    %161 = vector.shape_cast %160 : vector<1x1x512xf32> to vector<1x512xf32>
    %162 = vector.broadcast %161 : vector<1x512xf32> to vector<8x512xf32>
    %163 = arith.mulf %159, %162 : vector<8x512xf32>
    %164 = vector.extract_strided_slice %143 {offsets = [4, 0, 0], sizes = [1, 1, 512], strides = [1, 1, 1]} : vector<9x1x512xf32> to vector<1x1x512xf32>
    %165 = vector.shape_cast %164 : vector<1x1x512xf32> to vector<1x512xf32>
    %166 = vector.broadcast %165 : vector<1x512xf32> to vector<8x512xf32>
    %167 = arith.mulf %142, %166 : vector<8x512xf32>
    %c511_i32_48 = arith.constant 511 : i32
    %168 = tpu.dynamic_rotate %142 by %c511_i32_48 dim 1 : vector<8x512xf32>, i32 -> vector<8x512xf32>
    %169 = vector.extract_strided_slice %143 {offsets = [5, 0, 0], sizes = [1, 1, 512], strides = [1, 1, 1]} : vector<9x1x512xf32> to vector<1x1x512xf32>
    %170 = vector.shape_cast %169 : vector<1x1x512xf32> to vector<1x512xf32>
    %171 = vector.broadcast %170 : vector<1x512xf32> to vector<8x512xf32>
    %172 = arith.mulf %168, %171 : vector<8x512xf32>
    %c497_i32_49 = arith.constant 497 : i32
    %173 = tpu.dynamic_rotate %142 by %c497_i32_49 dim 1 : vector<8x512xf32>, i32 -> vector<8x512xf32>
    %174 = vector.extract_strided_slice %143 {offsets = [6, 0, 0], sizes = [1, 1, 512], strides = [1, 1, 1]} : vector<9x1x512xf32> to vector<1x1x512xf32>
    %175 = vector.shape_cast %174 : vector<1x1x512xf32> to vector<1x512xf32>
    %176 = vector.broadcast %175 : vector<1x512xf32> to vector<8x512xf32>
    %177 = arith.mulf %173, %176 : vector<8x512xf32>
    %c496_i32_50 = arith.constant 496 : i32
    %178 = tpu.dynamic_rotate %142 by %c496_i32_50 dim 1 : vector<8x512xf32>, i32 -> vector<8x512xf32>
    %179 = vector.extract_strided_slice %143 {offsets = [7, 0, 0], sizes = [1, 1, 512], strides = [1, 1, 1]} : vector<9x1x512xf32> to vector<1x1x512xf32>
    %180 = vector.shape_cast %179 : vector<1x1x512xf32> to vector<1x512xf32>
    %181 = vector.broadcast %180 : vector<1x512xf32> to vector<8x512xf32>
    %182 = arith.mulf %178, %181 : vector<8x512xf32>
    %c495_i32_51 = arith.constant 495 : i32
    %183 = tpu.dynamic_rotate %142 by %c495_i32_51 dim 1 : vector<8x512xf32>, i32 -> vector<8x512xf32>
    %184 = vector.extract_strided_slice %143 {offsets = [8, 0, 0], sizes = [1, 1, 512], strides = [1, 1, 1]} : vector<9x1x512xf32> to vector<1x1x512xf32>
    %185 = vector.shape_cast %184 : vector<1x1x512xf32> to vector<1x512xf32>
    %186 = vector.broadcast %185 : vector<1x512xf32> to vector<8x512xf32>
    %187 = arith.mulf %183, %186 : vector<8x512xf32>
    %188 = tpu.concatenate %148, %153, %158, %163, %167, %172, %177, %182, %187 in 0 : vector<8x512xf32>, vector<8x512xf32>, vector<8x512xf32>, vector<8x512xf32>, vector<8x512xf32>, vector<8x512xf32>, vector<8x512xf32>, vector<8x512xf32>, vector<8x512xf32> -> vector<72x512xf32>
    %189 = arith.truncf %188 : vector<72x512xf32> to vector<72x512xbf16>
    %c0_52 = arith.constant 0 : index
    %c0_53 = arith.constant 0 : index
    %190 = vector.load %arg8[%c0_52, %c0_53] : memref<8x72xbf16, #tpu.memory_space<vmem>>, vector<8x72xbf16>
    %cst_54 = arith.constant dense<0.000000e+00> : vector<8x512xf32>
    %191 = tpu.matmul %190, %189, %cst_54 {dimension_numbers = #tpu.dot_dimension_numbers<[1], [0], [0], [1], [0, 0, 1, 1], [], []>} : vector<8x72xbf16>, vector<72x512xbf16>, vector<8x512xf32> -> vector<8x512xf32>
    %c0_55 = arith.constant 0 : index
    %c0_56 = arith.constant 0 : index
    %192 = vector.load %arg9[%c0_55, %c0_56] : memref<8x1xf32, #tpu.memory_space<vmem>>, vector<8x1xf32>
    %c0_57 = arith.constant 0 : index
    %c0_58 = arith.constant 0 : index
    %193 = vector.load %arg10[%c0_57, %c0_58] : memref<8x1xf32, #tpu.memory_space<vmem>>, vector<8x1xf32>
    %cst_59 = arith.constant dense<0.000000e+00> : vector<8x1xf32>
    %194 = tpu.matmul %191, %0, %cst_59 {dimension_numbers = #tpu.dot_dimension_numbers<[1], [0], [0], [1], [0, 0, 1, 1], [], []>} : vector<8x512xf32>, vector<512x1xf32>, vector<8x1xf32> -> vector<8x1xf32>
    %cst_60 = arith.constant 0.001953125 : f32
    %195 = vector.broadcast %cst_60 : f32 to vector<8x1xf32>
    %196 = arith.mulf %194, %195 : vector<8x1xf32>
    %197 = vector.broadcast %196 : vector<8x1xf32> to vector<8x512xf32>
    %198 = arith.subf %191, %197 : vector<8x512xf32>
    %199 = arith.mulf %198, %198 : vector<8x512xf32>
    %cst_61 = arith.constant dense<0.000000e+00> : vector<8x1xf32>
    %200 = tpu.matmul %199, %0, %cst_61 {dimension_numbers = #tpu.dot_dimension_numbers<[1], [0], [0], [1], [0, 0, 1, 1], [], []>} : vector<8x512xf32>, vector<512x1xf32>, vector<8x1xf32> -> vector<8x1xf32>
    %cst_62 = arith.constant 0.001953125 : f32
    %201 = vector.broadcast %cst_62 : f32 to vector<8x1xf32>
    %202 = arith.mulf %200, %201 : vector<8x1xf32>
    %cst_63 = arith.constant 9.99999974E-6 : f32
    %203 = vector.broadcast %cst_63 : f32 to vector<8x1xf32>
    %204 = arith.addf %202, %203 : vector<8x1xf32>
    %205 = math.rsqrt %204 : vector<8x1xf32>
    %206 = arith.mulf %205, %192 : vector<8x1xf32>
    %207 = vector.broadcast %206 : vector<8x1xf32> to vector<8x512xf32>
    %208 = arith.mulf %198, %207 : vector<8x512xf32>
    %209 = vector.broadcast %193 : vector<8x1xf32> to vector<8x512xf32>
    %210 = arith.addf %208, %209 : vector<8x512xf32>
    %211 = arith.addf %210, %72 : vector<8x512xf32>
    %cst_64 = arith.constant 0.000000e+00 : f32
    %212 = vector.broadcast %cst_64 : f32 to vector<8x512xf32>
    %213 = arith.maximumf %211, %212 : vector<8x512xf32>
    %c0_65 = arith.constant 0 : index
    %c0_66 = arith.constant 0 : index
    %c0_67 = arith.constant 0 : index
    %214 = vector.load %arg1[%c0_65, %c0_66, %c0_67] : memref<9x1x512xf32, #tpu.memory_space<vmem>>, vector<9x1x512xf32>
    %c17_i32_68 = arith.constant 17 : i32
    %215 = tpu.dynamic_rotate %213 by %c17_i32_68 dim 1 : vector<8x512xf32>, i32 -> vector<8x512xf32>
    %216 = vector.extract_strided_slice %214 {offsets = [0, 0, 0], sizes = [1, 1, 512], strides = [1, 1, 1]} : vector<9x1x512xf32> to vector<1x1x512xf32>
    %217 = vector.shape_cast %216 : vector<1x1x512xf32> to vector<1x512xf32>
    %218 = vector.broadcast %217 : vector<1x512xf32> to vector<8x512xf32>
    %219 = arith.mulf %215, %218 : vector<8x512xf32>
    %c16_i32_69 = arith.constant 16 : i32
    %220 = tpu.dynamic_rotate %213 by %c16_i32_69 dim 1 : vector<8x512xf32>, i32 -> vector<8x512xf32>
    %221 = vector.extract_strided_slice %214 {offsets = [1, 0, 0], sizes = [1, 1, 512], strides = [1, 1, 1]} : vector<9x1x512xf32> to vector<1x1x512xf32>
    %222 = vector.shape_cast %221 : vector<1x1x512xf32> to vector<1x512xf32>
    %223 = vector.broadcast %222 : vector<1x512xf32> to vector<8x512xf32>
    %224 = arith.mulf %220, %223 : vector<8x512xf32>
    %c15_i32_70 = arith.constant 15 : i32
    %225 = tpu.dynamic_rotate %213 by %c15_i32_70 dim 1 : vector<8x512xf32>, i32 -> vector<8x512xf32>
    %226 = vector.extract_strided_slice %214 {offsets = [2, 0, 0], sizes = [1, 1, 512], strides = [1, 1, 1]} : vector<9x1x512xf32> to vector<1x1x512xf32>
    %227 = vector.shape_cast %226 : vector<1x1x512xf32> to vector<1x512xf32>
    %228 = vector.broadcast %227 : vector<1x512xf32> to vector<8x512xf32>
    %229 = arith.mulf %225, %228 : vector<8x512xf32>
    %c1_i32_71 = arith.constant 1 : i32
    %230 = tpu.dynamic_rotate %213 by %c1_i32_71 dim 1 : vector<8x512xf32>, i32 -> vector<8x512xf32>
    %231 = vector.extract_strided_slice %214 {offsets = [3, 0, 0], sizes = [1, 1, 512], strides = [1, 1, 1]} : vector<9x1x512xf32> to vector<1x1x512xf32>
    %232 = vector.shape_cast %231 : vector<1x1x512xf32> to vector<1x512xf32>
    %233 = vector.broadcast %232 : vector<1x512xf32> to vector<8x512xf32>
    %234 = arith.mulf %230, %233 : vector<8x512xf32>
    %235 = vector.extract_strided_slice %214 {offsets = [4, 0, 0], sizes = [1, 1, 512], strides = [1, 1, 1]} : vector<9x1x512xf32> to vector<1x1x512xf32>
    %236 = vector.shape_cast %235 : vector<1x1x512xf32> to vector<1x512xf32>
    %237 = vector.broadcast %236 : vector<1x512xf32> to vector<8x512xf32>
    %238 = arith.mulf %213, %237 : vector<8x512xf32>
    %c511_i32_72 = arith.constant 511 : i32
    %239 = tpu.dynamic_rotate %213 by %c511_i32_72 dim 1 : vector<8x512xf32>, i32 -> vector<8x512xf32>
    %240 = vector.extract_strided_slice %214 {offsets = [5, 0, 0], sizes = [1, 1, 512], strides = [1, 1, 1]} : vector<9x1x512xf32> to vector<1x1x512xf32>
    %241 = vector.shape_cast %240 : vector<1x1x512xf32> to vector<1x512xf32>
    %242 = vector.broadcast %241 : vector<1x512xf32> to vector<8x512xf32>
    %243 = arith.mulf %239, %242 : vector<8x512xf32>
    %c497_i32_73 = arith.constant 497 : i32
    %244 = tpu.dynamic_rotate %213 by %c497_i32_73 dim 1 : vector<8x512xf32>, i32 -> vector<8x512xf32>
    %245 = vector.extract_strided_slice %214 {offsets = [6, 0, 0], sizes = [1, 1, 512], strides = [1, 1, 1]} : vector<9x1x512xf32> to vector<1x1x512xf32>
    %246 = vector.shape_cast %245 : vector<1x1x512xf32> to vector<1x512xf32>
    %247 = vector.broadcast %246 : vector<1x512xf32> to vector<8x512xf32>
    %248 = arith.mulf %244, %247 : vector<8x512xf32>
    %c496_i32_74 = arith.constant 496 : i32
    %249 = tpu.dynamic_rotate %213 by %c496_i32_74 dim 1 : vector<8x512xf32>, i32 -> vector<8x512xf32>
    %250 = vector.extract_strided_slice %214 {offsets = [7, 0, 0], sizes = [1, 1, 512], strides = [1, 1, 1]} : vector<9x1x512xf32> to vector<1x1x512xf32>
    %251 = vector.shape_cast %250 : vector<1x1x512xf32> to vector<1x512xf32>
    %252 = vector.broadcast %251 : vector<1x512xf32> to vector<8x512xf32>
    %253 = arith.mulf %249, %252 : vector<8x512xf32>
    %c495_i32_75 = arith.constant 495 : i32
    %254 = tpu.dynamic_rotate %213 by %c495_i32_75 dim 1 : vector<8x512xf32>, i32 -> vector<8x512xf32>
    %255 = vector.extract_strided_slice %214 {offsets = [8, 0, 0], sizes = [1, 1, 512], strides = [1, 1, 1]} : vector<9x1x512xf32> to vector<1x1x512xf32>
    %256 = vector.shape_cast %255 : vector<1x1x512xf32> to vector<1x512xf32>
    %257 = vector.broadcast %256 : vector<1x512xf32> to vector<8x512xf32>
    %258 = arith.mulf %254, %257 : vector<8x512xf32>
    %259 = tpu.concatenate %219, %224, %229, %234, %238, %243, %248, %253, %258 in 0 : vector<8x512xf32>, vector<8x512xf32>, vector<8x512xf32>, vector<8x512xf32>, vector<8x512xf32>, vector<8x512xf32>, vector<8x512xf32>, vector<8x512xf32>, vector<8x512xf32> -> vector<72x512xf32>
    %260 = arith.truncf %259 : vector<72x512xf32> to vector<72x512xbf16>
    %c0_76 = arith.constant 0 : index
    %c0_77 = arith.constant 0 : index
    %261 = vector.load %arg11[%c0_76, %c0_77] : memref<16x72xbf16, #tpu.memory_space<vmem>>, vector<16x72xbf16>
    %cst_78 = arith.constant dense<0.000000e+00> : vector<16x512xf32>
    %262 = tpu.matmul %261, %260, %cst_78 {dimension_numbers = #tpu.dot_dimension_numbers<[1], [0], [0], [1], [0, 0, 1, 1], [], []>} : vector<16x72xbf16>, vector<72x512xbf16>, vector<16x512xf32> -> vector<16x512xf32>
    %c0_79 = arith.constant 0 : index
    %c0_80 = arith.constant 0 : index
    %263 = vector.load %arg12[%c0_79, %c0_80] : memref<16x1xf32, #tpu.memory_space<vmem>>, vector<16x1xf32>
    %c0_81 = arith.constant 0 : index
    %c0_82 = arith.constant 0 : index
    %264 = vector.load %arg13[%c0_81, %c0_82] : memref<16x1xf32, #tpu.memory_space<vmem>>, vector<16x1xf32>
    %cst_83 = arith.constant dense<0.000000e+00> : vector<16x1xf32>
    %265 = tpu.matmul %262, %0, %cst_83 {dimension_numbers = #tpu.dot_dimension_numbers<[1], [0], [0], [1], [0, 0, 1, 1], [], []>} : vector<16x512xf32>, vector<512x1xf32>, vector<16x1xf32> -> vector<16x1xf32>
    %cst_84 = arith.constant 0.001953125 : f32
    %266 = vector.broadcast %cst_84 : f32 to vector<16x1xf32>
    %267 = arith.mulf %265, %266 : vector<16x1xf32>
    %268 = vector.broadcast %267 : vector<16x1xf32> to vector<16x512xf32>
    %269 = arith.subf %262, %268 : vector<16x512xf32>
    %270 = arith.mulf %269, %269 : vector<16x512xf32>
    %cst_85 = arith.constant dense<0.000000e+00> : vector<16x1xf32>
    %271 = tpu.matmul %270, %0, %cst_85 {dimension_numbers = #tpu.dot_dimension_numbers<[1], [0], [0], [1], [0, 0, 1, 1], [], []>} : vector<16x512xf32>, vector<512x1xf32>, vector<16x1xf32> -> vector<16x1xf32>
    %cst_86 = arith.constant 0.001953125 : f32
    %272 = vector.broadcast %cst_86 : f32 to vector<16x1xf32>
    %273 = arith.mulf %271, %272 : vector<16x1xf32>
    %cst_87 = arith.constant 9.99999974E-6 : f32
    %274 = vector.broadcast %cst_87 : f32 to vector<16x1xf32>
    %275 = arith.addf %273, %274 : vector<16x1xf32>
    %276 = math.rsqrt %275 : vector<16x1xf32>
    %277 = arith.mulf %276, %263 : vector<16x1xf32>
    %278 = vector.broadcast %277 : vector<16x1xf32> to vector<16x512xf32>
    %279 = arith.mulf %269, %278 : vector<16x512xf32>
    %280 = vector.broadcast %264 : vector<16x1xf32> to vector<16x512xf32>
    %281 = arith.addf %279, %280 : vector<16x512xf32>
    %cst_88 = arith.constant 0.000000e+00 : f32
    %282 = vector.broadcast %cst_88 : f32 to vector<16x512xf32>
    %283 = arith.maximumf %281, %282 : vector<16x512xf32>
    %c0_89 = arith.constant 0 : index
    %c0_90 = arith.constant 0 : index
    %c0_91 = arith.constant 0 : index
    %284 = vector.load %arg1[%c0_89, %c0_90, %c0_91] : memref<9x1x512xf32, #tpu.memory_space<vmem>>, vector<9x1x512xf32>
    %c17_i32_92 = arith.constant 17 : i32
    %285 = tpu.dynamic_rotate %283 by %c17_i32_92 dim 1 : vector<16x512xf32>, i32 -> vector<16x512xf32>
    %286 = vector.extract_strided_slice %284 {offsets = [0, 0, 0], sizes = [1, 1, 512], strides = [1, 1, 1]} : vector<9x1x512xf32> to vector<1x1x512xf32>
    %287 = vector.shape_cast %286 : vector<1x1x512xf32> to vector<1x512xf32>
    %288 = vector.broadcast %287 : vector<1x512xf32> to vector<16x512xf32>
    %289 = arith.mulf %285, %288 : vector<16x512xf32>
    %c16_i32_93 = arith.constant 16 : i32
    %290 = tpu.dynamic_rotate %283 by %c16_i32_93 dim 1 : vector<16x512xf32>, i32 -> vector<16x512xf32>
    %291 = vector.extract_strided_slice %284 {offsets = [1, 0, 0], sizes = [1, 1, 512], strides = [1, 1, 1]} : vector<9x1x512xf32> to vector<1x1x512xf32>
    %292 = vector.shape_cast %291 : vector<1x1x512xf32> to vector<1x512xf32>
    %293 = vector.broadcast %292 : vector<1x512xf32> to vector<16x512xf32>
    %294 = arith.mulf %290, %293 : vector<16x512xf32>
    %c15_i32_94 = arith.constant 15 : i32
    %295 = tpu.dynamic_rotate %283 by %c15_i32_94 dim 1 : vector<16x512xf32>, i32 -> vector<16x512xf32>
    %296 = vector.extract_strided_slice %284 {offsets = [2, 0, 0], sizes = [1, 1, 512], strides = [1, 1, 1]} : vector<9x1x512xf32> to vector<1x1x512xf32>
    %297 = vector.shape_cast %296 : vector<1x1x512xf32> to vector<1x512xf32>
    %298 = vector.broadcast %297 : vector<1x512xf32> to vector<16x512xf32>
    %299 = arith.mulf %295, %298 : vector<16x512xf32>
    %c1_i32_95 = arith.constant 1 : i32
    %300 = tpu.dynamic_rotate %283 by %c1_i32_95 dim 1 : vector<16x512xf32>, i32 -> vector<16x512xf32>
    %301 = vector.extract_strided_slice %284 {offsets = [3, 0, 0], sizes = [1, 1, 512], strides = [1, 1, 1]} : vector<9x1x512xf32> to vector<1x1x512xf32>
    %302 = vector.shape_cast %301 : vector<1x1x512xf32> to vector<1x512xf32>
    %303 = vector.broadcast %302 : vector<1x512xf32> to vector<16x512xf32>
    %304 = arith.mulf %300, %303 : vector<16x512xf32>
    %305 = vector.extract_strided_slice %284 {offsets = [4, 0, 0], sizes = [1, 1, 512], strides = [1, 1, 1]} : vector<9x1x512xf32> to vector<1x1x512xf32>
    %306 = vector.shape_cast %305 : vector<1x1x512xf32> to vector<1x512xf32>
    %307 = vector.broadcast %306 : vector<1x512xf32> to vector<16x512xf32>
    %308 = arith.mulf %283, %307 : vector<16x512xf32>
    %309 = tpu.concatenate %289, %294, %299, %304, %308 in 0 : vector<16x512xf32>, vector<16x512xf32>, vector<16x512xf32>, vector<16x512xf32>, vector<16x512xf32> -> vector<80x512xf32>
    %310 = arith.truncf %309 : vector<80x512xf32> to vector<80x512xbf16>
    %c511_i32_96 = arith.constant 511 : i32
    %311 = tpu.dynamic_rotate %283 by %c511_i32_96 dim 1 : vector<16x512xf32>, i32 -> vector<16x512xf32>
    %312 = vector.extract_strided_slice %284 {offsets = [5, 0, 0], sizes = [1, 1, 512], strides = [1, 1, 1]} : vector<9x1x512xf32> to vector<1x1x512xf32>
    %313 = vector.shape_cast %312 : vector<1x1x512xf32> to vector<1x512xf32>
    %314 = vector.broadcast %313 : vector<1x512xf32> to vector<16x512xf32>
    %315 = arith.mulf %311, %314 : vector<16x512xf32>
    %c497_i32_97 = arith.constant 497 : i32
    %316 = tpu.dynamic_rotate %283 by %c497_i32_97 dim 1 : vector<16x512xf32>, i32 -> vector<16x512xf32>
    %317 = vector.extract_strided_slice %284 {offsets = [6, 0, 0], sizes = [1, 1, 512], strides = [1, 1, 1]} : vector<9x1x512xf32> to vector<1x1x512xf32>
    %318 = vector.shape_cast %317 : vector<1x1x512xf32> to vector<1x512xf32>
    %319 = vector.broadcast %318 : vector<1x512xf32> to vector<16x512xf32>
    %320 = arith.mulf %316, %319 : vector<16x512xf32>
    %c496_i32_98 = arith.constant 496 : i32
    %321 = tpu.dynamic_rotate %283 by %c496_i32_98 dim 1 : vector<16x512xf32>, i32 -> vector<16x512xf32>
    %322 = vector.extract_strided_slice %284 {offsets = [7, 0, 0], sizes = [1, 1, 512], strides = [1, 1, 1]} : vector<9x1x512xf32> to vector<1x1x512xf32>
    %323 = vector.shape_cast %322 : vector<1x1x512xf32> to vector<1x512xf32>
    %324 = vector.broadcast %323 : vector<1x512xf32> to vector<16x512xf32>
    %325 = arith.mulf %321, %324 : vector<16x512xf32>
    %c495_i32_99 = arith.constant 495 : i32
    %326 = tpu.dynamic_rotate %283 by %c495_i32_99 dim 1 : vector<16x512xf32>, i32 -> vector<16x512xf32>
    %327 = vector.extract_strided_slice %284 {offsets = [8, 0, 0], sizes = [1, 1, 512], strides = [1, 1, 1]} : vector<9x1x512xf32> to vector<1x1x512xf32>
    %328 = vector.shape_cast %327 : vector<1x1x512xf32> to vector<1x512xf32>
    %329 = vector.broadcast %328 : vector<1x512xf32> to vector<16x512xf32>
    %330 = arith.mulf %326, %329 : vector<16x512xf32>
    %331 = tpu.concatenate %315, %320, %325, %330 in 0 : vector<16x512xf32>, vector<16x512xf32>, vector<16x512xf32>, vector<16x512xf32> -> vector<64x512xf32>
    %332 = arith.truncf %331 : vector<64x512xf32> to vector<64x512xbf16>
    %c0_100 = arith.constant 0 : index
    %c0_101 = arith.constant 0 : index
    %333 = vector.load %arg14[%c0_100, %c0_101] : memref<16x80xbf16, #tpu.memory_space<vmem>>, vector<16x80xbf16>
    %cst_102 = arith.constant dense<0.000000e+00> : vector<16x512xf32>
    %334 = tpu.matmul %333, %310, %cst_102 {dimension_numbers = #tpu.dot_dimension_numbers<[1], [0], [0], [1], [0, 0, 1, 1], [], []>} : vector<16x80xbf16>, vector<80x512xbf16>, vector<16x512xf32> -> vector<16x512xf32>
    %c0_103 = arith.constant 0 : index
    %c0_104 = arith.constant 0 : index
    %335 = vector.load %arg15[%c0_103, %c0_104] : memref<16x64xbf16, #tpu.memory_space<vmem>>, vector<16x64xbf16>
    %cst_105 = arith.constant dense<0.000000e+00> : vector<16x512xf32>
    %336 = tpu.matmul %335, %332, %cst_105 {dimension_numbers = #tpu.dot_dimension_numbers<[1], [0], [0], [1], [0, 0, 1, 1], [], []>} : vector<16x64xbf16>, vector<64x512xbf16>, vector<16x512xf32> -> vector<16x512xf32>
    %337 = arith.addf %334, %336 : vector<16x512xf32>
    %c0_106 = arith.constant 0 : index
    %c0_107 = arith.constant 0 : index
    %338 = vector.load %arg16[%c0_106, %c0_107] : memref<16x1xf32, #tpu.memory_space<vmem>>, vector<16x1xf32>
    %c0_108 = arith.constant 0 : index
    %c0_109 = arith.constant 0 : index
    %339 = vector.load %arg17[%c0_108, %c0_109] : memref<16x1xf32, #tpu.memory_space<vmem>>, vector<16x1xf32>
    %cst_110 = arith.constant dense<0.000000e+00> : vector<16x1xf32>
    %340 = tpu.matmul %337, %0, %cst_110 {dimension_numbers = #tpu.dot_dimension_numbers<[1], [0], [0], [1], [0, 0, 1, 1], [], []>} : vector<16x512xf32>, vector<512x1xf32>, vector<16x1xf32> -> vector<16x1xf32>
    %cst_111 = arith.constant 0.001953125 : f32
    %341 = vector.broadcast %cst_111 : f32 to vector<16x1xf32>
    %342 = arith.mulf %340, %341 : vector<16x1xf32>
    %343 = vector.broadcast %342 : vector<16x1xf32> to vector<16x512xf32>
    %344 = arith.subf %337, %343 : vector<16x512xf32>
    %345 = arith.mulf %344, %344 : vector<16x512xf32>
    %cst_112 = arith.constant dense<0.000000e+00> : vector<16x1xf32>
    %346 = tpu.matmul %345, %0, %cst_112 {dimension_numbers = #tpu.dot_dimension_numbers<[1], [0], [0], [1], [0, 0, 1, 1], [], []>} : vector<16x512xf32>, vector<512x1xf32>, vector<16x1xf32> -> vector<16x1xf32>
    %cst_113 = arith.constant 0.001953125 : f32
    %347 = vector.broadcast %cst_113 : f32 to vector<16x1xf32>
    %348 = arith.mulf %346, %347 : vector<16x1xf32>
    %cst_114 = arith.constant 9.99999974E-6 : f32
    %349 = vector.broadcast %cst_114 : f32 to vector<16x1xf32>
    %350 = arith.addf %348, %349 : vector<16x1xf32>
    %351 = math.rsqrt %350 : vector<16x1xf32>
    %352 = arith.mulf %351, %338 : vector<16x1xf32>
    %353 = vector.broadcast %352 : vector<16x1xf32> to vector<16x512xf32>
    %354 = arith.mulf %344, %353 : vector<16x512xf32>
    %355 = vector.broadcast %339 : vector<16x1xf32> to vector<16x512xf32>
    %356 = arith.addf %354, %355 : vector<16x512xf32>
    %c0_115 = arith.constant 0 : index
    %c0_116 = arith.constant 0 : index
    %357 = vector.load %arg18[%c0_115, %c0_116] : memref<16x72xbf16, #tpu.memory_space<vmem>>, vector<16x72xbf16>
    %cst_117 = arith.constant dense<0.000000e+00> : vector<16x512xf32>
    %358 = tpu.matmul %357, %260, %cst_117 {dimension_numbers = #tpu.dot_dimension_numbers<[1], [0], [0], [1], [0, 0, 1, 1], [], []>} : vector<16x72xbf16>, vector<72x512xbf16>, vector<16x512xf32> -> vector<16x512xf32>
    %c0_118 = arith.constant 0 : index
    %c0_119 = arith.constant 0 : index
    %359 = vector.load %arg19[%c0_118, %c0_119] : memref<16x1xf32, #tpu.memory_space<vmem>>, vector<16x1xf32>
    %c0_120 = arith.constant 0 : index
    %c0_121 = arith.constant 0 : index
    %360 = vector.load %arg20[%c0_120, %c0_121] : memref<16x1xf32, #tpu.memory_space<vmem>>, vector<16x1xf32>
    %cst_122 = arith.constant dense<0.000000e+00> : vector<16x1xf32>
    %361 = tpu.matmul %358, %0, %cst_122 {dimension_numbers = #tpu.dot_dimension_numbers<[1], [0], [0], [1], [0, 0, 1, 1], [], []>} : vector<16x512xf32>, vector<512x1xf32>, vector<16x1xf32> -> vector<16x1xf32>
    %cst_123 = arith.constant 0.001953125 : f32
    %362 = vector.broadcast %cst_123 : f32 to vector<16x1xf32>
    %363 = arith.mulf %361, %362 : vector<16x1xf32>
    %364 = vector.broadcast %363 : vector<16x1xf32> to vector<16x512xf32>
    %365 = arith.subf %358, %364 : vector<16x512xf32>
    %366 = arith.mulf %365, %365 : vector<16x512xf32>
    %cst_124 = arith.constant dense<0.000000e+00> : vector<16x1xf32>
    %367 = tpu.matmul %366, %0, %cst_124 {dimension_numbers = #tpu.dot_dimension_numbers<[1], [0], [0], [1], [0, 0, 1, 1], [], []>} : vector<16x512xf32>, vector<512x1xf32>, vector<16x1xf32> -> vector<16x1xf32>
    %cst_125 = arith.constant 0.001953125 : f32
    %368 = vector.broadcast %cst_125 : f32 to vector<16x1xf32>
    %369 = arith.mulf %367, %368 : vector<16x1xf32>
    %cst_126 = arith.constant 9.99999974E-6 : f32
    %370 = vector.broadcast %cst_126 : f32 to vector<16x1xf32>
    %371 = arith.addf %369, %370 : vector<16x1xf32>
    %372 = math.rsqrt %371 : vector<16x1xf32>
    %373 = arith.mulf %372, %359 : vector<16x1xf32>
    %374 = vector.broadcast %373 : vector<16x1xf32> to vector<16x512xf32>
    %375 = arith.mulf %365, %374 : vector<16x512xf32>
    %376 = vector.broadcast %360 : vector<16x1xf32> to vector<16x512xf32>
    %377 = arith.addf %375, %376 : vector<16x512xf32>
    %378 = arith.addf %356, %377 : vector<16x512xf32>
    %cst_127 = arith.constant 0.000000e+00 : f32
    %379 = vector.broadcast %cst_127 : f32 to vector<16x512xf32>
    %380 = arith.maximumf %378, %379 : vector<16x512xf32>
    %381 = arith.truncf %380 : vector<16x512xf32> to vector<16x512xbf16>
    %c0_128 = arith.constant 0 : index
    %c0_129 = arith.constant 0 : index
    %382 = vector.load %arg21[%c0_128, %c0_129] : memref<16x512xbf16, #tpu.memory_space<vmem>>, vector<16x512xbf16>
    tpu.vector_store %arg21[%c0_128, %c0_129], %381 {strides = array<i32>} : memref<16x512xbf16, #tpu.memory_space<vmem>>, vector<16x512xbf16>,
    return
  }
}

module attributes {stable_mosaic.version = 11 : i64} {
  func.func @_head_kernel(%arg0: memref<16x128xbf16, #tpu.memory_space<vmem>>, %arg1: memref<128x2xbf16, #tpu.memory_space<vmem>>, %arg2: memref<6x16xbf16, #tpu.memory_space<vmem>>, %arg3: memref<6x1xf32, #tpu.memory_space<vmem>>, %arg4: memref<6x2xf32, #tpu.memory_space<vmem>>) attributes {dimension_semantics = [], scalar_prefetch = 0 : i64, scratch_operands = 0 : i64, tpu.core_type = #tpu.core_type<tc>} {
    %c0 = arith.constant 0 : index
    %c0_0 = arith.constant 0 : index
    %0 = vector.load %arg0[%c0, %c0_0] : memref<16x128xbf16, #tpu.memory_space<vmem>>, vector<16x128xbf16>
    %c0_1 = arith.constant 0 : index
    %c0_2 = arith.constant 0 : index
    %1 = vector.load %arg1[%c0_1, %c0_2] : memref<128x2xbf16, #tpu.memory_space<vmem>>, vector<128x2xbf16>
    %cst = arith.constant dense<0.000000e+00> : vector<16x2xf32>
    %2 = tpu.matmul %0, %1, %cst {dimension_numbers = #tpu.dot_dimension_numbers<[1], [0], [0], [1], [0, 0, 1, 1], [], []>} : vector<16x128xbf16>, vector<128x2xbf16>, vector<16x2xf32> -> vector<16x2xf32>
    %c0_3 = arith.constant 0 : index
    %c0_4 = arith.constant 0 : index
    %3 = vector.load %arg2[%c0_3, %c0_4] : memref<6x16xbf16, #tpu.memory_space<vmem>>, vector<6x16xbf16>
    %4 = arith.truncf %2 : vector<16x2xf32> to vector<16x2xbf16>
    %cst_5 = arith.constant dense<0.000000e+00> : vector<6x2xf32>
    %5 = tpu.matmul %3, %4, %cst_5 {dimension_numbers = #tpu.dot_dimension_numbers<[1], [0], [0], [1], [0, 0, 1, 1], [], []>} : vector<6x16xbf16>, vector<16x2xbf16>, vector<6x2xf32> -> vector<6x2xf32>
    %c0_6 = arith.constant 0 : index
    %c0_7 = arith.constant 0 : index
    %6 = vector.load %arg3[%c0_6, %c0_7] : memref<6x1xf32, #tpu.memory_space<vmem>>, vector<6x1xf32>
    %7 = vector.broadcast %6 : vector<6x1xf32> to vector<6x2xf32>
    %8 = arith.addf %5, %7 : vector<6x2xf32>
    %c0_8 = arith.constant 0 : index
    %c0_9 = arith.constant 0 : index
    %9 = vector.load %arg4[%c0_8, %c0_9] : memref<6x2xf32, #tpu.memory_space<vmem>>, vector<6x2xf32>
    tpu.vector_store %arg4[%c0_8, %c0_9], %8 {strides = array<i32>} : memref<6x2xf32, #tpu.memory_space<vmem>>, vector<6x2xf32>,
    return
  }
}

module attributes {stable_mosaic.version = 11 : i64} {
  func.func @_segment_kernel(%arg0: memref<4x16x128xbf16, #tpu.memory_space<vmem>>, %arg1: memref<9x1x128xf32, #tpu.memory_space<vmem>>, %arg2: memref<9x1x128xf32, #tpu.memory_space<vmem>>, %arg3: memref<16x80xbf16, #tpu.memory_space<vmem>>, %arg4: memref<16x64xbf16, #tpu.memory_space<vmem>>, %arg5: memref<16x1xf32, #tpu.memory_space<vmem>>, %arg6: memref<16x1xf32, #tpu.memory_space<vmem>>, %arg7: memref<16x80xbf16, #tpu.memory_space<vmem>>, %arg8: memref<16x64xbf16, #tpu.memory_space<vmem>>, %arg9: memref<16x1xf32, #tpu.memory_space<vmem>>, %arg10: memref<16x1xf32, #tpu.memory_space<vmem>>, %arg11: memref<16x80xbf16, #tpu.memory_space<vmem>>, %arg12: memref<16x64xbf16, #tpu.memory_space<vmem>>, %arg13: memref<16x1xf32, #tpu.memory_space<vmem>>, %arg14: memref<16x1xf32, #tpu.memory_space<vmem>>, %arg15: memref<16x128xbf16, #tpu.memory_space<vmem>>) attributes {dimension_semantics = [], scalar_prefetch = 0 : i64, scratch_operands = 0 : i64, tpu.core_type = #tpu.core_type<tc>} {
    %cst = arith.constant 1.000000e+00 : f32
    %0 = vector.broadcast %cst : f32 to vector<128x1xf32>
    %c0 = arith.constant 0 : index
    %c0_0 = arith.constant 0 : index
    %c0_1 = arith.constant 0 : index
    %1 = vector.load %arg0[%c0, %c0_0, %c0_1] : memref<4x16x128xbf16, #tpu.memory_space<vmem>>, vector<4x16x128xbf16>
    %2 = arith.extf %1 : vector<4x16x128xbf16> to vector<4x16x128xf32>
    %c0_2 = arith.constant 0 : index
    %c0_3 = arith.constant 0 : index
    %c0_4 = arith.constant 0 : index
    %3 = vector.load %arg2[%c0_2, %c0_3, %c0_4] : memref<9x1x128xf32, #tpu.memory_space<vmem>>, vector<9x1x128xf32>
    %4 = vector.extract_strided_slice %2 {offsets = [3, 0, 0], sizes = [1, 16, 128], strides = [1, 1, 1]} : vector<4x16x128xf32> to vector<1x16x128xf32>
    %5 = vector.shape_cast %4 : vector<1x16x128xf32> to vector<16x128xf32>
    %c9_i32 = arith.constant 9 : i32
    %6 = tpu.dynamic_rotate %5 by %c9_i32 dim 1 : vector<16x128xf32>, i32 -> vector<16x128xf32>
    %7 = vector.extract_strided_slice %3 {offsets = [0, 0, 0], sizes = [1, 1, 128], strides = [1, 1, 1]} : vector<9x1x128xf32> to vector<1x1x128xf32>
    %8 = vector.shape_cast %7 : vector<1x1x128xf32> to vector<1x128xf32>
    %9 = vector.broadcast %8 : vector<1x128xf32> to vector<16x128xf32>
    %10 = arith.mulf %6, %9 : vector<16x128xf32>
    %11 = vector.extract_strided_slice %2 {offsets = [2, 0, 0], sizes = [1, 16, 128], strides = [1, 1, 1]} : vector<4x16x128xf32> to vector<1x16x128xf32>
    %12 = vector.shape_cast %11 : vector<1x16x128xf32> to vector<16x128xf32>
    %c8_i32 = arith.constant 8 : i32
    %13 = tpu.dynamic_rotate %12 by %c8_i32 dim 1 : vector<16x128xf32>, i32 -> vector<16x128xf32>
    %14 = vector.extract_strided_slice %3 {offsets = [1, 0, 0], sizes = [1, 1, 128], strides = [1, 1, 1]} : vector<9x1x128xf32> to vector<1x1x128xf32>
    %15 = vector.shape_cast %14 : vector<1x1x128xf32> to vector<1x128xf32>
    %16 = vector.broadcast %15 : vector<1x128xf32> to vector<16x128xf32>
    %17 = arith.mulf %13, %16 : vector<16x128xf32>
    %18 = vector.extract_strided_slice %2 {offsets = [3, 0, 0], sizes = [1, 16, 128], strides = [1, 1, 1]} : vector<4x16x128xf32> to vector<1x16x128xf32>
    %19 = vector.shape_cast %18 : vector<1x16x128xf32> to vector<16x128xf32>
    %c8_i32_5 = arith.constant 8 : i32
    %20 = tpu.dynamic_rotate %19 by %c8_i32_5 dim 1 : vector<16x128xf32>, i32 -> vector<16x128xf32>
    %21 = vector.extract_strided_slice %3 {offsets = [2, 0, 0], sizes = [1, 1, 128], strides = [1, 1, 1]} : vector<9x1x128xf32> to vector<1x1x128xf32>
    %22 = vector.shape_cast %21 : vector<1x1x128xf32> to vector<1x128xf32>
    %23 = vector.broadcast %22 : vector<1x128xf32> to vector<16x128xf32>
    %24 = arith.mulf %20, %23 : vector<16x128xf32>
    %25 = vector.extract_strided_slice %2 {offsets = [1, 0, 0], sizes = [1, 16, 128], strides = [1, 1, 1]} : vector<4x16x128xf32> to vector<1x16x128xf32>
    %26 = vector.shape_cast %25 : vector<1x16x128xf32> to vector<16x128xf32>
    %c1_i32 = arith.constant 1 : i32
    %27 = tpu.dynamic_rotate %26 by %c1_i32 dim 1 : vector<16x128xf32>, i32 -> vector<16x128xf32>
    %28 = vector.extract_strided_slice %3 {offsets = [3, 0, 0], sizes = [1, 1, 128], strides = [1, 1, 1]} : vector<9x1x128xf32> to vector<1x1x128xf32>
    %29 = vector.shape_cast %28 : vector<1x1x128xf32> to vector<1x128xf32>
    %30 = vector.broadcast %29 : vector<1x128xf32> to vector<16x128xf32>
    %31 = arith.mulf %27, %30 : vector<16x128xf32>
    %32 = vector.extract_strided_slice %2 {offsets = [0, 0, 0], sizes = [1, 16, 128], strides = [1, 1, 1]} : vector<4x16x128xf32> to vector<1x16x128xf32>
    %33 = vector.shape_cast %32 : vector<1x16x128xf32> to vector<16x128xf32>
    %34 = vector.extract_strided_slice %3 {offsets = [4, 0, 0], sizes = [1, 1, 128], strides = [1, 1, 1]} : vector<9x1x128xf32> to vector<1x1x128xf32>
    %35 = vector.shape_cast %34 : vector<1x1x128xf32> to vector<1x128xf32>
    %36 = vector.broadcast %35 : vector<1x128xf32> to vector<16x128xf32>
    %37 = arith.mulf %33, %36 : vector<16x128xf32>
    %38 = tpu.concatenate %10, %17, %24, %31, %37 in 0 : vector<16x128xf32>, vector<16x128xf32>, vector<16x128xf32>, vector<16x128xf32>, vector<16x128xf32> -> vector<80x128xf32>
    %39 = arith.truncf %38 : vector<80x128xf32> to vector<80x128xbf16>
    %40 = vector.extract_strided_slice %2 {offsets = [1, 0, 0], sizes = [1, 16, 128], strides = [1, 1, 1]} : vector<4x16x128xf32> to vector<1x16x128xf32>
    %41 = vector.shape_cast %40 : vector<1x16x128xf32> to vector<16x128xf32>
    %42 = vector.extract_strided_slice %3 {offsets = [5, 0, 0], sizes = [1, 1, 128], strides = [1, 1, 1]} : vector<9x1x128xf32> to vector<1x1x128xf32>
    %43 = vector.shape_cast %42 : vector<1x1x128xf32> to vector<1x128xf32>
    %44 = vector.broadcast %43 : vector<1x128xf32> to vector<16x128xf32>
    %45 = arith.mulf %41, %44 : vector<16x128xf32>
    %46 = vector.extract_strided_slice %2 {offsets = [3, 0, 0], sizes = [1, 16, 128], strides = [1, 1, 1]} : vector<4x16x128xf32> to vector<1x16x128xf32>
    %47 = vector.shape_cast %46 : vector<1x16x128xf32> to vector<16x128xf32>
    %c1_i32_6 = arith.constant 1 : i32
    %48 = tpu.dynamic_rotate %47 by %c1_i32_6 dim 1 : vector<16x128xf32>, i32 -> vector<16x128xf32>
    %49 = vector.extract_strided_slice %3 {offsets = [6, 0, 0], sizes = [1, 1, 128], strides = [1, 1, 1]} : vector<9x1x128xf32> to vector<1x1x128xf32>
    %50 = vector.shape_cast %49 : vector<1x1x128xf32> to vector<1x128xf32>
    %51 = vector.broadcast %50 : vector<1x128xf32> to vector<16x128xf32>
    %52 = arith.mulf %48, %51 : vector<16x128xf32>
    %53 = vector.extract_strided_slice %2 {offsets = [2, 0, 0], sizes = [1, 16, 128], strides = [1, 1, 1]} : vector<4x16x128xf32> to vector<1x16x128xf32>
    %54 = vector.shape_cast %53 : vector<1x16x128xf32> to vector<16x128xf32>
    %55 = vector.extract_strided_slice %3 {offsets = [7, 0, 0], sizes = [1, 1, 128], strides = [1, 1, 1]} : vector<9x1x128xf32> to vector<1x1x128xf32>
    %56 = vector.shape_cast %55 : vector<1x1x128xf32> to vector<1x128xf32>
    %57 = vector.broadcast %56 : vector<1x128xf32> to vector<16x128xf32>
    %58 = arith.mulf %54, %57 : vector<16x128xf32>
    %59 = vector.extract_strided_slice %2 {offsets = [3, 0, 0], sizes = [1, 16, 128], strides = [1, 1, 1]} : vector<4x16x128xf32> to vector<1x16x128xf32>
    %60 = vector.shape_cast %59 : vector<1x16x128xf32> to vector<16x128xf32>
    %61 = vector.extract_strided_slice %3 {offsets = [8, 0, 0], sizes = [1, 1, 128], strides = [1, 1, 1]} : vector<9x1x128xf32> to vector<1x1x128xf32>
    %62 = vector.shape_cast %61 : vector<1x1x128xf32> to vector<1x128xf32>
    %63 = vector.broadcast %62 : vector<1x128xf32> to vector<16x128xf32>
    %64 = arith.mulf %60, %63 : vector<16x128xf32>
    %65 = tpu.concatenate %45, %52, %58, %64 in 0 : vector<16x128xf32>, vector<16x128xf32>, vector<16x128xf32>, vector<16x128xf32> -> vector<64x128xf32>
    %66 = arith.truncf %65 : vector<64x128xf32> to vector<64x128xbf16>
    %c0_7 = arith.constant 0 : index
    %c0_8 = arith.constant 0 : index
    %67 = vector.load %arg3[%c0_7, %c0_8] : memref<16x80xbf16, #tpu.memory_space<vmem>>, vector<16x80xbf16>
    %cst_9 = arith.constant dense<0.000000e+00> : vector<16x128xf32>
    %68 = tpu.matmul %67, %39, %cst_9 {dimension_numbers = #tpu.dot_dimension_numbers<[1], [0], [0], [1], [0, 0, 1, 1], [], []>} : vector<16x80xbf16>, vector<80x128xbf16>, vector<16x128xf32> -> vector<16x128xf32>
    %c0_10 = arith.constant 0 : index
    %c0_11 = arith.constant 0 : index
    %69 = vector.load %arg4[%c0_10, %c0_11] : memref<16x64xbf16, #tpu.memory_space<vmem>>, vector<16x64xbf16>
    %cst_12 = arith.constant dense<0.000000e+00> : vector<16x128xf32>
    %70 = tpu.matmul %69, %66, %cst_12 {dimension_numbers = #tpu.dot_dimension_numbers<[1], [0], [0], [1], [0, 0, 1, 1], [], []>} : vector<16x64xbf16>, vector<64x128xbf16>, vector<16x128xf32> -> vector<16x128xf32>
    %71 = arith.addf %68, %70 : vector<16x128xf32>
    %c0_13 = arith.constant 0 : index
    %c0_14 = arith.constant 0 : index
    %72 = vector.load %arg5[%c0_13, %c0_14] : memref<16x1xf32, #tpu.memory_space<vmem>>, vector<16x1xf32>
    %c0_15 = arith.constant 0 : index
    %c0_16 = arith.constant 0 : index
    %73 = vector.load %arg6[%c0_15, %c0_16] : memref<16x1xf32, #tpu.memory_space<vmem>>, vector<16x1xf32>
    %cst_17 = arith.constant dense<0.000000e+00> : vector<16x1xf32>
    %74 = tpu.matmul %71, %0, %cst_17 {dimension_numbers = #tpu.dot_dimension_numbers<[1], [0], [0], [1], [0, 0, 1, 1], [], []>} : vector<16x128xf32>, vector<128x1xf32>, vector<16x1xf32> -> vector<16x1xf32>
    %cst_18 = arith.constant 7.812500e-03 : f32
    %75 = vector.broadcast %cst_18 : f32 to vector<16x1xf32>
    %76 = arith.mulf %74, %75 : vector<16x1xf32>
    %77 = vector.broadcast %76 : vector<16x1xf32> to vector<16x128xf32>
    %78 = arith.subf %71, %77 : vector<16x128xf32>
    %79 = arith.mulf %78, %78 : vector<16x128xf32>
    %cst_19 = arith.constant dense<0.000000e+00> : vector<16x1xf32>
    %80 = tpu.matmul %79, %0, %cst_19 {dimension_numbers = #tpu.dot_dimension_numbers<[1], [0], [0], [1], [0, 0, 1, 1], [], []>} : vector<16x128xf32>, vector<128x1xf32>, vector<16x1xf32> -> vector<16x1xf32>
    %cst_20 = arith.constant 7.812500e-03 : f32
    %81 = vector.broadcast %cst_20 : f32 to vector<16x1xf32>
    %82 = arith.mulf %80, %81 : vector<16x1xf32>
    %cst_21 = arith.constant 9.99999974E-6 : f32
    %83 = vector.broadcast %cst_21 : f32 to vector<16x1xf32>
    %84 = arith.addf %82, %83 : vector<16x1xf32>
    %85 = math.rsqrt %84 : vector<16x1xf32>
    %86 = arith.mulf %85, %72 : vector<16x1xf32>
    %87 = vector.broadcast %86 : vector<16x1xf32> to vector<16x128xf32>
    %88 = arith.mulf %78, %87 : vector<16x128xf32>
    %89 = vector.broadcast %73 : vector<16x1xf32> to vector<16x128xf32>
    %90 = arith.addf %88, %89 : vector<16x128xf32>
    %cst_22 = arith.constant 0.000000e+00 : f32
    %91 = vector.broadcast %cst_22 : f32 to vector<16x128xf32>
    %92 = arith.maximumf %90, %91 : vector<16x128xf32>
    %c0_23 = arith.constant 0 : index
    %c0_24 = arith.constant 0 : index
    %c0_25 = arith.constant 0 : index
    %93 = vector.load %arg1[%c0_23, %c0_24, %c0_25] : memref<9x1x128xf32, #tpu.memory_space<vmem>>, vector<9x1x128xf32>
    %c9_i32_26 = arith.constant 9 : i32
    %94 = tpu.dynamic_rotate %92 by %c9_i32_26 dim 1 : vector<16x128xf32>, i32 -> vector<16x128xf32>
    %95 = vector.extract_strided_slice %93 {offsets = [0, 0, 0], sizes = [1, 1, 128], strides = [1, 1, 1]} : vector<9x1x128xf32> to vector<1x1x128xf32>
    %96 = vector.shape_cast %95 : vector<1x1x128xf32> to vector<1x128xf32>
    %97 = vector.broadcast %96 : vector<1x128xf32> to vector<16x128xf32>
    %98 = arith.mulf %94, %97 : vector<16x128xf32>
    %c8_i32_27 = arith.constant 8 : i32
    %99 = tpu.dynamic_rotate %92 by %c8_i32_27 dim 1 : vector<16x128xf32>, i32 -> vector<16x128xf32>
    %100 = vector.extract_strided_slice %93 {offsets = [1, 0, 0], sizes = [1, 1, 128], strides = [1, 1, 1]} : vector<9x1x128xf32> to vector<1x1x128xf32>
    %101 = vector.shape_cast %100 : vector<1x1x128xf32> to vector<1x128xf32>
    %102 = vector.broadcast %101 : vector<1x128xf32> to vector<16x128xf32>
    %103 = arith.mulf %99, %102 : vector<16x128xf32>
    %c7_i32 = arith.constant 7 : i32
    %104 = tpu.dynamic_rotate %92 by %c7_i32 dim 1 : vector<16x128xf32>, i32 -> vector<16x128xf32>
    %105 = vector.extract_strided_slice %93 {offsets = [2, 0, 0], sizes = [1, 1, 128], strides = [1, 1, 1]} : vector<9x1x128xf32> to vector<1x1x128xf32>
    %106 = vector.shape_cast %105 : vector<1x1x128xf32> to vector<1x128xf32>
    %107 = vector.broadcast %106 : vector<1x128xf32> to vector<16x128xf32>
    %108 = arith.mulf %104, %107 : vector<16x128xf32>
    %c1_i32_28 = arith.constant 1 : i32
    %109 = tpu.dynamic_rotate %92 by %c1_i32_28 dim 1 : vector<16x128xf32>, i32 -> vector<16x128xf32>
    %110 = vector.extract_strided_slice %93 {offsets = [3, 0, 0], sizes = [1, 1, 128], strides = [1, 1, 1]} : vector<9x1x128xf32> to vector<1x1x128xf32>
    %111 = vector.shape_cast %110 : vector<1x1x128xf32> to vector<1x128xf32>
    %112 = vector.broadcast %111 : vector<1x128xf32> to vector<16x128xf32>
    %113 = arith.mulf %109, %112 : vector<16x128xf32>
    %114 = vector.extract_strided_slice %93 {offsets = [4, 0, 0], sizes = [1, 1, 128], strides = [1, 1, 1]} : vector<9x1x128xf32> to vector<1x1x128xf32>
    %115 = vector.shape_cast %114 : vector<1x1x128xf32> to vector<1x128xf32>
    %116 = vector.broadcast %115 : vector<1x128xf32> to vector<16x128xf32>
    %117 = arith.mulf %92, %116 : vector<16x128xf32>
    %118 = tpu.concatenate %98, %103, %108, %113, %117 in 0 : vector<16x128xf32>, vector<16x128xf32>, vector<16x128xf32>, vector<16x128xf32>, vector<16x128xf32> -> vector<80x128xf32>
    %119 = arith.truncf %118 : vector<80x128xf32> to vector<80x128xbf16>
    %c127_i32 = arith.constant 127 : i32
    %120 = tpu.dynamic_rotate %92 by %c127_i32 dim 1 : vector<16x128xf32>, i32 -> vector<16x128xf32>
    %121 = vector.extract_strided_slice %93 {offsets = [5, 0, 0], sizes = [1, 1, 128], strides = [1, 1, 1]} : vector<9x1x128xf32> to vector<1x1x128xf32>
    %122 = vector.shape_cast %121 : vector<1x1x128xf32> to vector<1x128xf32>
    %123 = vector.broadcast %122 : vector<1x128xf32> to vector<16x128xf32>
    %124 = arith.mulf %120, %123 : vector<16x128xf32>
    %c121_i32 = arith.constant 121 : i32
    %125 = tpu.dynamic_rotate %92 by %c121_i32 dim 1 : vector<16x128xf32>, i32 -> vector<16x128xf32>
    %126 = vector.extract_strided_slice %93 {offsets = [6, 0, 0], sizes = [1, 1, 128], strides = [1, 1, 1]} : vector<9x1x128xf32> to vector<1x1x128xf32>
    %127 = vector.shape_cast %126 : vector<1x1x128xf32> to vector<1x128xf32>
    %128 = vector.broadcast %127 : vector<1x128xf32> to vector<16x128xf32>
    %129 = arith.mulf %125, %128 : vector<16x128xf32>
    %c120_i32 = arith.constant 120 : i32
    %130 = tpu.dynamic_rotate %92 by %c120_i32 dim 1 : vector<16x128xf32>, i32 -> vector<16x128xf32>
    %131 = vector.extract_strided_slice %93 {offsets = [7, 0, 0], sizes = [1, 1, 128], strides = [1, 1, 1]} : vector<9x1x128xf32> to vector<1x1x128xf32>
    %132 = vector.shape_cast %131 : vector<1x1x128xf32> to vector<1x128xf32>
    %133 = vector.broadcast %132 : vector<1x128xf32> to vector<16x128xf32>
    %134 = arith.mulf %130, %133 : vector<16x128xf32>
    %c119_i32 = arith.constant 119 : i32
    %135 = tpu.dynamic_rotate %92 by %c119_i32 dim 1 : vector<16x128xf32>, i32 -> vector<16x128xf32>
    %136 = vector.extract_strided_slice %93 {offsets = [8, 0, 0], sizes = [1, 1, 128], strides = [1, 1, 1]} : vector<9x1x128xf32> to vector<1x1x128xf32>
    %137 = vector.shape_cast %136 : vector<1x1x128xf32> to vector<1x128xf32>
    %138 = vector.broadcast %137 : vector<1x128xf32> to vector<16x128xf32>
    %139 = arith.mulf %135, %138 : vector<16x128xf32>
    %140 = tpu.concatenate %124, %129, %134, %139 in 0 : vector<16x128xf32>, vector<16x128xf32>, vector<16x128xf32>, vector<16x128xf32> -> vector<64x128xf32>
    %141 = arith.truncf %140 : vector<64x128xf32> to vector<64x128xbf16>
    %c0_29 = arith.constant 0 : index
    %c0_30 = arith.constant 0 : index
    %142 = vector.load %arg7[%c0_29, %c0_30] : memref<16x80xbf16, #tpu.memory_space<vmem>>, vector<16x80xbf16>
    %cst_31 = arith.constant dense<0.000000e+00> : vector<16x128xf32>
    %143 = tpu.matmul %142, %119, %cst_31 {dimension_numbers = #tpu.dot_dimension_numbers<[1], [0], [0], [1], [0, 0, 1, 1], [], []>} : vector<16x80xbf16>, vector<80x128xbf16>, vector<16x128xf32> -> vector<16x128xf32>
    %c0_32 = arith.constant 0 : index
    %c0_33 = arith.constant 0 : index
    %144 = vector.load %arg8[%c0_32, %c0_33] : memref<16x64xbf16, #tpu.memory_space<vmem>>, vector<16x64xbf16>
    %cst_34 = arith.constant dense<0.000000e+00> : vector<16x128xf32>
    %145 = tpu.matmul %144, %141, %cst_34 {dimension_numbers = #tpu.dot_dimension_numbers<[1], [0], [0], [1], [0, 0, 1, 1], [], []>} : vector<16x64xbf16>, vector<64x128xbf16>, vector<16x128xf32> -> vector<16x128xf32>
    %146 = arith.addf %143, %145 : vector<16x128xf32>
    %c0_35 = arith.constant 0 : index
    %c0_36 = arith.constant 0 : index
    %147 = vector.load %arg9[%c0_35, %c0_36] : memref<16x1xf32, #tpu.memory_space<vmem>>, vector<16x1xf32>
    %c0_37 = arith.constant 0 : index
    %c0_38 = arith.constant 0 : index
    %148 = vector.load %arg10[%c0_37, %c0_38] : memref<16x1xf32, #tpu.memory_space<vmem>>, vector<16x1xf32>
    %cst_39 = arith.constant dense<0.000000e+00> : vector<16x1xf32>
    %149 = tpu.matmul %146, %0, %cst_39 {dimension_numbers = #tpu.dot_dimension_numbers<[1], [0], [0], [1], [0, 0, 1, 1], [], []>} : vector<16x128xf32>, vector<128x1xf32>, vector<16x1xf32> -> vector<16x1xf32>
    %cst_40 = arith.constant 7.812500e-03 : f32
    %150 = vector.broadcast %cst_40 : f32 to vector<16x1xf32>
    %151 = arith.mulf %149, %150 : vector<16x1xf32>
    %152 = vector.broadcast %151 : vector<16x1xf32> to vector<16x128xf32>
    %153 = arith.subf %146, %152 : vector<16x128xf32>
    %154 = arith.mulf %153, %153 : vector<16x128xf32>
    %cst_41 = arith.constant dense<0.000000e+00> : vector<16x1xf32>
    %155 = tpu.matmul %154, %0, %cst_41 {dimension_numbers = #tpu.dot_dimension_numbers<[1], [0], [0], [1], [0, 0, 1, 1], [], []>} : vector<16x128xf32>, vector<128x1xf32>, vector<16x1xf32> -> vector<16x1xf32>
    %cst_42 = arith.constant 7.812500e-03 : f32
    %156 = vector.broadcast %cst_42 : f32 to vector<16x1xf32>
    %157 = arith.mulf %155, %156 : vector<16x1xf32>
    %cst_43 = arith.constant 9.99999974E-6 : f32
    %158 = vector.broadcast %cst_43 : f32 to vector<16x1xf32>
    %159 = arith.addf %157, %158 : vector<16x1xf32>
    %160 = math.rsqrt %159 : vector<16x1xf32>
    %161 = arith.mulf %160, %147 : vector<16x1xf32>
    %162 = vector.broadcast %161 : vector<16x1xf32> to vector<16x128xf32>
    %163 = arith.mulf %153, %162 : vector<16x128xf32>
    %164 = vector.broadcast %148 : vector<16x1xf32> to vector<16x128xf32>
    %165 = arith.addf %163, %164 : vector<16x128xf32>
    %c0_44 = arith.constant 0 : index
    %c0_45 = arith.constant 0 : index
    %166 = vector.load %arg11[%c0_44, %c0_45] : memref<16x80xbf16, #tpu.memory_space<vmem>>, vector<16x80xbf16>
    %cst_46 = arith.constant dense<0.000000e+00> : vector<16x128xf32>
    %167 = tpu.matmul %166, %39, %cst_46 {dimension_numbers = #tpu.dot_dimension_numbers<[1], [0], [0], [1], [0, 0, 1, 1], [], []>} : vector<16x80xbf16>, vector<80x128xbf16>, vector<16x128xf32> -> vector<16x128xf32>
    %c0_47 = arith.constant 0 : index
    %c0_48 = arith.constant 0 : index
    %168 = vector.load %arg12[%c0_47, %c0_48] : memref<16x64xbf16, #tpu.memory_space<vmem>>, vector<16x64xbf16>
    %cst_49 = arith.constant dense<0.000000e+00> : vector<16x128xf32>
    %169 = tpu.matmul %168, %66, %cst_49 {dimension_numbers = #tpu.dot_dimension_numbers<[1], [0], [0], [1], [0, 0, 1, 1], [], []>} : vector<16x64xbf16>, vector<64x128xbf16>, vector<16x128xf32> -> vector<16x128xf32>
    %170 = arith.addf %167, %169 : vector<16x128xf32>
    %c0_50 = arith.constant 0 : index
    %c0_51 = arith.constant 0 : index
    %171 = vector.load %arg13[%c0_50, %c0_51] : memref<16x1xf32, #tpu.memory_space<vmem>>, vector<16x1xf32>
    %c0_52 = arith.constant 0 : index
    %c0_53 = arith.constant 0 : index
    %172 = vector.load %arg14[%c0_52, %c0_53] : memref<16x1xf32, #tpu.memory_space<vmem>>, vector<16x1xf32>
    %cst_54 = arith.constant dense<0.000000e+00> : vector<16x1xf32>
    %173 = tpu.matmul %170, %0, %cst_54 {dimension_numbers = #tpu.dot_dimension_numbers<[1], [0], [0], [1], [0, 0, 1, 1], [], []>} : vector<16x128xf32>, vector<128x1xf32>, vector<16x1xf32> -> vector<16x1xf32>
    %cst_55 = arith.constant 7.812500e-03 : f32
    %174 = vector.broadcast %cst_55 : f32 to vector<16x1xf32>
    %175 = arith.mulf %173, %174 : vector<16x1xf32>
    %176 = vector.broadcast %175 : vector<16x1xf32> to vector<16x128xf32>
    %177 = arith.subf %170, %176 : vector<16x128xf32>
    %178 = arith.mulf %177, %177 : vector<16x128xf32>
    %cst_56 = arith.constant dense<0.000000e+00> : vector<16x1xf32>
    %179 = tpu.matmul %178, %0, %cst_56 {dimension_numbers = #tpu.dot_dimension_numbers<[1], [0], [0], [1], [0, 0, 1, 1], [], []>} : vector<16x128xf32>, vector<128x1xf32>, vector<16x1xf32> -> vector<16x1xf32>
    %cst_57 = arith.constant 7.812500e-03 : f32
    %180 = vector.broadcast %cst_57 : f32 to vector<16x1xf32>
    %181 = arith.mulf %179, %180 : vector<16x1xf32>
    %cst_58 = arith.constant 9.99999974E-6 : f32
    %182 = vector.broadcast %cst_58 : f32 to vector<16x1xf32>
    %183 = arith.addf %181, %182 : vector<16x1xf32>
    %184 = math.rsqrt %183 : vector<16x1xf32>
    %185 = arith.mulf %184, %171 : vector<16x1xf32>
    %186 = vector.broadcast %185 : vector<16x1xf32> to vector<16x128xf32>
    %187 = arith.mulf %177, %186 : vector<16x128xf32>
    %188 = vector.broadcast %172 : vector<16x1xf32> to vector<16x128xf32>
    %189 = arith.addf %187, %188 : vector<16x128xf32>
    %190 = arith.addf %165, %189 : vector<16x128xf32>
    %cst_59 = arith.constant 0.000000e+00 : f32
    %191 = vector.broadcast %cst_59 : f32 to vector<16x128xf32>
    %192 = arith.maximumf %190, %191 : vector<16x128xf32>
    %193 = arith.truncf %192 : vector<16x128xf32> to vector<16x128xbf16>
    %c0_60 = arith.constant 0 : index
    %c0_61 = arith.constant 0 : index
    %194 = vector.load %arg15[%c0_60, %c0_61] : memref<16x128xbf16, #tpu.memory_space<vmem>>, vector<16x128xbf16>
    tpu.vector_store %arg15[%c0_60, %c0_61], %193 {strides = array<i32>} : memref<16x128xbf16, #tpu.memory_space<vmem>>, vector<16x128xbf16>,
    return
  }
}

</mosaic_0001>

<llo_original>
// kernel: _lambda_.5
$region0: #{_lambda_.5}
  #allocation0 [shape = 'u32[]', space=smem, size = 0x4, offset = 0x4, fixed_abs, tag = 'smem constant byte address 0x4 - core index']
  #allocation1 [shape = 'u32[144,128]{1,0:T(1,128)}', space=vmem, size = 0x12000, scoped, tag = 'internal scratch']
  %s0 = inlined_call_operand.vmem [shape: bf16[16,128], index: 0, kind: input, shape index: {}]
  %s1 = inlined_call_operand.vmem [shape: bf16[128,2], index: 1, kind: input, shape index: {}]
  %s2 = inlined_call_operand.vmem [shape: bf16[6,16], index: 2, kind: input, shape index: {}]
  %s3 = inlined_call_operand.vmem [shape: f32[6,1], index: 3, kind: input, shape index: {}]
  %s4 = inlined_call_operand.vmem [shape: f32[6,2], index: 4, kind: output, shape index: {}]
  %s5 = sld [smem:[#allocation0]]
  $region26: #{_lambda_.5} parent=0
    _
  %s7 = ssub.s32 1, %s5
  %s8 = scalar_select 0, %s7, %s5
  // Predicated region
  $region2: #{_lambda_.5} parent=0 // pred_check
    _
  $region3: #{_lambda_.5} parent=0 // pred_check_branch
    %10 = sbr.rel (0) target = $region5
  $region4: #{_lambda_.5} parent=0 // pred_region
    _
  $region5: #{_lambda_.5} parent=0 // pred_fallthru
    _
  // Predicated region
  $region6: #{_lambda_.5} parent=0 // pred_check
    _
  $region7: #{_lambda_.5} parent=0 // pred_check_branch
    %12 = sbr.rel (0) target = $region9
  $region8: #{_lambda_.5} parent=0 // pred_region
    _
  $region9: #{_lambda_.5} parent=0 // pred_fallthru
    _
  // Predicated region
  $region10: #{_lambda_.5} parent=0 // pred_check
    _
  $region11: #{_lambda_.5} parent=0 // pred_check_branch
    %14 = sbr.rel (0) target = $region13
  $region12: #{_lambda_.5} parent=0 // pred_region
    _
  $region13: #{_lambda_.5} parent=0 // pred_fallthru
    _
  // Predicated region
  $region14: #{_lambda_.5} parent=0 // pred_check
    _
  $region15: #{_lambda_.5} parent=0 // pred_check_branch
    %16 = sbr.rel (0) target = $region17
  $region16: #{_lambda_.5} parent=0 // pred_region
    _
  $region17: #{_lambda_.5} parent=0 // pred_fallthru
    _
  %v18 = vld [vmem:[%s0] sm:$0xf]
  %v19 = vld [vmem:[%s0 + $0x4] sm:$0xf]
  %v20 = vld [vmem:[%s1] sm:$0xf]
  %v21 = vld [vmem:[%s1 + $0x4] sm:$0xf]
  %v22 = vld [vmem:[%s1 + $0x8] sm:$0xf]
  %v23 = vld [vmem:[%s1 + $0xc] sm:$0xf]
  %v24 = vld [vmem:[%s1 + $0x10] sm:$0xf]
  %v25 = vld [vmem:[%s1 + $0x14] sm:$0xf]
  %v26 = vld [vmem:[%s1 + $0x18] sm:$0xf]
  %v27 = vld [vmem:[%s1 + $0x1c] sm:$0xf]
  %v28 = vld [vmem:[%s1 + $0x20] sm:$0xf]
  %v29 = vld [vmem:[%s1 + $0x24] sm:$0xf]
  %v30 = vld [vmem:[%s1 + $0x28] sm:$0xf]
  %v31 = vld [vmem:[%s1 + $0x2c] sm:$0xf]
  %v32 = vld [vmem:[%s1 + $0x30] sm:$0xf]
  %v33 = vld [vmem:[%s1 + $0x34] sm:$0xf]
  %v34 = vld [vmem:[%s1 + $0x38] sm:$0xf]
  %v35 = vld [vmem:[%s1 + $0x3c] sm:$0xf]
  %v38 = vunpack.c.l.b16 %v18
  %v39 = vunpack.c.l.b16 %v19
  %v40 = vpack.c.b16 %v39, %v38
  %v58 = vunpack.c.l.b16 %v20
  %v59 = vunpack.c.l.b16 %v21
  %v60 = vunpack.c.l.b16 %v22
  %v61 = vunpack.c.l.b16 %v23
  %v62 = vunpack.c.l.b16 %v24
  %v63 = vunpack.c.l.b16 %v25
  %v64 = vunpack.c.l.b16 %v26
  %v65 = vunpack.c.l.b16 %v27
  %v66 = vunpack.c.l.b16 %v28
  %v67 = vunpack.c.l.b16 %v29
  %v68 = vunpack.c.l.b16 %v30
  %v69 = vunpack.c.l.b16 %v31
  %v70 = vunpack.c.l.b16 %v32
  %v71 = vunpack.c.l.b16 %v33
  %v72 = vunpack.c.l.b16 %v34
  %v73 = vunpack.c.l.b16 %v35
  %v74 = vpack.c.b16 %v59, %v58
  %v75 = vpack.c.b16 %v61, %v60
  %v76 = vpack.c.b16 %v63, %v62
  %v77 = vpack.c.b16 %v65, %v64
  %v78 = vpack.c.b16 %v67, %v66
  %v79 = vpack.c.b16 %v69, %v68
  %v80 = vpack.c.b16 %v71, %v70
  %v81 = vpack.c.b16 %v73, %v72
  %90 = vmatprep.subr.bf16.mxu0 0
  %91 = vmatpush1.bf16.msra.mxu0 %v74
  %92 = vmatprep.subr.bf16.mxu0 0
  %93 = vmatpush1.bf16.msra.mxu0 %v75
  %94 = vmatprep.subr.bf16.mxu0 0
  %95 = vmatpush1.bf16.msra.mxu0 %v76
  %96 = vmatprep.subr.bf16.mxu0 0
  %97 = vmatpush1.bf16.msra.mxu0 %v77
  %98 = vmatprep.subr.bf16.mxu0 0
  %99 = vmatpush1.bf16.msra.mxu0 %v78
  %100 = vmatprep.subr.bf16.mxu0 0
  %101 = vmatpush1.bf16.msra.mxu0 %v79
  %102 = vmatprep.subr.bf16.mxu0 0
  %103 = vmatpush1.bf16.msra.mxu0 %v80
  %104 = vmatprep.subr.bf16.mxu0 0
  %105 = vmatpush1.bf16.msra.mxu0 %v81
  %106 = vmatprep.subr.bf16.mxu0 0
  %107 = vmatpush1.bf16.msra.mxu0 0
  %108 = vmatprep.subr.bf16.mxu0 0
  %109 = vmatpush1.bf16.msra.mxu0 0
  %110 = vmatprep.subr.bf16.mxu0 0
  %111 = vmatpush1.bf16.msra.mxu0 0
  %112 = vmatprep.subr.bf16.mxu0 0
  %113 = vmatpush1.bf16.msra.mxu0 0
  %114 = vmatprep.subr.bf16.mxu0 0
  %115 = vmatpush1.bf16.msra.mxu0 0
  %116 = vmatprep.subr.bf16.mxu0 0
  %117 = vmatpush1.bf16.msra.mxu0 0
  %118 = vmatprep.subr.bf16.mxu0 0
  %119 = vmatpush1.bf16.msra.mxu0 0
  %120 = vmatprep.subr.bf16.mxu0 0
  %121 = vmatpush1.bf16.msra.mxu0 0
  %122 = vmatprep.mubr.bf16.mxu0 0
  %123 = vmatmul.mubr.bf16.gmra.mrb[0].mxu0 %v40
  %v124 = vpop.f32.mrb[0].mxu0
  %v125 = vadd.f32 0.0, %v124
  %v126 = vpop.f32.mrb[0].mxu0
  %v127 = vpop.f32.mrb[0].mxu0
  %v128 = vadd.f32 0.0, %v127
  %v129 = vpop.f32.mrb[0].mxu0
  %130 = vdwg.mxu0
  %v131 = vld [vmem:[%s2] sm:$0x7]
  %v132 = vpack.c.bf16 %v128, %v125
  %v133 = vld [vmem:[%s3] sm:$0x3f]
  %135 = vset.pattern.permute.xlu0 0
  %136 = vperm.xlu0 %135, %v133
  %v137 = vpop.permute.xlu0 %136
  %vm139 = vcmask 130048
  %v141 = vsel %vm139, %v131, 0
  %143 = vmatprep.subr.bf16.mxu0 0
  %144 = vmatpush1.bf16.msra.mxu0 %v132
  %145 = vmatprep.subr.bf16.mxu0 0
  %146 = vmatpush1.bf16.msra.mxu0 0
  %147 = vmatprep.subr.bf16.mxu0 0
  %148 = vmatpush1.bf16.msra.mxu0 0
  %149 = vmatprep.subr.bf16.mxu0 0
  %150 = vmatpush1.bf16.msra.mxu0 0
  %151 = vmatprep.subr.bf16.mxu0 0
  %152 = vmatpush1.bf16.msra.mxu0 0
  %153 = vmatprep.subr.bf16.mxu0 0
  %154 = vmatpush1.bf16.msra.mxu0 0
  %155 = vmatprep.subr.bf16.mxu0 0
  %156 = vmatpush1.bf16.msra.mxu0 0
  %157 = vmatprep.subr.bf16.mxu0 0
  %158 = vmatpush1.bf16.msra.mxu0 0
  %159 = vmatprep.subr.bf16.mxu0 0
  %160 = vmatpush1.bf16.msra.mxu0 0
  %161 = vmatprep.subr.bf16.mxu0 0
  %162 = vmatpush1.bf16.msra.mxu0 0
  %163 = vmatprep.subr.bf16.mxu0 0
  %164 = vmatpush1.bf16.msra.mxu0 0
  %165 = vmatprep.subr.bf16.mxu0 0
  %166 = vmatpush1.bf16.msra.mxu0 0
  %167 = vmatprep.subr.bf16.mxu0 0
  %168 = vmatpush1.bf16.msra.mxu0 0
  %169 = vmatprep.subr.bf16.mxu0 0
  %170 = vmatpush1.bf16.msra.mxu0 0
  %171 = vmatprep.subr.bf16.mxu0 0
  %172 = vmatpush1.bf16.msra.mxu0 0
  %173 = vmatprep.subr.bf16.mxu0 0
  %174 = vmatpush1.bf16.msra.mxu0 0
  %175 = vmatprep.mubr.bf16.mxu0 0
  %176 = vmatmul.mubr.bf16.gmra.mrb[0].mxu0 %v141
  %v177 = vpop.f32.mrb[0].mxu0
  %v178 = vadd.f32 %v137, %v177
  %v179 = vpop.f32.mrb[0].mxu0
  %v180 = vpop.f32.mrb[0].mxu0
  %v181 = vpop.f32.mrb[0].mxu0
  %182 = vdwg.mxu0
  %vm183 = vcmask 13312
  %184 = vst.msk [vmem:[%s4] sm:$0x3f] %vm183, %v178
  // Predicated region
  $region18: #{_lambda_.5} parent=0 // pred_check
    _
  $region19: #{_lambda_.5} parent=0 // pred_check_branch
    %186 = sbr.rel (0) target = $region21
  $region20: #{_lambda_.5} parent=0 // pred_region
    _
  $region21: #{_lambda_.5} parent=0 // pred_fallthru
    _
  // Predicated region
  $region22: #{_lambda_.5} parent=0 // pred_check
    _
  $region23: #{_lambda_.5} parent=0 // pred_check_branch
    %188 = sbr.rel (0) target = $region25
  $region24: #{_lambda_.5} parent=0 // pred_region
    _
  $region25: #{_lambda_.5} parent=0 // pred_fallthru
    _

// kernel: _lambda_.4
$region0: #{_lambda_.4}
  #allocation0 [shape = 'u32[]', space=smem, size = 0x4, offset = 0x4, fixed_abs, tag = 'smem constant byte address 0x4 - core index']
  #allocation1 [shape = 'u32[144,128]{1,0:T(1,128)}', space=vmem, size = 0x12000, scoped, tag = 'internal scratch']
  %s0 = inlined_call_operand.vmem [shape: bf16[4,16,128], index: 0, kind: input, shape index: {}]
  %s1 = inlined_call_operand.vmem [shape: f32[9,1,128], index: 1, kind: input, shape index: {}]
  %s2 = inlined_call_operand.vmem [shape: f32[9,1,128], index: 2, kind: input, shape index: {}]
  %s3 = inlined_call_operand.vmem [shape: bf16[16,80], index: 3, kind: input, shape index: {}]
  %s4 = inlined_call_operand.vmem [shape: bf16[16,64], index: 4, kind: input, shape index: {}]
  %s5 = inlined_call_operand.vmem [shape: f32[16,1], index: 5, kind: input, shape index: {}, may-alias: {5,9,13}]
  %s6 = inlined_call_operand.vmem [shape: f32[16,1], index: 6, kind: input, shape index: {}, may-alias: {6,10,14}]
  %s7 = inlined_call_operand.vmem [shape: bf16[16,80], index: 7, kind: input, shape index: {}]
  %s8 = inlined_call_operand.vmem [shape: bf16[16,64], index: 8, kind: input, shape index: {}]
  %s9 = inlined_call_operand.vmem [shape: f32[16,1], index: 9, kind: input, shape index: {}, may-alias: {5,9,13}]
  %s10 = inlined_call_operand.vmem [shape: f32[16,1], index: 10, kind: input, shape index: {}, may-alias: {6,10,14}]
  %s11 = inlined_call_operand.vmem [shape: bf16[16,80], index: 11, kind: input, shape index: {}]
  %s12 = inlined_call_operand.vmem [shape: bf16[16,64], index: 12, kind: input, shape index: {}]
  %s13 = inlined_call_operand.vmem [shape: f32[16,1], index: 13, kind: input, shape index: {}, may-alias: {5,9,13}]
  %s14 = inlined_call_operand.vmem [shape: f32[16,1], index: 14, kind: input, shape index: {}, may-alias: {6,10,14}]
  %s15 = inlined_call_operand.vmem [shape: bf16[16,128], index: 15, kind: output, shape index: {}]
  %s16 = sld [smem:[#allocation0]]
  $region70: #{_lambda_.4} parent=0
    _
  %s18 = ssub.s32 1, %s16
  %s19 = scalar_select 0, %s18, %s16
  // Predicated region
  $region2: #{_lambda_.4} parent=0 // pred_check
    _
  $region3: #{_lambda_.4} parent=0 // pred_check_branch
    %21 = sbr.rel (0) target = $region5
  $region4: #{_lambda_.4} parent=0 // pred_region
    _
  $region5: #{_lambda_.4} parent=0 // pred_fallthru
    _
  // Predicated region
  $region6: #{_lambda_.4} parent=0 // pred_check
    _
  $region7: #{_lambda_.4} parent=0 // pred_check_branch
    %23 = sbr.rel (0) target = $region9
  $region8: #{_lambda_.4} parent=0 // pred_region
    _
  $region9: #{_lambda_.4} parent=0 // pred_fallthru
    _
  // Predicated region
  $region10: #{_lambda_.4} parent=0 // pred_check
    _
  $region11: #{_lambda_.4} parent=0 // pred_check_branch
    %25 = sbr.rel (0) target = $region13
  $region12: #{_lambda_.4} parent=0 // pred_region
    _
  $region13: #{_lambda_.4} parent=0 // pred_fallthru
    _
  // Predicated region
  $region14: #{_lambda_.4} parent=0 // pred_check
    _
  $region15: #{_lambda_.4} parent=0 // pred_check_branch
    %27 = sbr.rel (0) target = $region17
  $region16: #{_lambda_.4} parent=0 // pred_region
    _
  $region17: #{_lambda_.4} parent=0 // pred_fallthru
    _
  // Predicated region
  $region18: #{_lambda_.4} parent=0 // pred_check
    _
  $region19: #{_lambda_.4} parent=0 // pred_check_branch
    %29 = sbr.rel (0) target = $region21
  $region20: #{_lambda_.4} parent=0 // pred_region
    _
  $region21: #{_lambda_.4} parent=0 // pred_fallthru
    _
  // Predicated region
  $region22: #{_lambda_.4} parent=0 // pred_check
    _
  $region23: #{_lambda_.4} parent=0 // pred_check_branch
    %31 = sbr.rel (0) target = $region25
  $region24: #{_lambda_.4} parent=0 // pred_region
    _
  $region25: #{_lambda_.4} parent=0 // pred_fallthru
    _
  // Predicated region
  $region26: #{_lambda_.4} parent=0 // pred_check
    _
  $region27: #{_lambda_.4} parent=0 // pred_check_branch
    %33 = sbr.rel (0) target = $region29
  $region28: #{_lambda_.4} parent=0 // pred_region
    _
  $region29: #{_lambda_.4} parent=0 // pred_fallthru
    _
  // Predicated region
  $region30: #{_lambda_.4} parent=0 // pred_check
    _
  $region31: #{_lambda_.4} parent=0 // pred_check_branch
    %35 = sbr.rel (0) target = $region33
  $region32: #{_lambda_.4} parent=0 // pred_region
    _
  $region33: #{_lambda_.4} parent=0 // pred_fallthru
    _
  // Predicated region
  $region34: #{_lambda_.4} parent=0 // pred_check
    _
  $region35: #{_lambda_.4} parent=0 // pred_check_branch
    %37 = sbr.rel (0) target = $region37
  $region36: #{_lambda_.4} parent=0 // pred_region
    _
  $region37: #{_lambda_.4} parent=0 // pred_fallthru
    _
  // Predicated region
  $region38: #{_lambda_.4} parent=0 // pred_check
    _
  $region39: #{_lambda_.4} parent=0 // pred_check_branch
    %39 = sbr.rel (0) target = $region41
  $region40: #{_lambda_.4} parent=0 // pred_region
    _
  $region41: #{_lambda_.4} parent=0 // pred_fallthru
    _
  // Predicated region
  $region42: #{_lambda_.4} parent=0 // pred_check
    _
  $region43: #{_lambda_.4} parent=0 // pred_check_branch
    %41 = sbr.rel (0) target = $region45
  $region44: #{_lambda_.4} parent=0 // pred_region
    _
  $region45: #{_lambda_.4} parent=0 // pred_fallthru
    _
  // Predicated region
  $region46: #{_lambda_.4} parent=0 // pred_check
    _
  $region47: #{_lambda_.4} parent=0 // pred_check_branch
    %43 = sbr.rel (0) target = $region49
  $region48: #{_lambda_.4} parent=0 // pred_region
    _
  $region49: #{_lambda_.4} parent=0 // pred_fallthru
    _
  // Predicated region
  $region50: #{_lambda_.4} parent=0 // pred_check
    _
  $region51: #{_lambda_.4} parent=0 // pred_check_branch
    %45 = sbr.rel (0) target = $region53
  $region52: #{_lambda_.4} parent=0 // pred_region
    _
  $region53: #{_lambda_.4} parent=0 // pred_fallthru
    _
  // Predicated region
  $region54: #{_lambda_.4} parent=0 // pred_check
    _
  $region55: #{_lambda_.4} parent=0 // pred_check_branch
    %47 = sbr.rel (0) target = $region57
  $region56: #{_lambda_.4} parent=0 // pred_region
    _
  $region57: #{_lambda_.4} parent=0 // pred_fallthru
    _
  // Predicated region
  $region58: #{_lambda_.4} parent=0 // pred_check
    _
  $region59: #{_lambda_.4} parent=0 // pred_check_branch
    %49 = sbr.rel (0) target = $region61
  $region60: #{_lambda_.4} parent=0 // pred_region
    _
  $region61: #{_lambda_.4} parent=0 // pred_fallthru
    _
  %v51 = vld [vmem:[%s0] sm:$0xf]
  %v52 = vld [vmem:[%s0 + $0x4] sm:$0xf]
  %v53 = vld [vmem:[%s0 + $0x8] sm:$0xf]
  %v54 = vld [vmem:[%s0 + $0xc] sm:$0xf]
  %v55 = vld [vmem:[%s0 + $0x10] sm:$0xf]
  %v56 = vld [vmem:[%s0 + $0x14] sm:$0xf]
  %v57 = vld [vmem:[%s0 + $0x18] sm:$0xf]
  %v58 = vld [vmem:[%s0 + $0x1c] sm:$0xf]
  %v59 = vunpack.c.l.bf16 %v51
  %v60 = vunpack.c.l.bf16 %v52
  %v61 = vunpack.c.l.bf16 %v53
  %v62 = vunpack.c.l.bf16 %v54
  %v63 = vunpack.c.l.bf16 %v55
  %v64 = vunpack.c.l.bf16 %v56
  %v65 = vunpack.c.l.bf16 %v57
  %v66 = vunpack.c.l.bf16 %v58
  %v67 = vld [vmem:[%s2] sm:$0x1]
  %v68 = vld [vmem:[%s2 + $0x1] sm:$0x1]
  %v69 = vld [vmem:[%s2 + $0x2] sm:$0x1]
  %v70 = vld [vmem:[%s2 + $0x3] sm:$0x1]
  %v71 = vld [vmem:[%s2 + $0x4] sm:$0x1]
  %v72 = vld [vmem:[%s2 + $0x5] sm:$0x1]
  %v73 = vld [vmem:[%s2 + $0x6] sm:$0x1]
  %v74 = vld [vmem:[%s2 + $0x7] sm:$0x1]
  %v75 = vld [vmem:[%s2 + $0x8] sm:$0x1]
  %76 = vrot.lane.b32.xlu0 %v65, 9
  %v77 = vpop.permute.xlu0 %76
  %78 = vrot.lane.b32.xlu0 %v66, 9
  %v79 = vpop.permute.xlu0 %78
  %v81 = vlaneseq
  %v82 = vshrl.u32 %v81, 7
  %v83 = vsub.s32 0, %v82
  %v84 = vrot.slane %v67, %v83
  %v86 = vmul.f32 %v77, %v84
  %v87 = vmul.f32 %v79, %v84
  %88 = vrot.lane.b32.xlu0 %v63, 8
  %v89 = vpop.permute.xlu0 %88
  %90 = vrot.lane.b32.xlu0 %v64, 8
  %v91 = vpop.permute.xlu0 %90
  %v93 = vlaneseq
  %v94 = vshrl.u32 %v93, 7
  %v95 = vsub.s32 0, %v94
  %v96 = vrot.slane %v68, %v95
  %v98 = vmul.f32 %v89, %v96
  %v99 = vmul.f32 %v91, %v96
  %100 = vrot.lane.b32.xlu0 %v65, 8
  %v101 = vpop.permute.xlu0 %100
  %102 = vrot.lane.b32.xlu0 %v66, 8
  %v103 = vpop.permute.xlu0 %102
  %v105 = vlaneseq
  %v106 = vshrl.u32 %v105, 7
  %v107 = vsub.s32 0, %v106
  %v108 = vrot.slane %v69, %v107
  %v110 = vmul.f32 %v101, %v108
  %v111 = vmul.f32 %v103, %v108
  %112 = vrot.lane.b32.xlu0 %v61, 1
  %v113 = vpop.permute.xlu0 %112
  %114 = vrot.lane.b32.xlu0 %v62, 1
  %v115 = vpop.permute.xlu0 %114
  %v117 = vlaneseq
  %v118 = vshrl.u32 %v117, 7
  %v119 = vsub.s32 0, %v118
  %v120 = vrot.slane %v70, %v119
  %v122 = vmul.f32 %v113, %v120
  %v123 = vmul.f32 %v115, %v120
  %v125 = vlaneseq
  %v126 = vshrl.u32 %v125, 7
  %v127 = vsub.s32 0, %v126
  %v128 = vrot.slane %v71, %v127
  %v130 = vmul.f32 %v59, %v128
  %v131 = vmul.f32 %v60, %v128
  %v132 = vpack.c.bf16 %v87, %v86
  %v133 = vpack.c.bf16 %v99, %v98
  %v134 = vpack.c.bf16 %v111, %v110
  %v135 = vpack.c.bf16 %v123, %v122
  %v136 = vpack.c.bf16 %v131, %v130
  %v138 = vlaneseq
  %v139 = vshrl.u32 %v138, 7
  %v140 = vsub.s32 0, %v139
  %v141 = vrot.slane %v72, %v140
  %v143 = vmul.f32 %v61, %v141
  %v144 = vmul.f32 %v62, %v141
  %145 = vrot.lane.b32.xlu0 %v65, 1
  %v146 = vpop.permute.xlu0 %145
  %147 = vrot.lane.b32.xlu0 %v66, 1
  %v148 = vpop.permute.xlu0 %147
  %v150 = vlaneseq
  %v151 = vshrl.u32 %v150, 7
  %v152 = vsub.s32 0, %v151
  %v153 = vrot.slane %v73, %v152
  %v155 = vmul.f32 %v146, %v153
  %v156 = vmul.f32 %v148, %v153
  %v158 = vlaneseq
  %v159 = vshrl.u32 %v158, 7
  %v160 = vsub.s32 0, %v159
  %v161 = vrot.slane %v74, %v160
  %v163 = vmul.f32 %v63, %v161
  %v164 = vmul.f32 %v64, %v161
  %v166 = vlaneseq
  %v167 = vshrl.u32 %v166, 7
  %v168 = vsub.s32 0, %v167
  %v169 = vrot.slane %v75, %v168
  %v171 = vmul.f32 %v65, %v169
  %v172 = vmul.f32 %v66, %v169
  %v173 = vpack.c.bf16 %v144, %v143
  %v174 = vpack.c.bf16 %v156, %v155
  %v175 = vpack.c.bf16 %v164, %v163
  %v176 = vpack.c.bf16 %v172, %v171
  %v177 = vld [vmem:[%s3] sm:$0xf]
  %v178 = vld [vmem:[%s3 + $0x4] sm:$0xf]
  %v179 = vld [vmem:[%s4] sm:$0xf]
  %v180 = vld [vmem:[%s4 + $0x4] sm:$0xf]
  %v183 = vunpack.c.l.b16 %v179
  %v184 = vunpack.c.l.b16 %v180
  %v185 = vpack.c.b16 %v184, %v183
  %vm186 = vcmask 523264
  %v188 = vsel %vm186, %v185, 0
  %190 = vmatprep.subr.bf16.mxu0 0
  %191 = vmatpush1.bf16.msra.mxu0 %v173
  %192 = vmatprep.subr.bf16.mxu0 0
  %193 = vmatpush1.bf16.msra.mxu0 %v174
  %194 = vmatprep.subr.bf16.mxu0 0
  %195 = vmatpush1.bf16.msra.mxu0 %v175
  %196 = vmatprep.subr.bf16.mxu0 0
  %197 = vmatpush1.bf16.msra.mxu0 %v176
  %198 = vmatprep.subr.bf16.mxu0 0
  %199 = vmatpush1.bf16.msra.mxu0 0
  %200 = vmatprep.subr.bf16.mxu0 0
  %201 = vmatpush1.bf16.msra.mxu0 0
  %202 = vmatprep.subr.bf16.mxu0 0
  %203 = vmatpush1.bf16.msra.mxu0 0
  %204 = vmatprep.subr.bf16.mxu0 0
  %205 = vmatpush1.bf16.msra.mxu0 0
  %206 = vmatprep.subr.bf16.mxu0 0
  %207 = vmatpush1.bf16.msra.mxu0 0
  %208 = vmatprep.subr.bf16.mxu0 0
  %209 = vmatpush1.bf16.msra.mxu0 0
  %210 = vmatprep.subr.bf16.mxu0 0
  %211 = vmatpush1.bf16.msra.mxu0 0
  %212 = vmatprep.subr.bf16.mxu0 0
  %213 = vmatpush1.bf16.msra.mxu0 0
  %214 = vmatprep.subr.bf16.mxu0 0
  %215 = vmatpush1.bf16.msra.mxu0 0
  %216 = vmatprep.subr.bf16.mxu0 0
  %217 = vmatpush1.bf16.msra.mxu0 0
  %218 = vmatprep.subr.bf16.mxu0 0
  %219 = vmatpush1.bf16.msra.mxu0 0
  %220 = vmatprep.subr.bf16.mxu0 0
  %221 = vmatpush1.bf16.msra.mxu0 0
  %222 = vmatprep.mubr.bf16.mxu0 0
  %223 = vmatmul.mubr.bf16.gmra.mrb[0].mxu0 %v188
  %v224 = vpop.f32.mrb[0].mxu0
  %v225 = vadd.f32 0.0, %v224
  %v226 = vpop.f32.mrb[0].mxu0
  %v227 = vpop.f32.mrb[0].mxu0
  %v228 = vadd.f32 0.0, %v227
  %v229 = vpop.f32.mrb[0].mxu0
  %230 = vdwg.mxu0
  %v233 = vunpack.c.l.b16 %v177
  %v234 = vunpack.c.l.b16 %v178
  %v235 = vpack.c.b16 %v234, %v233
  %vm236 = vcmask 654336
  %v238 = vsel %vm236, %v235, 0
  %240 = vmatprep.subr.bf16.mxu0 0
  %241 = vmatpush1.bf16.msra.mxu0 %v132
  %242 = vmatprep.subr.bf16.mxu0 0
  %243 = vmatpush1.bf16.msra.mxu0 %v133
  %244 = vmatprep.subr.bf16.mxu0 0
  %245 = vmatpush1.bf16.msra.mxu0 %v134
  %246 = vmatprep.subr.bf16.mxu0 0
  %247 = vmatpush1.bf16.msra.mxu0 %v135
  %248 = vmatprep.subr.bf16.mxu0 0
  %249 = vmatpush1.bf16.msra.mxu0 %v136
  %250 = vmatprep.subr.bf16.mxu0 0
  %251 = vmatpush1.bf16.msra.mxu0 0
  %252 = vmatprep.subr.bf16.mxu0 0
  %253 = vmatpush1.bf16.msra.mxu0 0
  %254 = vmatprep.subr.bf16.mxu0 0
  %255 = vmatpush1.bf16.msra.mxu0 0
  %256 = vmatprep.subr.bf16.mxu0 0
  %257 = vmatpush1.bf16.msra.mxu0 0
  %258 = vmatprep.subr.bf16.mxu0 0
  %259 = vmatpush1.bf16.msra.mxu0 0
  %260 = vmatprep.subr.bf16.mxu0 0
  %261 = vmatpush1.bf16.msra.mxu0 0
  %262 = vmatprep.subr.bf16.mxu0 0
  %263 = vmatpush1.bf16.msra.mxu0 0
  %264 = vmatprep.subr.bf16.mxu0 0
  %265 = vmatpush1.bf16.msra.mxu0 0
  %266 = vmatprep.subr.bf16.mxu0 0
  %267 = vmatpush1.bf16.msra.mxu0 0
  %268 = vmatprep.subr.bf16.mxu0 0
  %269 = vmatpush1.bf16.msra.mxu0 0
  %270 = vmatprep.subr.bf16.mxu0 0
  %271 = vmatpush1.bf16.msra.mxu0 0
  %272 = vmatprep.mubr.bf16.mxu0 0
  %273 = vmatmul.mubr.bf16.gmra.mrb[0].mxu0 %v238
  %v274 = vpop.f32.mrb[0].mxu0
  %v275 = vadd.f32 %v225, %v274
  %v276 = vpop.f32.mrb[0].mxu0
  %v277 = vpop.f32.mrb[0].mxu0
  %v278 = vadd.f32 %v228, %v277
  %v279 = vpop.f32.mrb[0].mxu0
  %280 = vdwg.mxu0
  %v281 = vld [vmem:[%s5] sm:$0xff]
  %v282 = vld [vmem:[%s5 + $0x8] sm:$0xff]
  %v283 = vld [vmem:[%s6] sm:$0xff]
  %v284 = vld [vmem:[%s6 + $0x8] sm:$0xff]
  %285 = vmatprep.subr.mxu0 0.0
  %286 = vmatpush1.msra.mxu0 1.0
  %287 = vmatprep.subr.mxu0 0.0
  %288 = vmatpush1.msra.mxu0 1.0
  %289 = vmatprep.subr.mxu0 0.0
  %290 = vmatpush1.msra.mxu0 1.0
  %291 = vmatprep.subr.mxu0 0.0
  %292 = vmatpush1.msra.mxu0 1.0
  %293 = vmatprep.subr.mxu0 0.0
  %294 = vmatpush1.msra.mxu0 1.0
  %295 = vmatprep.subr.mxu0 0.0
  %296 = vmatpush1.msra.mxu0 1.0
  %297 = vmatprep.subr.mxu0 0.0
  %298 = vmatpush1.msra.mxu0 1.0
  %299 = vmatprep.subr.mxu0 0.0
  %300 = vmatpush1.msra.mxu0 1.0
  %301 = vmatprep.subr.mxu0 0.0
  %302 = vmatpush1.msra.mxu0 1.0
  %303 = vmatprep.subr.mxu0 0.0
  %304 = vmatpush1.msra.mxu0 1.0
  %305 = vmatprep.subr.mxu0 0.0
  %306 = vmatpush1.msra.mxu0 1.0
  %307 = vmatprep.subr.mxu0 0.0
  %308 = vmatpush1.msra.mxu0 1.0
  %309 = vmatprep.subr.mxu0 0.0
  %310 = vmatpush1.msra.mxu0 1.0
  %311 = vmatprep.subr.mxu0 0.0
  %312 = vmatpush1.msra.mxu0 1.0
  %313 = vmatprep.subr.mxu0 0.0
  %314 = vmatpush1.msra.mxu0 1.0
  %315 = vmatprep.subr.mxu0 0.0
  %316 = vmatpush1.msra.mxu0 1.0
  %317 = vmatprep.subr.mxu0 0.0
  %318 = vmatpush1.msra.mxu0 0.0
  %319 = vmatprep.subr.mxu0 0.0
  %320 = vmatpush1.msra.mxu0 0.0
  %321 = vmatprep.subr.mxu0 0.0
  %322 = vmatpush1.msra.mxu0 0.0
  %323 = vmatprep.subr.mxu0 0.0
  %324 = vmatpush1.msra.mxu0 0.0
  %325 = vmatprep.subr.mxu0 0.0
  %326 = vmatpush1.msra.mxu0 0.0
  %327 = vmatprep.subr.mxu0 0.0
  %328 = vmatpush1.msra.mxu0 0.0
  %329 = vmatprep.subr.mxu0 0.0
  %330 = vmatpush1.msra.mxu0 0.0
  %331 = vmatprep.subr.mxu0 0.0
  %332 = vmatpush1.msra.mxu0 0.0
  %333 = vmatprep.subr.mxu0 0.0
  %334 = vmatpush1.msra.mxu0 0.0
  %335 = vmatprep.subr.mxu0 0.0
  %336 = vmatpush1.msra.mxu0 0.0
  %337 = vmatprep.subr.mxu0 0.0
  %338 = vmatpush1.msra.mxu0 0.0
  %339 = vmatprep.subr.mxu0 0.0
  %340 = vmatpush1.msra.mxu0 0.0
  %341 = vmatprep.subr.mxu0 0.0
  %342 = vmatpush1.msra.mxu0 0.0
  %343 = vmatprep.subr.mxu0 0.0
  %344 = vmatpush1.msra.mxu0 0.0
  %345 = vmatprep.subr.mxu0 0.0
  %346 = vmatpush1.msra.mxu0 0.0
  %347 = vmatprep.subr.mxu0 0.0
  %348 = vmatpush1.msra.mxu0 0.0
  %349 = vmatprep.mubr.f32.mxu0 0.0
  %350 = vmatmul.mubr.f32.gmra.mrb[0].mxu0 %v275
  %v351 = vpop.f32.mrb[0].mxu0
  %v352 = vadd.f32 0.0, %v351
  %v353 = vpop.f32.mrb[0].mxu0
  %354 = vmatprep.mubr.f32.mxu0 0.0
  %355 = vmatmul.mubr.f32.gmra.mrb[0].mxu0 %v278
  %v356 = vpop.f32.mrb[0].mxu0
  %v357 = vadd.f32 0.0, %v356
  %v358 = vpop.f32.mrb[0].mxu0
  %359 = vdwg.mxu0
  %v360 = vmul.f32 %v352, 0.0078125
  %v361 = vmul.f32 %v357, 0.0078125
  %363 = vset.pattern.permute.xlu0 0
  %364 = vperm.xlu0 %363, %v360
  %v365 = vpop.permute.xlu0 %364
  %368 = vset.pattern.permute.xlu0 0
  %369 = vperm.xlu0 %368, %v361
  %v370 = vpop.permute.xlu0 %369
  %v372 = vsub.f32 %v275, %v365
  %v373 = vsub.f32 %v278, %v370
  %v374 = vmul.f32 %v372, %v372
  %v375 = vmul.f32 %v373, %v373
  %376 = vmatprep.subr.mxu0 0.0
  %377 = vmatpush1.msra.mxu0 1.0
  %378 = vmatprep.subr.mxu0 0.0
  %379 = vmatpush1.msra.mxu0 1.0
  %380 = vmatprep.subr.mxu0 0.0
  %381 = vmatpush1.msra.mxu0 1.0
  %382 = vmatprep.subr.mxu0 0.0
  %383 = vmatpush1.msra.mxu0 1.0
  %384 = vmatprep.subr.mxu0 0.0
  %385 = vmatpush1.msra.mxu0 1.0
  %386 = vmatprep.subr.mxu0 0.0
  %387 = vmatpush1.msra.mxu0 1.0
  %388 = vmatprep.subr.mxu0 0.0
  %389 = vmatpush1.msra.mxu0 1.0
  %390 = vmatprep.subr.mxu0 0.0
  %391 = vmatpush1.msra.mxu0 1.0
  %392 = vmatprep.subr.mxu0 0.0
  %393 = vmatpush1.msra.mxu0 1.0
  %394 = vmatprep.subr.mxu0 0.0
  %395 = vmatpush1.msra.mxu0 1.0
  %396 = vmatprep.subr.mxu0 0.0
  %397 = vmatpush1.msra.mxu0 1.0
  %398 = vmatprep.subr.mxu0 0.0
  %399 = vmatpush1.msra.mxu0 1.0
  %400 = vmatprep.subr.mxu0 0.0
  %401 = vmatpush1.msra.mxu0 1.0
  %402 = vmatprep.subr.mxu0 0.0
  %403 = vmatpush1.msra.mxu0 1.0
  %404 = vmatprep.subr.mxu0 0.0
  %405 = vmatpush1.msra.mxu0 1.0
  %406 = vmatprep.subr.mxu0 0.0
  %407 = vmatpush1.msra.mxu0 1.0
  %408 = vmatprep.subr.mxu0 0.0
  %409 = vmatpush1.msra.mxu0 0.0
  %410 = vmatprep.subr.mxu0 0.0
  %411 = vmatpush1.msra.mxu0 0.0
  %412 = vmatprep.subr.mxu0 0.0
  %413 = vmatpush1.msra.mxu0 0.0
  %414 = vmatprep.subr.mxu0 0.0
  %415 = vmatpush1.msra.mxu0 0.0
  %416 = vmatprep.subr.mxu0 0.0
  %417 = vmatpush1.msra.mxu0 0.0
  %418 = vmatprep.subr.mxu0 0.0
  %419 = vmatpush1.msra.mxu0 0.0
  %420 = vmatprep.subr.mxu0 0.0
  %421 = vmatpush1.msra.mxu0 0.0
  %422 = vmatprep.subr.mxu0 0.0
  %423 = vmatpush1.msra.mxu0 0.0
  %424 = vmatprep.subr.mxu0 0.0
  %425 = vmatpush1.msra.mxu0 0.0
  %426 = vmatprep.subr.mxu0 0.0
  %427 = vmatpush1.msra.mxu0 0.0
  %428 = vmatprep.subr.mxu0 0.0
  %429 = vmatpush1.msra.mxu0 0.0
  %430 = vmatprep.subr.mxu0 0.0
  %431 = vmatpush1.msra.mxu0 0.0
  %432 = vmatprep.subr.mxu0 0.0
  %433 = vmatpush1.msra.mxu0 0.0
  %434 = vmatprep.subr.mxu0 0.0
  %435 = vmatpush1.msra.mxu0 0.0
  %436 = vmatprep.subr.mxu0 0.0
  %437 = vmatpush1.msra.mxu0 0.0
  %438 = vmatprep.subr.mxu0 0.0
  %439 = vmatpush1.msra.mxu0 0.0
  %440 = vmatprep.mubr.f32.mxu0 0.0
  %441 = vmatmul.mubr.f32.gmra.mrb[0].mxu0 %v374
  %v442 = vpop.f32.mrb[0].mxu0
  %v443 = vadd.f32 0.0, %v442
  %v444 = vpop.f32.mrb[0].mxu0
  %445 = vmatprep.mubr.f32.mxu0 0.0
  %446 = vmatmul.mubr.f32.gmra.mrb[0].mxu0 %v375
  %v447 = vpop.f32.mrb[0].mxu0
  %v448 = vadd.f32 0.0, %v447
  %v449 = vpop.f32.mrb[0].mxu0
  %450 = vdwg.mxu0
  %v451 = vmul.f32 %v443, 0.0078125
  %v452 = vmul.f32 %v448, 0.0078125
  %v453 = vadd.f32 %v451, 1e-05
  %v454 = vadd.f32 %v452, 1e-05
  %v455 = vrsqrt.pop %v453
  %v456 = vrsqrt.pop %v454
  %v457 = vmul.f32 %v455, %v281
  %v458 = vmul.f32 %v456, %v282
  %460 = vset.pattern.permute.xlu0 0
  %461 = vperm.xlu0 %460, %v457
  %v462 = vpop.permute.xlu0 %461
  %465 = vset.pattern.permute.xlu0 0
  %466 = vperm.xlu0 %465, %v458
  %v467 = vpop.permute.xlu0 %466
  %v469 = vmul.f32 %v372, %v462
  %v470 = vmul.f32 %v373, %v467
  %472 = vset.pattern.permute.xlu0 0
  %473 = vperm.xlu0 %472, %v283
  %v474 = vpop.permute.xlu0 %473
  %477 = vset.pattern.permute.xlu0 0
  %478 = vperm.xlu0 %477, %v284
  %v479 = vpop.permute.xlu0 %478
  %v481 = vadd.f32 %v469, %v474
  %v482 = vadd.f32 %v470, %v479
  %v483 = vmax.f32 %v481, 0.0
  %v484 = vmax.f32 %v482, 0.0
  %v485 = vld [vmem:[%s1] sm:$0x1]
  %v486 = vld [vmem:[%s1 + $0x1] sm:$0x1]
  %v487 = vld [vmem:[%s1 + $0x2] sm:$0x1]
  %v488 = vld [vmem:[%s1 + $0x3] sm:$0x1]
  %v489 = vld [vmem:[%s1 + $0x4] sm:$0x1]
  %v490 = vld [vmem:[%s1 + $0x5] sm:$0x1]
  %v491 = vld [vmem:[%s1 + $0x6] sm:$0x1]
  %v492 = vld [vmem:[%s1 + $0x7] sm:$0x1]
  %v493 = vld [vmem:[%s1 + $0x8] sm:$0x1]
  %494 = vrot.lane.b32.xlu0 %v483, 9
  %v495 = vpop.permute.xlu0 %494
  %496 = vrot.lane.b32.xlu0 %v484, 9
  %v497 = vpop.permute.xlu0 %496
  %v499 = vlaneseq
  %v500 = vshrl.u32 %v499, 7
  %v501 = vsub.s32 0, %v500
  %v502 = vrot.slane %v485, %v501
  %v504 = vmul.f32 %v495, %v502
  %v505 = vmul.f32 %v497, %v502
  %506 = vrot.lane.b32.xlu0 %v483, 8
  %v507 = vpop.permute.xlu0 %506
  %508 = vrot.lane.b32.xlu0 %v484, 8
  %v509 = vpop.permute.xlu0 %508
  %v511 = vlaneseq
  %v512 = vshrl.u32 %v511, 7
  %v513 = vsub.s32 0, %v512
  %v514 = vrot.slane %v486, %v513
  %v516 = vmul.f32 %v507, %v514
  %v517 = vmul.f32 %v509, %v514
  %518 = vrot.lane.b32.xlu0 %v483, 7
  %v519 = vpop.permute.xlu0 %518
  %520 = vrot.lane.b32.xlu0 %v484, 7
  %v521 = vpop.permute.xlu0 %520
  %v523 = vlaneseq
  %v524 = vshrl.u32 %v523, 7
  %v525 = vsub.s32 0, %v524
  %v526 = vrot.slane %v487, %v525
  %v528 = vmul.f32 %v519, %v526
  %v529 = vmul.f32 %v521, %v526
  %530 = vrot.lane.b32.xlu0 %v483, 1
  %v531 = vpop.permute.xlu0 %530
  %532 = vrot.lane.b32.xlu0 %v484, 1
  %v533 = vpop.permute.xlu0 %532
  %v535 = vlaneseq
  %v536 = vshrl.u32 %v535, 7
  %v537 = vsub.s32 0, %v536
  %v538 = vrot.slane %v488, %v537
  %v540 = vmul.f32 %v531, %v538
  %v541 = vmul.f32 %v533, %v538
  %v543 = vlaneseq
  %v544 = vshrl.u32 %v543, 7
  %v545 = vsub.s32 0, %v544
  %v546 = vrot.slane %v489, %v545
  %v548 = vmul.f32 %v483, %v546
  %v549 = vmul.f32 %v484, %v546
  %v550 = vpack.c.bf16 %v505, %v504
  %v551 = vpack.c.bf16 %v517, %v516
  %v552 = vpack.c.bf16 %v529, %v528
  %v553 = vpack.c.bf16 %v541, %v540
  %v554 = vpack.c.bf16 %v549, %v548
  %555 = vrot.lane.b32.xlu0 %v483, 127
  %v556 = vpop.permute.xlu0 %555
  %557 = vrot.lane.b32.xlu0 %v484, 127
  %v558 = vpop.permute.xlu0 %557
  %v560 = vlaneseq
  %v561 = vshrl.u32 %v560, 7
  %v562 = vsub.s32 0, %v561
  %v563 = vrot.slane %v490, %v562
  %v565 = vmul.f32 %v556, %v563
  %v566 = vmul.f32 %v558, %v563
  %567 = vrot.lane.b32.xlu0 %v483, 121
  %v568 = vpop.permute.xlu0 %567
  %569 = vrot.lane.b32.xlu0 %v484, 121
  %v570 = vpop.permute.xlu0 %569
  %v572 = vlaneseq
  %v573 = vshrl.u32 %v572, 7
  %v574 = vsub.s32 0, %v573
  %v575 = vrot.slane %v491, %v574
  %v577 = vmul.f32 %v568, %v575
  %v578 = vmul.f32 %v570, %v575
  %579 = vrot.lane.b32.xlu0 %v483, 120
  %v580 = vpop.permute.xlu0 %579
  %581 = vrot.lane.b32.xlu0 %v484, 120
  %v582 = vpop.permute.xlu0 %581
  %v584 = vlaneseq
  %v585 = vshrl.u32 %v584, 7
  %v586 = vsub.s32 0, %v585
  %v587 = vrot.slane %v492, %v586
  %v589 = vmul.f32 %v580, %v587
  %v590 = vmul.f32 %v582, %v587
  %591 = vrot.lane.b32.xlu0 %v483, 119
  %v592 = vpop.permute.xlu0 %591
  %593 = vrot.lane.b32.xlu0 %v484, 119
  %v594 = vpop.permute.xlu0 %593
  %v596 = vlaneseq
  %v597 = vshrl.u32 %v596, 7
  %v598 = vsub.s32 0, %v597
  %v599 = vrot.slane %v493, %v598
  %v601 = vmul.f32 %v592, %v599
  %v602 = vmul.f32 %v594, %v599
  %v603 = vpack.c.bf16 %v566, %v565
  %v604 = vpack.c.bf16 %v578, %v577
  %v605 = vpack.c.bf16 %v590, %v589
  %v606 = vpack.c.bf16 %v602, %v601
  %v607 = vld [vmem:[%s7] sm:$0xf]
  %v608 = vld [vmem:[%s7 + $0x4] sm:$0xf]
  %v609 = vld [vmem:[%s8] sm:$0xf]
  %v610 = vld [vmem:[%s8 + $0x4] sm:$0xf]
  %v613 = vunpack.c.l.b16 %v609
  %v614 = vunpack.c.l.b16 %v610
  %v615 = vpack.c.b16 %v614, %v613
  %v617 = vsel %vm186, %v615, 0
  %619 = vmatprep.subr.bf16.mxu0 0
  %620 = vmatpush1.bf16.msra.mxu0 %v603
  %621 = vmatprep.subr.bf16.mxu0 0
  %622 = vmatpush1.bf16.msra.mxu0 %v604
  %623 = vmatprep.subr.bf16.mxu0 0
  %624 = vmatpush1.bf16.msra.mxu0 %v605
  %625 = vmatprep.subr.bf16.mxu0 0
  %626 = vmatpush1.bf16.msra.mxu0 %v606
  %627 = vmatprep.subr.bf16.mxu0 0
  %628 = vmatpush1.bf16.msra.mxu0 0
  %629 = vmatprep.subr.bf16.mxu0 0
  %630 = vmatpush1.bf16.msra.mxu0 0
  %631 = vmatprep.subr.bf16.mxu0 0
  %632 = vmatpush1.bf16.msra.mxu0 0
  %633 = vmatprep.subr.bf16.mxu0 0
  %634 = vmatpush1.bf16.msra.mxu0 0
  %635 = vmatprep.subr.bf16.mxu0 0
  %636 = vmatpush1.bf16.msra.mxu0 0
  %637 = vmatprep.subr.bf16.mxu0 0
  %638 = vmatpush1.bf16.msra.mxu0 0
  %639 = vmatprep.subr.bf16.mxu0 0
  %640 = vmatpush1.bf16.msra.mxu0 0
  %641 = vmatprep.subr.bf16.mxu0 0
  %642 = vmatpush1.bf16.msra.mxu0 0
  %643 = vmatprep.subr.bf16.mxu0 0
  %644 = vmatpush1.bf16.msra.mxu0 0
  %645 = vmatprep.subr.bf16.mxu0 0
  %646 = vmatpush1.bf16.msra.mxu0 0
  %647 = vmatprep.subr.bf16.mxu0 0
  %648 = vmatpush1.bf16.msra.mxu0 0
  %649 = vmatprep.subr.bf16.mxu0 0
  %650 = vmatpush1.bf16.msra.mxu0 0
  %651 = vmatprep.mubr.bf16.mxu0 0
  %652 = vmatmul.mubr.bf16.gmra.mrb[0].mxu0 %v617
  %v653 = vpop.f32.mrb[0].mxu0
  %v654 = vadd.f32 0.0, %v653
  %v655 = vpop.f32.mrb[0].mxu0
  %v656 = vpop.f32.mrb[0].mxu0
  %v657 = vadd.f32 0.0, %v656
  %v658 = vpop.f32.mrb[0].mxu0
  %659 = vdwg.mxu0
  %v662 = vunpack.c.l.b16 %v607
  %v663 = vunpack.c.l.b16 %v608
  %v664 = vpack.c.b16 %v663, %v662
  %v666 = vsel %vm236, %v664, 0
  %668 = vmatprep.subr.bf16.mxu0 0
  %669 = vmatpush1.bf16.msra.mxu0 %v550
  %670 = vmatprep.subr.bf16.mxu0 0
  %671 = vmatpush1.bf16.msra.mxu0 %v551
  %672 = vmatprep.subr.bf16.mxu0 0
  %673 = vmatpush1.bf16.msra.mxu0 %v552
  %674 = vmatprep.subr.bf16.mxu0 0
  %675 = vmatpush1.bf16.msra.mxu0 %v553
  %676 = vmatprep.subr.bf16.mxu0 0
  %677 = vmatpush1.bf16.msra.mxu0 %v554
  %678 = vmatprep.subr.bf16.mxu0 0
  %679 = vmatpush1.bf16.msra.mxu0 0
  %680 = vmatprep.subr.bf16.mxu0 0
  %681 = vmatpush1.bf16.msra.mxu0 0
  %682 = vmatprep.subr.bf16.mxu0 0
  %683 = vmatpush1.bf16.msra.mxu0 0
  %684 = vmatprep.subr.bf16.mxu0 0
  %685 = vmatpush1.bf16.msra.mxu0 0
  %686 = vmatprep.subr.bf16.mxu0 0
  %687 = vmatpush1.bf16.msra.mxu0 0
  %688 = vmatprep.subr.bf16.mxu0 0
  %689 = vmatpush1.bf16.msra.mxu0 0
  %690 = vmatprep.subr.bf16.mxu0 0
  %691 = vmatpush1.bf16.msra.mxu0 0
  %692 = vmatprep.subr.bf16.mxu0 0
  %693 = vmatpush1.bf16.msra.mxu0 0
  %694 = vmatprep.subr.bf16.mxu0 0
  %695 = vmatpush1.bf16.msra.mxu0 0
  %696 = vmatprep.subr.bf16.mxu0 0
  %697 = vmatpush1.bf16.msra.mxu0 0
  %698 = vmatprep.subr.bf16.mxu0 0
  %699 = vmatpush1.bf16.msra.mxu0 0
  %700 = vmatprep.mubr.bf16.mxu0 0
  %701 = vmatmul.mubr.bf16.gmra.mrb[0].mxu0 %v666
  %v702 = vpop.f32.mrb[0].mxu0
  %v703 = vadd.f32 %v654, %v702
  %v704 = vpop.f32.mrb[0].mxu0
  %v705 = vpop.f32.mrb[0].mxu0
  %v706 = vadd.f32 %v657, %v705
  %v707 = vpop.f32.mrb[0].mxu0
  %708 = vdwg.mxu0
  %v709 = vld [vmem:[%s9] sm:$0xff]
  %v710 = vld [vmem:[%s9 + $0x8] sm:$0xff]
  %v711 = vld [vmem:[%s10] sm:$0xff]
  %v712 = vld [vmem:[%s10 + $0x8] sm:$0xff]
  %713 = vmatprep.subr.mxu0 0.0
  %714 = vmatpush1.msra.mxu0 1.0
  %715 = vmatprep.subr.mxu0 0.0
  %716 = vmatpush1.msra.mxu0 1.0
  %717 = vmatprep.subr.mxu0 0.0
  %718 = vmatpush1.msra.mxu0 1.0
  %719 = vmatprep.subr.mxu0 0.0
  %720 = vmatpush1.msra.mxu0 1.0
  %721 = vmatprep.subr.mxu0 0.0
  %722 = vmatpush1.msra.mxu0 1.0
  %723 = vmatprep.subr.mxu0 0.0
  %724 = vmatpush1.msra.mxu0 1.0
  %725 = vmatprep.subr.mxu0 0.0
  %726 = vmatpush1.msra.mxu0 1.0
  %727 = vmatprep.subr.mxu0 0.0
  %728 = vmatpush1.msra.mxu0 1.0
  %729 = vmatprep.subr.mxu0 0.0
  %730 = vmatpush1.msra.mxu0 1.0
  %731 = vmatprep.subr.mxu0 0.0
  %732 = vmatpush1.msra.mxu0 1.0
  %733 = vmatprep.subr.mxu0 0.0
  %734 = vmatpush1.msra.mxu0 1.0
  %735 = vmatprep.subr.mxu0 0.0
  %736 = vmatpush1.msra.mxu0 1.0
  %737 = vmatprep.subr.mxu0 0.0
  %738 = vmatpush1.msra.mxu0 1.0
  %739 = vmatprep.subr.mxu0 0.0
  %740 = vmatpush1.msra.mxu0 1.0
  %741 = vmatprep.subr.mxu0 0.0
  %742 = vmatpush1.msra.mxu0 1.0
  %743 = vmatprep.subr.mxu0 0.0
  %744 = vmatpush1.msra.mxu0 1.0
  %745 = vmatprep.subr.mxu0 0.0
  %746 = vmatpush1.msra.mxu0 0.0
  %747 = vmatprep.subr.mxu0 0.0
  %748 = vmatpush1.msra.mxu0 0.0
  %749 = vmatprep.subr.mxu0 0.0
  %750 = vmatpush1.msra.mxu0 0.0
  %751 = vmatprep.subr.mxu0 0.0
  %752 = vmatpush1.msra.mxu0 0.0
  %753 = vmatprep.subr.mxu0 0.0
  %754 = vmatpush1.msra.mxu0 0.0
  %755 = vmatprep.subr.mxu0 0.0
  %756 = vmatpush1.msra.mxu0 0.0
  %757 = vmatprep.subr.mxu0 0.0
  %758 = vmatpush1.msra.mxu0 0.0
  %759 = vmatprep.subr.mxu0 0.0
  %760 = vmatpush1.msra.mxu0 0.0
  %761 = vmatprep.subr.mxu0 0.0
  %762 = vmatpush1.msra.mxu0 0.0
  %763 = vmatprep.subr.mxu0 0.0
  %764 = vmatpush1.msra.mxu0 0.0
  %765 = vmatprep.subr.mxu0 0.0
  %766 = vmatpush1.msra.mxu0 0.0
  %767 = vmatprep.subr.mxu0 0.0
  %768 = vmatpush1.msra.mxu0 0.0
  %769 = vmatprep.subr.mxu0 0.0
  %770 = vmatpush1.msra.mxu0 0.0
  %771 = vmatprep.subr.mxu0 0.0
  %772 = vmatpush1.msra.mxu0 0.0
  %773 = vmatprep.subr.mxu0 0.0
  %774 = vmatpush1.msra.mxu0 0.0
  %775 = vmatprep.subr.mxu0 0.0
  %776 = vmatpush1.msra.mxu0 0.0
  %777 = vmatprep.mubr.f32.mxu0 0.0
  %778 = vmatmul.mubr.f32.gmra.mrb[0].mxu0 %v703
  %v779 = vpop.f32.mrb[0].mxu0
  %v780 = vadd.f32 0.0, %v779
  %v781 = vpop.f32.mrb[0].mxu0
  %782 = vmatprep.mubr.f32.mxu0 0.0
  %783 = vmatmul.mubr.f32.gmra.mrb[0].mxu0 %v706
  %v784 = vpop.f32.mrb[0].mxu0
  %v785 = vadd.f32 0.0, %v784
  %v786 = vpop.f32.mrb[0].mxu0
  %787 = vdwg.mxu0
  %v788 = vmul.f32 %v780, 0.0078125
  %v789 = vmul.f32 %v785, 0.0078125
  %791 = vset.pattern.permute.xlu0 0
  %792 = vperm.xlu0 %791, %v788
  %v793 = vpop.permute.xlu0 %792
  %796 = vset.pattern.permute.xlu0 0
  %797 = vperm.xlu0 %796, %v789
  %v798 = vpop.permute.xlu0 %797
  %v800 = vsub.f32 %v703, %v793
  %v801 = vsub.f32 %v706, %v798
  %v802 = vmul.f32 %v800, %v800
  %v803 = vmul.f32 %v801, %v801
  %804 = vmatprep.subr.mxu0 0.0
  %805 = vmatpush1.msra.mxu0 1.0
  %806 = vmatprep.subr.mxu0 0.0
  %807 = vmatpush1.msra.mxu0 1.0
  %808 = vmatprep.subr.mxu0 0.0
  %809 = vmatpush1.msra.mxu0 1.0
  %810 = vmatprep.subr.mxu0 0.0
  %811 = vmatpush1.msra.mxu0 1.0
  %812 = vmatprep.subr.mxu0 0.0
  %813 = vmatpush1.msra.mxu0 1.0
  %814 = vmatprep.subr.mxu0 0.0
  %815 = vmatpush1.msra.mxu0 1.0
  %816 = vmatprep.subr.mxu0 0.0
  %817 = vmatpush1.msra.mxu0 1.0
  %818 = vmatprep.subr.mxu0 0.0
  %819 = vmatpush1.msra.mxu0 1.0
  %820 = vmatprep.subr.mxu0 0.0
  %821 = vmatpush1.msra.mxu0 1.0
  %822 = vmatprep.subr.mxu0 0.0
  %823 = vmatpush1.msra.mxu0 1.0
  %824 = vmatprep.subr.mxu0 0.0
  %825 = vmatpush1.msra.mxu0 1.0
  %826 = vmatprep.subr.mxu0 0.0
  %827 = vmatpush1.msra.mxu0 1.0
  %828 = vmatprep.subr.mxu0 0.0
  %829 = vmatpush1.msra.mxu0 1.0
  %830 = vmatprep.subr.mxu0 0.0
  %831 = vmatpush1.msra.mxu0 1.0
  %832 = vmatprep.subr.mxu0 0.0
  %833 = vmatpush1.msra.mxu0 1.0
  %834 = vmatprep.subr.mxu0 0.0
  %835 = vmatpush1.msra.mxu0 1.0
  %836 = vmatprep.subr.mxu0 0.0
  %837 = vmatpush1.msra.mxu0 0.0
  %838 = vmatprep.subr.mxu0 0.0
  %839 = vmatpush1.msra.mxu0 0.0
  %840 = vmatprep.subr.mxu0 0.0
  %841 = vmatpush1.msra.mxu0 0.0
  %842 = vmatprep.subr.mxu0 0.0
  %843 = vmatpush1.msra.mxu0 0.0
  %844 = vmatprep.subr.mxu0 0.0
  %845 = vmatpush1.msra.mxu0 0.0
  %846 = vmatprep.subr.mxu0 0.0
  %847 = vmatpush1.msra.mxu0 0.0
  %848 = vmatprep.subr.mxu0 0.0
  %849 = vmatpush1.msra.mxu0 0.0
  %850 = vmatprep.subr.mxu0 0.0
  %851 = vmatpush1.msra.mxu0 0.0
  %852 = vmatprep.subr.mxu0 0.0
  %853 = vmatpush1.msra.mxu0 0.0
  %854 = vmatprep.subr.mxu0 0.0
  %855 = vmatpush1.msra.mxu0 0.0
  %856 = vmatprep.subr.mxu0 0.0
  %857 = vmatpush1.msra.mxu0 0.0
  %858 = vmatprep.subr.mxu0 0.0
  %859 = vmatpush1.msra.mxu0 0.0
  %860 = vmatprep.subr.mxu0 0.0
  %861 = vmatpush1.msra.mxu0 0.0
  %862 = vmatprep.subr.mxu0 0.0
  %863 = vmatpush1.msra.mxu0 0.0
  %864 = vmatprep.subr.mxu0 0.0
  %865 = vmatpush1.msra.mxu0 0.0
  %866 = vmatprep.subr.mxu0 0.0
  %867 = vmatpush1.msra.mxu0 0.0
  %868 = vmatprep.mubr.f32.mxu0 0.0
  %869 = vmatmul.mubr.f32.gmra.mrb[0].mxu0 %v802
  %v870 = vpop.f32.mrb[0].mxu0
  %v871 = vadd.f32 0.0, %v870
  %v872 = vpop.f32.mrb[0].mxu0
  %873 = vmatprep.mubr.f32.mxu0 0.0
  %874 = vmatmul.mubr.f32.gmra.mrb[0].mxu0 %v803
  %v875 = vpop.f32.mrb[0].mxu0
  %v876 = vadd.f32 0.0, %v875
  %v877 = vpop.f32.mrb[0].mxu0
  %878 = vdwg.mxu0
  %v879 = vmul.f32 %v871, 0.0078125
  %v880 = vmul.f32 %v876, 0.0078125
  %v881 = vadd.f32 %v879, 1e-05
  %v882 = vadd.f32 %v880, 1e-05
  %v883 = vrsqrt.pop %v881
  %v884 = vrsqrt.pop %v882
  %v885 = vmul.f32 %v883, %v709
  %v886 = vmul.f32 %v884, %v710
  %888 = vset.pattern.permute.xlu0 0
  %889 = vperm.xlu0 %888, %v885
  %v890 = vpop.permute.xlu0 %889
  %893 = vset.pattern.permute.xlu0 0
  %894 = vperm.xlu0 %893, %v886
  %v895 = vpop.permute.xlu0 %894
  %v897 = vmul.f32 %v800, %v890
  %v898 = vmul.f32 %v801, %v895
  %900 = vset.pattern.permute.xlu0 0
  %901 = vperm.xlu0 %900, %v711
  %v902 = vpop.permute.xlu0 %901
  %905 = vset.pattern.permute.xlu0 0
  %906 = vperm.xlu0 %905, %v712
  %v907 = vpop.permute.xlu0 %906
  %v909 = vadd.f32 %v897, %v902
  %v910 = vadd.f32 %v898, %v907
  %v911 = vld [vmem:[%s11] sm:$0xf]
  %v912 = vld [vmem:[%s11 + $0x4] sm:$0xf]
  %v913 = vld [vmem:[%s12] sm:$0xf]
  %v914 = vld [vmem:[%s12 + $0x4] sm:$0xf]
  %v917 = vunpack.c.l.b16 %v913
  %v918 = vunpack.c.l.b16 %v914
  %v919 = vpack.c.b16 %v918, %v917
  %v921 = vsel %vm186, %v919, 0
  %923 = vmatprep.subr.bf16.mxu0 0
  %924 = vmatpush1.bf16.msra.mxu0 %v173
  %925 = vmatprep.subr.bf16.mxu0 0
  %926 = vmatpush1.bf16.msra.mxu0 %v174
  %927 = vmatprep.subr.bf16.mxu0 0
  %928 = vmatpush1.bf16.msra.mxu0 %v175
  %929 = vmatprep.subr.bf16.mxu0 0
  %930 = vmatpush1.bf16.msra.mxu0 %v176
  %931 = vmatprep.subr.bf16.mxu0 0
  %932 = vmatpush1.bf16.msra.mxu0 0
  %933 = vmatprep.subr.bf16.mxu0 0
  %934 = vmatpush1.bf16.msra.mxu0 0
  %935 = vmatprep.subr.bf16.mxu0 0
  %936 = vmatpush1.bf16.msra.mxu0 0
  %937 = vmatprep.subr.bf16.mxu0 0
  %938 = vmatpush1.bf16.msra.mxu0 0
  %939 = vmatprep.subr.bf16.mxu0 0
  %940 = vmatpush1.bf16.msra.mxu0 0
  %941 = vmatprep.subr.bf16.mxu0 0
  %942 = vmatpush1.bf16.msra.mxu0 0
  %943 = vmatprep.subr.bf16.mxu0 0
  %944 = vmatpush1.bf16.msra.mxu0 0
  %945 = vmatprep.subr.bf16.mxu0 0
  %946 = vmatpush1.bf16.msra.mxu0 0
  %947 = vmatprep.subr.bf16.mxu0 0
  %948 = vmatpush1.bf16.msra.mxu0 0
  %949 = vmatprep.subr.bf16.mxu0 0
  %950 = vmatpush1.bf16.msra.mxu0 0
  %951 = vmatprep.subr.bf16.mxu0 0
  %952 = vmatpush1.bf16.msra.mxu0 0
  %953 = vmatprep.subr.bf16.mxu0 0
  %954 = vmatpush1.bf16.msra.mxu0 0
  %955 = vmatprep.mubr.bf16.mxu0 0
  %956 = vmatmul.mubr.bf16.gmra.mrb[0].mxu0 %v921
  %v957 = vpop.f32.mrb[0].mxu0
  %v958 = vadd.f32 0.0, %v957
  %v959 = vpop.f32.mrb[0].mxu0
  %v960 = vpop.f32.mrb[0].mxu0
  %v961 = vadd.f32 0.0, %v960
  %v962 = vpop.f32.mrb[0].mxu0
  %963 = vdwg.mxu0
  %v966 = vunpack.c.l.b16 %v911
  %v967 = vunpack.c.l.b16 %v912
  %v968 = vpack.c.b16 %v967, %v966
  %v970 = vsel %vm236, %v968, 0
  %972 = vmatprep.subr.bf16.mxu0 0
  %973 = vmatpush1.bf16.msra.mxu0 %v132
  %974 = vmatprep.subr.bf16.mxu0 0
  %975 = vmatpush1.bf16.msra.mxu0 %v133
  %976 = vmatprep.subr.bf16.mxu0 0
  %977 = vmatpush1.bf16.msra.mxu0 %v134
  %978 = vmatprep.subr.bf16.mxu0 0
  %979 = vmatpush1.bf16.msra.mxu0 %v135
  %980 = vmatprep.subr.bf16.mxu0 0
  %981 = vmatpush1.bf16.msra.mxu0 %v136
  %982 = vmatprep.subr.bf16.mxu0 0
  %983 = vmatpush1.bf16.msra.mxu0 0
  %984 = vmatprep.subr.bf16.mxu0 0
  %985 = vmatpush1.bf16.msra.mxu0 0
  %986 = vmatprep.subr.bf16.mxu0 0
  %987 = vmatpush1.bf16.msra.mxu0 0
  %988 = vmatprep.subr.bf16.mxu0 0
  %989 = vmatpush1.bf16.msra.mxu0 0
  %990 = vmatprep.subr.bf16.mxu0 0
  %991 = vmatpush1.bf16.msra.mxu0 0
  %992 = vmatprep.subr.bf16.mxu0 0
  %993 = vmatpush1.bf16.msra.mxu0 0
  %994 = vmatprep.subr.bf16.mxu0 0
  %995 = vmatpush1.bf16.msra.mxu0 0
  %996 = vmatprep.subr.bf16.mxu0 0
  %997 = vmatpush1.bf16.msra.mxu0 0
  %998 = vmatprep.subr.bf16.mxu0 0
  %999 = vmatpush1.bf16.msra.mxu0 0
  %1000 = vmatprep.subr.bf16.mxu0 0
  %1001 = vmatpush1.bf16.msra.mxu0 0
  %1002 = vmatprep.subr.bf16.mxu0 0
  %1003 = vmatpush1.bf16.msra.mxu0 0
  %1004 = vmatprep.mubr.bf16.mxu0 0
  %1005 = vmatmul.mubr.bf16.gmra.mrb[0].mxu0 %v970
  %v1006 = vpop.f32.mrb[0].mxu0
  %v1007 = vadd.f32 %v958, %v1006
  %v1008 = vpop.f32.mrb[0].mxu0
  %v1009 = vpop.f32.mrb[0].mxu0
  %v1010 = vadd.f32 %v961, %v1009
  %v1011 = vpop.f32.mrb[0].mxu0
  %1012 = vdwg.mxu0
  %v1013 = vld [vmem:[%s13] sm:$0xff]
  %v1014 = vld [vmem:[%s13 + $0x8] sm:$0xff]
  %v1015 = vld [vmem:[%s14] sm:$0xff]
  %v1016 = vld [vmem:[%s14 + $0x8] sm:$0xff]
  %1017 = vmatprep.subr.mxu0 0.0
  %1018 = vmatpush1.msra.mxu0 1.0
  %1019 = vmatprep.subr.mxu0 0.0
  %1020 = vmatpush1.msra.mxu0 1.0
  %1021 = vmatprep.subr.mxu0 0.0
  %1022 = vmatpush1.msra.mxu0 1.0
  %1023 = vmatprep.subr.mxu0 0.0
  %1024 = vmatpush1.msra.mxu0 1.0
  %1025 = vmatprep.subr.mxu0 0.0
  %1026 = vmatpush1.msra.mxu0 1.0
  %1027 = vmatprep.subr.mxu0 0.0
  %1028 = vmatpush1.msra.mxu0 1.0
  %1029 = vmatprep.subr.mxu0 0.0
  %1030 = vmatpush1.msra.mxu0 1.0
  %1031 = vmatprep.subr.mxu0 0.0
  %1032 = vmatpush1.msra.mxu0 1.0
  %1033 = vmatprep.subr.mxu0 0.0
  %1034 = vmatpush1.msra.mxu0 1.0
  %1035 = vmatprep.subr.mxu0 0.0
  %1036 = vmatpush1.msra.mxu0 1.0
  %1037 = vmatprep.subr.mxu0 0.0
  %1038 = vmatpush1.msra.mxu0 1.0
  %1039 = vmatprep.subr.mxu0 0.0
  %1040 = vmatpush1.msra.mxu0 1.0
  %1041 = vmatprep.subr.mxu0 0.0
  %1042 = vmatpush1.msra.mxu0 1.0
  %1043 = vmatprep.subr.mxu0 0.0
  %1044 = vmatpush1.msra.mxu0 1.0
  %1045 = vmatprep.subr.mxu0 0.0
  %1046 = vmatpush1.msra.mxu0 1.0
  %1047 = vmatprep.subr.mxu0 0.0
  %1048 = vmatpush1.msra.mxu0 1.0
  %1049 = vmatprep.subr.mxu0 0.0
  %1050 = vmatpush1.msra.mxu0 0.0
  %1051 = vmatprep.subr.mxu0 0.0
  %1052 = vmatpush1.msra.mxu0 0.0
  %1053 = vmatprep.subr.mxu0 0.0
  %1054 = vmatpush1.msra.mxu0 0.0
  %1055 = vmatprep.subr.mxu0 0.0
  %1056 = vmatpush1.msra.mxu0 0.0
  %1057 = vmatprep.subr.mxu0 0.0
  %1058 = vmatpush1.msra.mxu0 0.0
  %1059 = vmatprep.subr.mxu0 0.0
  %1060 = vmatpush1.msra.mxu0 0.0
  %1061 = vmatprep.subr.mxu0 0.0
  %1062 = vmatpush1.msra.mxu0 0.0
  %1063 = vmatprep.subr.mxu0 0.0
  %1064 = vmatpush1.msra.mxu0 0.0
  %1065 = vmatprep.subr.mxu0 0.0
  %1066 = vmatpush1.msra.mxu0 0.0
  %1067 = vmatprep.subr.mxu0 0.0
  %1068 = vmatpush1.msra.mxu0 0.0
  %1069 = vmatprep.subr.mxu0 0.0
  %1070 = vmatpush1.msra.mxu0 0.0
  %1071 = vmatprep.subr.mxu0 0.0
  %1072 = vmatpush1.msra.mxu0 0.0
  %1073 = vmatprep.subr.mxu0 0.0
  %1074 = vmatpush1.msra.mxu0 0.0
  %1075 = vmatprep.subr.mxu0 0.0
  %1076 = vmatpush1.msra.mxu0 0.0
  %1077 = vmatprep.subr.mxu0 0.0
  %1078 = vmatpush1.msra.mxu0 0.0
  %1079 = vmatprep.subr.mxu0 0.0
  %1080 = vmatpush1.msra.mxu0 0.0
  %1081 = vmatprep.mubr.f32.mxu0 0.0
  %1082 = vmatmul.mubr.f32.gmra.mrb[0].mxu0 %v1007
  %v1083 = vpop.f32.mrb[0].mxu0
  %v1084 = vadd.f32 0.0, %v1083
  %v1085 = vpop.f32.mrb[0].mxu0
  %1086 = vmatprep.mubr.f32.mxu0 0.0
  %1087 = vmatmul.mubr.f32.gmra.mrb[0].mxu0 %v1010
  %v1088 = vpop.f32.mrb[0].mxu0
  %v1089 = vadd.f32 0.0, %v1088
  %v1090 = vpop.f32.mrb[0].mxu0
  %1091 = vdwg.mxu0
  %v1092 = vmul.f32 %v1084, 0.0078125
  %v1093 = vmul.f32 %v1089, 0.0078125
  %1095 = vset.pattern.permute.xlu0 0
  %1096 = vperm.xlu0 %1095, %v1092
  %v1097 = vpop.permute.xlu0 %1096
  %1100 = vset.pattern.permute.xlu0 0
  %1101 = vperm.xlu0 %1100, %v1093
  %v1102 = vpop.permute.xlu0 %1101
  %v1104 = vsub.f32 %v1007, %v1097
  %v1105 = vsub.f32 %v1010, %v1102
  %v1106 = vmul.f32 %v1104, %v1104
  %v1107 = vmul.f32 %v1105, %v1105
  %1108 = vmatprep.subr.mxu0 0.0
  %1109 = vmatpush1.msra.mxu0 1.0
  %1110 = vmatprep.subr.mxu0 0.0
  %1111 = vmatpush1.msra.mxu0 1.0
  %1112 = vmatprep.subr.mxu0 0.0
  %1113 = vmatpush1.msra.mxu0 1.0
  %1114 = vmatprep.subr.mxu0 0.0
  %1115 = vmatpush1.msra.mxu0 1.0
  %1116 = vmatprep.subr.mxu0 0.0
  %1117 = vmatpush1.msra.mxu0 1.0
  %1118 = vmatprep.subr.mxu0 0.0
  %1119 = vmatpush1.msra.mxu0 1.0
  %1120 = vmatprep.subr.mxu0 0.0
  %1121 = vmatpush1.msra.mxu0 1.0
  %1122 = vmatprep.subr.mxu0 0.0
  %1123 = vmatpush1.msra.mxu0 1.0
  %1124 = vmatprep.subr.mxu0 0.0
  %1125 = vmatpush1.msra.mxu0 1.0
  %1126 = vmatprep.subr.mxu0 0.0
  %1127 = vmatpush1.msra.mxu0 1.0
  %1128 = vmatprep.subr.mxu0 0.0
  %1129 = vmatpush1.msra.mxu0 1.0
  %1130 = vmatprep.subr.mxu0 0.0
  %1131 = vmatpush1.msra.mxu0 1.0
  %1132 = vmatprep.subr.mxu0 0.0
  %1133 = vmatpush1.msra.mxu0 1.0
  %1134 = vmatprep.subr.mxu0 0.0
  %1135 = vmatpush1.msra.mxu0 1.0
  %1136 = vmatprep.subr.mxu0 0.0
  %1137 = vmatpush1.msra.mxu0 1.0
  %1138 = vmatprep.subr.mxu0 0.0
  %1139 = vmatpush1.msra.mxu0 1.0
  %1140 = vmatprep.subr.mxu0 0.0
  %1141 = vmatpush1.msra.mxu0 0.0
  %1142 = vmatprep.subr.mxu0 0.0
  %1143 = vmatpush1.msra.mxu0 0.0
  %1144 = vmatprep.subr.mxu0 0.0
  %1145 = vmatpush1.msra.mxu0 0.0
  %1146 = vmatprep.subr.mxu0 0.0
  %1147 = vmatpush1.msra.mxu0 0.0
  %1148 = vmatprep.subr.mxu0 0.0
  %1149 = vmatpush1.msra.mxu0 0.0
  %1150 = vmatprep.subr.mxu0 0.0
  %1151 = vmatpush1.msra.mxu0 0.0
  %1152 = vmatprep.subr.mxu0 0.0
  %1153 = vmatpush1.msra.mxu0 0.0
  %1154 = vmatprep.subr.mxu0 0.0
  %1155 = vmatpush1.msra.mxu0 0.0
  %1156 = vmatprep.subr.mxu0 0.0
  %1157 = vmatpush1.msra.mxu0 0.0
  %1158 = vmatprep.subr.mxu0 0.0
  %1159 = vmatpush1.msra.mxu0 0.0
  %1160 = vmatprep.subr.mxu0 0.0
  %1161 = vmatpush1.msra.mxu0 0.0
  %1162 = vmatprep.subr.mxu0 0.0
  %1163 = vmatpush1.msra.mxu0 0.0
  %1164 = vmatprep.subr.mxu0 0.0
  %1165 = vmatpush1.msra.mxu0 0.0
  %1166 = vmatprep.subr.mxu0 0.0
  %1167 = vmatpush1.msra.mxu0 0.0
  %1168 = vmatprep.subr.mxu0 0.0
  %1169 = vmatpush1.msra.mxu0 0.0
  %1170 = vmatprep.subr.mxu0 0.0
  %1171 = vmatpush1.msra.mxu0 0.0
  %1172 = vmatprep.mubr.f32.mxu0 0.0
  %1173 = vmatmul.mubr.f32.gmra.mrb[0].mxu0 %v1106
  %v1174 = vpop.f32.mrb[0].mxu0
  %v1175 = vadd.f32 0.0, %v1174
  %v1176 = vpop.f32.mrb[0].mxu0
  %1177 = vmatprep.mubr.f32.mxu0 0.0
  %1178 = vmatmul.mubr.f32.gmra.mrb[0].mxu0 %v1107
  %v1179 = vpop.f32.mrb[0].mxu0
  %v1180 = vadd.f32 0.0, %v1179
  %v1181 = vpop.f32.mrb[0].mxu0
  %1182 = vdwg.mxu0
  %v1183 = vmul.f32 %v1175, 0.0078125
  %v1184 = vmul.f32 %v1180, 0.0078125
  %v1185 = vadd.f32 %v1183, 1e-05
  %v1186 = vadd.f32 %v1184, 1e-05
  %v1187 = vrsqrt.pop %v1185
  %v1188 = vrsqrt.pop %v1186
  %v1189 = vmul.f32 %v1187, %v1013
  %v1190 = vmul.f32 %v1188, %v1014
  %1192 = vset.pattern.permute.xlu0 0
  %1193 = vperm.xlu0 %1192, %v1189
  %v1194 = vpop.permute.xlu0 %1193
  %1197 = vset.pattern.permute.xlu0 0
  %1198 = vperm.xlu0 %1197, %v1190
  %v1199 = vpop.permute.xlu0 %1198
  %v1201 = vmul.f32 %v1104, %v1194
  %v1202 = vmul.f32 %v1105, %v1199
  %1204 = vset.pattern.permute.xlu0 0
  %1205 = vperm.xlu0 %1204, %v1015
  %v1206 = vpop.permute.xlu0 %1205
  %1209 = vset.pattern.permute.xlu0 0
  %1210 = vperm.xlu0 %1209, %v1016
  %v1211 = vpop.permute.xlu0 %1210
  %v1213 = vadd.f32 %v1201, %v1206
  %v1214 = vadd.f32 %v1202, %v1211
  %v1215 = vadd.f32 %v909, %v1213
  %v1216 = vadd.f32 %v910, %v1214
  %v1217 = vmax.f32 %v1215, 0.0
  %v1218 = vmax.f32 %v1216, 0.0
  %v1219 = vpack.c.bf16 %v1218, %v1217
  %v1221 = vunpack.c.l.b16 %v1219
  %v1222 = vunpack.c.h.b16 %v1219
  %v1223 = vpack.c.b16 %v1221, %v1221
  %v1224 = vpack.c.b16 %v1222, %v1222
  %1227 = vst [vmem:[%s15] sm:$0xf] %v1223
  %1228 = vst [vmem:[%s15 + $0x4] sm:$0xf] %v1224
  // Predicated region
  $region62: #{_lambda_.4} parent=0 // pred_check
    _
  $region63: #{_lambda_.4} parent=0 // pred_check_branch
    %1230 = sbr.rel (0) target = $region65
  $region64: #{_lambda_.4} parent=0 // pred_region
    _
  $region65: #{_lambda_.4} parent=0 // pred_fallthru
    _
  // Predicated region
  $region66: #{_lambda_.4} parent=0 // pred_check
    _
  $region67: #{_lambda_.4} parent=0 // pred_check_branch
    %1232 = sbr.rel (0) target = $region69
  $region68: #{_lambda_.4} parent=0 // pred_region
    _
  $region69: #{_lambda_.4} parent=0 // pred_fallthru
    _

// kernel: _lambda_.3
$region0: #{_lambda_.3}
  #allocation0 [shape = 'u32[]', space=smem, size = 0x4, offset = 0x4, fixed_abs, tag = 'smem constant byte address 0x4 - core index']
  #allocation1 [shape = 'u32[144,128]{1,0:T(1,128)}', space=vmem, size = 0x12000, scoped, tag = 'internal scratch']
  %s0 = inlined_call_operand.vmem [shape: bf16[8,512], index: 0, kind: input, shape index: {}]
  %s1 = inlined_call_operand.vmem [shape: f32[9,1,512], index: 1, kind: input, shape index: {}]
  %s2 = inlined_call_operand.vmem [shape: bf16[8,72], index: 2, kind: input, shape index: {}]
  %s3 = inlined_call_operand.vmem [shape: f32[8,1], index: 3, kind: input, shape index: {}, may-alias: {3,6,9}]
  %s4 = inlined_call_operand.vmem [shape: f32[8,1], index: 4, kind: input, shape index: {}, may-alias: {4,7,10}]
  %s5 = inlined_call_operand.vmem [shape: bf16[8,72], index: 5, kind: input, shape index: {}]
  %s6 = inlined_call_operand.vmem [shape: f32[8,1], index: 6, kind: input, shape index: {}, may-alias: {3,6,9}]
  %s7 = inlined_call_operand.vmem [shape: f32[8,1], index: 7, kind: input, shape index: {}, may-alias: {4,7,10}]
  %s8 = inlined_call_operand.vmem [shape: bf16[8,72], index: 8, kind: input, shape index: {}]
  %s9 = inlined_call_operand.vmem [shape: f32[8,1], index: 9, kind: input, shape index: {}, may-alias: {3,6,9}]
  %s10 = inlined_call_operand.vmem [shape: f32[8,1], index: 10, kind: input, shape index: {}, may-alias: {4,7,10}]
  %s11 = inlined_call_operand.vmem [shape: bf16[16,72], index: 11, kind: input, shape index: {}]
  %s12 = inlined_call_operand.vmem [shape: f32[16,1], index: 12, kind: input, shape index: {}, may-alias: {12,16,19}]
  %s13 = inlined_call_operand.vmem [shape: f32[16,1], index: 13, kind: input, shape index: {}, may-alias: {13,17,20}]
  %s14 = inlined_call_operand.vmem [shape: bf16[16,80], index: 14, kind: input, shape index: {}]
  %s15 = inlined_call_operand.vmem [shape: bf16[16,64], index: 15, kind: input, shape index: {}]
  %s16 = inlined_call_operand.vmem [shape: f32[16,1], index: 16, kind: input, shape index: {}, may-alias: {12,16,19}]
  %s17 = inlined_call_operand.vmem [shape: f32[16,1], index: 17, kind: input, shape index: {}, may-alias: {13,17,20}]
  %s18 = inlined_call_operand.vmem [shape: bf16[16,72], index: 18, kind: input, shape index: {}]
  %s19 = inlined_call_operand.vmem [shape: f32[16,1], index: 19, kind: input, shape index: {}, may-alias: {12,16,19}]
  %s20 = inlined_call_operand.vmem [shape: f32[16,1], index: 20, kind: input, shape index: {}, may-alias: {13,17,20}]
  %s21 = inlined_call_operand.vmem [shape: bf16[16,512], index: 21, kind: output, shape index: {}]
  %s22 = sld [smem:[#allocation0]]
  $region94: #{_lambda_.3} parent=0
    _
  %s24 = ssub.s32 1, %s22
  %s25 = scalar_select 0, %s24, %s22
  // Predicated region
  $region2: #{_lambda_.3} parent=0 // pred_check
    _
  $region3: #{_lambda_.3} parent=0 // pred_check_branch
    %27 = sbr.rel (0) target = $region5
  $region4: #{_lambda_.3} parent=0 // pred_region
    _
  $region5: #{_lambda_.3} parent=0 // pred_fallthru
    _
  // Predicated region
  $region6: #{_lambda_.3} parent=0 // pred_check
    _
  $region7: #{_lambda_.3} parent=0 // pred_check_branch
    %29 = sbr.rel (0) target = $region9
  $region8: #{_lambda_.3} parent=0 // pred_region
    _
  $region9: #{_lambda_.3} parent=0 // pred_fallthru
    _
  // Predicated region
  $region10: #{_lambda_.3} parent=0 // pred_check
    _
  $region11: #{_lambda_.3} parent=0 // pred_check_branch
    %31 = sbr.rel (0) target = $region13
  $region12: #{_lambda_.3} parent=0 // pred_region
    _
  $region13: #{_lambda_.3} parent=0 // pred_fallthru
    _
  // Predicated region
  $region14: #{_lambda_.3} parent=0 // pred_check
    _
  $region15: #{_lambda_.3} parent=0 // pred_check_branch
    %33 = sbr.rel (0) target = $region17
  $region16: #{_lambda_.3} parent=0 // pred_region
    _
  $region17: #{_lambda_.3} parent=0 // pred_fallthru
    _
  // Predicated region
  $region18: #{_lambda_.3} parent=0 // pred_check
    _
  $region19: #{_lambda_.3} parent=0 // pred_check_branch
    %35 = sbr.rel (0) target = $region21
  $region20: #{_lambda_.3} parent=0 // pred_region
    _
  $region21: #{_lambda_.3} parent=0 // pred_fallthru
    _
  // Predicated region
  $region22: #{_lambda_.3} parent=0 // pred_check
    _
  $region23: #{_lambda_.3} parent=0 // pred_check_branch
    %37 = sbr.rel (0) target = $region25
  $region24: #{_lambda_.3} parent=0 // pred_region
    _
  $region25: #{_lambda_.3} parent=0 // pred_fallthru
    _
  // Predicated region
  $region26: #{_lambda_.3} parent=0 // pred_check
    _
  $region27: #{_lambda_.3} parent=0 // pred_check_branch
    %39 = sbr.rel (0) target = $region29
  $region28: #{_lambda_.3} parent=0 // pred_region
    _
  $region29: #{_lambda_.3} parent=0 // pred_fallthru
    _
  // Predicated region
  $region30: #{_lambda_.3} parent=0 // pred_check
    _
  $region31: #{_lambda_.3} parent=0 // pred_check_branch
    %41 = sbr.rel (0) target = $region33
  $region32: #{_lambda_.3} parent=0 // pred_region
    _
  $region33: #{_lambda_.3} parent=0 // pred_fallthru
    _
  // Predicated region
  $region34: #{_lambda_.3} parent=0 // pred_check
    _
  $region35: #{_lambda_.3} parent=0 // pred_check_branch
    %43 = sbr.rel (0) target = $region37
  $region36: #{_lambda_.3} parent=0 // pred_region
    _
  $region37: #{_lambda_.3} parent=0 // pred_fallthru
    _
  // Predicated region
  $region38: #{_lambda_.3} parent=0 // pred_check
    _
  $region39: #{_lambda_.3} parent=0 // pred_check_branch
    %45 = sbr.rel (0) target = $region41
  $region40: #{_lambda_.3} parent=0 // pred_region
    _
  $region41: #{_lambda_.3} parent=0 // pred_fallthru
    _
  // Predicated region
  $region42: #{_lambda_.3} parent=0 // pred_check
    _
  $region43: #{_lambda_.3} parent=0 // pred_check_branch
    %47 = sbr.rel (0) target = $region45
  $region44: #{_lambda_.3} parent=0 // pred_region
    _
  $region45: #{_lambda_.3} parent=0 // pred_fallthru
    _
  // Predicated region
  $region46: #{_lambda_.3} parent=0 // pred_check
    _
  $region47: #{_lambda_.3} parent=0 // pred_check_branch
    %49 = sbr.rel (0) target = $region49
  $region48: #{_lambda_.3} parent=0 // pred_region
    _
  $region49: #{_lambda_.3} parent=0 // pred_fallthru
    _
  // Predicated region
  $region50: #{_lambda_.3} parent=0 // pred_check
    _
  $region51: #{_lambda_.3} parent=0 // pred_check_branch
    %51 = sbr.rel (0) target = $region53
  $region52: #{_lambda_.3} parent=0 // pred_region
    _
  $region53: #{_lambda_.3} parent=0 // pred_fallthru
    _
  // Predicated region
  $region54: #{_lambda_.3} parent=0 // pred_check
    _
  $region55: #{_lambda_.3} parent=0 // pred_check_branch
    %53 = sbr.rel (0) target = $region57
  $region56: #{_lambda_.3} parent=0 // pred_region
    _
  $region57: #{_lambda_.3} parent=0 // pred_fallthru
    _
  // Predicated region
  $region58: #{_lambda_.3} parent=0 // pred_check
    _
  $region59: #{_lambda_.3} parent=0 // pred_check_branch
    %55 = sbr.rel (0) target = $region61
  $region60: #{_lambda_.3} parent=0 // pred_region
    _
  $region61: #{_lambda_.3} parent=0 // pred_fallthru
    _
  // Predicated region
  $region62: #{_lambda_.3} parent=0 // pred_check
    _
  $region63: #{_lambda_.3} parent=0 // pred_check_branch
    %57 = sbr.rel (0) target = $region65
  $region64: #{_lambda_.3} parent=0 // pred_region
    _
  $region65: #{_lambda_.3} parent=0 // pred_fallthru
    _
  // Predicated region
  $region66: #{_lambda_.3} parent=0 // pred_check
    _
  $region67: #{_lambda_.3} parent=0 // pred_check_branch
    %59 = sbr.rel (0) target = $region69
  $region68: #{_lambda_.3} parent=0 // pred_region
    _
  $region69: #{_lambda_.3} parent=0 // pred_fallthru
    _
  // Predicated region
  $region70: #{_lambda_.3} parent=0 // pred_check
    _
  $region71: #{_lambda_.3} parent=0 // pred_check_branch
    %61 = sbr.rel (0) target = $region73
  $region72: #{_lambda_.3} parent=0 // pred_region
    _
  $region73: #{_lambda_.3} parent=0 // pred_fallthru
    _
  // Predicated region
  $region74: #{_lambda_.3} parent=0 // pred_check
    _
  $region75: #{_lambda_.3} parent=0 // pred_check_branch
    %63 = sbr.rel (0) target = $region77
  $region76: #{_lambda_.3} parent=0 // pred_region
    _
  $region77: #{_lambda_.3} parent=0 // pred_fallthru
    _
  // Predicated region
  $region78: #{_lambda_.3} parent=0 // pred_check
    _
  $region79: #{_lambda_.3} parent=0 // pred_check_branch
    %65 = sbr.rel (0) target = $region81
  $region80: #{_lambda_.3} parent=0 // pred_region
    _
  $region81: #{_lambda_.3} parent=0 // pred_fallthru
    _
  // Predicated region
  $region82: #{_lambda_.3} parent=0 // pred_check
    _
  $region83: #{_lambda_.3} parent=0 // pred_check_branch
    %67 = sbr.rel (0) target = $region85
  $region84: #{_lambda_.3} parent=0 // pred_region
    _
  $region85: #{_lambda_.3} parent=0 // pred_fallthru
    _
  %v69 = vld [vmem:[%s0] sm:$0xff]
  %v70 = vld [vmem:[%s0 + $0x8] sm:$0xff]
  %v71 = vunpack.c.l.bf16 %v69
  %v72 = vunpack.c.h.bf16 %v69
  %v73 = vunpack.c.l.bf16 %v70
  %v74 = vunpack.c.h.bf16 %v70
  %v75 = vld [vmem:[%s1] sm:$0xf]
  %v76 = vld [vmem:[%s1 + $0x4] sm:$0xf]
  %v77 = vld [vmem:[%s1 + $0x8] sm:$0xf]
  %v78 = vld [vmem:[%s1 + $0xc] sm:$0xf]
  %v79 = vld [vmem:[%s1 + $0x10] sm:$0xf]
  %v80 = vld [vmem:[%s1 + $0x14] sm:$0xf]
  %v81 = vld [vmem:[%s1 + $0x18] sm:$0xf]
  %v82 = vld [vmem:[%s1 + $0x1c] sm:$0xf]
  %v83 = vld [vmem:[%s1 + $0x20] sm:$0xf]
  %84 = vrot.lane.b32.xlu0 %v71, 17
  %v85 = vpop.permute.xlu0 %84
  %86 = vrot.lane.b32.xlu0 %v72, 17
  %v87 = vpop.permute.xlu0 %86
  %88 = vrot.lane.b32.xlu0 %v73, 17
  %v89 = vpop.permute.xlu0 %88
  %90 = vrot.lane.b32.xlu0 %v74, 17
  %v91 = vpop.permute.xlu0 %90
  %v92 = vlaneseq
  %v93 = vand.u32 %v92, 127
  %vm94 = vcmp.lt.s32.totalorder %v93, 17
  %v95 = vsel %vm94, %v89, %v91
  %v96 = vsel %vm94, %v87, %v89
  %v97 = vsel %vm94, %v85, %v87
  %v98 = vsel %vm94, %v91, %v85
  %v100 = vlaneseq
  %v101 = vshrl.u32 %v100, 7
  %v102 = vsub.s32 0, %v101
  %v103 = vrot.slane %v75, %v102
  %v104 = vlaneseq
  %v105 = vshrl.u32 %v104, 7
  %v106 = vsub.s32 1, %v105
  %v107 = vrot.slane %v75, %v106
  %v108 = vlaneseq
  %v109 = vshrl.u32 %v108, 7
  %v110 = vsub.s32 2, %v109
  %v111 = vrot.slane %v75, %v110
  %v112 = vlaneseq
  %v113 = vshrl.u32 %v112, 7
  %v114 = vsub.s32 3, %v113
  %v115 = vrot.slane %v75, %v114
  %v120 = vmul.f32 %v98, %v103
  %v121 = vmul.f32 %v97, %v107
  %v122 = vmul.f32 %v96, %v111
  %v123 = vmul.f32 %v95, %v115
  %124 = vrot.lane.b32.xlu0 %v71, 16
  %v125 = vpop.permute.xlu0 %124
  %126 = vrot.lane.b32.xlu0 %v72, 16
  %v127 = vpop.permute.xlu0 %126
  %128 = vrot.lane.b32.xlu0 %v73, 16
  %v129 = vpop.permute.xlu0 %128
  %130 = vrot.lane.b32.xlu0 %v74, 16
  %v131 = vpop.permute.xlu0 %130
  %vm132 = vcmp.lt.s32.totalorder %v93, 16
  %v133 = vsel %vm132, %v129, %v131
  %v134 = vsel %vm132, %v127, %v129
  %v135 = vsel %vm132, %v125, %v127
  %v136 = vsel %vm132, %v131, %v125
  %v138 = vlaneseq
  %v139 = vshrl.u32 %v138, 7
  %v140 = vsub.s32 0, %v139
  %v141 = vrot.slane %v76, %v140
  %v142 = vlaneseq
  %v143 = vshrl.u32 %v142, 7
  %v144 = vsub.s32 1, %v143
  %v145 = vrot.slane %v76, %v144
  %v146 = vlaneseq
  %v147 = vshrl.u32 %v146, 7
  %v148 = vsub.s32 2, %v147
  %v149 = vrot.slane %v76, %v148
  %v150 = vlaneseq
  %v151 = vshrl.u32 %v150, 7
  %v152 = vsub.s32 3, %v151
  %v153 = vrot.slane %v76, %v152
  %v158 = vmul.f32 %v136, %v141
  %v159 = vmul.f32 %v135, %v145
  %v160 = vmul.f32 %v134, %v149
  %v161 = vmul.f32 %v133, %v153
  %162 = vrot.lane.b32.xlu0 %v71, 15
  %v163 = vpop.permute.xlu0 %162
  %164 = vrot.lane.b32.xlu0 %v72, 15
  %v165 = vpop.permute.xlu0 %164
  %166 = vrot.lane.b32.xlu0 %v73, 15
  %v167 = vpop.permute.xlu0 %166
  %168 = vrot.lane.b32.xlu0 %v74, 15
  %v169 = vpop.permute.xlu0 %168
  %vm170 = vcmp.lt.s32.totalorder %v93, 15
  %v171 = vsel %vm170, %v167, %v169
  %v172 = vsel %vm170, %v165, %v167
  %v173 = vsel %vm170, %v163, %v165
  %v174 = vsel %vm170, %v169, %v163
  %v176 = vlaneseq
  %v177 = vshrl.u32 %v176, 7
  %v178 = vsub.s32 0, %v177
  %v179 = vrot.slane %v77, %v178
  %v180 = vlaneseq
  %v181 = vshrl.u32 %v180, 7
  %v182 = vsub.s32 1, %v181
  %v183 = vrot.slane %v77, %v182
  %v184 = vlaneseq
  %v185 = vshrl.u32 %v184, 7
  %v186 = vsub.s32 2, %v185
  %v187 = vrot.slane %v77, %v186
  %v188 = vlaneseq
  %v189 = vshrl.u32 %v188, 7
  %v190 = vsub.s32 3, %v189
  %v191 = vrot.slane %v77, %v190
  %v196 = vmul.f32 %v174, %v179
  %v197 = vmul.f32 %v173, %v183
  %v198 = vmul.f32 %v172, %v187
  %v199 = vmul.f32 %v171, %v191
  %200 = vrot.lane.b32.xlu0 %v71, 1
  %v201 = vpop.permute.xlu0 %200
  %202 = vrot.lane.b32.xlu0 %v72, 1
  %v203 = vpop.permute.xlu0 %202
  %204 = vrot.lane.b32.xlu0 %v73, 1
  %v205 = vpop.permute.xlu0 %204
  %206 = vrot.lane.b32.xlu0 %v74, 1
  %v207 = vpop.permute.xlu0 %206
  %vm208 = vcmp.lt.s32.totalorder %v93, 1
  %v209 = vsel %vm208, %v205, %v207
  %v210 = vsel %vm208, %v203, %v205
  %v211 = vsel %vm208, %v201, %v203
  %v212 = vsel %vm208, %v207, %v201
  %v214 = vlaneseq
  %v215 = vshrl.u32 %v214, 7
  %v216 = vsub.s32 0, %v215
  %v217 = vrot.slane %v78, %v216
  %v218 = vlaneseq
  %v219 = vshrl.u32 %v218, 7
  %v220 = vsub.s32 1, %v219
  %v221 = vrot.slane %v78, %v220
  %v222 = vlaneseq
  %v223 = vshrl.u32 %v222, 7
  %v224 = vsub.s32 2, %v223
  %v225 = vrot.slane %v78, %v224
  %v226 = vlaneseq
  %v227 = vshrl.u32 %v226, 7
  %v228 = vsub.s32 3, %v227
  %v229 = vrot.slane %v78, %v228
  %v234 = vmul.f32 %v212, %v217
  %v235 = vmul.f32 %v211, %v221
  %v236 = vmul.f32 %v210, %v225
  %v237 = vmul.f32 %v209, %v229
  %v239 = vlaneseq
  %v240 = vshrl.u32 %v239, 7
  %v241 = vsub.s32 0, %v240
  %v242 = vrot.slane %v79, %v241
  %v243 = vlaneseq
  %v244 = vshrl.u32 %v243, 7
  %v245 = vsub.s32 1, %v244
  %v246 = vrot.slane %v79, %v245
  %v247 = vlaneseq
  %v248 = vshrl.u32 %v247, 7
  %v249 = vsub.s32 2, %v248
  %v250 = vrot.slane %v79, %v249
  %v251 = vlaneseq
  %v252 = vshrl.u32 %v251, 7
  %v253 = vsub.s32 3, %v252
  %v254 = vrot.slane %v79, %v253
  %v259 = vmul.f32 %v71, %v242
  %v260 = vmul.f32 %v72, %v246
  %v261 = vmul.f32 %v73, %v250
  %v262 = vmul.f32 %v74, %v254
  %263 = vrot.lane.b32.xlu0 %v71, 127
  %v264 = vpop.permute.xlu0 %263
  %265 = vrot.lane.b32.xlu0 %v72, 127
  %v266 = vpop.permute.xlu0 %265
  %267 = vrot.lane.b32.xlu0 %v73, 127
  %v268 = vpop.permute.xlu0 %267
  %269 = vrot.lane.b32.xlu0 %v74, 127
  %v270 = vpop.permute.xlu0 %269
  %vm271 = vcmp.lt.s32.totalorder %v93, 127
  %v272 = vsel %vm271, %v268, %v270
  %v273 = vsel %vm271, %v266, %v268
  %v274 = vsel %vm271, %v264, %v266
  %v275 = vsel %vm271, %v270, %v264
  %v277 = vlaneseq
  %v278 = vshrl.u32 %v277, 7
  %v279 = vsub.s32 0, %v278
  %v280 = vrot.slane %v80, %v279
  %v281 = vlaneseq
  %v282 = vshrl.u32 %v281, 7
  %v283 = vsub.s32 1, %v282
  %v284 = vrot.slane %v80, %v283
  %v285 = vlaneseq
  %v286 = vshrl.u32 %v285, 7
  %v287 = vsub.s32 2, %v286
  %v288 = vrot.slane %v80, %v287
  %v289 = vlaneseq
  %v290 = vshrl.u32 %v289, 7
  %v291 = vsub.s32 3, %v290
  %v292 = vrot.slane %v80, %v291
  %v297 = vmul.f32 %v274, %v280
  %v298 = vmul.f32 %v273, %v284
  %v299 = vmul.f32 %v272, %v288
  %v300 = vmul.f32 %v275, %v292
  %301 = vrot.lane.b32.xlu0 %v71, 113
  %v302 = vpop.permute.xlu0 %301
  %303 = vrot.lane.b32.xlu0 %v72, 113
  %v304 = vpop.permute.xlu0 %303
  %305 = vrot.lane.b32.xlu0 %v73, 113
  %v306 = vpop.permute.xlu0 %305
  %307 = vrot.lane.b32.xlu0 %v74, 113
  %v308 = vpop.permute.xlu0 %307
  %vm309 = vcmp.lt.s32.totalorder %v93, 113
  %v310 = vsel %vm309, %v306, %v308
  %v311 = vsel %vm309, %v304, %v306
  %v312 = vsel %vm309, %v302, %v304
  %v313 = vsel %vm309, %v308, %v302
  %v315 = vlaneseq
  %v316 = vshrl.u32 %v315, 7
  %v317 = vsub.s32 0, %v316
  %v318 = vrot.slane %v81, %v317
  %v319 = vlaneseq
  %v320 = vshrl.u32 %v319, 7
  %v321 = vsub.s32 1, %v320
  %v322 = vrot.slane %v81, %v321
  %v323 = vlaneseq
  %v324 = vshrl.u32 %v323, 7
  %v325 = vsub.s32 2, %v324
  %v326 = vrot.slane %v81, %v325
  %v327 = vlaneseq
  %v328 = vshrl.u32 %v327, 7
  %v329 = vsub.s32 3, %v328
  %v330 = vrot.slane %v81, %v329
  %v335 = vmul.f32 %v312, %v318
  %v336 = vmul.f32 %v311, %v322
  %v337 = vmul.f32 %v310, %v326
  %v338 = vmul.f32 %v313, %v330
  %339 = vrot.lane.b32.xlu0 %v71, 112
  %v340 = vpop.permute.xlu0 %339
  %341 = vrot.lane.b32.xlu0 %v72, 112
  %v342 = vpop.permute.xlu0 %341
  %343 = vrot.lane.b32.xlu0 %v73, 112
  %v344 = vpop.permute.xlu0 %343
  %345 = vrot.lane.b32.xlu0 %v74, 112
  %v346 = vpop.permute.xlu0 %345
  %vm347 = vcmp.lt.s32.totalorder %v93, 112
  %v348 = vsel %vm347, %v344, %v346
  %v349 = vsel %vm347, %v342, %v344
  %v350 = vsel %vm347, %v340, %v342
  %v351 = vsel %vm347, %v346, %v340
  %v353 = vlaneseq
  %v354 = vshrl.u32 %v353, 7
  %v355 = vsub.s32 0, %v354
  %v356 = vrot.slane %v82, %v355
  %v357 = vlaneseq
  %v358 = vshrl.u32 %v357, 7
  %v359 = vsub.s32 1, %v358
  %v360 = vrot.slane %v82, %v359
  %v361 = vlaneseq
  %v362 = vshrl.u32 %v361, 7
  %v363 = vsub.s32 2, %v362
  %v364 = vrot.slane %v82, %v363
  %v365 = vlaneseq
  %v366 = vshrl.u32 %v365, 7
  %v367 = vsub.s32 3, %v366
  %v368 = vrot.slane %v82, %v367
  %v373 = vmul.f32 %v350, %v356
  %v374 = vmul.f32 %v349, %v360
  %v375 = vmul.f32 %v348, %v364
  %v376 = vmul.f32 %v351, %v368
  %377 = vrot.lane.b32.xlu0 %v71, 111
  %v378 = vpop.permute.xlu0 %377
  %379 = vrot.lane.b32.xlu0 %v72, 111
  %v380 = vpop.permute.xlu0 %379
  %381 = vrot.lane.b32.xlu0 %v73, 111
  %v382 = vpop.permute.xlu0 %381
  %383 = vrot.lane.b32.xlu0 %v74, 111
  %v384 = vpop.permute.xlu0 %383
  %vm385 = vcmp.lt.s32.totalorder %v93, 111
  %v386 = vsel %vm385, %v382, %v384
  %v387 = vsel %vm385, %v380, %v382
  %v388 = vsel %vm385, %v378, %v380
  %v389 = vsel %vm385, %v384, %v378
  %v391 = vlaneseq
  %v392 = vshrl.u32 %v391, 7
  %v393 = vsub.s32 0, %v392
  %v394 = vrot.slane %v83, %v393
  %v395 = vlaneseq
  %v396 = vshrl.u32 %v395, 7
  %v397 = vsub.s32 1, %v396
  %v398 = vrot.slane %v83, %v397
  %v399 = vlaneseq
  %v400 = vshrl.u32 %v399, 7
  %v401 = vsub.s32 2, %v400
  %v402 = vrot.slane %v83, %v401
  %v403 = vlaneseq
  %v404 = vshrl.u32 %v403, 7
  %v405 = vsub.s32 3, %v404
  %v406 = vrot.slane %v83, %v405
  %v411 = vmul.f32 %v388, %v394
  %v412 = vmul.f32 %v387, %v398
  %v413 = vmul.f32 %v386, %v402
  %v414 = vmul.f32 %v389, %v406
  %v415 = vpack.c.bf16 %v158, %v120
  %v416 = vpack.c.bf16 %v159, %v121
  %v417 = vpack.c.bf16 %v160, %v122
  %v418 = vpack.c.bf16 %v161, %v123
  %v419 = vpack.c.bf16 %v234, %v196
  %v420 = vpack.c.bf16 %v235, %v197
  %v421 = vpack.c.bf16 %v236, %v198
  %v422 = vpack.c.bf16 %v237, %v199
  %v423 = vpack.c.bf16 %v297, %v259
  %v424 = vpack.c.bf16 %v298, %v260
  %v425 = vpack.c.bf16 %v299, %v261
  %v426 = vpack.c.bf16 %v300, %v262
  %v427 = vpack.c.bf16 %v373, %v335
  %v428 = vpack.c.bf16 %v374, %v336
  %v429 = vpack.c.bf16 %v375, %v337
  %v430 = vpack.c.bf16 %v376, %v338
  %v431 = vpack.c.bf16 %v411, %v411
  %v432 = vpack.c.bf16 %v412, %v412
  %v433 = vpack.c.bf16 %v413, %v413
  %v434 = vpack.c.bf16 %v414, %v414
  %v435 = vld [vmem:[%s2] sm:$0xf]
  %vm436 = vcmask 588800
  %v438 = vsel %vm436, %v435, 0
  %vm440 = vcmask 1043456
  %v442 = vsel %vm440, %v431, 0
  %v445 = vsel %vm440, %v432, 0
  %v448 = vsel %vm440, %v433, 0
  %v451 = vsel %vm440, %v434, 0
  %453 = vmatprep.subr.bf16.mxu0 %v416
  %454 = vmatpush1.bf16.msra.mxu0 %v415
  %455 = vmatprep.subr.bf16.mxu0 %v420
  %456 = vmatpush1.bf16.msra.mxu0 %v419
  %457 = vmatprep.subr.bf16.mxu0 %v424
  %458 = vmatpush1.bf16.msra.mxu0 %v423
  %459 = vmatprep.subr.bf16.mxu0 %v428
  %460 = vmatpush1.bf16.msra.mxu0 %v427
  %461 = vmatprep.subr.bf16.mxu0 %v445
  %462 = vmatpush1.bf16.msra.mxu0 %v442
  %463 = vmatprep.subr.bf16.mxu0 0
  %464 = vmatpush1.bf16.msra.mxu0 0
  %465 = vmatprep.subr.bf16.mxu0 0
  %466 = vmatpush1.bf16.msra.mxu0 0
  %467 = vmatprep.subr.bf16.mxu0 0
  %468 = vmatpush1.bf16.msra.mxu0 0
  %469 = vmatprep.subr.bf16.mxu0 0
  %470 = vmatpush1.bf16.msra.mxu0 0
  %471 = vmatprep.subr.bf16.mxu0 0
  %472 = vmatpush1.bf16.msra.mxu0 0
  %473 = vmatprep.subr.bf16.mxu0 0
  %474 = vmatpush1.bf16.msra.mxu0 0
  %475 = vmatprep.subr.bf16.mxu0 0
  %476 = vmatpush1.bf16.msra.mxu0 0
  %477 = vmatprep.subr.bf16.mxu0 0
  %478 = vmatpush1.bf16.msra.mxu0 0
  %479 = vmatprep.subr.bf16.mxu0 0
  %480 = vmatpush1.bf16.msra.mxu0 0
  %481 = vmatprep.subr.bf16.mxu0 0
  %482 = vmatpush1.bf16.msra.mxu0 0
  %483 = vmatprep.subr.bf16.mxu0 0
  %484 = vmatpush1.bf16.msra.mxu0 0
  %485 = vmatprep.mubr.bf16.mxu0 0
  %486 = vmatmul.mubr.bf16.gmra.mrb[0].mxu0 %v438
  %v487 = vpop.f32.mrb[0].mxu0
  %v488 = vadd.f32 0.0, %v487
  %v489 = vpop.f32.mrb[0].mxu0
  %v490 = vadd.f32 0.0, %v489
  %v491 = vpop.f32.mrb[0].mxu0
  %v492 = vpop.f32.mrb[0].mxu0
  %493 = vdwg.mxu0
  %494 = vmatprep.subr.bf16.mxu0 %v418
  %495 = vmatpush1.bf16.msra.mxu0 %v417
  %496 = vmatprep.subr.bf16.mxu0 %v422
  %497 = vmatpush1.bf16.msra.mxu0 %v421
  %498 = vmatprep.subr.bf16.mxu0 %v426
  %499 = vmatpush1.bf16.msra.mxu0 %v425
  %500 = vmatprep.subr.bf16.mxu0 %v430
  %501 = vmatpush1.bf16.msra.mxu0 %v429
  %502 = vmatprep.subr.bf16.mxu0 %v451
  %503 = vmatpush1.bf16.msra.mxu0 %v448
  %504 = vmatprep.subr.bf16.mxu0 0
  %505 = vmatpush1.bf16.msra.mxu0 0
  %506 = vmatprep.subr.bf16.mxu0 0
  %507 = vmatpush1.bf16.msra.mxu0 0
  %508 = vmatprep.subr.bf16.mxu0 0
  %509 = vmatpush1.bf16.msra.mxu0 0
  %510 = vmatprep.subr.bf16.mxu0 0
  %511 = vmatpush1.bf16.msra.mxu0 0
  %512 = vmatprep.subr.bf16.mxu0 0
  %513 = vmatpush1.bf16.msra.mxu0 0
  %514 = vmatprep.subr.bf16.mxu0 0
  %515 = vmatpush1.bf16.msra.mxu0 0
  %516 = vmatprep.subr.bf16.mxu0 0
  %517 = vmatpush1.bf16.msra.mxu0 0
  %518 = vmatprep.subr.bf16.mxu0 0
  %519 = vmatpush1.bf16.msra.mxu0 0
  %520 = vmatprep.subr.bf16.mxu0 0
  %521 = vmatpush1.bf16.msra.mxu0 0
  %522 = vmatprep.subr.bf16.mxu0 0
  %523 = vmatpush1.bf16.msra.mxu0 0
  %524 = vmatprep.subr.bf16.mxu0 0
  %525 = vmatpush1.bf16.msra.mxu0 0
  %526 = vmatprep.mubr.bf16.mxu0 0
  %527 = vmatmul.mubr.bf16.gmra.mrb[0].mxu0 %v438
  %v528 = vpop.f32.mrb[0].mxu0
  %v529 = vadd.f32 0.0, %v528
  %v530 = vpop.f32.mrb[0].mxu0
  %v531 = vadd.f32 0.0, %v530
  %v532 = vpop.f32.mrb[0].mxu0
  %v533 = vpop.f32.mrb[0].mxu0
  %534 = vdwg.mxu0
  %v535 = vld [vmem:[%s3] sm:$0xff]
  %v536 = vld [vmem:[%s4] sm:$0xff]
  %537 = vmatprep.subr.mxu0 0.0
  %538 = vmatpush1.msra.mxu0 1.0
  %539 = vmatprep.subr.mxu0 0.0
  %540 = vmatpush1.msra.mxu0 1.0
  %541 = vmatprep.subr.mxu0 0.0
  %542 = vmatpush1.msra.mxu0 1.0
  %543 = vmatprep.subr.mxu0 0.0
  %544 = vmatpush1.msra.mxu0 1.0
  %545 = vmatprep.subr.mxu0 0.0
  %546 = vmatpush1.msra.mxu0 1.0
  %547 = vmatprep.subr.mxu0 0.0
  %548 = vmatpush1.msra.mxu0 1.0
  %549 = vmatprep.subr.mxu0 0.0
  %550 = vmatpush1.msra.mxu0 1.0
  %551 = vmatprep.subr.mxu0 0.0
  %552 = vmatpush1.msra.mxu0 1.0
  %553 = vmatprep.subr.mxu0 0.0
  %554 = vmatpush1.msra.mxu0 1.0
  %555 = vmatprep.subr.mxu0 0.0
  %556 = vmatpush1.msra.mxu0 1.0
  %557 = vmatprep.subr.mxu0 0.0
  %558 = vmatpush1.msra.mxu0 1.0
  %559 = vmatprep.subr.mxu0 0.0
  %560 = vmatpush1.msra.mxu0 1.0
  %561 = vmatprep.subr.mxu0 0.0
  %562 = vmatpush1.msra.mxu0 1.0
  %563 = vmatprep.subr.mxu0 0.0
  %564 = vmatpush1.msra.mxu0 1.0
  %565 = vmatprep.subr.mxu0 0.0
  %566 = vmatpush1.msra.mxu0 1.0
  %567 = vmatprep.subr.mxu0 0.0
  %568 = vmatpush1.msra.mxu0 1.0
  %569 = vmatprep.subr.mxu0 0.0
  %570 = vmatpush1.msra.mxu0 1.0
  %571 = vmatprep.subr.mxu0 0.0
  %572 = vmatpush1.msra.mxu0 1.0
  %573 = vmatprep.subr.mxu0 0.0
  %574 = vmatpush1.msra.mxu0 1.0
  %575 = vmatprep.subr.mxu0 0.0
  %576 = vmatpush1.msra.mxu0 1.0
  %577 = vmatprep.subr.mxu0 0.0
  %578 = vmatpush1.msra.mxu0 1.0
  %579 = vmatprep.subr.mxu0 0.0
  %580 = vmatpush1.msra.mxu0 1.0
  %581 = vmatprep.subr.mxu0 0.0
  %582 = vmatpush1.msra.mxu0 1.0
  %583 = vmatprep.subr.mxu0 0.0
  %584 = vmatpush1.msra.mxu0 1.0
  %585 = vmatprep.subr.mxu0 0.0
  %586 = vmatpush1.msra.mxu0 1.0
  %587 = vmatprep.subr.mxu0 0.0
  %588 = vmatpush1.msra.mxu0 1.0
  %589 = vmatprep.subr.mxu0 0.0
  %590 = vmatpush1.msra.mxu0 1.0
  %591 = vmatprep.subr.mxu0 0.0
  %592 = vmatpush1.msra.mxu0 1.0
  %593 = vmatprep.subr.mxu0 0.0
  %594 = vmatpush1.msra.mxu0 1.0
  %595 = vmatprep.subr.mxu0 0.0
  %596 = vmatpush1.msra.mxu0 1.0
  %597 = vmatprep.subr.mxu0 0.0
  %598 = vmatpush1.msra.mxu0 1.0
  %599 = vmatprep.subr.mxu0 0.0
  %600 = vmatpush1.msra.mxu0 1.0
  %601 = vmatprep.mubr.f32.mxu0 %v490
  %602 = vmatmul.mubr.f32.gmra.mrb[0].mxu0 %v488
  %v603 = vpop.f32.mrb[0].mxu0
  %v604 = vadd.f32 0.0, %v603
  %v605 = vpop.f32.mrb[0].mxu0
  %606 = vdwg.mxu0
  %607 = vmatprep.subr.mxu0 0.0
  %608 = vmatpush1.msra.mxu0 1.0
  %609 = vmatprep.subr.mxu0 0.0
  %610 = vmatpush1.msra.mxu0 1.0
  %611 = vmatprep.subr.mxu0 0.0
  %612 = vmatpush1.msra.mxu0 1.0
  %613 = vmatprep.subr.mxu0 0.0
  %614 = vmatpush1.msra.mxu0 1.0
  %615 = vmatprep.subr.mxu0 0.0
  %616 = vmatpush1.msra.mxu0 1.0
  %617 = vmatprep.subr.mxu0 0.0
  %618 = vmatpush1.msra.mxu0 1.0
  %619 = vmatprep.subr.mxu0 0.0
  %620 = vmatpush1.msra.mxu0 1.0
  %621 = vmatprep.subr.mxu0 0.0
  %622 = vmatpush1.msra.mxu0 1.0
  %623 = vmatprep.subr.mxu0 0.0
  %624 = vmatpush1.msra.mxu0 1.0
  %625 = vmatprep.subr.mxu0 0.0
  %626 = vmatpush1.msra.mxu0 1.0
  %627 = vmatprep.subr.mxu0 0.0
  %628 = vmatpush1.msra.mxu0 1.0
  %629 = vmatprep.subr.mxu0 0.0
  %630 = vmatpush1.msra.mxu0 1.0
  %631 = vmatprep.subr.mxu0 0.0
  %632 = vmatpush1.msra.mxu0 1.0
  %633 = vmatprep.subr.mxu0 0.0
  %634 = vmatpush1.msra.mxu0 1.0
  %635 = vmatprep.subr.mxu0 0.0
  %636 = vmatpush1.msra.mxu0 1.0
  %637 = vmatprep.subr.mxu0 0.0
  %638 = vmatpush1.msra.mxu0 1.0
  %639 = vmatprep.subr.mxu0 0.0
  %640 = vmatpush1.msra.mxu0 1.0
  %641 = vmatprep.subr.mxu0 0.0
  %642 = vmatpush1.msra.mxu0 1.0
  %643 = vmatprep.subr.mxu0 0.0
  %644 = vmatpush1.msra.mxu0 1.0
  %645 = vmatprep.subr.mxu0 0.0
  %646 = vmatpush1.msra.mxu0 1.0
  %647 = vmatprep.subr.mxu0 0.0
  %648 = vmatpush1.msra.mxu0 1.0
  %649 = vmatprep.subr.mxu0 0.0
  %650 = vmatpush1.msra.mxu0 1.0
  %651 = vmatprep.subr.mxu0 0.0
  %652 = vmatpush1.msra.mxu0 1.0
  %653 = vmatprep.subr.mxu0 0.0
  %654 = vmatpush1.msra.mxu0 1.0
  %655 = vmatprep.subr.mxu0 0.0
  %656 = vmatpush1.msra.mxu0 1.0
  %657 = vmatprep.subr.mxu0 0.0
  %658 = vmatpush1.msra.mxu0 1.0
  %659 = vmatprep.subr.mxu0 0.0
  %660 = vmatpush1.msra.mxu0 1.0
  %661 = vmatprep.subr.mxu0 0.0
  %662 = vmatpush1.msra.mxu0 1.0
  %663 = vmatprep.subr.mxu0 0.0
  %664 = vmatpush1.msra.mxu0 1.0
  %665 = vmatprep.subr.mxu0 0.0
  %666 = vmatpush1.msra.mxu0 1.0
  %667 = vmatprep.subr.mxu0 0.0
  %668 = vmatpush1.msra.mxu0 1.0
  %669 = vmatprep.subr.mxu0 0.0
  %670 = vmatpush1.msra.mxu0 1.0
  %671 = vmatprep.mubr.f32.mxu0 %v531
  %672 = vmatmul.mubr.f32.gmra.mrb[0].mxu0 %v529
  %v673 = vpop.f32.mrb[0].mxu0
  %v674 = vadd.f32 %v604, %v673
  %v675 = vpop.f32.mrb[0].mxu0
  %676 = vdwg.mxu0
  %v677 = vmul.f32 %v674, 0.001953125
  %679 = vset.pattern.permute.xlu0 0
  %680 = vperm.xlu0 %679, %v677
  %v681 = vpop.permute.xlu0 %680
  %v683 = vsub.f32 %v488, %v681
  %v684 = vsub.f32 %v490, %v681
  %v685 = vsub.f32 %v529, %v681
  %v686 = vsub.f32 %v531, %v681
  %v687 = vmul.f32 %v683, %v683
  %v688 = vmul.f32 %v684, %v684
  %v689 = vmul.f32 %v685, %v685
  %v690 = vmul.f32 %v686, %v686
  %691 = vmatprep.subr.mxu0 0.0
  %692 = vmatpush1.msra.mxu0 1.0
  %693 = vmatprep.subr.mxu0 0.0
  %694 = vmatpush1.msra.mxu0 1.0
  %695 = vmatprep.subr.mxu0 0.0
  %696 = vmatpush1.msra.mxu0 1.0
  %697 = vmatprep.subr.mxu0 0.0
  %698 = vmatpush1.msra.mxu0 1.0
  %699 = vmatprep.subr.mxu0 0.0
  %700 = vmatpush1.msra.mxu0 1.0
  %701 = vmatprep.subr.mxu0 0.0
  %702 = vmatpush1.msra.mxu0 1.0
  %703 = vmatprep.subr.mxu0 0.0
  %704 = vmatpush1.msra.mxu0 1.0
  %705 = vmatprep.subr.mxu0 0.0
  %706 = vmatpush1.msra.mxu0 1.0
  %707 = vmatprep.subr.mxu0 0.0
  %708 = vmatpush1.msra.mxu0 1.0
  %709 = vmatprep.subr.mxu0 0.0
  %710 = vmatpush1.msra.mxu0 1.0
  %711 = vmatprep.subr.mxu0 0.0
  %712 = vmatpush1.msra.mxu0 1.0
  %713 = vmatprep.subr.mxu0 0.0
  %714 = vmatpush1.msra.mxu0 1.0
  %715 = vmatprep.subr.mxu0 0.0
  %716 = vmatpush1.msra.mxu0 1.0
  %717 = vmatprep.subr.mxu0 0.0
  %718 = vmatpush1.msra.mxu0 1.0
  %719 = vmatprep.subr.mxu0 0.0
  %720 = vmatpush1.msra.mxu0 1.0
  %721 = vmatprep.subr.mxu0 0.0
  %722 = vmatpush1.msra.mxu0 1.0
  %723 = vmatprep.subr.mxu0 0.0
  %724 = vmatpush1.msra.mxu0 1.0
  %725 = vmatprep.subr.mxu0 0.0
  %726 = vmatpush1.msra.mxu0 1.0
  %727 = vmatprep.subr.mxu0 0.0
  %728 = vmatpush1.msra.mxu0 1.0
  %729 = vmatprep.subr.mxu0 0.0
  %730 = vmatpush1.msra.mxu0 1.0
  %731 = vmatprep.subr.mxu0 0.0
  %732 = vmatpush1.msra.mxu0 1.0
  %733 = vmatprep.subr.mxu0 0.0
  %734 = vmatpush1.msra.mxu0 1.0
  %735 = vmatprep.subr.mxu0 0.0
  %736 = vmatpush1.msra.mxu0 1.0
  %737 = vmatprep.subr.mxu0 0.0
  %738 = vmatpush1.msra.mxu0 1.0
  %739 = vmatprep.subr.mxu0 0.0
  %740 = vmatpush1.msra.mxu0 1.0
  %741 = vmatprep.subr.mxu0 0.0
  %742 = vmatpush1.msra.mxu0 1.0
  %743 = vmatprep.subr.mxu0 0.0
  %744 = vmatpush1.msra.mxu0 1.0
  %745 = vmatprep.subr.mxu0 0.0
  %746 = vmatpush1.msra.mxu0 1.0
  %747 = vmatprep.subr.mxu0 0.0
  %748 = vmatpush1.msra.mxu0 1.0
  %749 = vmatprep.subr.mxu0 0.0
  %750 = vmatpush1.msra.mxu0 1.0
  %751 = vmatprep.subr.mxu0 0.0
  %752 = vmatpush1.msra.mxu0 1.0
  %753 = vmatprep.subr.mxu0 0.0
  %754 = vmatpush1.msra.mxu0 1.0
  %755 = vmatprep.mubr.f32.mxu0 %v688
  %756 = vmatmul.mubr.f32.gmra.mrb[0].mxu0 %v687
  %v757 = vpop.f32.mrb[0].mxu0
  %v758 = vadd.f32 0.0, %v757
  %v759 = vpop.f32.mrb[0].mxu0
  %760 = vdwg.mxu0
  %761 = vmatprep.subr.mxu0 0.0
  %762 = vmatpush1.msra.mxu0 1.0
  %763 = vmatprep.subr.mxu0 0.0
  %764 = vmatpush1.msra.mxu0 1.0
  %765 = vmatprep.subr.mxu0 0.0
  %766 = vmatpush1.msra.mxu0 1.0
  %767 = vmatprep.subr.mxu0 0.0
  %768 = vmatpush1.msra.mxu0 1.0
  %769 = vmatprep.subr.mxu0 0.0
  %770 = vmatpush1.msra.mxu0 1.0
  %771 = vmatprep.subr.mxu0 0.0
  %772 = vmatpush1.msra.mxu0 1.0
  %773 = vmatprep.subr.mxu0 0.0
  %774 = vmatpush1.msra.mxu0 1.0
  %775 = vmatprep.subr.mxu0 0.0
  %776 = vmatpush1.msra.mxu0 1.0
  %777 = vmatprep.subr.mxu0 0.0
  %778 = vmatpush1.msra.mxu0 1.0
  %779 = vmatprep.subr.mxu0 0.0
  %780 = vmatpush1.msra.mxu0 1.0
  %781 = vmatprep.subr.mxu0 0.0
  %782 = vmatpush1.msra.mxu0 1.0
  %783 = vmatprep.subr.mxu0 0.0
  %784 = vmatpush1.msra.mxu0 1.0
  %785 = vmatprep.subr.mxu0 0.0
  %786 = vmatpush1.msra.mxu0 1.0
  %787 = vmatprep.subr.mxu0 0.0
  %788 = vmatpush1.msra.mxu0 1.0
  %789 = vmatprep.subr.mxu0 0.0
  %790 = vmatpush1.msra.mxu0 1.0
  %791 = vmatprep.subr.mxu0 0.0
  %792 = vmatpush1.msra.mxu0 1.0
  %793 = vmatprep.subr.mxu0 0.0
  %794 = vmatpush1.msra.mxu0 1.0
  %795 = vmatprep.subr.mxu0 0.0
  %796 = vmatpush1.msra.mxu0 1.0
  %797 = vmatprep.subr.mxu0 0.0
  %798 = vmatpush1.msra.mxu0 1.0
  %799 = vmatprep.subr.mxu0 0.0
  %800 = vmatpush1.msra.mxu0 1.0
  %801 = vmatprep.subr.mxu0 0.0
  %802 = vmatpush1.msra.mxu0 1.0
  %803 = vmatprep.subr.mxu0 0.0
  %804 = vmatpush1.msra.mxu0 1.0
  %805 = vmatprep.subr.mxu0 0.0
  %806 = vmatpush1.msra.mxu0 1.0
  %807 = vmatprep.subr.mxu0 0.0
  %808 = vmatpush1.msra.mxu0 1.0
  %809 = vmatprep.subr.mxu0 0.0
  %810 = vmatpush1.msra.mxu0 1.0
  %811 = vmatprep.subr.mxu0 0.0
  %812 = vmatpush1.msra.mxu0 1.0
  %813 = vmatprep.subr.mxu0 0.0
  %814 = vmatpush1.msra.mxu0 1.0
  %815 = vmatprep.subr.mxu0 0.0
  %816 = vmatpush1.msra.mxu0 1.0
  %817 = vmatprep.subr.mxu0 0.0
  %818 = vmatpush1.msra.mxu0 1.0
  %819 = vmatprep.subr.mxu0 0.0
  %820 = vmatpush1.msra.mxu0 1.0
  %821 = vmatprep.subr.mxu0 0.0
  %822 = vmatpush1.msra.mxu0 1.0
  %823 = vmatprep.subr.mxu0 0.0
  %824 = vmatpush1.msra.mxu0 1.0
  %825 = vmatprep.mubr.f32.mxu0 %v690
  %826 = vmatmul.mubr.f32.gmra.mrb[0].mxu0 %v689
  %v827 = vpop.f32.mrb[0].mxu0
  %v828 = vadd.f32 %v758, %v827
  %v829 = vpop.f32.mrb[0].mxu0
  %830 = vdwg.mxu0
  %v831 = vmul.f32 %v828, 0.001953125
  %v832 = vadd.f32 %v831, 1e-05
  %v833 = vrsqrt.pop %v832
  %v834 = vmul.f32 %v833, %v535
  %836 = vset.pattern.permute.xlu0 0
  %837 = vperm.xlu0 %836, %v834
  %v838 = vpop.permute.xlu0 %837
  %v840 = vmul.f32 %v683, %v838
  %v841 = vmul.f32 %v684, %v838
  %v842 = vmul.f32 %v685, %v838
  %v843 = vmul.f32 %v686, %v838
  %845 = vset.pattern.permute.xlu0 0
  %846 = vperm.xlu0 %845, %v536
  %v847 = vpop.permute.xlu0 %846
  %v849 = vadd.f32 %v840, %v847
  %v850 = vadd.f32 %v841, %v847
  %v851 = vadd.f32 %v842, %v847
  %v852 = vadd.f32 %v843, %v847
  %v853 = vmax.f32 %v849, 0.0
  %v854 = vmax.f32 %v850, 0.0
  %v855 = vmax.f32 %v851, 0.0
  %v856 = vmax.f32 %v852, 0.0
  %857 = vrot.lane.b32.xlu0 %v853, 17
  %v858 = vpop.permute.xlu0 %857
  %859 = vrot.lane.b32.xlu0 %v854, 17
  %v860 = vpop.permute.xlu0 %859
  %861 = vrot.lane.b32.xlu0 %v855, 17
  %v862 = vpop.permute.xlu0 %861
  %863 = vrot.lane.b32.xlu0 %v856, 17
  %v864 = vpop.permute.xlu0 %863
  %v865 = vsel %vm94, %v862, %v864
  %v866 = vsel %vm94, %v860, %v862
  %v867 = vsel %vm94, %v858, %v860
  %v868 = vsel %vm94, %v864, %v858
  %v869 = vmul.f32 %v868, %v103
  %v870 = vmul.f32 %v867, %v107
  %v871 = vmul.f32 %v866, %v111
  %v872 = vmul.f32 %v865, %v115
  %873 = vrot.lane.b32.xlu0 %v853, 16
  %v874 = vpop.permute.xlu0 %873
  %875 = vrot.lane.b32.xlu0 %v854, 16
  %v876 = vpop.permute.xlu0 %875
  %877 = vrot.lane.b32.xlu0 %v855, 16
  %v878 = vpop.permute.xlu0 %877
  %879 = vrot.lane.b32.xlu0 %v856, 16
  %v880 = vpop.permute.xlu0 %879
  %v881 = vsel %vm132, %v878, %v880
  %v882 = vsel %vm132, %v876, %v878
  %v883 = vsel %vm132, %v874, %v876
  %v884 = vsel %vm132, %v880, %v874
  %v885 = vmul.f32 %v884, %v141
  %v886 = vmul.f32 %v883, %v145
  %v887 = vmul.f32 %v882, %v149
  %v888 = vmul.f32 %v881, %v153
  %889 = vrot.lane.b32.xlu0 %v853, 15
  %v890 = vpop.permute.xlu0 %889
  %891 = vrot.lane.b32.xlu0 %v854, 15
  %v892 = vpop.permute.xlu0 %891
  %893 = vrot.lane.b32.xlu0 %v855, 15
  %v894 = vpop.permute.xlu0 %893
  %895 = vrot.lane.b32.xlu0 %v856, 15
  %v896 = vpop.permute.xlu0 %895
  %v897 = vsel %vm170, %v894, %v896
  %v898 = vsel %vm170, %v892, %v894
  %v899 = vsel %vm170, %v890, %v892
  %v900 = vsel %vm170, %v896, %v890
  %v901 = vmul.f32 %v900, %v179
  %v902 = vmul.f32 %v899, %v183
  %v903 = vmul.f32 %v898, %v187
  %v904 = vmul.f32 %v897, %v191
  %905 = vrot.lane.b32.xlu0 %v853, 1
  %v906 = vpop.permute.xlu0 %905
  %907 = vrot.lane.b32.xlu0 %v854, 1
  %v908 = vpop.permute.xlu0 %907
  %909 = vrot.lane.b32.xlu0 %v855, 1
  %v910 = vpop.permute.xlu0 %909
  %911 = vrot.lane.b32.xlu0 %v856, 1
  %v912 = vpop.permute.xlu0 %911
  %v913 = vsel %vm208, %v910, %v912
  %v914 = vsel %vm208, %v908, %v910
  %v915 = vsel %vm208, %v906, %v908
  %v916 = vsel %vm208, %v912, %v906
  %v917 = vmul.f32 %v916, %v217
  %v918 = vmul.f32 %v915, %v221
  %v919 = vmul.f32 %v914, %v225
  %v920 = vmul.f32 %v913, %v229
  %v921 = vmul.f32 %v853, %v242
  %v922 = vmul.f32 %v854, %v246
  %v923 = vmul.f32 %v855, %v250
  %v924 = vmul.f32 %v856, %v254
  %925 = vrot.lane.b32.xlu0 %v853, 127
  %v926 = vpop.permute.xlu0 %925
  %927 = vrot.lane.b32.xlu0 %v854, 127
  %v928 = vpop.permute.xlu0 %927
  %929 = vrot.lane.b32.xlu0 %v855, 127
  %v930 = vpop.permute.xlu0 %929
  %931 = vrot.lane.b32.xlu0 %v856, 127
  %v932 = vpop.permute.xlu0 %931
  %v933 = vsel %vm271, %v930, %v932
  %v934 = vsel %vm271, %v928, %v930
  %v935 = vsel %vm271, %v926, %v928
  %v936 = vsel %vm271, %v932, %v926
  %v937 = vmul.f32 %v935, %v280
  %v938 = vmul.f32 %v934, %v284
  %v939 = vmul.f32 %v933, %v288
  %v940 = vmul.f32 %v936, %v292
  %941 = vrot.lane.b32.xlu0 %v853, 113
  %v942 = vpop.permute.xlu0 %941
  %943 = vrot.lane.b32.xlu0 %v854, 113
  %v944 = vpop.permute.xlu0 %943
  %945 = vrot.lane.b32.xlu0 %v855, 113
  %v946 = vpop.permute.xlu0 %945
  %947 = vrot.lane.b32.xlu0 %v856, 113
  %v948 = vpop.permute.xlu0 %947
  %v949 = vsel %vm309, %v946, %v948
  %v950 = vsel %vm309, %v944, %v946
  %v951 = vsel %vm309, %v942, %v944
  %v952 = vsel %vm309, %v948, %v942
  %v953 = vmul.f32 %v951, %v318
  %v954 = vmul.f32 %v950, %v322
  %v955 = vmul.f32 %v949, %v326
  %v956 = vmul.f32 %v952, %v330
  %957 = vrot.lane.b32.xlu0 %v853, 112
  %v958 = vpop.permute.xlu0 %957
  %959 = vrot.lane.b32.xlu0 %v854, 112
  %v960 = vpop.permute.xlu0 %959
  %961 = vrot.lane.b32.xlu0 %v855, 112
  %v962 = vpop.permute.xlu0 %961
  %963 = vrot.lane.b32.xlu0 %v856, 112
  %v964 = vpop.permute.xlu0 %963
  %v965 = vsel %vm347, %v962, %v964
  %v966 = vsel %vm347, %v960, %v962
  %v967 = vsel %vm347, %v958, %v960
  %v968 = vsel %vm347, %v964, %v958
  %v969 = vmul.f32 %v967, %v356
  %v970 = vmul.f32 %v966, %v360
  %v971 = vmul.f32 %v965, %v364
  %v972 = vmul.f32 %v968, %v368
  %973 = vrot.lane.b32.xlu0 %v853, 111
  %v974 = vpop.permute.xlu0 %973
  %975 = vrot.lane.b32.xlu0 %v854, 111
  %v976 = vpop.permute.xlu0 %975
  %977 = vrot.lane.b32.xlu0 %v855, 111
  %v978 = vpop.permute.xlu0 %977
  %979 = vrot.lane.b32.xlu0 %v856, 111
  %v980 = vpop.permute.xlu0 %979
  %v981 = vsel %vm385, %v978, %v980
  %v982 = vsel %vm385, %v976, %v978
  %v983 = vsel %vm385, %v974, %v976
  %v984 = vsel %vm385, %v980, %v974
  %v985 = vmul.f32 %v983, %v394
  %v986 = vmul.f32 %v982, %v398
  %v987 = vmul.f32 %v981, %v402
  %v988 = vmul.f32 %v984, %v406
  %v989 = vpack.c.bf16 %v885, %v869
  %v990 = vpack.c.bf16 %v886, %v870
  %v991 = vpack.c.bf16 %v887, %v871
  %v992 = vpack.c.bf16 %v888, %v872
  %v993 = vpack.c.bf16 %v917, %v901
  %v994 = vpack.c.bf16 %v918, %v902
  %v995 = vpack.c.bf16 %v919, %v903
  %v996 = vpack.c.bf16 %v920, %v904
  %v997 = vpack.c.bf16 %v937, %v921
  %v998 = vpack.c.bf16 %v938, %v922
  %v999 = vpack.c.bf16 %v939, %v923
  %v1000 = vpack.c.bf16 %v940, %v924
  %v1001 = vpack.c.bf16 %v969, %v953
  %v1002 = vpack.c.bf16 %v970, %v954
  %v1003 = vpack.c.bf16 %v971, %v955
  %v1004 = vpack.c.bf16 %v972, %v956
  %v1005 = vpack.c.bf16 %v985, %v985
  %v1006 = vpack.c.bf16 %v986, %v986
  %v1007 = vpack.c.bf16 %v987, %v987
  %v1008 = vpack.c.bf16 %v988, %v988
  %v1009 = vld [vmem:[%s5] sm:$0xf]
  %v1011 = vsel %vm436, %v1009, 0
  %v1014 = vsel %vm440, %v1005, 0
  %v1017 = vsel %vm440, %v1006, 0
  %v1020 = vsel %vm440, %v1007, 0
  %v1023 = vsel %vm440, %v1008, 0
  %1025 = vmatprep.subr.bf16.mxu0 %v990
  %1026 = vmatpush1.bf16.msra.mxu0 %v989
  %1027 = vmatprep.subr.bf16.mxu0 %v994
  %1028 = vmatpush1.bf16.msra.mxu0 %v993
  %1029 = vmatprep.subr.bf16.mxu0 %v998
  %1030 = vmatpush1.bf16.msra.mxu0 %v997
  %1031 = vmatprep.subr.bf16.mxu0 %v1002
  %1032 = vmatpush1.bf16.msra.mxu0 %v1001
  %1033 = vmatprep.subr.bf16.mxu0 %v1017
  %1034 = vmatpush1.bf16.msra.mxu0 %v1014
  %1035 = vmatprep.subr.bf16.mxu0 0
  %1036 = vmatpush1.bf16.msra.mxu0 0
  %1037 = vmatprep.subr.bf16.mxu0 0
  %1038 = vmatpush1.bf16.msra.mxu0 0
  %1039 = vmatprep.subr.bf16.mxu0 0
  %1040 = vmatpush1.bf16.msra.mxu0 0
  %1041 = vmatprep.subr.bf16.mxu0 0
  %1042 = vmatpush1.bf16.msra.mxu0 0
  %1043 = vmatprep.subr.bf16.mxu0 0
  %1044 = vmatpush1.bf16.msra.mxu0 0
  %1045 = vmatprep.subr.bf16.mxu0 0
  %1046 = vmatpush1.bf16.msra.mxu0 0
  %1047 = vmatprep.subr.bf16.mxu0 0
  %1048 = vmatpush1.bf16.msra.mxu0 0
  %1049 = vmatprep.subr.bf16.mxu0 0
  %1050 = vmatpush1.bf16.msra.mxu0 0
  %1051 = vmatprep.subr.bf16.mxu0 0
  %1052 = vmatpush1.bf16.msra.mxu0 0
  %1053 = vmatprep.subr.bf16.mxu0 0
  %1054 = vmatpush1.bf16.msra.mxu0 0
  %1055 = vmatprep.subr.bf16.mxu0 0
  %1056 = vmatpush1.bf16.msra.mxu0 0
  %1057 = vmatprep.mubr.bf16.mxu0 0
  %1058 = vmatmul.mubr.bf16.gmra.mrb[0].mxu0 %v1011
  %v1059 = vpop.f32.mrb[0].mxu0
  %v1060 = vadd.f32 0.0, %v1059
  %v1061 = vpop.f32.mrb[0].mxu0
  %v1062 = vadd.f32 0.0, %v1061
  %v1063 = vpop.f32.mrb[0].mxu0
  %v1064 = vpop.f32.mrb[0].mxu0
  %1065 = vdwg.mxu0
  %1066 = vmatprep.subr.bf16.mxu0 %v992
  %1067 = vmatpush1.bf16.msra.mxu0 %v991
  %1068 = vmatprep.subr.bf16.mxu0 %v996
  %1069 = vmatpush1.bf16.msra.mxu0 %v995
  %1070 = vmatprep.subr.bf16.mxu0 %v1000
  %1071 = vmatpush1.bf16.msra.mxu0 %v999
  %1072 = vmatprep.subr.bf16.mxu0 %v1004
  %1073 = vmatpush1.bf16.msra.mxu0 %v1003
  %1074 = vmatprep.subr.bf16.mxu0 %v1023
  %1075 = vmatpush1.bf16.msra.mxu0 %v1020
  %1076 = vmatprep.subr.bf16.mxu0 0
  %1077 = vmatpush1.bf16.msra.mxu0 0
  %1078 = vmatprep.subr.bf16.mxu0 0
  %1079 = vmatpush1.bf16.msra.mxu0 0
  %1080 = vmatprep.subr.bf16.mxu0 0
  %1081 = vmatpush1.bf16.msra.mxu0 0
  %1082 = vmatprep.subr.bf16.mxu0 0
  %1083 = vmatpush1.bf16.msra.mxu0 0
  %1084 = vmatprep.subr.bf16.mxu0 0
  %1085 = vmatpush1.bf16.msra.mxu0 0
  %1086 = vmatprep.subr.bf16.mxu0 0
  %1087 = vmatpush1.bf16.msra.mxu0 0
  %1088 = vmatprep.subr.bf16.mxu0 0
  %1089 = vmatpush1.bf16.msra.mxu0 0
  %1090 = vmatprep.subr.bf16.mxu0 0
  %1091 = vmatpush1.bf16.msra.mxu0 0
  %1092 = vmatprep.subr.bf16.mxu0 0
  %1093 = vmatpush1.bf16.msra.mxu0 0
  %1094 = vmatprep.subr.bf16.mxu0 0
  %1095 = vmatpush1.bf16.msra.mxu0 0
  %1096 = vmatprep.subr.bf16.mxu0 0
  %1097 = vmatpush1.bf16.msra.mxu0 0
  %1098 = vmatprep.mubr.bf16.mxu0 0
  %1099 = vmatmul.mubr.bf16.gmra.mrb[0].mxu0 %v1011
  %v1100 = vpop.f32.mrb[0].mxu0
  %v1101 = vadd.f32 0.0, %v1100
  %v1102 = vpop.f32.mrb[0].mxu0
  %v1103 = vadd.f32 0.0, %v1102
  %v1104 = vpop.f32.mrb[0].mxu0
  %v1105 = vpop.f32.mrb[0].mxu0
  %1106 = vdwg.mxu0
  %v1107 = vld [vmem:[%s6] sm:$0xff]
  %v1108 = vld [vmem:[%s7] sm:$0xff]
  %1109 = vmatprep.subr.mxu0 0.0
  %1110 = vmatpush1.msra.mxu0 1.0
  %1111 = vmatprep.subr.mxu0 0.0
  %1112 = vmatpush1.msra.mxu0 1.0
  %1113 = vmatprep.subr.mxu0 0.0
  %1114 = vmatpush1.msra.mxu0 1.0
  %1115 = vmatprep.subr.mxu0 0.0
  %1116 = vmatpush1.msra.mxu0 1.0
  %1117 = vmatprep.subr.mxu0 0.0
  %1118 = vmatpush1.msra.mxu0 1.0
  %1119 = vmatprep.subr.mxu0 0.0
  %1120 = vmatpush1.msra.mxu0 1.0
  %1121 = vmatprep.subr.mxu0 0.0
  %1122 = vmatpush1.msra.mxu0 1.0
  %1123 = vmatprep.subr.mxu0 0.0
  %1124 = vmatpush1.msra.mxu0 1.0
  %1125 = vmatprep.subr.mxu0 0.0
  %1126 = vmatpush1.msra.mxu0 1.0
  %1127 = vmatprep.subr.mxu0 0.0
  %1128 = vmatpush1.msra.mxu0 1.0
  %1129 = vmatprep.subr.mxu0 0.0
  %1130 = vmatpush1.msra.mxu0 1.0
  %1131 = vmatprep.subr.mxu0 0.0
  %1132 = vmatpush1.msra.mxu0 1.0
  %1133 = vmatprep.subr.mxu0 0.0
  %1134 = vmatpush1.msra.mxu0 1.0
  %1135 = vmatprep.subr.mxu0 0.0
  %1136 = vmatpush1.msra.mxu0 1.0
  %1137 = vmatprep.subr.mxu0 0.0
  %1138 = vmatpush1.msra.mxu0 1.0
  %1139 = vmatprep.subr.mxu0 0.0
  %1140 = vmatpush1.msra.mxu0 1.0
  %1141 = vmatprep.subr.mxu0 0.0
  %1142 = vmatpush1.msra.mxu0 1.0
  %1143 = vmatprep.subr.mxu0 0.0
  %1144 = vmatpush1.msra.mxu0 1.0
  %1145 = vmatprep.subr.mxu0 0.0
  %1146 = vmatpush1.msra.mxu0 1.0
  %1147 = vmatprep.subr.mxu0 0.0
  %1148 = vmatpush1.msra.mxu0 1.0
  %1149 = vmatprep.subr.mxu0 0.0
  %1150 = vmatpush1.msra.mxu0 1.0
  %1151 = vmatprep.subr.mxu0 0.0
  %1152 = vmatpush1.msra.mxu0 1.0
  %1153 = vmatprep.subr.mxu0 0.0
  %1154 = vmatpush1.msra.mxu0 1.0
  %1155 = vmatprep.subr.mxu0 0.0
  %1156 = vmatpush1.msra.mxu0 1.0
  %1157 = vmatprep.subr.mxu0 0.0
  %1158 = vmatpush1.msra.mxu0 1.0
  %1159 = vmatprep.subr.mxu0 0.0
  %1160 = vmatpush1.msra.mxu0 1.0
  %1161 = vmatprep.subr.mxu0 0.0
  %1162 = vmatpush1.msra.mxu0 1.0
  %1163 = vmatprep.subr.mxu0 0.0
  %1164 = vmatpush1.msra.mxu0 1.0
  %1165 = vmatprep.subr.mxu0 0.0
  %1166 = vmatpush1.msra.mxu0 1.0
  %1167 = vmatprep.subr.mxu0 0.0
  %1168 = vmatpush1.msra.mxu0 1.0
  %1169 = vmatprep.subr.mxu0 0.0
  %1170 = vmatpush1.msra.mxu0 1.0
  %1171 = vmatprep.subr.mxu0 0.0
  %1172 = vmatpush1.msra.mxu0 1.0
  %1173 = vmatprep.mubr.f32.mxu0 %v1062
  %1174 = vmatmul.mubr.f32.gmra.mrb[0].mxu0 %v1060
  %v1175 = vpop.f32.mrb[0].mxu0
  %v1176 = vadd.f32 0.0, %v1175
  %v1177 = vpop.f32.mrb[0].mxu0
  %1178 = vdwg.mxu0
  %1179 = vmatprep.subr.mxu0 0.0
  %1180 = vmatpush1.msra.mxu0 1.0
  %1181 = vmatprep.subr.mxu0 0.0
  %1182 = vmatpush1.msra.mxu0 1.0
  %1183 = vmatprep.subr.mxu0 0.0
  %1184 = vmatpush1.msra.mxu0 1.0
  %1185 = vmatprep.subr.mxu0 0.0
  %1186 = vmatpush1.msra.mxu0 1.0
  %1187 = vmatprep.subr.mxu0 0.0
  %1188 = vmatpush1.msra.mxu0 1.0
  %1189 = vmatprep.subr.mxu0 0.0
  %1190 = vmatpush1.msra.mxu0 1.0
  %1191 = vmatprep.subr.mxu0 0.0
  %1192 = vmatpush1.msra.mxu0 1.0
  %1193 = vmatprep.subr.mxu0 0.0
  %1194 = vmatpush1.msra.mxu0 1.0
  %1195 = vmatprep.subr.mxu0 0.0
  %1196 = vmatpush1.msra.mxu0 1.0
  %1197 = vmatprep.subr.mxu0 0.0
  %1198 = vmatpush1.msra.mxu0 1.0
  %1199 = vmatprep.subr.mxu0 0.0
  %1200 = vmatpush1.msra.mxu0 1.0
  %1201 = vmatprep.subr.mxu0 0.0
  %1202 = vmatpush1.msra.mxu0 1.0
  %1203 = vmatprep.subr.mxu0 0.0
  %1204 = vmatpush1.msra.mxu0 1.0
  %1205 = vmatprep.subr.mxu0 0.0
  %1206 = vmatpush1.msra.mxu0 1.0
  %1207 = vmatprep.subr.mxu0 0.0
  %1208 = vmatpush1.msra.mxu0 1.0
  %1209 = vmatprep.subr.mxu0 0.0
  %1210 = vmatpush1.msra.mxu0 1.0
  %1211 = vmatprep.subr.mxu0 0.0
  %1212 = vmatpush1.msra.mxu0 1.0
  %1213 = vmatprep.subr.mxu0 0.0
  %1214 = vmatpush1.msra.mxu0 1.0
  %1215 = vmatprep.subr.mxu0 0.0
  %1216 = vmatpush1.msra.mxu0 1.0
  %1217 = vmatprep.subr.mxu0 0.0
  %1218 = vmatpush1.msra.mxu0 1.0
  %1219 = vmatprep.subr.mxu0 0.0
  %1220 = vmatpush1.msra.mxu0 1.0
  %1221 = vmatprep.subr.mxu0 0.0
  %1222 = vmatpush1.msra.mxu0 1.0
  %1223 = vmatprep.subr.mxu0 0.0
  %1224 = vmatpush1.msra.mxu0 1.0
  %1225 = vmatprep.subr.mxu0 0.0
  %1226 = vmatpush1.msra.mxu0 1.0
  %1227 = vmatprep.subr.mxu0 0.0
  %1228 = vmatpush1.msra.mxu0 1.0
  %1229 = vmatprep.subr.mxu0 0.0
  %1230 = vmatpush1.msra.mxu0 1.0
  %1231 = vmatprep.subr.mxu0 0.0
  %1232 = vmatpush1.msra.mxu0 1.0
  %1233 = vmatprep.subr.mxu0 0.0
  %1234 = vmatpush1.msra.mxu0 1.0
  %1235 = vmatprep.subr.mxu0 0.0
  %1236 = vmatpush1.msra.mxu0 1.0
  %1237 = vmatprep.subr.mxu0 0.0
  %1238 = vmatpush1.msra.mxu0 1.0
  %1239 = vmatprep.subr.mxu0 0.0
  %1240 = vmatpush1.msra.mxu0 1.0
  %1241 = vmatprep.subr.mxu0 0.0
  %1242 = vmatpush1.msra.mxu0 1.0
  %1243 = vmatprep.mubr.f32.mxu0 %v1103
  %1244 = vmatmul.mubr.f32.gmra.mrb[0].mxu0 %v1101
  %v1245 = vpop.f32.mrb[0].mxu0
  %v1246 = vadd.f32 %v1176, %v1245
  %v1247 = vpop.f32.mrb[0].mxu0
  %1248 = vdwg.mxu0
  %v1249 = vmul.f32 %v1246, 0.001953125
  %1251 = vset.pattern.permute.xlu0 0
  %1252 = vperm.xlu0 %1251, %v1249
  %v1253 = vpop.permute.xlu0 %1252
  %v1255 = vsub.f32 %v1060, %v1253
  %v1256 = vsub.f32 %v1062, %v1253
  %v1257 = vsub.f32 %v1101, %v1253
  %v1258 = vsub.f32 %v1103, %v1253
  %v1259 = vmul.f32 %v1255, %v1255
  %v1260 = vmul.f32 %v1256, %v1256
  %v1261 = vmul.f32 %v1257, %v1257
  %v1262 = vmul.f32 %v1258, %v1258
  %1263 = vmatprep.subr.mxu0 0.0
  %1264 = vmatpush1.msra.mxu0 1.0
  %1265 = vmatprep.subr.mxu0 0.0
  %1266 = vmatpush1.msra.mxu0 1.0
  %1267 = vmatprep.subr.mxu0 0.0
  %1268 = vmatpush1.msra.mxu0 1.0
  %1269 = vmatprep.subr.mxu0 0.0
  %1270 = vmatpush1.msra.mxu0 1.0
  %1271 = vmatprep.subr.mxu0 0.0
  %1272 = vmatpush1.msra.mxu0 1.0
  %1273 = vmatprep.subr.mxu0 0.0
  %1274 = vmatpush1.msra.mxu0 1.0
  %1275 = vmatprep.subr.mxu0 0.0
  %1276 = vmatpush1.msra.mxu0 1.0
  %1277 = vmatprep.subr.mxu0 0.0
  %1278 = vmatpush1.msra.mxu0 1.0
  %1279 = vmatprep.subr.mxu0 0.0
  %1280 = vmatpush1.msra.mxu0 1.0
  %1281 = vmatprep.subr.mxu0 0.0
  %1282 = vmatpush1.msra.mxu0 1.0
  %1283 = vmatprep.subr.mxu0 0.0
  %1284 = vmatpush1.msra.mxu0 1.0
  %1285 = vmatprep.subr.mxu0 0.0
  %1286 = vmatpush1.msra.mxu0 1.0
  %1287 = vmatprep.subr.mxu0 0.0
  %1288 = vmatpush1.msra.mxu0 1.0
  %1289 = vmatprep.subr.mxu0 0.0
  %1290 = vmatpush1.msra.mxu0 1.0
  %1291 = vmatprep.subr.mxu0 0.0
  %1292 = vmatpush1.msra.mxu0 1.0
  %1293 = vmatprep.subr.mxu0 0.0
  %1294 = vmatpush1.msra.mxu0 1.0
  %1295 = vmatprep.subr.mxu0 0.0
  %1296 = vmatpush1.msra.mxu0 1.0
  %1297 = vmatprep.subr.mxu0 0.0
  %1298 = vmatpush1.msra.mxu0 1.0
  %1299 = vmatprep.subr.mxu0 0.0
  %1300 = vmatpush1.msra.mxu0 1.0
  %1301 = vmatprep.subr.mxu0 0.0
  %1302 = vmatpush1.msra.mxu0 1.0
  %1303 = vmatprep.subr.mxu0 0.0
  %1304 = vmatpush1.msra.mxu0 1.0
  %1305 = vmatprep.subr.mxu0 0.0
  %1306 = vmatpush1.msra.mxu0 1.0
  %1307 = vmatprep.subr.mxu0 0.0
  %1308 = vmatpush1.msra.mxu0 1.0
  %1309 = vmatprep.subr.mxu0 0.0
  %1310 = vmatpush1.msra.mxu0 1.0
  %1311 = vmatprep.subr.mxu0 0.0
  %1312 = vmatpush1.msra.mxu0 1.0
  %1313 = vmatprep.subr.mxu0 0.0
  %1314 = vmatpush1.msra.mxu0 1.0
  %1315 = vmatprep.subr.mxu0 0.0
  %1316 = vmatpush1.msra.mxu0 1.0
  %1317 = vmatprep.subr.mxu0 0.0
  %1318 = vmatpush1.msra.mxu0 1.0
  %1319 = vmatprep.subr.mxu0 0.0
  %1320 = vmatpush1.msra.mxu0 1.0
  %1321 = vmatprep.subr.mxu0 0.0
  %1322 = vmatpush1.msra.mxu0 1.0
  %1323 = vmatprep.subr.mxu0 0.0
  %1324 = vmatpush1.msra.mxu0 1.0
  %1325 = vmatprep.subr.mxu0 0.0
  %1326 = vmatpush1.msra.mxu0 1.0
  %1327 = vmatprep.mubr.f32.mxu0 %v1260
  %1328 = vmatmul.mubr.f32.gmra.mrb[0].mxu0 %v1259
  %v1329 = vpop.f32.mrb[0].mxu0
  %v1330 = vadd.f32 0.0, %v1329
  %v1331 = vpop.f32.mrb[0].mxu0
  %1332 = vdwg.mxu0
  %1333 = vmatprep.subr.mxu0 0.0
  %1334 = vmatpush1.msra.mxu0 1.0
  %1335 = vmatprep.subr.mxu0 0.0
  %1336 = vmatpush1.msra.mxu0 1.0
  %1337 = vmatprep.subr.mxu0 0.0
  %1338 = vmatpush1.msra.mxu0 1.0
  %1339 = vmatprep.subr.mxu0 0.0
  %1340 = vmatpush1.msra.mxu0 1.0
  %1341 = vmatprep.subr.mxu0 0.0
  %1342 = vmatpush1.msra.mxu0 1.0
  %1343 = vmatprep.subr.mxu0 0.0
  %1344 = vmatpush1.msra.mxu0 1.0
  %1345 = vmatprep.subr.mxu0 0.0
  %1346 = vmatpush1.msra.mxu0 1.0
  %1347 = vmatprep.subr.mxu0 0.0
  %1348 = vmatpush1.msra.mxu0 1.0
  %1349 = vmatprep.subr.mxu0 0.0
  %1350 = vmatpush1.msra.mxu0 1.0
  %1351 = vmatprep.subr.mxu0 0.0
  %1352 = vmatpush1.msra.mxu0 1.0
  %1353 = vmatprep.subr.mxu0 0.0
  %1354 = vmatpush1.msra.mxu0 1.0
  %1355 = vmatprep.subr.mxu0 0.0
  %1356 = vmatpush1.msra.mxu0 1.0
  %1357 = vmatprep.subr.mxu0 0.0
  %1358 = vmatpush1.msra.mxu0 1.0
  %1359 = vmatprep.subr.mxu0 0.0
  %1360 = vmatpush1.msra.mxu0 1.0
  %1361 = vmatprep.subr.mxu0 0.0
  %1362 = vmatpush1.msra.mxu0 1.0
  %1363 = vmatprep.subr.mxu0 0.0
  %1364 = vmatpush1.msra.mxu0 1.0
  %1365 = vmatprep.subr.mxu0 0.0
  %1366 = vmatpush1.msra.mxu0 1.0
  %1367 = vmatprep.subr.mxu0 0.0
  %1368 = vmatpush1.msra.mxu0 1.0
  %1369 = vmatprep.subr.mxu0 0.0
  %1370 = vmatpush1.msra.mxu0 1.0
  %1371 = vmatprep.subr.mxu0 0.0
  %1372 = vmatpush1.msra.mxu0 1.0
  %1373 = vmatprep.subr.mxu0 0.0
  %1374 = vmatpush1.msra.mxu0 1.0
  %1375 = vmatprep.subr.mxu0 0.0
  %1376 = vmatpush1.msra.mxu0 1.0
  %1377 = vmatprep.subr.mxu0 0.0
  %1378 = vmatpush1.msra.mxu0 1.0
  %1379 = vmatprep.subr.mxu0 0.0
  %1380 = vmatpush1.msra.mxu0 1.0
  %1381 = vmatprep.subr.mxu0 0.0
  %1382 = vmatpush1.msra.mxu0 1.0
  %1383 = vmatprep.subr.mxu0 0.0
  %1384 = vmatpush1.msra.mxu0 1.0
  %1385 = vmatprep.subr.mxu0 0.0
  %1386 = vmatpush1.msra.mxu0 1.0
  %1387 = vmatprep.subr.mxu0 0.0
  %1388 = vmatpush1.msra.mxu0 1.0
  %1389 = vmatprep.subr.mxu0 0.0
  %1390 = vmatpush1.msra.mxu0 1.0
  %1391 = vmatprep.subr.mxu0 0.0
  %1392 = vmatpush1.msra.mxu0 1.0
  %1393 = vmatprep.subr.mxu0 0.0
  %1394 = vmatpush1.msra.mxu0 1.0
  %1395 = vmatprep.subr.mxu0 0.0
  %1396 = vmatpush1.msra.mxu0 1.0
  %1397 = vmatprep.mubr.f32.mxu0 %v1262
  %1398 = vmatmul.mubr.f32.gmra.mrb[0].mxu0 %v1261
  %v1399 = vpop.f32.mrb[0].mxu0
  %v1400 = vadd.f32 %v1330, %v1399
  %v1401 = vpop.f32.mrb[0].mxu0
  %1402 = vdwg.mxu0
  %v1403 = vmul.f32 %v1400, 0.001953125
  %v1404 = vadd.f32 %v1403, 1e-05
  %v1405 = vrsqrt.pop %v1404
  %v1406 = vmul.f32 %v1405, %v1107
  %1408 = vset.pattern.permute.xlu0 0
  %1409 = vperm.xlu0 %1408, %v1406
  %v1410 = vpop.permute.xlu0 %1409
  %v1412 = vmul.f32 %v1255, %v1410
  %v1413 = vmul.f32 %v1256, %v1410
  %v1414 = vmul.f32 %v1257, %v1410
  %v1415 = vmul.f32 %v1258, %v1410
  %1417 = vset.pattern.permute.xlu0 0
  %1418 = vperm.xlu0 %1417, %v1108
  %v1419 = vpop.permute.xlu0 %1418
  %v1421 = vadd.f32 %v1412, %v1419
  %v1422 = vadd.f32 %v1413, %v1419
  %v1423 = vadd.f32 %v1414, %v1419
  %v1424 = vadd.f32 %v1415, %v1419
  %v1425 = vmax.f32 %v1421, 0.0
  %v1426 = vmax.f32 %v1422, 0.0
  %v1427 = vmax.f32 %v1423, 0.0
  %v1428 = vmax.f32 %v1424, 0.0
  %1429 = vrot.lane.b32.xlu0 %v1425, 17
  %v1430 = vpop.permute.xlu0 %1429
  %1431 = vrot.lane.b32.xlu0 %v1426, 17
  %v1432 = vpop.permute.xlu0 %1431
  %1433 = vrot.lane.b32.xlu0 %v1427, 17
  %v1434 = vpop.permute.xlu0 %1433
  %1435 = vrot.lane.b32.xlu0 %v1428, 17
  %v1436 = vpop.permute.xlu0 %1435
  %v1437 = vsel %vm94, %v1434, %v1436
  %v1438 = vsel %vm94, %v1432, %v1434
  %v1439 = vsel %vm94, %v1430, %v1432
  %v1440 = vsel %vm94, %v1436, %v1430
  %v1441 = vmul.f32 %v1440, %v103
  %v1442 = vmul.f32 %v1439, %v107
  %v1443 = vmul.f32 %v1438, %v111
  %v1444 = vmul.f32 %v1437, %v115
  %1445 = vrot.lane.b32.xlu0 %v1425, 16
  %v1446 = vpop.permute.xlu0 %1445
  %1447 = vrot.lane.b32.xlu0 %v1426, 16
  %v1448 = vpop.permute.xlu0 %1447
  %1449 = vrot.lane.b32.xlu0 %v1427, 16
  %v1450 = vpop.permute.xlu0 %1449
  %1451 = vrot.lane.b32.xlu0 %v1428, 16
  %v1452 = vpop.permute.xlu0 %1451
  %v1453 = vsel %vm132, %v1450, %v1452
  %v1454 = vsel %vm132, %v1448, %v1450
  %v1455 = vsel %vm132, %v1446, %v1448
  %v1456 = vsel %vm132, %v1452, %v1446
  %v1457 = vmul.f32 %v1456, %v141
  %v1458 = vmul.f32 %v1455, %v145
  %v1459 = vmul.f32 %v1454, %v149
  %v1460 = vmul.f32 %v1453, %v153
  %1461 = vrot.lane.b32.xlu0 %v1425, 15
  %v1462 = vpop.permute.xlu0 %1461
  %1463 = vrot.lane.b32.xlu0 %v1426, 15
  %v1464 = vpop.permute.xlu0 %1463
  %1465 = vrot.lane.b32.xlu0 %v1427, 15
  %v1466 = vpop.permute.xlu0 %1465
  %1467 = vrot.lane.b32.xlu0 %v1428, 15
  %v1468 = vpop.permute.xlu0 %1467
  %v1469 = vsel %vm170, %v1466, %v1468
  %v1470 = vsel %vm170, %v1464, %v1466
  %v1471 = vsel %vm170, %v1462, %v1464
  %v1472 = vsel %vm170, %v1468, %v1462
  %v1473 = vmul.f32 %v1472, %v179
  %v1474 = vmul.f32 %v1471, %v183
  %v1475 = vmul.f32 %v1470, %v187
  %v1476 = vmul.f32 %v1469, %v191
  %1477 = vrot.lane.b32.xlu0 %v1425, 1
  %v1478 = vpop.permute.xlu0 %1477
  %1479 = vrot.lane.b32.xlu0 %v1426, 1
  %v1480 = vpop.permute.xlu0 %1479
  %1481 = vrot.lane.b32.xlu0 %v1427, 1
  %v1482 = vpop.permute.xlu0 %1481
  %1483 = vrot.lane.b32.xlu0 %v1428, 1
  %v1484 = vpop.permute.xlu0 %1483
  %v1485 = vsel %vm208, %v1482, %v1484
  %v1486 = vsel %vm208, %v1480, %v1482
  %v1487 = vsel %vm208, %v1478, %v1480
  %v1488 = vsel %vm208, %v1484, %v1478
  %v1489 = vmul.f32 %v1488, %v217
  %v1490 = vmul.f32 %v1487, %v221
  %v1491 = vmul.f32 %v1486, %v225
  %v1492 = vmul.f32 %v1485, %v229
  %v1493 = vmul.f32 %v1425, %v242
  %v1494 = vmul.f32 %v1426, %v246
  %v1495 = vmul.f32 %v1427, %v250
  %v1496 = vmul.f32 %v1428, %v254
  %1497 = vrot.lane.b32.xlu0 %v1425, 127
  %v1498 = vpop.permute.xlu0 %1497
  %1499 = vrot.lane.b32.xlu0 %v1426, 127
  %v1500 = vpop.permute.xlu0 %1499
  %1501 = vrot.lane.b32.xlu0 %v1427, 127
  %v1502 = vpop.permute.xlu0 %1501
  %1503 = vrot.lane.b32.xlu0 %v1428, 127
  %v1504 = vpop.permute.xlu0 %1503
  %v1505 = vsel %vm271, %v1502, %v1504
  %v1506 = vsel %vm271, %v1500, %v1502
  %v1507 = vsel %vm271, %v1498, %v1500
  %v1508 = vsel %vm271, %v1504, %v1498
  %v1509 = vmul.f32 %v1507, %v280
  %v1510 = vmul.f32 %v1506, %v284
  %v1511 = vmul.f32 %v1505, %v288
  %v1512 = vmul.f32 %v1508, %v292
  %1513 = vrot.lane.b32.xlu0 %v1425, 113
  %v1514 = vpop.permute.xlu0 %1513
  %1515 = vrot.lane.b32.xlu0 %v1426, 113
  %v1516 = vpop.permute.xlu0 %1515
  %1517 = vrot.lane.b32.xlu0 %v1427, 113
  %v1518 = vpop.permute.xlu0 %1517
  %1519 = vrot.lane.b32.xlu0 %v1428, 113
  %v1520 = vpop.permute.xlu0 %1519
  %v1521 = vsel %vm309, %v1518, %v1520
  %v1522 = vsel %vm309, %v1516, %v1518
  %v1523 = vsel %vm309, %v1514, %v1516
  %v1524 = vsel %vm309, %v1520, %v1514
  %v1525 = vmul.f32 %v1523, %v318
  %v1526 = vmul.f32 %v1522, %v322
  %v1527 = vmul.f32 %v1521, %v326
  %v1528 = vmul.f32 %v1524, %v330
  %1529 = vrot.lane.b32.xlu0 %v1425, 112
  %v1530 = vpop.permute.xlu0 %1529
  %1531 = vrot.lane.b32.xlu0 %v1426, 112
  %v1532 = vpop.permute.xlu0 %1531
  %1533 = vrot.lane.b32.xlu0 %v1427, 112
  %v1534 = vpop.permute.xlu0 %1533
  %1535 = vrot.lane.b32.xlu0 %v1428, 112
  %v1536 = vpop.permute.xlu0 %1535
  %v1537 = vsel %vm347, %v1534, %v1536
  %v1538 = vsel %vm347, %v1532, %v1534
  %v1539 = vsel %vm347, %v1530, %v1532
  %v1540 = vsel %vm347, %v1536, %v1530
  %v1541 = vmul.f32 %v1539, %v356
  %v1542 = vmul.f32 %v1538, %v360
  %v1543 = vmul.f32 %v1537, %v364
  %v1544 = vmul.f32 %v1540, %v368
  %1545 = vrot.lane.b32.xlu0 %v1425, 111
  %v1546 = vpop.permute.xlu0 %1545
  %1547 = vrot.lane.b32.xlu0 %v1426, 111
  %v1548 = vpop.permute.xlu0 %1547
  %1549 = vrot.lane.b32.xlu0 %v1427, 111
  %v1550 = vpop.permute.xlu0 %1549
  %1551 = vrot.lane.b32.xlu0 %v1428, 111
  %v1552 = vpop.permute.xlu0 %1551
  %v1553 = vsel %vm385, %v1550, %v1552
  %v1554 = vsel %vm385, %v1548, %v1550
  %v1555 = vsel %vm385, %v1546, %v1548
  %v1556 = vsel %vm385, %v1552, %v1546
  %v1557 = vmul.f32 %v1555, %v394
  %v1558 = vmul.f32 %v1554, %v398
  %v1559 = vmul.f32 %v1553, %v402
  %v1560 = vmul.f32 %v1556, %v406
  %v1561 = vpack.c.bf16 %v1457, %v1441
  %v1562 = vpack.c.bf16 %v1458, %v1442
  %v1563 = vpack.c.bf16 %v1459, %v1443
  %v1564 = vpack.c.bf16 %v1460, %v1444
  %v1565 = vpack.c.bf16 %v1489, %v1473
  %v1566 = vpack.c.bf16 %v1490, %v1474
  %v1567 = vpack.c.bf16 %v1491, %v1475
  %v1568 = vpack.c.bf16 %v1492, %v1476
  %v1569 = vpack.c.bf16 %v1509, %v1493
  %v1570 = vpack.c.bf16 %v1510, %v1494
  %v1571 = vpack.c.bf16 %v1511, %v1495
  %v1572 = vpack.c.bf16 %v1512, %v1496
  %v1573 = vpack.c.bf16 %v1541, %v1525
  %v1574 = vpack.c.bf16 %v1542, %v1526
  %v1575 = vpack.c.bf16 %v1543, %v1527
  %v1576 = vpack.c.bf16 %v1544, %v1528
  %v1577 = vpack.c.bf16 %v1557, %v1557
  %v1578 = vpack.c.bf16 %v1558, %v1558
  %v1579 = vpack.c.bf16 %v1559, %v1559
  %v1580 = vpack.c.bf16 %v1560, %v1560
  %v1581 = vld [vmem:[%s8] sm:$0xf]
  %v1583 = vsel %vm436, %v1581, 0
  %v1586 = vsel %vm440, %v1577, 0
  %v1589 = vsel %vm440, %v1578, 0
  %v1592 = vsel %vm440, %v1579, 0
  %v1595 = vsel %vm440, %v1580, 0
  %1597 = vmatprep.subr.bf16.mxu0 %v1562
  %1598 = vmatpush1.bf16.msra.mxu0 %v1561
  %1599 = vmatprep.subr.bf16.mxu0 %v1566
  %1600 = vmatpush1.bf16.msra.mxu0 %v1565
  %1601 = vmatprep.subr.bf16.mxu0 %v1570
  %1602 = vmatpush1.bf16.msra.mxu0 %v1569
  %1603 = vmatprep.subr.bf16.mxu0 %v1574
  %1604 = vmatpush1.bf16.msra.mxu0 %v1573
  %1605 = vmatprep.subr.bf16.mxu0 %v1589
  %1606 = vmatpush1.bf16.msra.mxu0 %v1586
  %1607 = vmatprep.subr.bf16.mxu0 0
  %1608 = vmatpush1.bf16.msra.mxu0 0
  %1609 = vmatprep.subr.bf16.mxu0 0
  %1610 = vmatpush1.bf16.msra.mxu0 0
  %1611 = vmatprep.subr.bf16.mxu0 0
  %1612 = vmatpush1.bf16.msra.mxu0 0
  %1613 = vmatprep.subr.bf16.mxu0 0
  %1614 = vmatpush1.bf16.msra.mxu0 0
  %1615 = vmatprep.subr.bf16.mxu0 0
  %1616 = vmatpush1.bf16.msra.mxu0 0
  %1617 = vmatprep.subr.bf16.mxu0 0
  %1618 = vmatpush1.bf16.msra.mxu0 0
  %1619 = vmatprep.subr.bf16.mxu0 0
  %1620 = vmatpush1.bf16.msra.mxu0 0
  %1621 = vmatprep.subr.bf16.mxu0 0
  %1622 = vmatpush1.bf16.msra.mxu0 0
  %1623 = vmatprep.subr.bf16.mxu0 0
  %1624 = vmatpush1.bf16.msra.mxu0 0
  %1625 = vmatprep.subr.bf16.mxu0 0
  %1626 = vmatpush1.bf16.msra.mxu0 0
  %1627 = vmatprep.subr.bf16.mxu0 0
  %1628 = vmatpush1.bf16.msra.mxu0 0
  %1629 = vmatprep.mubr.bf16.mxu0 0
  %1630 = vmatmul.mubr.bf16.gmra.mrb[0].mxu0 %v1583
  %v1631 = vpop.f32.mrb[0].mxu0
  %v1632 = vadd.f32 0.0, %v1631
  %v1633 = vpop.f32.mrb[0].mxu0
  %v1634 = vadd.f32 0.0, %v1633
  %v1635 = vpop.f32.mrb[0].mxu0
  %v1636 = vpop.f32.mrb[0].mxu0
  %1637 = vdwg.mxu0
  %1638 = vmatprep.subr.bf16.mxu0 %v1564
  %1639 = vmatpush1.bf16.msra.mxu0 %v1563
  %1640 = vmatprep.subr.bf16.mxu0 %v1568
  %1641 = vmatpush1.bf16.msra.mxu0 %v1567
  %1642 = vmatprep.subr.bf16.mxu0 %v1572
  %1643 = vmatpush1.bf16.msra.mxu0 %v1571
  %1644 = vmatprep.subr.bf16.mxu0 %v1576
  %1645 = vmatpush1.bf16.msra.mxu0 %v1575
  %1646 = vmatprep.subr.bf16.mxu0 %v1595
  %1647 = vmatpush1.bf16.msra.mxu0 %v1592
  %1648 = vmatprep.subr.bf16.mxu0 0
  %1649 = vmatpush1.bf16.msra.mxu0 0
  %1650 = vmatprep.subr.bf16.mxu0 0
  %1651 = vmatpush1.bf16.msra.mxu0 0
  %1652 = vmatprep.subr.bf16.mxu0 0
  %1653 = vmatpush1.bf16.msra.mxu0 0
  %1654 = vmatprep.subr.bf16.mxu0 0
  %1655 = vmatpush1.bf16.msra.mxu0 0
  %1656 = vmatprep.subr.bf16.mxu0 0
  %1657 = vmatpush1.bf16.msra.mxu0 0
  %1658 = vmatprep.subr.bf16.mxu0 0
  %1659 = vmatpush1.bf16.msra.mxu0 0
  %1660 = vmatprep.subr.bf16.mxu0 0
  %1661 = vmatpush1.bf16.msra.mxu0 0
  %1662 = vmatprep.subr.bf16.mxu0 0
  %1663 = vmatpush1.bf16.msra.mxu0 0
  %1664 = vmatprep.subr.bf16.mxu0 0
  %1665 = vmatpush1.bf16.msra.mxu0 0
  %1666 = vmatprep.subr.bf16.mxu0 0
  %1667 = vmatpush1.bf16.msra.mxu0 0
  %1668 = vmatprep.subr.bf16.mxu0 0
  %1669 = vmatpush1.bf16.msra.mxu0 0
  %1670 = vmatprep.mubr.bf16.mxu0 0
  %1671 = vmatmul.mubr.bf16.gmra.mrb[0].mxu0 %v1583
  %v1672 = vpop.f32.mrb[0].mxu0
  %v1673 = vadd.f32 0.0, %v1672
  %v1674 = vpop.f32.mrb[0].mxu0
  %v1675 = vadd.f32 0.0, %v1674
  %v1676 = vpop.f32.mrb[0].mxu0
  %v1677 = vpop.f32.mrb[0].mxu0
  %1678 = vdwg.mxu0
  %v1679 = vld [vmem:[%s9] sm:$0xff]
  %v1680 = vld [vmem:[%s10] sm:$0xff]
  %1681 = vmatprep.subr.mxu0 0.0
  %1682 = vmatpush1.msra.mxu0 1.0
  %1683 = vmatprep.subr.mxu0 0.0
  %1684 = vmatpush1.msra.mxu0 1.0
  %1685 = vmatprep.subr.mxu0 0.0
  %1686 = vmatpush1.msra.mxu0 1.0
  %1687 = vmatprep.subr.mxu0 0.0
  %1688 = vmatpush1.msra.mxu0 1.0
  %1689 = vmatprep.subr.mxu0 0.0
  %1690 = vmatpush1.msra.mxu0 1.0
  %1691 = vmatprep.subr.mxu0 0.0
  %1692 = vmatpush1.msra.mxu0 1.0
  %1693 = vmatprep.subr.mxu0 0.0
  %1694 = vmatpush1.msra.mxu0 1.0
  %1695 = vmatprep.subr.mxu0 0.0
  %1696 = vmatpush1.msra.mxu0 1.0
  %1697 = vmatprep.subr.mxu0 0.0
  %1698 = vmatpush1.msra.mxu0 1.0
  %1699 = vmatprep.subr.mxu0 0.0
  %1700 = vmatpush1.msra.mxu0 1.0
  %1701 = vmatprep.subr.mxu0 0.0
  %1702 = vmatpush1.msra.mxu0 1.0
  %1703 = vmatprep.subr.mxu0 0.0
  %1704 = vmatpush1.msra.mxu0 1.0
  %1705 = vmatprep.subr.mxu0 0.0
  %1706 = vmatpush1.msra.mxu0 1.0
  %1707 = vmatprep.subr.mxu0 0.0
  %1708 = vmatpush1.msra.mxu0 1.0
  %1709 = vmatprep.subr.mxu0 0.0
  %1710 = vmatpush1.msra.mxu0 1.0
  %1711 = vmatprep.subr.mxu0 0.0
  %1712 = vmatpush1.msra.mxu0 1.0
  %1713 = vmatprep.subr.mxu0 0.0
  %1714 = vmatpush1.msra.mxu0 1.0
  %1715 = vmatprep.subr.mxu0 0.0
  %1716 = vmatpush1.msra.mxu0 1.0
  %1717 = vmatprep.subr.mxu0 0.0
  %1718 = vmatpush1.msra.mxu0 1.0
  %1719 = vmatprep.subr.mxu0 0.0
  %1720 = vmatpush1.msra.mxu0 1.0
  %1721 = vmatprep.subr.mxu0 0.0
  %1722 = vmatpush1.msra.mxu0 1.0
  %1723 = vmatprep.subr.mxu0 0.0
  %1724 = vmatpush1.msra.mxu0 1.0
  %1725 = vmatprep.subr.mxu0 0.0
  %1726 = vmatpush1.msra.mxu0 1.0
  %1727 = vmatprep.subr.mxu0 0.0
  %1728 = vmatpush1.msra.mxu0 1.0
  %1729 = vmatprep.subr.mxu0 0.0
  %1730 = vmatpush1.msra.mxu0 1.0
  %1731 = vmatprep.subr.mxu0 0.0
  %1732 = vmatpush1.msra.mxu0 1.0
  %1733 = vmatprep.subr.mxu0 0.0
  %1734 = vmatpush1.msra.mxu0 1.0
  %1735 = vmatprep.subr.mxu0 0.0
  %1736 = vmatpush1.msra.mxu0 1.0
  %1737 = vmatprep.subr.mxu0 0.0
  %1738 = vmatpush1.msra.mxu0 1.0
  %1739 = vmatprep.subr.mxu0 0.0
  %1740 = vmatpush1.msra.mxu0 1.0
  %1741 = vmatprep.subr.mxu0 0.0
  %1742 = vmatpush1.msra.mxu0 1.0
  %1743 = vmatprep.subr.mxu0 0.0
  %1744 = vmatpush1.msra.mxu0 1.0
  %1745 = vmatprep.mubr.f32.mxu0 %v1634
  %1746 = vmatmul.mubr.f32.gmra.mrb[0].mxu0 %v1632
  %v1747 = vpop.f32.mrb[0].mxu0
  %v1748 = vadd.f32 0.0, %v1747
  %v1749 = vpop.f32.mrb[0].mxu0
  %1750 = vdwg.mxu0
  %1751 = vmatprep.subr.mxu0 0.0
  %1752 = vmatpush1.msra.mxu0 1.0
  %1753 = vmatprep.subr.mxu0 0.0
  %1754 = vmatpush1.msra.mxu0 1.0
  %1755 = vmatprep.subr.mxu0 0.0
  %1756 = vmatpush1.msra.mxu0 1.0
  %1757 = vmatprep.subr.mxu0 0.0
  %1758 = vmatpush1.msra.mxu0 1.0
  %1759 = vmatprep.subr.mxu0 0.0
  %1760 = vmatpush1.msra.mxu0 1.0
  %1761 = vmatprep.subr.mxu0 0.0
  %1762 = vmatpush1.msra.mxu0 1.0
  %1763 = vmatprep.subr.mxu0 0.0
  %1764 = vmatpush1.msra.mxu0 1.0
  %1765 = vmatprep.subr.mxu0 0.0
  %1766 = vmatpush1.msra.mxu0 1.0
  %1767 = vmatprep.subr.mxu0 0.0
  %1768 = vmatpush1.msra.mxu0 1.0
  %1769 = vmatprep.subr.mxu0 0.0
  %1770 = vmatpush1.msra.mxu0 1.0
  %1771 = vmatprep.subr.mxu0 0.0
  %1772 = vmatpush1.msra.mxu0 1.0
  %1773 = vmatprep.subr.mxu0 0.0
  %1774 = vmatpush1.msra.mxu0 1.0
  %1775 = vmatprep.subr.mxu0 0.0
  %1776 = vmatpush1.msra.mxu0 1.0
  %1777 = vmatprep.subr.mxu0 0.0
  %1778 = vmatpush1.msra.mxu0 1.0
  %1779 = vmatprep.subr.mxu0 0.0
  %1780 = vmatpush1.msra.mxu0 1.0
  %1781 = vmatprep.subr.mxu0 0.0
  %1782 = vmatpush1.msra.mxu0 1.0
  %1783 = vmatprep.subr.mxu0 0.0
  %1784 = vmatpush1.msra.mxu0 1.0
  %1785 = vmatprep.subr.mxu0 0.0
  %1786 = vmatpush1.msra.mxu0 1.0
  %1787 = vmatprep.subr.mxu0 0.0
  %1788 = vmatpush1.msra.mxu0 1.0
  %1789 = vmatprep.subr.mxu0 0.0
  %1790 = vmatpush1.msra.mxu0 1.0
  %1791 = vmatprep.subr.mxu0 0.0
  %1792 = vmatpush1.msra.mxu0 1.0
  %1793 = vmatprep.subr.mxu0 0.0
  %1794 = vmatpush1.msra.mxu0 1.0
  %1795 = vmatprep.subr.mxu0 0.0
  %1796 = vmatpush1.msra.mxu0 1.0
  %1797 = vmatprep.subr.mxu0 0.0
  %1798 = vmatpush1.msra.mxu0 1.0
  %1799 = vmatprep.subr.mxu0 0.0
  %1800 = vmatpush1.msra.mxu0 1.0
  %1801 = vmatprep.subr.mxu0 0.0
  %1802 = vmatpush1.msra.mxu0 1.0
  %1803 = vmatprep.subr.mxu0 0.0
  %1804 = vmatpush1.msra.mxu0 1.0
  %1805 = vmatprep.subr.mxu0 0.0
  %1806 = vmatpush1.msra.mxu0 1.0
  %1807 = vmatprep.subr.mxu0 0.0
  %1808 = vmatpush1.msra.mxu0 1.0
  %1809 = vmatprep.subr.mxu0 0.0
  %1810 = vmatpush1.msra.mxu0 1.0
  %1811 = vmatprep.subr.mxu0 0.0
  %1812 = vmatpush1.msra.mxu0 1.0
  %1813 = vmatprep.subr.mxu0 0.0
  %1814 = vmatpush1.msra.mxu0 1.0
  %1815 = vmatprep.mubr.f32.mxu0 %v1675
  %1816 = vmatmul.mubr.f32.gmra.mrb[0].mxu0 %v1673
  %v1817 = vpop.f32.mrb[0].mxu0
  %v1818 = vadd.f32 %v1748, %v1817
  %v1819 = vpop.f32.mrb[0].mxu0
  %1820 = vdwg.mxu0
  %v1821 = vmul.f32 %v1818, 0.001953125
  %1823 = vset.pattern.permute.xlu0 0
  %1824 = vperm.xlu0 %1823, %v1821
  %v1825 = vpop.permute.xlu0 %1824
  %v1827 = vsub.f32 %v1632, %v1825
  %v1828 = vsub.f32 %v1634, %v1825
  %v1829 = vsub.f32 %v1673, %v1825
  %v1830 = vsub.f32 %v1675, %v1825
  %v1831 = vmul.f32 %v1827, %v1827
  %v1832 = vmul.f32 %v1828, %v1828
  %v1833 = vmul.f32 %v1829, %v1829
  %v1834 = vmul.f32 %v1830, %v1830
  %1835 = vmatprep.subr.mxu0 0.0
  %1836 = vmatpush1.msra.mxu0 1.0
  %1837 = vmatprep.subr.mxu0 0.0
  %1838 = vmatpush1.msra.mxu0 1.0
  %1839 = vmatprep.subr.mxu0 0.0
  %1840 = vmatpush1.msra.mxu0 1.0
  %1841 = vmatprep.subr.mxu0 0.0
  %1842 = vmatpush1.msra.mxu0 1.0
  %1843 = vmatprep.subr.mxu0 0.0
  %1844 = vmatpush1.msra.mxu0 1.0
  %1845 = vmatprep.subr.mxu0 0.0
  %1846 = vmatpush1.msra.mxu0 1.0
  %1847 = vmatprep.subr.mxu0 0.0
  %1848 = vmatpush1.msra.mxu0 1.0
  %1849 = vmatprep.subr.mxu0 0.0
  %1850 = vmatpush1.msra.mxu0 1.0
  %1851 = vmatprep.subr.mxu0 0.0
  %1852 = vmatpush1.msra.mxu0 1.0
  %1853 = vmatprep.subr.mxu0 0.0
  %1854 = vmatpush1.msra.mxu0 1.0
  %1855 = vmatprep.subr.mxu0 0.0
  %1856 = vmatpush1.msra.mxu0 1.0
  %1857 = vmatprep.subr.mxu0 0.0
  %1858 = vmatpush1.msra.mxu0 1.0
  %1859 = vmatprep.subr.mxu0 0.0
  %1860 = vmatpush1.msra.mxu0 1.0
  %1861 = vmatprep.subr.mxu0 0.0
  %1862 = vmatpush1.msra.mxu0 1.0
  %1863 = vmatprep.subr.mxu0 0.0
  %1864 = vmatpush1.msra.mxu0 1.0
  %1865 = vmatprep.subr.mxu0 0.0
  %1866 = vmatpush1.msra.mxu0 1.0
  %1867 = vmatprep.subr.mxu0 0.0
  %1868 = vmatpush1.msra.mxu0 1.0
  %1869 = vmatprep.subr.mxu0 0.0
  %1870 = vmatpush1.msra.mxu0 1.0
  %1871 = vmatprep.subr.mxu0 0.0
  %1872 = vmatpush1.msra.mxu0 1.0
  %1873 = vmatprep.subr.mxu0 0.0
  %1874 = vmatpush1.msra.mxu0 1.0
  %1875 = vmatprep.subr.mxu0 0.0
  %1876 = vmatpush1.msra.mxu0 1.0
  %1877 = vmatprep.subr.mxu0 0.0
  %1878 = vmatpush1.msra.mxu0 1.0
  %1879 = vmatprep.subr.mxu0 0.0
  %1880 = vmatpush1.msra.mxu0 1.0
  %1881 = vmatprep.subr.mxu0 0.0
  %1882 = vmatpush1.msra.mxu0 1.0
  %1883 = vmatprep.subr.mxu0 0.0
  %1884 = vmatpush1.msra.mxu0 1.0
  %1885 = vmatprep.subr.mxu0 0.0
  %1886 = vmatpush1.msra.mxu0 1.0
  %1887 = vmatprep.subr.mxu0 0.0
  %1888 = vmatpush1.msra.mxu0 1.0
  %1889 = vmatprep.subr.mxu0 0.0
  %1890 = vmatpush1.msra.mxu0 1.0
  %1891 = vmatprep.subr.mxu0 0.0
  %1892 = vmatpush1.msra.mxu0 1.0
  %1893 = vmatprep.subr.mxu0 0.0
  %1894 = vmatpush1.msra.mxu0 1.0
  %1895 = vmatprep.subr.mxu0 0.0
  %1896 = vmatpush1.msra.mxu0 1.0
  %1897 = vmatprep.subr.mxu0 0.0
  %1898 = vmatpush1.msra.mxu0 1.0
  %1899 = vmatprep.mubr.f32.mxu0 %v1832
  %1900 = vmatmul.mubr.f32.gmra.mrb[0].mxu0 %v1831
  %v1901 = vpop.f32.mrb[0].mxu0
  %v1902 = vadd.f32 0.0, %v1901
  %v1903 = vpop.f32.mrb[0].mxu0
  %1904 = vdwg.mxu0
  %1905 = vmatprep.subr.mxu0 0.0
  %1906 = vmatpush1.msra.mxu0 1.0
  %1907 = vmatprep.subr.mxu0 0.0
  %1908 = vmatpush1.msra.mxu0 1.0
  %1909 = vmatprep.subr.mxu0 0.0
  %1910 = vmatpush1.msra.mxu0 1.0
  %1911 = vmatprep.subr.mxu0 0.0
  %1912 = vmatpush1.msra.mxu0 1.0
  %1913 = vmatprep.subr.mxu0 0.0
  %1914 = vmatpush1.msra.mxu0 1.0
  %1915 = vmatprep.subr.mxu0 0.0
  %1916 = vmatpush1.msra.mxu0 1.0
  %1917 = vmatprep.subr.mxu0 0.0
  %1918 = vmatpush1.msra.mxu0 1.0
  %1919 = vmatprep.subr.mxu0 0.0
  %1920 = vmatpush1.msra.mxu0 1.0
  %1921 = vmatprep.subr.mxu0 0.0
  %1922 = vmatpush1.msra.mxu0 1.0
  %1923 = vmatprep.subr.mxu0 0.0
  %1924 = vmatpush1.msra.mxu0 1.0
  %1925 = vmatprep.subr.mxu0 0.0
  %1926 = vmatpush1.msra.mxu0 1.0
  %1927 = vmatprep.subr.mxu0 0.0
  %1928 = vmatpush1.msra.mxu0 1.0
  %1929 = vmatprep.subr.mxu0 0.0
  %1930 = vmatpush1.msra.mxu0 1.0
  %1931 = vmatprep.subr.mxu0 0.0
  %1932 = vmatpush1.msra.mxu0 1.0
  %1933 = vmatprep.subr.mxu0 0.0
  %1934 = vmatpush1.msra.mxu0 1.0
  %1935 = vmatprep.subr.mxu0 0.0
  %1936 = vmatpush1.msra.mxu0 1.0
  %1937 = vmatprep.subr.mxu0 0.0
  %1938 = vmatpush1.msra.mxu0 1.0
  %1939 = vmatprep.subr.mxu0 0.0
  %1940 = vmatpush1.msra.mxu0 1.0
  %1941 = vmatprep.subr.mxu0 0.0
  %1942 = vmatpush1.msra.mxu0 1.0
  %1943 = vmatprep.subr.mxu0 0.0
  %1944 = vmatpush1.msra.mxu0 1.0
  %1945 = vmatprep.subr.mxu0 0.0
  %1946 = vmatpush1.msra.mxu0 1.0
  %1947 = vmatprep.subr.mxu0 0.0
  %1948 = vmatpush1.msra.mxu0 1.0
  %1949 = vmatprep.subr.mxu0 0.0
  %1950 = vmatpush1.msra.mxu0 1.0
  %1951 = vmatprep.subr.mxu0 0.0
  %1952 = vmatpush1.msra.mxu0 1.0
  %1953 = vmatprep.subr.mxu0 0.0
  %1954 = vmatpush1.msra.mxu0 1.0
  %1955 = vmatprep.subr.mxu0 0.0
  %1956 = vmatpush1.msra.mxu0 1.0
  %1957 = vmatprep.subr.mxu0 0.0
  %1958 = vmatpush1.msra.mxu0 1.0
  %1959 = vmatprep.subr.mxu0 0.0
  %1960 = vmatpush1.msra.mxu0 1.0
  %1961 = vmatprep.subr.mxu0 0.0
  %1962 = vmatpush1.msra.mxu0 1.0
  %1963 = vmatprep.subr.mxu0 0.0
  %1964 = vmatpush1.msra.mxu0 1.0
  %1965 = vmatprep.subr.mxu0 0.0
  %1966 = vmatpush1.msra.mxu0 1.0
  %1967 = vmatprep.subr.mxu0 0.0
  %1968 = vmatpush1.msra.mxu0 1.0
  %1969 = vmatprep.mubr.f32.mxu0 %v1834
  %1970 = vmatmul.mubr.f32.gmra.mrb[0].mxu0 %v1833
  %v1971 = vpop.f32.mrb[0].mxu0
  %v1972 = vadd.f32 %v1902, %v1971
  %v1973 = vpop.f32.mrb[0].mxu0
  %1974 = vdwg.mxu0
  %v1975 = vmul.f32 %v1972, 0.001953125
  %v1976 = vadd.f32 %v1975, 1e-05
  %v1977 = vrsqrt.pop %v1976
  %v1978 = vmul.f32 %v1977, %v1679
  %1980 = vset.pattern.permute.xlu0 0
  %1981 = vperm.xlu0 %1980, %v1978
  %v1982 = vpop.permute.xlu0 %1981
  %v1984 = vmul.f32 %v1827, %v1982
  %v1985 = vmul.f32 %v1828, %v1982
  %v1986 = vmul.f32 %v1829, %v1982
  %v1987 = vmul.f32 %v1830, %v1982
  %1989 = vset.pattern.permute.xlu0 0
  %1990 = vperm.xlu0 %1989, %v1680
  %v1991 = vpop.permute.xlu0 %1990
  %v1993 = vadd.f32 %v1984, %v1991
  %v1994 = vadd.f32 %v1985, %v1991
  %v1995 = vadd.f32 %v1986, %v1991
  %v1996 = vadd.f32 %v1987, %v1991
  %v1997 = vadd.f32 %v1993, %v853
  %v1998 = vadd.f32 %v1994, %v854
  %v1999 = vadd.f32 %v1995, %v855
  %v2000 = vadd.f32 %v1996, %v856
  %v2001 = vmax.f32 %v1997, 0.0
  %v2002 = vmax.f32 %v1998, 0.0
  %v2003 = vmax.f32 %v1999, 0.0
  %v2004 = vmax.f32 %v2000, 0.0
  %2005 = vrot.lane.b32.xlu0 %v2001, 17
  %v2006 = vpop.permute.xlu0 %2005
  %2007 = vrot.lane.b32.xlu0 %v2002, 17
  %v2008 = vpop.permute.xlu0 %2007
  %2009 = vrot.lane.b32.xlu0 %v2003, 17
  %v2010 = vpop.permute.xlu0 %2009
  %2011 = vrot.lane.b32.xlu0 %v2004, 17
  %v2012 = vpop.permute.xlu0 %2011
  %v2013 = vsel %vm94, %v2010, %v2012
  %v2014 = vsel %vm94, %v2008, %v2010
  %v2015 = vsel %vm94, %v2006, %v2008
  %v2016 = vsel %vm94, %v2012, %v2006
  %v2017 = vmul.f32 %v2016, %v103
  %v2018 = vmul.f32 %v2015, %v107
  %v2019 = vmul.f32 %v2014, %v111
  %v2020 = vmul.f32 %v2013, %v115
  %2021 = vrot.lane.b32.xlu0 %v2001, 16
  %v2022 = vpop.permute.xlu0 %2021
  %2023 = vrot.lane.b32.xlu0 %v2002, 16
  %v2024 = vpop.permute.xlu0 %2023
  %2025 = vrot.lane.b32.xlu0 %v2003, 16
  %v2026 = vpop.permute.xlu0 %2025
  %2027 = vrot.lane.b32.xlu0 %v2004, 16
  %v2028 = vpop.permute.xlu0 %2027
  %v2029 = vsel %vm132, %v2026, %v2028
  %v2030 = vsel %vm132, %v2024, %v2026
  %v2031 = vsel %vm132, %v2022, %v2024
  %v2032 = vsel %vm132, %v2028, %v2022
  %v2033 = vmul.f32 %v2032, %v141
  %v2034 = vmul.f32 %v2031, %v145
  %v2035 = vmul.f32 %v2030, %v149
  %v2036 = vmul.f32 %v2029, %v153
  %2037 = vrot.lane.b32.xlu0 %v2001, 15
  %v2038 = vpop.permute.xlu0 %2037
  %2039 = vrot.lane.b32.xlu0 %v2002, 15
  %v2040 = vpop.permute.xlu0 %2039
  %2041 = vrot.lane.b32.xlu0 %v2003, 15
  %v2042 = vpop.permute.xlu0 %2041
  %2043 = vrot.lane.b32.xlu0 %v2004, 15
  %v2044 = vpop.permute.xlu0 %2043
  %v2045 = vsel %vm170, %v2042, %v2044
  %v2046 = vsel %vm170, %v2040, %v2042
  %v2047 = vsel %vm170, %v2038, %v2040
  %v2048 = vsel %vm170, %v2044, %v2038
  %v2049 = vmul.f32 %v2048, %v179
  %v2050 = vmul.f32 %v2047, %v183
  %v2051 = vmul.f32 %v2046, %v187
  %v2052 = vmul.f32 %v2045, %v191
  %2053 = vrot.lane.b32.xlu0 %v2001, 1
  %v2054 = vpop.permute.xlu0 %2053
  %2055 = vrot.lane.b32.xlu0 %v2002, 1
  %v2056 = vpop.permute.xlu0 %2055
  %2057 = vrot.lane.b32.xlu0 %v2003, 1
  %v2058 = vpop.permute.xlu0 %2057
  %2059 = vrot.lane.b32.xlu0 %v2004, 1
  %v2060 = vpop.permute.xlu0 %2059
  %v2061 = vsel %vm208, %v2058, %v2060
  %v2062 = vsel %vm208, %v2056, %v2058
  %v2063 = vsel %vm208, %v2054, %v2056
  %v2064 = vsel %vm208, %v2060, %v2054
  %v2065 = vmul.f32 %v2064, %v217
  %v2066 = vmul.f32 %v2063, %v221
  %v2067 = vmul.f32 %v2062, %v225
  %v2068 = vmul.f32 %v2061, %v229
  %v2069 = vmul.f32 %v2001, %v242
  %v2070 = vmul.f32 %v2002, %v246
  %v2071 = vmul.f32 %v2003, %v250
  %v2072 = vmul.f32 %v2004, %v254
  %2073 = vrot.lane.b32.xlu0 %v2001, 127
  %v2074 = vpop.permute.xlu0 %2073
  %2075 = vrot.lane.b32.xlu0 %v2002, 127
  %v2076 = vpop.permute.xlu0 %2075
  %2077 = vrot.lane.b32.xlu0 %v2003, 127
  %v2078 = vpop.permute.xlu0 %2077
  %2079 = vrot.lane.b32.xlu0 %v2004, 127
  %v2080 = vpop.permute.xlu0 %2079
  %v2081 = vsel %vm271, %v2078, %v2080
  %v2082 = vsel %vm271, %v2076, %v2078
  %v2083 = vsel %vm271, %v2074, %v2076
  %v2084 = vsel %vm271, %v2080, %v2074
  %v2085 = vmul.f32 %v2083, %v280
  %v2086 = vmul.f32 %v2082, %v284
  %v2087 = vmul.f32 %v2081, %v288
  %v2088 = vmul.f32 %v2084, %v292
  %2089 = vrot.lane.b32.xlu0 %v2001, 113
  %v2090 = vpop.permute.xlu0 %2089
  %2091 = vrot.lane.b32.xlu0 %v2002, 113
  %v2092 = vpop.permute.xlu0 %2091
  %2093 = vrot.lane.b32.xlu0 %v2003, 113
  %v2094 = vpop.permute.xlu0 %2093
  %2095 = vrot.lane.b32.xlu0 %v2004, 113
  %v2096 = vpop.permute.xlu0 %2095
  %v2097 = vsel %vm309, %v2094, %v2096
  %v2098 = vsel %vm309, %v2092, %v2094
  %v2099 = vsel %vm309, %v2090, %v2092
  %v2100 = vsel %vm309, %v2096, %v2090
  %v2101 = vmul.f32 %v2099, %v318
  %v2102 = vmul.f32 %v2098, %v322
  %v2103 = vmul.f32 %v2097, %v326
  %v2104 = vmul.f32 %v2100, %v330
  %2105 = vrot.lane.b32.xlu0 %v2001, 112
  %v2106 = vpop.permute.xlu0 %2105
  %2107 = vrot.lane.b32.xlu0 %v2002, 112
  %v2108 = vpop.permute.xlu0 %2107
  %2109 = vrot.lane.b32.xlu0 %v2003, 112
  %v2110 = vpop.permute.xlu0 %2109
  %2111 = vrot.lane.b32.xlu0 %v2004, 112
  %v2112 = vpop.permute.xlu0 %2111
  %v2113 = vsel %vm347, %v2110, %v2112
  %v2114 = vsel %vm347, %v2108, %v2110
  %v2115 = vsel %vm347, %v2106, %v2108
  %v2116 = vsel %vm347, %v2112, %v2106
  %v2117 = vmul.f32 %v2115, %v356
  %v2118 = vmul.f32 %v2114, %v360
  %v2119 = vmul.f32 %v2113, %v364
  %v2120 = vmul.f32 %v2116, %v368
  %2121 = vrot.lane.b32.xlu0 %v2001, 111
  %v2122 = vpop.permute.xlu0 %2121
  %2123 = vrot.lane.b32.xlu0 %v2002, 111
  %v2124 = vpop.permute.xlu0 %2123
  %2125 = vrot.lane.b32.xlu0 %v2003, 111
  %v2126 = vpop.permute.xlu0 %2125
  %2127 = vrot.lane.b32.xlu0 %v2004, 111
  %v2128 = vpop.permute.xlu0 %2127
  %v2129 = vsel %vm385, %v2126, %v2128
  %v2130 = vsel %vm385, %v2124, %v2126
  %v2131 = vsel %vm385, %v2122, %v2124
  %v2132 = vsel %vm385, %v2128, %v2122
  %v2133 = vmul.f32 %v2131, %v394
  %v2134 = vmul.f32 %v2130, %v398
  %v2135 = vmul.f32 %v2129, %v402
  %v2136 = vmul.f32 %v2132, %v406
  %v2137 = vpack.c.bf16 %v2033, %v2017
  %v2138 = vpack.c.bf16 %v2034, %v2018
  %v2139 = vpack.c.bf16 %v2035, %v2019
  %v2140 = vpack.c.bf16 %v2036, %v2020
  %v2141 = vpack.c.bf16 %v2065, %v2049
  %v2142 = vpack.c.bf16 %v2066, %v2050
  %v2143 = vpack.c.bf16 %v2067, %v2051
  %v2144 = vpack.c.bf16 %v2068, %v2052
  %v2145 = vpack.c.bf16 %v2085, %v2069
  %v2146 = vpack.c.bf16 %v2086, %v2070
  %v2147 = vpack.c.bf16 %v2087, %v2071
  %v2148 = vpack.c.bf16 %v2088, %v2072
  %v2149 = vpack.c.bf16 %v2117, %v2101
  %v2150 = vpack.c.bf16 %v2118, %v2102
  %v2151 = vpack.c.bf16 %v2119, %v2103
  %v2152 = vpack.c.bf16 %v2120, %v2104
  %v2153 = vpack.c.bf16 %v2133, %v2133
  %v2154 = vpack.c.bf16 %v2134, %v2134
  %v2155 = vpack.c.bf16 %v2135, %v2135
  %v2156 = vpack.c.bf16 %v2136, %v2136
  %v2157 = vld [vmem:[%s11] sm:$0xf]
  %v2158 = vld [vmem:[%s11 + $0x4] sm:$0xf]
  %v2161 = vunpack.c.l.b16 %v2157
  %v2162 = vunpack.c.l.b16 %v2158
  %v2163 = vpack.c.b16 %v2162, %v2161
  %v2165 = vsel %vm436, %v2163, 0
  %v2168 = vsel %vm440, %v2153, 0
  %v2171 = vsel %vm440, %v2154, 0
  %v2174 = vsel %vm440, %v2155, 0
  %v2177 = vsel %vm440, %v2156, 0
  %2179 = vmatprep.subr.bf16.mxu0 %v2138
  %2180 = vmatpush1.bf16.msra.mxu0 %v2137
  %2181 = vmatprep.subr.bf16.mxu0 %v2142
  %2182 = vmatpush1.bf16.msra.mxu0 %v2141
  %2183 = vmatprep.subr.bf16.mxu0 %v2146
  %2184 = vmatpush1.bf16.msra.mxu0 %v2145
  %2185 = vmatprep.subr.bf16.mxu0 %v2150
  %2186 = vmatpush1.bf16.msra.mxu0 %v2149
  %2187 = vmatprep.subr.bf16.mxu0 %v2171
  %2188 = vmatpush1.bf16.msra.mxu0 %v2168
  %2189 = vmatprep.subr.bf16.mxu0 0
  %2190 = vmatpush1.bf16.msra.mxu0 0
  %2191 = vmatprep.subr.bf16.mxu0 0
  %2192 = vmatpush1.bf16.msra.mxu0 0
  %2193 = vmatprep.subr.bf16.mxu0 0
  %2194 = vmatpush1.bf16.msra.mxu0 0
  %2195 = vmatprep.subr.bf16.mxu0 0
  %2196 = vmatpush1.bf16.msra.mxu0 0
  %2197 = vmatprep.subr.bf16.mxu0 0
  %2198 = vmatpush1.bf16.msra.mxu0 0
  %2199 = vmatprep.subr.bf16.mxu0 0
  %2200 = vmatpush1.bf16.msra.mxu0 0
  %2201 = vmatprep.subr.bf16.mxu0 0
  %2202 = vmatpush1.bf16.msra.mxu0 0
  %2203 = vmatprep.subr.bf16.mxu0 0
  %2204 = vmatpush1.bf16.msra.mxu0 0
  %2205 = vmatprep.subr.bf16.mxu0 0
  %2206 = vmatpush1.bf16.msra.mxu0 0
  %2207 = vmatprep.subr.bf16.mxu0 0
  %2208 = vmatpush1.bf16.msra.mxu0 0
  %2209 = vmatprep.subr.bf16.mxu0 0
  %2210 = vmatpush1.bf16.msra.mxu0 0
  %2211 = vmatprep.mubr.bf16.mxu0 0
  %2212 = vmatmul.mubr.bf16.gmra.mrb[0].mxu0 %v2165
  %v2213 = vpop.f32.mrb[0].mxu0
  %v2214 = vadd.f32 0.0, %v2213
  %v2215 = vpop.f32.mrb[0].mxu0
  %v2216 = vadd.f32 0.0, %v2215
  %v2217 = vpop.f32.mrb[0].mxu0
  %v2218 = vadd.f32 0.0, %v2217
  %v2219 = vpop.f32.mrb[0].mxu0
  %v2220 = vadd.f32 0.0, %v2219
  %2221 = vdwg.mxu0
  %2222 = vmatprep.subr.bf16.mxu0 %v2140
  %2223 = vmatpush1.bf16.msra.mxu0 %v2139
  %2224 = vmatprep.subr.bf16.mxu0 %v2144
  %2225 = vmatpush1.bf16.msra.mxu0 %v2143
  %2226 = vmatprep.subr.bf16.mxu0 %v2148
  %2227 = vmatpush1.bf16.msra.mxu0 %v2147
  %2228 = vmatprep.subr.bf16.mxu0 %v2152
  %2229 = vmatpush1.bf16.msra.mxu0 %v2151
  %2230 = vmatprep.subr.bf16.mxu0 %v2177
  %2231 = vmatpush1.bf16.msra.mxu0 %v2174
  %2232 = vmatprep.subr.bf16.mxu0 0
  %2233 = vmatpush1.bf16.msra.mxu0 0
  %2234 = vmatprep.subr.bf16.mxu0 0
  %2235 = vmatpush1.bf16.msra.mxu0 0
  %2236 = vmatprep.subr.bf16.mxu0 0
  %2237 = vmatpush1.bf16.msra.mxu0 0
  %2238 = vmatprep.subr.bf16.mxu0 0
  %2239 = vmatpush1.bf16.msra.mxu0 0
  %2240 = vmatprep.subr.bf16.mxu0 0
  %2241 = vmatpush1.bf16.msra.mxu0 0
  %2242 = vmatprep.subr.bf16.mxu0 0
  %2243 = vmatpush1.bf16.msra.mxu0 0
  %2244 = vmatprep.subr.bf16.mxu0 0
  %2245 = vmatpush1.bf16.msra.mxu0 0
  %2246 = vmatprep.subr.bf16.mxu0 0
  %2247 = vmatpush1.bf16.msra.mxu0 0
  %2248 = vmatprep.subr.bf16.mxu0 0
  %2249 = vmatpush1.bf16.msra.mxu0 0
  %2250 = vmatprep.subr.bf16.mxu0 0
  %2251 = vmatpush1.bf16.msra.mxu0 0
  %2252 = vmatprep.subr.bf16.mxu0 0
  %2253 = vmatpush1.bf16.msra.mxu0 0
  %2254 = vmatprep.mubr.bf16.mxu0 0
  %2255 = vmatmul.mubr.bf16.gmra.mrb[0].mxu0 %v2165
  %v2256 = vpop.f32.mrb[0].mxu0
  %v2257 = vadd.f32 0.0, %v2256
  %v2258 = vpop.f32.mrb[0].mxu0
  %v2259 = vadd.f32 0.0, %v2258
  %v2260 = vpop.f32.mrb[0].mxu0
  %v2261 = vadd.f32 0.0, %v2260
  %v2262 = vpop.f32.mrb[0].mxu0
  %v2263 = vadd.f32 0.0, %v2262
  %2264 = vdwg.mxu0
  %v2265 = vld [vmem:[%s12] sm:$0xff]
  %v2266 = vld [vmem:[%s12 + $0x8] sm:$0xff]
  %v2267 = vld [vmem:[%s13] sm:$0xff]
  %v2268 = vld [vmem:[%s13 + $0x8] sm:$0xff]
  %2269 = vmatprep.subr.mxu0 0.0
  %2270 = vmatpush1.msra.mxu0 1.0
  %2271 = vmatprep.subr.mxu0 0.0
  %2272 = vmatpush1.msra.mxu0 1.0
  %2273 = vmatprep.subr.mxu0 0.0
  %2274 = vmatpush1.msra.mxu0 1.0
  %2275 = vmatprep.subr.mxu0 0.0
  %2276 = vmatpush1.msra.mxu0 1.0
  %2277 = vmatprep.subr.mxu0 0.0
  %2278 = vmatpush1.msra.mxu0 1.0
  %2279 = vmatprep.subr.mxu0 0.0
  %2280 = vmatpush1.msra.mxu0 1.0
  %2281 = vmatprep.subr.mxu0 0.0
  %2282 = vmatpush1.msra.mxu0 1.0
  %2283 = vmatprep.subr.mxu0 0.0
  %2284 = vmatpush1.msra.mxu0 1.0
  %2285 = vmatprep.subr.mxu0 0.0
  %2286 = vmatpush1.msra.mxu0 1.0
  %2287 = vmatprep.subr.mxu0 0.0
  %2288 = vmatpush1.msra.mxu0 1.0
  %2289 = vmatprep.subr.mxu0 0.0
  %2290 = vmatpush1.msra.mxu0 1.0
  %2291 = vmatprep.subr.mxu0 0.0
  %2292 = vmatpush1.msra.mxu0 1.0
  %2293 = vmatprep.subr.mxu0 0.0
  %2294 = vmatpush1.msra.mxu0 1.0
  %2295 = vmatprep.subr.mxu0 0.0
  %2296 = vmatpush1.msra.mxu0 1.0
  %2297 = vmatprep.subr.mxu0 0.0
  %2298 = vmatpush1.msra.mxu0 1.0
  %2299 = vmatprep.subr.mxu0 0.0
  %2300 = vmatpush1.msra.mxu0 1.0
  %2301 = vmatprep.subr.mxu0 0.0
  %2302 = vmatpush1.msra.mxu0 1.0
  %2303 = vmatprep.subr.mxu0 0.0
  %2304 = vmatpush1.msra.mxu0 1.0
  %2305 = vmatprep.subr.mxu0 0.0
  %2306 = vmatpush1.msra.mxu0 1.0
  %2307 = vmatprep.subr.mxu0 0.0
  %2308 = vmatpush1.msra.mxu0 1.0
  %2309 = vmatprep.subr.mxu0 0.0
  %2310 = vmatpush1.msra.mxu0 1.0
  %2311 = vmatprep.subr.mxu0 0.0
  %2312 = vmatpush1.msra.mxu0 1.0
  %2313 = vmatprep.subr.mxu0 0.0
  %2314 = vmatpush1.msra.mxu0 1.0
  %2315 = vmatprep.subr.mxu0 0.0
  %2316 = vmatpush1.msra.mxu0 1.0
  %2317 = vmatprep.subr.mxu0 0.0
  %2318 = vmatpush1.msra.mxu0 1.0
  %2319 = vmatprep.subr.mxu0 0.0
  %2320 = vmatpush1.msra.mxu0 1.0
  %2321 = vmatprep.subr.mxu0 0.0
  %2322 = vmatpush1.msra.mxu0 1.0
  %2323 = vmatprep.subr.mxu0 0.0
  %2324 = vmatpush1.msra.mxu0 1.0
  %2325 = vmatprep.subr.mxu0 0.0
  %2326 = vmatpush1.msra.mxu0 1.0
  %2327 = vmatprep.subr.mxu0 0.0
  %2328 = vmatpush1.msra.mxu0 1.0
  %2329 = vmatprep.subr.mxu0 0.0
  %2330 = vmatpush1.msra.mxu0 1.0
  %2331 = vmatprep.subr.mxu0 0.0
  %2332 = vmatpush1.msra.mxu0 1.0
  %2333 = vmatprep.mubr.f32.mxu0 %v2216
  %2334 = vmatmul.mubr.f32.gmra.mrb[0].mxu0 %v2214
  %v2335 = vpop.f32.mrb[0].mxu0
  %v2336 = vadd.f32 0.0, %v2335
  %v2337 = vpop.f32.mrb[0].mxu0
  %2338 = vmatprep.mubr.f32.mxu0 %v2220
  %2339 = vmatmul.mubr.f32.gmra.mrb[0].mxu0 %v2218
  %v2340 = vpop.f32.mrb[0].mxu0
  %v2341 = vadd.f32 0.0, %v2340
  %v2342 = vpop.f32.mrb[0].mxu0
  %2343 = vdwg.mxu0
  %2344 = vmatprep.subr.mxu0 0.0
  %2345 = vmatpush1.msra.mxu0 1.0
  %2346 = vmatprep.subr.mxu0 0.0
  %2347 = vmatpush1.msra.mxu0 1.0
  %2348 = vmatprep.subr.mxu0 0.0
  %2349 = vmatpush1.msra.mxu0 1.0
  %2350 = vmatprep.subr.mxu0 0.0
  %2351 = vmatpush1.msra.mxu0 1.0
  %2352 = vmatprep.subr.mxu0 0.0
  %2353 = vmatpush1.msra.mxu0 1.0
  %2354 = vmatprep.subr.mxu0 0.0
  %2355 = vmatpush1.msra.mxu0 1.0
  %2356 = vmatprep.subr.mxu0 0.0
  %2357 = vmatpush1.msra.mxu0 1.0
  %2358 = vmatprep.subr.mxu0 0.0
  %2359 = vmatpush1.msra.mxu0 1.0
  %2360 = vmatprep.subr.mxu0 0.0
  %2361 = vmatpush1.msra.mxu0 1.0
  %2362 = vmatprep.subr.mxu0 0.0
  %2363 = vmatpush1.msra.mxu0 1.0
  %2364 = vmatprep.subr.mxu0 0.0
  %2365 = vmatpush1.msra.mxu0 1.0
  %2366 = vmatprep.subr.mxu0 0.0
  %2367 = vmatpush1.msra.mxu0 1.0
  %2368 = vmatprep.subr.mxu0 0.0
  %2369 = vmatpush1.msra.mxu0 1.0
  %2370 = vmatprep.subr.mxu0 0.0
  %2371 = vmatpush1.msra.mxu0 1.0
  %2372 = vmatprep.subr.mxu0 0.0
  %2373 = vmatpush1.msra.mxu0 1.0
  %2374 = vmatprep.subr.mxu0 0.0
  %2375 = vmatpush1.msra.mxu0 1.0
  %2376 = vmatprep.subr.mxu0 0.0
  %2377 = vmatpush1.msra.mxu0 1.0
  %2378 = vmatprep.subr.mxu0 0.0
  %2379 = vmatpush1.msra.mxu0 1.0
  %2380 = vmatprep.subr.mxu0 0.0
  %2381 = vmatpush1.msra.mxu0 1.0
  %2382 = vmatprep.subr.mxu0 0.0
  %2383 = vmatpush1.msra.mxu0 1.0
  %2384 = vmatprep.subr.mxu0 0.0
  %2385 = vmatpush1.msra.mxu0 1.0
  %2386 = vmatprep.subr.mxu0 0.0
  %2387 = vmatpush1.msra.mxu0 1.0
  %2388 = vmatprep.subr.mxu0 0.0
  %2389 = vmatpush1.msra.mxu0 1.0
  %2390 = vmatprep.subr.mxu0 0.0
  %2391 = vmatpush1.msra.mxu0 1.0
  %2392 = vmatprep.subr.mxu0 0.0
  %2393 = vmatpush1.msra.mxu0 1.0
  %2394 = vmatprep.subr.mxu0 0.0
  %2395 = vmatpush1.msra.mxu0 1.0
  %2396 = vmatprep.subr.mxu0 0.0
  %2397 = vmatpush1.msra.mxu0 1.0
  %2398 = vmatprep.subr.mxu0 0.0
  %2399 = vmatpush1.msra.mxu0 1.0
  %2400 = vmatprep.subr.mxu0 0.0
  %2401 = vmatpush1.msra.mxu0 1.0
  %2402 = vmatprep.subr.mxu0 0.0
  %2403 = vmatpush1.msra.mxu0 1.0
  %2404 = vmatprep.subr.mxu0 0.0
  %2405 = vmatpush1.msra.mxu0 1.0
  %2406 = vmatprep.subr.mxu0 0.0
  %2407 = vmatpush1.msra.mxu0 1.0
  %2408 = vmatprep.mubr.f32.mxu0 %v2259
  %2409 = vmatmul.mubr.f32.gmra.mrb[0].mxu0 %v2257
  %v2410 = vpop.f32.mrb[0].mxu0
  %v2411 = vadd.f32 %v2336, %v2410
  %v2412 = vpop.f32.mrb[0].mxu0
  %2413 = vmatprep.mubr.f32.mxu0 %v2263
  %2414 = vmatmul.mubr.f32.gmra.mrb[0].mxu0 %v2261
  %v2415 = vpop.f32.mrb[0].mxu0
  %v2416 = vadd.f32 %v2341, %v2415
  %v2417 = vpop.f32.mrb[0].mxu0
  %2418 = vdwg.mxu0
  %v2419 = vmul.f32 %v2411, 0.001953125
  %v2420 = vmul.f32 %v2416, 0.001953125
  %2422 = vset.pattern.permute.xlu0 0
  %2423 = vperm.xlu0 %2422, %v2419
  %v2424 = vpop.permute.xlu0 %2423
  %2427 = vset.pattern.permute.xlu0 0
  %2428 = vperm.xlu0 %2427, %v2420
  %v2429 = vpop.permute.xlu0 %2428
  %v2431 = vsub.f32 %v2214, %v2424
  %v2432 = vsub.f32 %v2216, %v2424
  %v2433 = vsub.f32 %v2257, %v2424
  %v2434 = vsub.f32 %v2259, %v2424
  %v2435 = vsub.f32 %v2218, %v2429
  %v2436 = vsub.f32 %v2220, %v2429
  %v2437 = vsub.f32 %v2261, %v2429
  %v2438 = vsub.f32 %v2263, %v2429
  %v2439 = vmul.f32 %v2431, %v2431
  %v2440 = vmul.f32 %v2432, %v2432
  %v2441 = vmul.f32 %v2433, %v2433
  %v2442 = vmul.f32 %v2434, %v2434
  %v2443 = vmul.f32 %v2435, %v2435
  %v2444 = vmul.f32 %v2436, %v2436
  %v2445 = vmul.f32 %v2437, %v2437
  %v2446 = vmul.f32 %v2438, %v2438
  %2447 = vmatprep.subr.mxu0 0.0
  %2448 = vmatpush1.msra.mxu0 1.0
  %2449 = vmatprep.subr.mxu0 0.0
  %2450 = vmatpush1.msra.mxu0 1.0
  %2451 = vmatprep.subr.mxu0 0.0
  %2452 = vmatpush1.msra.mxu0 1.0
  %2453 = vmatprep.subr.mxu0 0.0
  %2454 = vmatpush1.msra.mxu0 1.0
  %2455 = vmatprep.subr.mxu0 0.0
  %2456 = vmatpush1.msra.mxu0 1.0
  %2457 = vmatprep.subr.mxu0 0.0
  %2458 = vmatpush1.msra.mxu0 1.0
  %2459 = vmatprep.subr.mxu0 0.0
  %2460 = vmatpush1.msra.mxu0 1.0
  %2461 = vmatprep.subr.mxu0 0.0
  %2462 = vmatpush1.msra.mxu0 1.0
  %2463 = vmatprep.subr.mxu0 0.0
  %2464 = vmatpush1.msra.mxu0 1.0
  %2465 = vmatprep.subr.mxu0 0.0
  %2466 = vmatpush1.msra.mxu0 1.0
  %2467 = vmatprep.subr.mxu0 0.0
  %2468 = vmatpush1.msra.mxu0 1.0
  %2469 = vmatprep.subr.mxu0 0.0
  %2470 = vmatpush1.msra.mxu0 1.0
  %2471 = vmatprep.subr.mxu0 0.0
  %2472 = vmatpush1.msra.mxu0 1.0
  %2473 = vmatprep.subr.mxu0 0.0
  %2474 = vmatpush1.msra.mxu0 1.0
  %2475 = vmatprep.subr.mxu0 0.0
  %2476 = vmatpush1.msra.mxu0 1.0
  %2477 = vmatprep.subr.mxu0 0.0
  %2478 = vmatpush1.msra.mxu0 1.0
  %2479 = vmatprep.subr.mxu0 0.0
  %2480 = vmatpush1.msra.mxu0 1.0
  %2481 = vmatprep.subr.mxu0 0.0
  %2482 = vmatpush1.msra.mxu0 1.0
  %2483 = vmatprep.subr.mxu0 0.0
  %2484 = vmatpush1.msra.mxu0 1.0
  %2485 = vmatprep.subr.mxu0 0.0
  %2486 = vmatpush1.msra.mxu0 1.0
  %2487 = vmatprep.subr.mxu0 0.0
  %2488 = vmatpush1.msra.mxu0 1.0
  %2489 = vmatprep.subr.mxu0 0.0
  %2490 = vmatpush1.msra.mxu0 1.0
  %2491 = vmatprep.subr.mxu0 0.0
  %2492 = vmatpush1.msra.mxu0 1.0
  %2493 = vmatprep.subr.mxu0 0.0
  %2494 = vmatpush1.msra.mxu0 1.0
  %2495 = vmatprep.subr.mxu0 0.0
  %2496 = vmatpush1.msra.mxu0 1.0
  %2497 = vmatprep.subr.mxu0 0.0
  %2498 = vmatpush1.msra.mxu0 1.0
  %2499 = vmatprep.subr.mxu0 0.0
  %2500 = vmatpush1.msra.mxu0 1.0
  %2501 = vmatprep.subr.mxu0 0.0
  %2502 = vmatpush1.msra.mxu0 1.0
  %2503 = vmatprep.subr.mxu0 0.0
  %2504 = vmatpush1.msra.mxu0 1.0
  %2505 = vmatprep.subr.mxu0 0.0
  %2506 = vmatpush1.msra.mxu0 1.0
  %2507 = vmatprep.subr.mxu0 0.0
  %2508 = vmatpush1.msra.mxu0 1.0
  %2509 = vmatprep.subr.mxu0 0.0
  %2510 = vmatpush1.msra.mxu0 1.0
  %2511 = vmatprep.mubr.f32.mxu0 %v2440
  %2512 = vmatmul.mubr.f32.gmra.mrb[0].mxu0 %v2439
  %v2513 = vpop.f32.mrb[0].mxu0
  %v2514 = vadd.f32 0.0, %v2513
  %v2515 = vpop.f32.mrb[0].mxu0
  %2516 = vmatprep.mubr.f32.mxu0 %v2444
  %2517 = vmatmul.mubr.f32.gmra.mrb[0].mxu0 %v2443
  %v2518 = vpop.f32.mrb[0].mxu0
  %v2519 = vadd.f32 0.0, %v2518
  %v2520 = vpop.f32.mrb[0].mxu0
  %2521 = vdwg.mxu0
  %2522 = vmatprep.subr.mxu0 0.0
  %2523 = vmatpush1.msra.mxu0 1.0
  %2524 = vmatprep.subr.mxu0 0.0
  %2525 = vmatpush1.msra.mxu0 1.0
  %2526 = vmatprep.subr.mxu0 0.0
  %2527 = vmatpush1.msra.mxu0 1.0
  %2528 = vmatprep.subr.mxu0 0.0
  %2529 = vmatpush1.msra.mxu0 1.0
  %2530 = vmatprep.subr.mxu0 0.0
  %2531 = vmatpush1.msra.mxu0 1.0
  %2532 = vmatprep.subr.mxu0 0.0
  %2533 = vmatpush1.msra.mxu0 1.0
  %2534 = vmatprep.subr.mxu0 0.0
  %2535 = vmatpush1.msra.mxu0 1.0
  %2536 = vmatprep.subr.mxu0 0.0
  %2537 = vmatpush1.msra.mxu0 1.0
  %2538 = vmatprep.subr.mxu0 0.0
  %2539 = vmatpush1.msra.mxu0 1.0
  %2540 = vmatprep.subr.mxu0 0.0
  %2541 = vmatpush1.msra.mxu0 1.0
  %2542 = vmatprep.subr.mxu0 0.0
  %2543 = vmatpush1.msra.mxu0 1.0
  %2544 = vmatprep.subr.mxu0 0.0
  %2545 = vmatpush1.msra.mxu0 1.0
  %2546 = vmatprep.subr.mxu0 0.0
  %2547 = vmatpush1.msra.mxu0 1.0
  %2548 = vmatprep.subr.mxu0 0.0
  %2549 = vmatpush1.msra.mxu0 1.0
  %2550 = vmatprep.subr.mxu0 0.0
  %2551 = vmatpush1.msra.mxu0 1.0
  %2552 = vmatprep.subr.mxu0 0.0
  %2553 = vmatpush1.msra.mxu0 1.0
  %2554 = vmatprep.subr.mxu0 0.0
  %2555 = vmatpush1.msra.mxu0 1.0
  %2556 = vmatprep.subr.mxu0 0.0
  %2557 = vmatpush1.msra.mxu0 1.0
  %2558 = vmatprep.subr.mxu0 0.0
  %2559 = vmatpush1.msra.mxu0 1.0
  %2560 = vmatprep.subr.mxu0 0.0
  %2561 = vmatpush1.msra.mxu0 1.0
  %2562 = vmatprep.subr.mxu0 0.0
  %2563 = vmatpush1.msra.mxu0 1.0
  %2564 = vmatprep.subr.mxu0 0.0
  %2565 = vmatpush1.msra.mxu0 1.0
  %2566 = vmatprep.subr.mxu0 0.0
  %2567 = vmatpush1.msra.mxu0 1.0
  %2568 = vmatprep.subr.mxu0 0.0
  %2569 = vmatpush1.msra.mxu0 1.0
  %2570 = vmatprep.subr.mxu0 0.0
  %2571 = vmatpush1.msra.mxu0 1.0
  %2572 = vmatprep.subr.mxu0 0.0
  %2573 = vmatpush1.msra.mxu0 1.0
  %2574 = vmatprep.subr.mxu0 0.0
  %2575 = vmatpush1.msra.mxu0 1.0
  %2576 = vmatprep.subr.mxu0 0.0
  %2577 = vmatpush1.msra.mxu0 1.0
  %2578 = vmatprep.subr.mxu0 0.0
  %2579 = vmatpush1.msra.mxu0 1.0
  %2580 = vmatprep.subr.mxu0 0.0
  %2581 = vmatpush1.msra.mxu0 1.0
  %2582 = vmatprep.subr.mxu0 0.0
  %2583 = vmatpush1.msra.mxu0 1.0
  %2584 = vmatprep.subr.mxu0 0.0
  %2585 = vmatpush1.msra.mxu0 1.0
  %2586 = vmatprep.mubr.f32.mxu0 %v2442
  %2587 = vmatmul.mubr.f32.gmra.mrb[0].mxu0 %v2441
  %v2588 = vpop.f32.mrb[0].mxu0
  %v2589 = vadd.f32 %v2514, %v2588
  %v2590 = vpop.f32.mrb[0].mxu0
  %2591 = vmatprep.mubr.f32.mxu0 %v2446
  %2592 = vmatmul.mubr.f32.gmra.mrb[0].mxu0 %v2445
  %v2593 = vpop.f32.mrb[0].mxu0
  %v2594 = vadd.f32 %v2519, %v2593
  %v2595 = vpop.f32.mrb[0].mxu0
  %2596 = vdwg.mxu0
  %v2597 = vmul.f32 %v2589, 0.001953125
  %v2598 = vmul.f32 %v2594, 0.001953125
  %v2599 = vadd.f32 %v2597, 1e-05
  %v2600 = vadd.f32 %v2598, 1e-05
  %v2601 = vrsqrt.pop %v2599
  %v2602 = vrsqrt.pop %v2600
  %v2603 = vmul.f32 %v2601, %v2265
  %v2604 = vmul.f32 %v2602, %v2266
  %2606 = vset.pattern.permute.xlu0 0
  %2607 = vperm.xlu0 %2606, %v2603
  %v2608 = vpop.permute.xlu0 %2607
  %2611 = vset.pattern.permute.xlu0 0
  %2612 = vperm.xlu0 %2611, %v2604
  %v2613 = vpop.permute.xlu0 %2612
  %v2615 = vmul.f32 %v2431, %v2608
  %v2616 = vmul.f32 %v2432, %v2608
  %v2617 = vmul.f32 %v2433, %v2608
  %v2618 = vmul.f32 %v2434, %v2608
  %v2619 = vmul.f32 %v2435, %v2613
  %v2620 = vmul.f32 %v2436, %v2613
  %v2621 = vmul.f32 %v2437, %v2613
  %v2622 = vmul.f32 %v2438, %v2613
  %2624 = vset.pattern.permute.xlu0 0
  %2625 = vperm.xlu0 %2624, %v2267
  %v2626 = vpop.permute.xlu0 %2625
  %2629 = vset.pattern.permute.xlu0 0
  %2630 = vperm.xlu0 %2629, %v2268
  %v2631 = vpop.permute.xlu0 %2630
  %v2633 = vadd.f32 %v2615, %v2626
  %v2634 = vadd.f32 %v2616, %v2626
  %v2635 = vadd.f32 %v2617, %v2626
  %v2636 = vadd.f32 %v2618, %v2626
  %v2637 = vadd.f32 %v2619, %v2631
  %v2638 = vadd.f32 %v2620, %v2631
  %v2639 = vadd.f32 %v2621, %v2631
  %v2640 = vadd.f32 %v2622, %v2631
  %v2641 = vmax.f32 %v2633, 0.0
  %v2642 = vmax.f32 %v2634, 0.0
  %v2643 = vmax.f32 %v2635, 0.0
  %v2644 = vmax.f32 %v2636, 0.0
  %v2645 = vmax.f32 %v2637, 0.0
  %v2646 = vmax.f32 %v2638, 0.0
  %v2647 = vmax.f32 %v2639, 0.0
  %v2648 = vmax.f32 %v2640, 0.0
  %2649 = vrot.lane.b32.xlu0 %v2641, 17
  %v2650 = vpop.permute.xlu0 %2649
  %2651 = vrot.lane.b32.xlu0 %v2645, 17
  %v2652 = vpop.permute.xlu0 %2651
  %2653 = vrot.lane.b32.xlu0 %v2642, 17
  %v2654 = vpop.permute.xlu0 %2653
  %2655 = vrot.lane.b32.xlu0 %v2646, 17
  %v2656 = vpop.permute.xlu0 %2655
  %2657 = vrot.lane.b32.xlu0 %v2643, 17
  %v2658 = vpop.permute.xlu0 %2657
  %2659 = vrot.lane.b32.xlu0 %v2647, 17
  %v2660 = vpop.permute.xlu0 %2659
  %2661 = vrot.lane.b32.xlu0 %v2644, 17
  %v2662 = vpop.permute.xlu0 %2661
  %2663 = vrot.lane.b32.xlu0 %v2648, 17
  %v2664 = vpop.permute.xlu0 %2663
  %v2665 = vsel %vm94, %v2658, %v2662
  %v2666 = vsel %vm94, %v2660, %v2664
  %v2667 = vsel %vm94, %v2654, %v2658
  %v2668 = vsel %vm94, %v2656, %v2660
  %v2669 = vsel %vm94, %v2650, %v2654
  %v2670 = vsel %vm94, %v2652, %v2656
  %v2671 = vsel %vm94, %v2662, %v2650
  %v2672 = vsel %vm94, %v2664, %v2652
  %v2673 = vmul.f32 %v2671, %v103
  %v2674 = vmul.f32 %v2669, %v107
  %v2675 = vmul.f32 %v2667, %v111
  %v2676 = vmul.f32 %v2665, %v115
  %v2677 = vmul.f32 %v2672, %v103
  %v2678 = vmul.f32 %v2670, %v107
  %v2679 = vmul.f32 %v2668, %v111
  %v2680 = vmul.f32 %v2666, %v115
  %2681 = vrot.lane.b32.xlu0 %v2641, 16
  %v2682 = vpop.permute.xlu0 %2681
  %2683 = vrot.lane.b32.xlu0 %v2645, 16
  %v2684 = vpop.permute.xlu0 %2683
  %2685 = vrot.lane.b32.xlu0 %v2642, 16
  %v2686 = vpop.permute.xlu0 %2685
  %2687 = vrot.lane.b32.xlu0 %v2646, 16
  %v2688 = vpop.permute.xlu0 %2687
  %2689 = vrot.lane.b32.xlu0 %v2643, 16
  %v2690 = vpop.permute.xlu0 %2689
  %2691 = vrot.lane.b32.xlu0 %v2647, 16
  %v2692 = vpop.permute.xlu0 %2691
  %2693 = vrot.lane.b32.xlu0 %v2644, 16
  %v2694 = vpop.permute.xlu0 %2693
  %2695 = vrot.lane.b32.xlu0 %v2648, 16
  %v2696 = vpop.permute.xlu0 %2695
  %v2697 = vsel %vm132, %v2690, %v2694
  %v2698 = vsel %vm132, %v2692, %v2696
  %v2699 = vsel %vm132, %v2686, %v2690
  %v2700 = vsel %vm132, %v2688, %v2692
  %v2701 = vsel %vm132, %v2682, %v2686
  %v2702 = vsel %vm132, %v2684, %v2688
  %v2703 = vsel %vm132, %v2694, %v2682
  %v2704 = vsel %vm132, %v2696, %v2684
  %v2705 = vmul.f32 %v2703, %v141
  %v2706 = vmul.f32 %v2701, %v145
  %v2707 = vmul.f32 %v2699, %v149
  %v2708 = vmul.f32 %v2697, %v153
  %v2709 = vmul.f32 %v2704, %v141
  %v2710 = vmul.f32 %v2702, %v145
  %v2711 = vmul.f32 %v2700, %v149
  %v2712 = vmul.f32 %v2698, %v153
  %2713 = vrot.lane.b32.xlu0 %v2641, 15
  %v2714 = vpop.permute.xlu0 %2713
  %2715 = vrot.lane.b32.xlu0 %v2645, 15
  %v2716 = vpop.permute.xlu0 %2715
  %2717 = vrot.lane.b32.xlu0 %v2642, 15
  %v2718 = vpop.permute.xlu0 %2717
  %2719 = vrot.lane.b32.xlu0 %v2646, 15
  %v2720 = vpop.permute.xlu0 %2719
  %2721 = vrot.lane.b32.xlu0 %v2643, 15
  %v2722 = vpop.permute.xlu0 %2721
  %2723 = vrot.lane.b32.xlu0 %v2647, 15
  %v2724 = vpop.permute.xlu0 %2723
  %2725 = vrot.lane.b32.xlu0 %v2644, 15
  %v2726 = vpop.permute.xlu0 %2725
  %2727 = vrot.lane.b32.xlu0 %v2648, 15
  %v2728 = vpop.permute.xlu0 %2727
  %v2729 = vsel %vm170, %v2722, %v2726
  %v2730 = vsel %vm170, %v2724, %v2728
  %v2731 = vsel %vm170, %v2718, %v2722
  %v2732 = vsel %vm170, %v2720, %v2724
  %v2733 = vsel %vm170, %v2714, %v2718
  %v2734 = vsel %vm170, %v2716, %v2720
  %v2735 = vsel %vm170, %v2726, %v2714
  %v2736 = vsel %vm170, %v2728, %v2716
  %v2737 = vmul.f32 %v2735, %v179
  %v2738 = vmul.f32 %v2733, %v183
  %v2739 = vmul.f32 %v2731, %v187
  %v2740 = vmul.f32 %v2729, %v191
  %v2741 = vmul.f32 %v2736, %v179
  %v2742 = vmul.f32 %v2734, %v183
  %v2743 = vmul.f32 %v2732, %v187
  %v2744 = vmul.f32 %v2730, %v191
  %2745 = vrot.lane.b32.xlu0 %v2641, 1
  %v2746 = vpop.permute.xlu0 %2745
  %2747 = vrot.lane.b32.xlu0 %v2645, 1
  %v2748 = vpop.permute.xlu0 %2747
  %2749 = vrot.lane.b32.xlu0 %v2642, 1
  %v2750 = vpop.permute.xlu0 %2749
  %2751 = vrot.lane.b32.xlu0 %v2646, 1
  %v2752 = vpop.permute.xlu0 %2751
  %2753 = vrot.lane.b32.xlu0 %v2643, 1
  %v2754 = vpop.permute.xlu0 %2753
  %2755 = vrot.lane.b32.xlu0 %v2647, 1
  %v2756 = vpop.permute.xlu0 %2755
  %2757 = vrot.lane.b32.xlu0 %v2644, 1
  %v2758 = vpop.permute.xlu0 %2757
  %2759 = vrot.lane.b32.xlu0 %v2648, 1
  %v2760 = vpop.permute.xlu0 %2759
  %v2761 = vsel %vm208, %v2754, %v2758
  %v2762 = vsel %vm208, %v2756, %v2760
  %v2763 = vsel %vm208, %v2750, %v2754
  %v2764 = vsel %vm208, %v2752, %v2756
  %v2765 = vsel %vm208, %v2746, %v2750
  %v2766 = vsel %vm208, %v2748, %v2752
  %v2767 = vsel %vm208, %v2758, %v2746
  %v2768 = vsel %vm208, %v2760, %v2748
  %v2769 = vmul.f32 %v2767, %v217
  %v2770 = vmul.f32 %v2765, %v221
  %v2771 = vmul.f32 %v2763, %v225
  %v2772 = vmul.f32 %v2761, %v229
  %v2773 = vmul.f32 %v2768, %v217
  %v2774 = vmul.f32 %v2766, %v221
  %v2775 = vmul.f32 %v2764, %v225
  %v2776 = vmul.f32 %v2762, %v229
  %v2777 = vmul.f32 %v2641, %v242
  %v2778 = vmul.f32 %v2642, %v246
  %v2779 = vmul.f32 %v2643, %v250
  %v2780 = vmul.f32 %v2644, %v254
  %v2781 = vmul.f32 %v2645, %v242
  %v2782 = vmul.f32 %v2646, %v246
  %v2783 = vmul.f32 %v2647, %v250
  %v2784 = vmul.f32 %v2648, %v254
  %v2785 = vpack.c.bf16 %v2677, %v2673
  %v2786 = vpack.c.bf16 %v2678, %v2674
  %v2787 = vpack.c.bf16 %v2679, %v2675
  %v2788 = vpack.c.bf16 %v2680, %v2676
  %v2789 = vpack.c.bf16 %v2709, %v2705
  %v2790 = vpack.c.bf16 %v2710, %v2706
  %v2791 = vpack.c.bf16 %v2711, %v2707
  %v2792 = vpack.c.bf16 %v2712, %v2708
  %v2793 = vpack.c.bf16 %v2741, %v2737
  %v2794 = vpack.c.bf16 %v2742, %v2738
  %v2795 = vpack.c.bf16 %v2743, %v2739
  %v2796 = vpack.c.bf16 %v2744, %v2740
  %v2797 = vpack.c.bf16 %v2773, %v2769
  %v2798 = vpack.c.bf16 %v2774, %v2770
  %v2799 = vpack.c.bf16 %v2775, %v2771
  %v2800 = vpack.c.bf16 %v2776, %v2772
  %v2801 = vpack.c.bf16 %v2781, %v2777
  %v2802 = vpack.c.bf16 %v2782, %v2778
  %v2803 = vpack.c.bf16 %v2783, %v2779
  %v2804 = vpack.c.bf16 %v2784, %v2780
  %2805 = vrot.lane.b32.xlu0 %v2641, 127
  %v2806 = vpop.permute.xlu0 %2805
  %2807 = vrot.lane.b32.xlu0 %v2645, 127
  %v2808 = vpop.permute.xlu0 %2807
  %2809 = vrot.lane.b32.xlu0 %v2642, 127
  %v2810 = vpop.permute.xlu0 %2809
  %2811 = vrot.lane.b32.xlu0 %v2646, 127
  %v2812 = vpop.permute.xlu0 %2811
  %2813 = vrot.lane.b32.xlu0 %v2643, 127
  %v2814 = vpop.permute.xlu0 %2813
  %2815 = vrot.lane.b32.xlu0 %v2647, 127
  %v2816 = vpop.permute.xlu0 %2815
  %2817 = vrot.lane.b32.xlu0 %v2644, 127
  %v2818 = vpop.permute.xlu0 %2817
  %2819 = vrot.lane.b32.xlu0 %v2648, 127
  %v2820 = vpop.permute.xlu0 %2819
  %v2821 = vsel %vm271, %v2814, %v2818
  %v2822 = vsel %vm271, %v2816, %v2820
  %v2823 = vsel %vm271, %v2810, %v2814
  %v2824 = vsel %vm271, %v2812, %v2816
  %v2825 = vsel %vm271, %v2806, %v2810
  %v2826 = vsel %vm271, %v2808, %v2812
  %v2827 = vsel %vm271, %v2818, %v2806
  %v2828 = vsel %vm271, %v2820, %v2808
  %v2829 = vmul.f32 %v2825, %v280
  %v2830 = vmul.f32 %v2823, %v284
  %v2831 = vmul.f32 %v2821, %v288
  %v2832 = vmul.f32 %v2827, %v292
  %v2833 = vmul.f32 %v2826, %v280
  %v2834 = vmul.f32 %v2824, %v284
  %v2835 = vmul.f32 %v2822, %v288
  %v2836 = vmul.f32 %v2828, %v292
  %2837 = vrot.lane.b32.xlu0 %v2641, 113
  %v2838 = vpop.permute.xlu0 %2837
  %2839 = vrot.lane.b32.xlu0 %v2645, 113
  %v2840 = vpop.permute.xlu0 %2839
  %2841 = vrot.lane.b32.xlu0 %v2642, 113
  %v2842 = vpop.permute.xlu0 %2841
  %2843 = vrot.lane.b32.xlu0 %v2646, 113
  %v2844 = vpop.permute.xlu0 %2843
  %2845 = vrot.lane.b32.xlu0 %v2643, 113
  %v2846 = vpop.permute.xlu0 %2845
  %2847 = vrot.lane.b32.xlu0 %v2647, 113
  %v2848 = vpop.permute.xlu0 %2847
  %2849 = vrot.lane.b32.xlu0 %v2644, 113
  %v2850 = vpop.permute.xlu0 %2849
  %2851 = vrot.lane.b32.xlu0 %v2648, 113
  %v2852 = vpop.permute.xlu0 %2851
  %v2853 = vsel %vm309, %v2846, %v2850
  %v2854 = vsel %vm309, %v2848, %v2852
  %v2855 = vsel %vm309, %v2842, %v2846
  %v2856 = vsel %vm309, %v2844, %v2848
  %v2857 = vsel %vm309, %v2838, %v2842
  %v2858 = vsel %vm309, %v2840, %v2844
  %v2859 = vsel %vm309, %v2850, %v2838
  %v2860 = vsel %vm309, %v2852, %v2840
  %v2861 = vmul.f32 %v2857, %v318
  %v2862 = vmul.f32 %v2855, %v322
  %v2863 = vmul.f32 %v2853, %v326
  %v2864 = vmul.f32 %v2859, %v330
  %v2865 = vmul.f32 %v2858, %v318
  %v2866 = vmul.f32 %v2856, %v322
  %v2867 = vmul.f32 %v2854, %v326
  %v2868 = vmul.f32 %v2860, %v330
  %2869 = vrot.lane.b32.xlu0 %v2641, 112
  %v2870 = vpop.permute.xlu0 %2869
  %2871 = vrot.lane.b32.xlu0 %v2645, 112
  %v2872 = vpop.permute.xlu0 %2871
  %2873 = vrot.lane.b32.xlu0 %v2642, 112
  %v2874 = vpop.permute.xlu0 %2873
  %2875 = vrot.lane.b32.xlu0 %v2646, 112
  %v2876 = vpop.permute.xlu0 %2875
  %2877 = vrot.lane.b32.xlu0 %v2643, 112
  %v2878 = vpop.permute.xlu0 %2877
  %2879 = vrot.lane.b32.xlu0 %v2647, 112
  %v2880 = vpop.permute.xlu0 %2879
  %2881 = vrot.lane.b32.xlu0 %v2644, 112
  %v2882 = vpop.permute.xlu0 %2881
  %2883 = vrot.lane.b32.xlu0 %v2648, 112
  %v2884 = vpop.permute.xlu0 %2883
  %v2885 = vsel %vm347, %v2878, %v2882
  %v2886 = vsel %vm347, %v2880, %v2884
  %v2887 = vsel %vm347, %v2874, %v2878
  %v2888 = vsel %vm347, %v2876, %v2880
  %v2889 = vsel %vm347, %v2870, %v2874
  %v2890 = vsel %vm347, %v2872, %v2876
  %v2891 = vsel %vm347, %v2882, %v2870
  %v2892 = vsel %vm347, %v2884, %v2872
  %v2893 = vmul.f32 %v2889, %v356
  %v2894 = vmul.f32 %v2887, %v360
  %v2895 = vmul.f32 %v2885, %v364
  %v2896 = vmul.f32 %v2891, %v368
  %v2897 = vmul.f32 %v2890, %v356
  %v2898 = vmul.f32 %v2888, %v360
  %v2899 = vmul.f32 %v2886, %v364
  %v2900 = vmul.f32 %v2892, %v368
  %2901 = vrot.lane.b32.xlu0 %v2641, 111
  %v2902 = vpop.permute.xlu0 %2901
  %2903 = vrot.lane.b32.xlu0 %v2645, 111
  %v2904 = vpop.permute.xlu0 %2903
  %2905 = vrot.lane.b32.xlu0 %v2642, 111
  %v2906 = vpop.permute.xlu0 %2905
  %2907 = vrot.lane.b32.xlu0 %v2646, 111
  %v2908 = vpop.permute.xlu0 %2907
  %2909 = vrot.lane.b32.xlu0 %v2643, 111
  %v2910 = vpop.permute.xlu0 %2909
  %2911 = vrot.lane.b32.xlu0 %v2647, 111
  %v2912 = vpop.permute.xlu0 %2911
  %2913 = vrot.lane.b32.xlu0 %v2644, 111
  %v2914 = vpop.permute.xlu0 %2913
  %2915 = vrot.lane.b32.xlu0 %v2648, 111
  %v2916 = vpop.permute.xlu0 %2915
  %v2917 = vsel %vm385, %v2910, %v2914
  %v2918 = vsel %vm385, %v2912, %v2916
  %v2919 = vsel %vm385, %v2906, %v2910
  %v2920 = vsel %vm385, %v2908, %v2912
  %v2921 = vsel %vm385, %v2902, %v2906
  %v2922 = vsel %vm385, %v2904, %v2908
  %v2923 = vsel %vm385, %v2914, %v2902
  %v2924 = vsel %vm385, %v2916, %v2904
  %v2925 = vmul.f32 %v2921, %v394
  %v2926 = vmul.f32 %v2919, %v398
  %v2927 = vmul.f32 %v2917, %v402
  %v2928 = vmul.f32 %v2923, %v406
  %v2929 = vmul.f32 %v2922, %v394
  %v2930 = vmul.f32 %v2920, %v398
  %v2931 = vmul.f32 %v2918, %v402
  %v2932 = vmul.f32 %v2924, %v406
  %v2933 = vpack.c.bf16 %v2833, %v2829
  %v2934 = vpack.c.bf16 %v2834, %v2830
  %v2935 = vpack.c.bf16 %v2835, %v2831
  %v2936 = vpack.c.bf16 %v2836, %v2832
  %v2937 = vpack.c.bf16 %v2865, %v2861
  %v2938 = vpack.c.bf16 %v2866, %v2862
  %v2939 = vpack.c.bf16 %v2867, %v2863
  %v2940 = vpack.c.bf16 %v2868, %v2864
  %v2941 = vpack.c.bf16 %v2897, %v2893
  %v2942 = vpack.c.bf16 %v2898, %v2894
  %v2943 = vpack.c.bf16 %v2899, %v2895
  %v2944 = vpack.c.bf16 %v2900, %v2896
  %v2945 = vpack.c.bf16 %v2929, %v2925
  %v2946 = vpack.c.bf16 %v2930, %v2926
  %v2947 = vpack.c.bf16 %v2931, %v2927
  %v2948 = vpack.c.bf16 %v2932, %v2928
  %v2949 = vld [vmem:[%s14] sm:$0xf]
  %v2950 = vld [vmem:[%s14 + $0x4] sm:$0xf]
  %v2951 = vld [vmem:[%s15] sm:$0xf]
  %v2952 = vld [vmem:[%s15 + $0x4] sm:$0xf]
  %v2955 = vunpack.c.l.b16 %v2951
  %v2956 = vunpack.c.l.b16 %v2952
  %v2957 = vpack.c.b16 %v2956, %v2955
  %vm2958 = vcmask 523264
  %v2960 = vsel %vm2958, %v2957, 0
  %2962 = vmatprep.subr.bf16.mxu0 %v2934
  %2963 = vmatpush1.bf16.msra.mxu0 %v2933
  %2964 = vmatprep.subr.bf16.mxu0 %v2938
  %2965 = vmatpush1.bf16.msra.mxu0 %v2937
  %2966 = vmatprep.subr.bf16.mxu0 %v2942
  %2967 = vmatpush1.bf16.msra.mxu0 %v2941
  %2968 = vmatprep.subr.bf16.mxu0 %v2946
  %2969 = vmatpush1.bf16.msra.mxu0 %v2945
  %2970 = vmatprep.subr.bf16.mxu0 0
  %2971 = vmatpush1.bf16.msra.mxu0 0
  %2972 = vmatprep.subr.bf16.mxu0 0
  %2973 = vmatpush1.bf16.msra.mxu0 0
  %2974 = vmatprep.subr.bf16.mxu0 0
  %2975 = vmatpush1.bf16.msra.mxu0 0
  %2976 = vmatprep.subr.bf16.mxu0 0
  %2977 = vmatpush1.bf16.msra.mxu0 0
  %2978 = vmatprep.subr.bf16.mxu0 0
  %2979 = vmatpush1.bf16.msra.mxu0 0
  %2980 = vmatprep.subr.bf16.mxu0 0
  %2981 = vmatpush1.bf16.msra.mxu0 0
  %2982 = vmatprep.subr.bf16.mxu0 0
  %2983 = vmatpush1.bf16.msra.mxu0 0
  %2984 = vmatprep.subr.bf16.mxu0 0
  %2985 = vmatpush1.bf16.msra.mxu0 0
  %2986 = vmatprep.subr.bf16.mxu0 0
  %2987 = vmatpush1.bf16.msra.mxu0 0
  %2988 = vmatprep.subr.bf16.mxu0 0
  %2989 = vmatpush1.bf16.msra.mxu0 0
  %2990 = vmatprep.subr.bf16.mxu0 0
  %2991 = vmatpush1.bf16.msra.mxu0 0
  %2992 = vmatprep.subr.bf16.mxu0 0
  %2993 = vmatpush1.bf16.msra.mxu0 0
  %2994 = vmatprep.mubr.bf16.mxu0 0
  %2995 = vmatmul.mubr.bf16.gmra.mrb[0].mxu0 %v2960
  %v2996 = vpop.f32.mrb[0].mxu0
  %v2997 = vadd.f32 0.0, %v2996
  %v2998 = vpop.f32.mrb[0].mxu0
  %v2999 = vadd.f32 0.0, %v2998
  %v3000 = vpop.f32.mrb[0].mxu0
  %v3001 = vadd.f32 0.0, %v3000
  %v3002 = vpop.f32.mrb[0].mxu0
  %v3003 = vadd.f32 0.0, %v3002
  %3004 = vdwg.mxu0
  %3005 = vmatprep.subr.bf16.mxu0 %v2936
  %3006 = vmatpush1.bf16.msra.mxu0 %v2935
  %3007 = vmatprep.subr.bf16.mxu0 %v2940
  %3008 = vmatpush1.bf16.msra.mxu0 %v2939
  %3009 = vmatprep.subr.bf16.mxu0 %v2944
  %3010 = vmatpush1.bf16.msra.mxu0 %v2943
  %3011 = vmatprep.subr.bf16.mxu0 %v2948
  %3012 = vmatpush1.bf16.msra.mxu0 %v2947
  %3013 = vmatprep.subr.bf16.mxu0 0
  %3014 = vmatpush1.bf16.msra.mxu0 0
  %3015 = vmatprep.subr.bf16.mxu0 0
  %3016 = vmatpush1.bf16.msra.mxu0 0
  %3017 = vmatprep.subr.bf16.mxu0 0
  %3018 = vmatpush1.bf16.msra.mxu0 0
  %3019 = vmatprep.subr.bf16.mxu0 0
  %3020 = vmatpush1.bf16.msra.mxu0 0
  %3021 = vmatprep.subr.bf16.mxu0 0
  %3022 = vmatpush1.bf16.msra.mxu0 0
  %3023 = vmatprep.subr.bf16.mxu0 0
  %3024 = vmatpush1.bf16.msra.mxu0 0
  %3025 = vmatprep.subr.bf16.mxu0 0
  %3026 = vmatpush1.bf16.msra.mxu0 0
  %3027 = vmatprep.subr.bf16.mxu0 0
  %3028 = vmatpush1.bf16.msra.mxu0 0
  %3029 = vmatprep.subr.bf16.mxu0 0
  %3030 = vmatpush1.bf16.msra.mxu0 0
  %3031 = vmatprep.subr.bf16.mxu0 0
  %3032 = vmatpush1.bf16.msra.mxu0 0
  %3033 = vmatprep.subr.bf16.mxu0 0
  %3034 = vmatpush1.bf16.msra.mxu0 0
  %3035 = vmatprep.subr.bf16.mxu0 0
  %3036 = vmatpush1.bf16.msra.mxu0 0
  %3037 = vmatprep.mubr.bf16.mxu0 0
  %3038 = vmatmul.mubr.bf16.gmra.mrb[0].mxu0 %v2960
  %v3039 = vpop.f32.mrb[0].mxu0
  %v3040 = vadd.f32 0.0, %v3039
  %v3041 = vpop.f32.mrb[0].mxu0
  %v3042 = vadd.f32 0.0, %v3041
  %v3043 = vpop.f32.mrb[0].mxu0
  %v3044 = vadd.f32 0.0, %v3043
  %v3045 = vpop.f32.mrb[0].mxu0
  %v3046 = vadd.f32 0.0, %v3045
  %3047 = vdwg.mxu0
  %v3050 = vunpack.c.l.b16 %v2949
  %v3051 = vunpack.c.l.b16 %v2950
  %v3052 = vpack.c.b16 %v3051, %v3050
  %vm3053 = vcmask 654336
  %v3055 = vsel %vm3053, %v3052, 0
  %3057 = vmatprep.subr.bf16.mxu0 %v2786
  %3058 = vmatpush1.bf16.msra.mxu0 %v2785
  %3059 = vmatprep.subr.bf16.mxu0 %v2790
  %3060 = vmatpush1.bf16.msra.mxu0 %v2789
  %3061 = vmatprep.subr.bf16.mxu0 %v2794
  %3062 = vmatpush1.bf16.msra.mxu0 %v2793
  %3063 = vmatprep.subr.bf16.mxu0 %v2798
  %3064 = vmatpush1.bf16.msra.mxu0 %v2797
  %3065 = vmatprep.subr.bf16.mxu0 %v2802
  %3066 = vmatpush1.bf16.msra.mxu0 %v2801
  %3067 = vmatprep.subr.bf16.mxu0 0
  %3068 = vmatpush1.bf16.msra.mxu0 0
  %3069 = vmatprep.subr.bf16.mxu0 0
  %3070 = vmatpush1.bf16.msra.mxu0 0
  %3071 = vmatprep.subr.bf16.mxu0 0
  %3072 = vmatpush1.bf16.msra.mxu0 0
  %3073 = vmatprep.subr.bf16.mxu0 0
  %3074 = vmatpush1.bf16.msra.mxu0 0
  %3075 = vmatprep.subr.bf16.mxu0 0
  %3076 = vmatpush1.bf16.msra.mxu0 0
  %3077 = vmatprep.subr.bf16.mxu0 0
  %3078 = vmatpush1.bf16.msra.mxu0 0
  %3079 = vmatprep.subr.bf16.mxu0 0
  %3080 = vmatpush1.bf16.msra.mxu0 0
  %3081 = vmatprep.subr.bf16.mxu0 0
  %3082 = vmatpush1.bf16.msra.mxu0 0
  %3083 = vmatprep.subr.bf16.mxu0 0
  %3084 = vmatpush1.bf16.msra.mxu0 0
  %3085 = vmatprep.subr.bf16.mxu0 0
  %3086 = vmatpush1.bf16.msra.mxu0 0
  %3087 = vmatprep.subr.bf16.mxu0 0
  %3088 = vmatpush1.bf16.msra.mxu0 0
  %3089 = vmatprep.mubr.bf16.mxu0 0
  %3090 = vmatmul.mubr.bf16.gmra.mrb[0].mxu0 %v3055
  %v3091 = vpop.f32.mrb[0].mxu0
  %v3092 = vadd.f32 %v2997, %v3091
  %v3093 = vpop.f32.mrb[0].mxu0
  %v3094 = vadd.f32 %v2999, %v3093
  %v3095 = vpop.f32.mrb[0].mxu0
  %v3096 = vadd.f32 %v3001, %v3095
  %v3097 = vpop.f32.mrb[0].mxu0
  %v3098 = vadd.f32 %v3003, %v3097
  %3099 = vdwg.mxu0
  %3100 = vmatprep.subr.bf16.mxu0 %v2788
  %3101 = vmatpush1.bf16.msra.mxu0 %v2787
  %3102 = vmatprep.subr.bf16.mxu0 %v2792
  %3103 = vmatpush1.bf16.msra.mxu0 %v2791
  %3104 = vmatprep.subr.bf16.mxu0 %v2796
  %3105 = vmatpush1.bf16.msra.mxu0 %v2795
  %3106 = vmatprep.subr.bf16.mxu0 %v2800
  %3107 = vmatpush1.bf16.msra.mxu0 %v2799
  %3108 = vmatprep.subr.bf16.mxu0 %v2804
  %3109 = vmatpush1.bf16.msra.mxu0 %v2803
  %3110 = vmatprep.subr.bf16.mxu0 0
  %3111 = vmatpush1.bf16.msra.mxu0 0
  %3112 = vmatprep.subr.bf16.mxu0 0
  %3113 = vmatpush1.bf16.msra.mxu0 0
  %3114 = vmatprep.subr.bf16.mxu0 0
  %3115 = vmatpush1.bf16.msra.mxu0 0
  %3116 = vmatprep.subr.bf16.mxu0 0
  %3117 = vmatpush1.bf16.msra.mxu0 0
  %3118 = vmatprep.subr.bf16.mxu0 0
  %3119 = vmatpush1.bf16.msra.mxu0 0
  %3120 = vmatprep.subr.bf16.mxu0 0
  %3121 = vmatpush1.bf16.msra.mxu0 0
  %3122 = vmatprep.subr.bf16.mxu0 0
  %3123 = vmatpush1.bf16.msra.mxu0 0
  %3124 = vmatprep.subr.bf16.mxu0 0
  %3125 = vmatpush1.bf16.msra.mxu0 0
  %3126 = vmatprep.subr.bf16.mxu0 0
  %3127 = vmatpush1.bf16.msra.mxu0 0
  %3128 = vmatprep.subr.bf16.mxu0 0
  %3129 = vmatpush1.bf16.msra.mxu0 0
  %3130 = vmatprep.subr.bf16.mxu0 0
  %3131 = vmatpush1.bf16.msra.mxu0 0
  %3132 = vmatprep.mubr.bf16.mxu0 0
  %3133 = vmatmul.mubr.bf16.gmra.mrb[0].mxu0 %v3055
  %v3134 = vpop.f32.mrb[0].mxu0
  %v3135 = vadd.f32 %v3040, %v3134
  %v3136 = vpop.f32.mrb[0].mxu0
  %v3137 = vadd.f32 %v3042, %v3136
  %v3138 = vpop.f32.mrb[0].mxu0
  %v3139 = vadd.f32 %v3044, %v3138
  %v3140 = vpop.f32.mrb[0].mxu0
  %v3141 = vadd.f32 %v3046, %v3140
  %3142 = vdwg.mxu0
  %v3143 = vld [vmem:[%s16] sm:$0xff]
  %v3144 = vld [vmem:[%s16 + $0x8] sm:$0xff]
  %v3145 = vld [vmem:[%s17] sm:$0xff]
  %v3146 = vld [vmem:[%s17 + $0x8] sm:$0xff]
  %3147 = vmatprep.subr.mxu0 0.0
  %3148 = vmatpush1.msra.mxu0 1.0
  %3149 = vmatprep.subr.mxu0 0.0
  %3150 = vmatpush1.msra.mxu0 1.0
  %3151 = vmatprep.subr.mxu0 0.0
  %3152 = vmatpush1.msra.mxu0 1.0
  %3153 = vmatprep.subr.mxu0 0.0
  %3154 = vmatpush1.msra.mxu0 1.0
  %3155 = vmatprep.subr.mxu0 0.0
  %3156 = vmatpush1.msra.mxu0 1.0
  %3157 = vmatprep.subr.mxu0 0.0
  %3158 = vmatpush1.msra.mxu0 1.0
  %3159 = vmatprep.subr.mxu0 0.0
  %3160 = vmatpush1.msra.mxu0 1.0
  %3161 = vmatprep.subr.mxu0 0.0
  %3162 = vmatpush1.msra.mxu0 1.0
  %3163 = vmatprep.subr.mxu0 0.0
  %3164 = vmatpush1.msra.mxu0 1.0
  %3165 = vmatprep.subr.mxu0 0.0
  %3166 = vmatpush1.msra.mxu0 1.0
  %3167 = vmatprep.subr.mxu0 0.0
  %3168 = vmatpush1.msra.mxu0 1.0
  %3169 = vmatprep.subr.mxu0 0.0
  %3170 = vmatpush1.msra.mxu0 1.0
  %3171 = vmatprep.subr.mxu0 0.0
  %3172 = vmatpush1.msra.mxu0 1.0
  %3173 = vmatprep.subr.mxu0 0.0
  %3174 = vmatpush1.msra.mxu0 1.0
  %3175 = vmatprep.subr.mxu0 0.0
  %3176 = vmatpush1.msra.mxu0 1.0
  %3177 = vmatprep.subr.mxu0 0.0
  %3178 = vmatpush1.msra.mxu0 1.0
  %3179 = vmatprep.subr.mxu0 0.0
  %3180 = vmatpush1.msra.mxu0 1.0
  %3181 = vmatprep.subr.mxu0 0.0
  %3182 = vmatpush1.msra.mxu0 1.0
  %3183 = vmatprep.subr.mxu0 0.0
  %3184 = vmatpush1.msra.mxu0 1.0
  %3185 = vmatprep.subr.mxu0 0.0
  %3186 = vmatpush1.msra.mxu0 1.0
  %3187 = vmatprep.subr.mxu0 0.0
  %3188 = vmatpush1.msra.mxu0 1.0
  %3189 = vmatprep.subr.mxu0 0.0
  %3190 = vmatpush1.msra.mxu0 1.0
  %3191 = vmatprep.subr.mxu0 0.0
  %3192 = vmatpush1.msra.mxu0 1.0
  %3193 = vmatprep.subr.mxu0 0.0
  %3194 = vmatpush1.msra.mxu0 1.0
  %3195 = vmatprep.subr.mxu0 0.0
  %3196 = vmatpush1.msra.mxu0 1.0
  %3197 = vmatprep.subr.mxu0 0.0
  %3198 = vmatpush1.msra.mxu0 1.0
  %3199 = vmatprep.subr.mxu0 0.0
  %3200 = vmatpush1.msra.mxu0 1.0
  %3201 = vmatprep.subr.mxu0 0.0
  %3202 = vmatpush1.msra.mxu0 1.0
  %3203 = vmatprep.subr.mxu0 0.0
  %3204 = vmatpush1.msra.mxu0 1.0
  %3205 = vmatprep.subr.mxu0 0.0
  %3206 = vmatpush1.msra.mxu0 1.0
  %3207 = vmatprep.subr.mxu0 0.0
  %3208 = vmatpush1.msra.mxu0 1.0
  %3209 = vmatprep.subr.mxu0 0.0
  %3210 = vmatpush1.msra.mxu0 1.0
  %3211 = vmatprep.mubr.f32.mxu0 %v3094
  %3212 = vmatmul.mubr.f32.gmra.mrb[0].mxu0 %v3092
  %v3213 = vpop.f32.mrb[0].mxu0
  %v3214 = vadd.f32 0.0, %v3213
  %v3215 = vpop.f32.mrb[0].mxu0
  %3216 = vmatprep.mubr.f32.mxu0 %v3098
  %3217 = vmatmul.mubr.f32.gmra.mrb[0].mxu0 %v3096
  %v3218 = vpop.f32.mrb[0].mxu0
  %v3219 = vadd.f32 0.0, %v3218
  %v3220 = vpop.f32.mrb[0].mxu0
  %3221 = vdwg.mxu0
  %3222 = vmatprep.subr.mxu0 0.0
  %3223 = vmatpush1.msra.mxu0 1.0
  %3224 = vmatprep.subr.mxu0 0.0
  %3225 = vmatpush1.msra.mxu0 1.0
  %3226 = vmatprep.subr.mxu0 0.0
  %3227 = vmatpush1.msra.mxu0 1.0
  %3228 = vmatprep.subr.mxu0 0.0
  %3229 = vmatpush1.msra.mxu0 1.0
  %3230 = vmatprep.subr.mxu0 0.0
  %3231 = vmatpush1.msra.mxu0 1.0
  %3232 = vmatprep.subr.mxu0 0.0
  %3233 = vmatpush1.msra.mxu0 1.0
  %3234 = vmatprep.subr.mxu0 0.0
  %3235 = vmatpush1.msra.mxu0 1.0
  %3236 = vmatprep.subr.mxu0 0.0
  %3237 = vmatpush1.msra.mxu0 1.0
  %3238 = vmatprep.subr.mxu0 0.0
  %3239 = vmatpush1.msra.mxu0 1.0
  %3240 = vmatprep.subr.mxu0 0.0
  %3241 = vmatpush1.msra.mxu0 1.0
  %3242 = vmatprep.subr.mxu0 0.0
  %3243 = vmatpush1.msra.mxu0 1.0
  %3244 = vmatprep.subr.mxu0 0.0
  %3245 = vmatpush1.msra.mxu0 1.0
  %3246 = vmatprep.subr.mxu0 0.0
  %3247 = vmatpush1.msra.mxu0 1.0
  %3248 = vmatprep.subr.mxu0 0.0
  %3249 = vmatpush1.msra.mxu0 1.0
  %3250 = vmatprep.subr.mxu0 0.0
  %3251 = vmatpush1.msra.mxu0 1.0
  %3252 = vmatprep.subr.mxu0 0.0
  %3253 = vmatpush1.msra.mxu0 1.0
  %3254 = vmatprep.subr.mxu0 0.0
  %3255 = vmatpush1.msra.mxu0 1.0
  %3256 = vmatprep.subr.mxu0 0.0
  %3257 = vmatpush1.msra.mxu0 1.0
  %3258 = vmatprep.subr.mxu0 0.0
  %3259 = vmatpush1.msra.mxu0 1.0
  %3260 = vmatprep.subr.mxu0 0.0
  %3261 = vmatpush1.msra.mxu0 1.0
  %3262 = vmatprep.subr.mxu0 0.0
  %3263 = vmatpush1.msra.mxu0 1.0
  %3264 = vmatprep.subr.mxu0 0.0
  %3265 = vmatpush1.msra.mxu0 1.0
  %3266 = vmatprep.subr.mxu0 0.0
  %3267 = vmatpush1.msra.mxu0 1.0
  %3268 = vmatprep.subr.mxu0 0.0
  %3269 = vmatpush1.msra.mxu0 1.0
  %3270 = vmatprep.subr.mxu0 0.0
  %3271 = vmatpush1.msra.mxu0 1.0
  %3272 = vmatprep.subr.mxu0 0.0
  %3273 = vmatpush1.msra.mxu0 1.0
  %3274 = vmatprep.subr.mxu0 0.0
  %3275 = vmatpush1.msra.mxu0 1.0
  %3276 = vmatprep.subr.mxu0 0.0
  %3277 = vmatpush1.msra.mxu0 1.0
  %3278 = vmatprep.subr.mxu0 0.0
  %3279 = vmatpush1.msra.mxu0 1.0
  %3280 = vmatprep.subr.mxu0 0.0
  %3281 = vmatpush1.msra.mxu0 1.0
  %3282 = vmatprep.subr.mxu0 0.0
  %3283 = vmatpush1.msra.mxu0 1.0
  %3284 = vmatprep.subr.mxu0 0.0
  %3285 = vmatpush1.msra.mxu0 1.0
  %3286 = vmatprep.mubr.f32.mxu0 %v3137
  %3287 = vmatmul.mubr.f32.gmra.mrb[0].mxu0 %v3135
  %v3288 = vpop.f32.mrb[0].mxu0
  %v3289 = vadd.f32 %v3214, %v3288
  %v3290 = vpop.f32.mrb[0].mxu0
  %3291 = vmatprep.mubr.f32.mxu0 %v3141
  %3292 = vmatmul.mubr.f32.gmra.mrb[0].mxu0 %v3139
  %v3293 = vpop.f32.mrb[0].mxu0
  %v3294 = vadd.f32 %v3219, %v3293
  %v3295 = vpop.f32.mrb[0].mxu0
  %3296 = vdwg.mxu0
  %v3297 = vmul.f32 %v3289, 0.001953125
  %v3298 = vmul.f32 %v3294, 0.001953125
  %3300 = vset.pattern.permute.xlu0 0
  %3301 = vperm.xlu0 %3300, %v3297
  %v3302 = vpop.permute.xlu0 %3301
  %3305 = vset.pattern.permute.xlu0 0
  %3306 = vperm.xlu0 %3305, %v3298
  %v3307 = vpop.permute.xlu0 %3306
  %v3309 = vsub.f32 %v3092, %v3302
  %v3310 = vsub.f32 %v3094, %v3302
  %v3311 = vsub.f32 %v3135, %v3302
  %v3312 = vsub.f32 %v3137, %v3302
  %v3313 = vsub.f32 %v3096, %v3307
  %v3314 = vsub.f32 %v3098, %v3307
  %v3315 = vsub.f32 %v3139, %v3307
  %v3316 = vsub.f32 %v3141, %v3307
  %v3317 = vmul.f32 %v3309, %v3309
  %v3318 = vmul.f32 %v3310, %v3310
  %v3319 = vmul.f32 %v3311, %v3311
  %v3320 = vmul.f32 %v3312, %v3312
  %v3321 = vmul.f32 %v3313, %v3313
  %v3322 = vmul.f32 %v3314, %v3314
  %v3323 = vmul.f32 %v3315, %v3315
  %v3324 = vmul.f32 %v3316, %v3316
  %3325 = vmatprep.subr.mxu0 0.0
  %3326 = vmatpush1.msra.mxu0 1.0
  %3327 = vmatprep.subr.mxu0 0.0
  %3328 = vmatpush1.msra.mxu0 1.0
  %3329 = vmatprep.subr.mxu0 0.0
  %3330 = vmatpush1.msra.mxu0 1.0
  %3331 = vmatprep.subr.mxu0 0.0
  %3332 = vmatpush1.msra.mxu0 1.0
  %3333 = vmatprep.subr.mxu0 0.0
  %3334 = vmatpush1.msra.mxu0 1.0
  %3335 = vmatprep.subr.mxu0 0.0
  %3336 = vmatpush1.msra.mxu0 1.0
  %3337 = vmatprep.subr.mxu0 0.0
  %3338 = vmatpush1.msra.mxu0 1.0
  %3339 = vmatprep.subr.mxu0 0.0
  %3340 = vmatpush1.msra.mxu0 1.0
  %3341 = vmatprep.subr.mxu0 0.0
  %3342 = vmatpush1.msra.mxu0 1.0
  %3343 = vmatprep.subr.mxu0 0.0
  %3344 = vmatpush1.msra.mxu0 1.0
  %3345 = vmatprep.subr.mxu0 0.0
  %3346 = vmatpush1.msra.mxu0 1.0
  %3347 = vmatprep.subr.mxu0 0.0
  %3348 = vmatpush1.msra.mxu0 1.0
  %3349 = vmatprep.subr.mxu0 0.0
  %3350 = vmatpush1.msra.mxu0 1.0
  %3351 = vmatprep.subr.mxu0 0.0
  %3352 = vmatpush1.msra.mxu0 1.0
  %3353 = vmatprep.subr.mxu0 0.0
  %3354 = vmatpush1.msra.mxu0 1.0
  %3355 = vmatprep.subr.mxu0 0.0
  %3356 = vmatpush1.msra.mxu0 1.0
  %3357 = vmatprep.subr.mxu0 0.0
  %3358 = vmatpush1.msra.mxu0 1.0
  %3359 = vmatprep.subr.mxu0 0.0
  %3360 = vmatpush1.msra.mxu0 1.0
  %3361 = vmatprep.subr.mxu0 0.0
  %3362 = vmatpush1.msra.mxu0 1.0
  %3363 = vmatprep.subr.mxu0 0.0
  %3364 = vmatpush1.msra.mxu0 1.0
  %3365 = vmatprep.subr.mxu0 0.0
  %3366 = vmatpush1.msra.mxu0 1.0
  %3367 = vmatprep.subr.mxu0 0.0
  %3368 = vmatpush1.msra.mxu0 1.0
  %3369 = vmatprep.subr.mxu0 0.0
  %3370 = vmatpush1.msra.mxu0 1.0
  %3371 = vmatprep.subr.mxu0 0.0
  %3372 = vmatpush1.msra.mxu0 1.0
  %3373 = vmatprep.subr.mxu0 0.0
  %3374 = vmatpush1.msra.mxu0 1.0
  %3375 = vmatprep.subr.mxu0 0.0
  %3376 = vmatpush1.msra.mxu0 1.0
  %3377 = vmatprep.subr.mxu0 0.0
  %3378 = vmatpush1.msra.mxu0 1.0
  %3379 = vmatprep.subr.mxu0 0.0
  %3380 = vmatpush1.msra.mxu0 1.0
  %3381 = vmatprep.subr.mxu0 0.0
  %3382 = vmatpush1.msra.mxu0 1.0
  %3383 = vmatprep.subr.mxu0 0.0
  %3384 = vmatpush1.msra.mxu0 1.0
  %3385 = vmatprep.subr.mxu0 0.0
  %3386 = vmatpush1.msra.mxu0 1.0
  %3387 = vmatprep.subr.mxu0 0.0
  %3388 = vmatpush1.msra.mxu0 1.0
  %3389 = vmatprep.mubr.f32.mxu0 %v3318
  %3390 = vmatmul.mubr.f32.gmra.mrb[0].mxu0 %v3317
  %v3391 = vpop.f32.mrb[0].mxu0
  %v3392 = vadd.f32 0.0, %v3391
  %v3393 = vpop.f32.mrb[0].mxu0
  %3394 = vmatprep.mubr.f32.mxu0 %v3322
  %3395 = vmatmul.mubr.f32.gmra.mrb[0].mxu0 %v3321
  %v3396 = vpop.f32.mrb[0].mxu0
  %v3397 = vadd.f32 0.0, %v3396
  %v3398 = vpop.f32.mrb[0].mxu0
  %3399 = vdwg.mxu0
  %3400 = vmatprep.subr.mxu0 0.0
  %3401 = vmatpush1.msra.mxu0 1.0
  %3402 = vmatprep.subr.mxu0 0.0
  %3403 = vmatpush1.msra.mxu0 1.0
  %3404 = vmatprep.subr.mxu0 0.0
  %3405 = vmatpush1.msra.mxu0 1.0
  %3406 = vmatprep.subr.mxu0 0.0
  %3407 = vmatpush1.msra.mxu0 1.0
  %3408 = vmatprep.subr.mxu0 0.0
  %3409 = vmatpush1.msra.mxu0 1.0
  %3410 = vmatprep.subr.mxu0 0.0
  %3411 = vmatpush1.msra.mxu0 1.0
  %3412 = vmatprep.subr.mxu0 0.0
  %3413 = vmatpush1.msra.mxu0 1.0
  %3414 = vmatprep.subr.mxu0 0.0
  %3415 = vmatpush1.msra.mxu0 1.0
  %3416 = vmatprep.subr.mxu0 0.0
  %3417 = vmatpush1.msra.mxu0 1.0
  %3418 = vmatprep.subr.mxu0 0.0
  %3419 = vmatpush1.msra.mxu0 1.0
  %3420 = vmatprep.subr.mxu0 0.0
  %3421 = vmatpush1.msra.mxu0 1.0
  %3422 = vmatprep.subr.mxu0 0.0
  %3423 = vmatpush1.msra.mxu0 1.0
  %3424 = vmatprep.subr.mxu0 0.0
  %3425 = vmatpush1.msra.mxu0 1.0
  %3426 = vmatprep.subr.mxu0 0.0
  %3427 = vmatpush1.msra.mxu0 1.0
  %3428 = vmatprep.subr.mxu0 0.0
  %3429 = vmatpush1.msra.mxu0 1.0
  %3430 = vmatprep.subr.mxu0 0.0
  %3431 = vmatpush1.msra.mxu0 1.0
  %3432 = vmatprep.subr.mxu0 0.0
  %3433 = vmatpush1.msra.mxu0 1.0
  %3434 = vmatprep.subr.mxu0 0.0
  %3435 = vmatpush1.msra.mxu0 1.0
  %3436 = vmatprep.subr.mxu0 0.0
  %3437 = vmatpush1.msra.mxu0 1.0
  %3438 = vmatprep.subr.mxu0 0.0
  %3439 = vmatpush1.msra.mxu0 1.0
  %3440 = vmatprep.subr.mxu0 0.0
  %3441 = vmatpush1.msra.mxu0 1.0
  %3442 = vmatprep.subr.mxu0 0.0
  %3443 = vmatpush1.msra.mxu0 1.0
  %3444 = vmatprep.subr.mxu0 0.0
  %3445 = vmatpush1.msra.mxu0 1.0
  %3446 = vmatprep.subr.mxu0 0.0
  %3447 = vmatpush1.msra.mxu0 1.0
  %3448 = vmatprep.subr.mxu0 0.0
  %3449 = vmatpush1.msra.mxu0 1.0
  %3450 = vmatprep.subr.mxu0 0.0
  %3451 = vmatpush1.msra.mxu0 1.0
  %3452 = vmatprep.subr.mxu0 0.0
  %3453 = vmatpush1.msra.mxu0 1.0
  %3454 = vmatprep.subr.mxu0 0.0
  %3455 = vmatpush1.msra.mxu0 1.0
  %3456 = vmatprep.subr.mxu0 0.0
  %3457 = vmatpush1.msra.mxu0 1.0
  %3458 = vmatprep.subr.mxu0 0.0
  %3459 = vmatpush1.msra.mxu0 1.0
  %3460 = vmatprep.subr.mxu0 0.0
  %3461 = vmatpush1.msra.mxu0 1.0
  %3462 = vmatprep.subr.mxu0 0.0
  %3463 = vmatpush1.msra.mxu0 1.0
  %3464 = vmatprep.mubr.f32.mxu0 %v3320
  %3465 = vmatmul.mubr.f32.gmra.mrb[0].mxu0 %v3319
  %v3466 = vpop.f32.mrb[0].mxu0
  %v3467 = vadd.f32 %v3392, %v3466
  %v3468 = vpop.f32.mrb[0].mxu0
  %3469 = vmatprep.mubr.f32.mxu0 %v3324
  %3470 = vmatmul.mubr.f32.gmra.mrb[0].mxu0 %v3323
  %v3471 = vpop.f32.mrb[0].mxu0
  %v3472 = vadd.f32 %v3397, %v3471
  %v3473 = vpop.f32.mrb[0].mxu0
  %3474 = vdwg.mxu0
  %v3475 = vmul.f32 %v3467, 0.001953125
  %v3476 = vmul.f32 %v3472, 0.001953125
  %v3477 = vadd.f32 %v3475, 1e-05
  %v3478 = vadd.f32 %v3476, 1e-05
  %v3479 = vrsqrt.pop %v3477
  %v3480 = vrsqrt.pop %v3478
  %v3481 = vmul.f32 %v3479, %v3143
  %v3482 = vmul.f32 %v3480, %v3144
  %3484 = vset.pattern.permute.xlu0 0
  %3485 = vperm.xlu0 %3484, %v3481
  %v3486 = vpop.permute.xlu0 %3485
  %3489 = vset.pattern.permute.xlu0 0
  %3490 = vperm.xlu0 %3489, %v3482
  %v3491 = vpop.permute.xlu0 %3490
  %v3493 = vmul.f32 %v3309, %v3486
  %v3494 = vmul.f32 %v3310, %v3486
  %v3495 = vmul.f32 %v3311, %v3486
  %v3496 = vmul.f32 %v3312, %v3486
  %v3497 = vmul.f32 %v3313, %v3491
  %v3498 = vmul.f32 %v3314, %v3491
  %v3499 = vmul.f32 %v3315, %v3491
  %v3500 = vmul.f32 %v3316, %v3491
  %3502 = vset.pattern.permute.xlu0 0
  %3503 = vperm.xlu0 %3502, %v3145
  %v3504 = vpop.permute.xlu0 %3503
  %3507 = vset.pattern.permute.xlu0 0
  %3508 = vperm.xlu0 %3507, %v3146
  %v3509 = vpop.permute.xlu0 %3508
  %v3511 = vadd.f32 %v3493, %v3504
  %v3512 = vadd.f32 %v3494, %v3504
  %v3513 = vadd.f32 %v3495, %v3504
  %v3514 = vadd.f32 %v3496, %v3504
  %v3515 = vadd.f32 %v3497, %v3509
  %v3516 = vadd.f32 %v3498, %v3509
  %v3517 = vadd.f32 %v3499, %v3509
  %v3518 = vadd.f32 %v3500, %v3509
  %v3519 = vld [vmem:[%s18] sm:$0xf]
  %v3520 = vld [vmem:[%s18 + $0x4] sm:$0xf]
  %v3523 = vunpack.c.l.b16 %v3519
  %v3524 = vunpack.c.l.b16 %v3520
  %v3525 = vpack.c.b16 %v3524, %v3523
  %v3527 = vsel %vm436, %v3525, 0
  %3529 = vmatprep.subr.bf16.mxu0 %v2138
  %3530 = vmatpush1.bf16.msra.mxu0 %v2137
  %3531 = vmatprep.subr.bf16.mxu0 %v2142
  %3532 = vmatpush1.bf16.msra.mxu0 %v2141
  %3533 = vmatprep.subr.bf16.mxu0 %v2146
  %3534 = vmatpush1.bf16.msra.mxu0 %v2145
  %3535 = vmatprep.subr.bf16.mxu0 %v2150
  %3536 = vmatpush1.bf16.msra.mxu0 %v2149
  %3537 = vmatprep.subr.bf16.mxu0 %v2171
  %3538 = vmatpush1.bf16.msra.mxu0 %v2168
  %3539 = vmatprep.subr.bf16.mxu0 0
  %3540 = vmatpush1.bf16.msra.mxu0 0
  %3541 = vmatprep.subr.bf16.mxu0 0
  %3542 = vmatpush1.bf16.msra.mxu0 0
  %3543 = vmatprep.subr.bf16.mxu0 0
  %3544 = vmatpush1.bf16.msra.mxu0 0
  %3545 = vmatprep.subr.bf16.mxu0 0
  %3546 = vmatpush1.bf16.msra.mxu0 0
  %3547 = vmatprep.subr.bf16.mxu0 0
  %3548 = vmatpush1.bf16.msra.mxu0 0
  %3549 = vmatprep.subr.bf16.mxu0 0
  %3550 = vmatpush1.bf16.msra.mxu0 0
  %3551 = vmatprep.subr.bf16.mxu0 0
  %3552 = vmatpush1.bf16.msra.mxu0 0
  %3553 = vmatprep.subr.bf16.mxu0 0
  %3554 = vmatpush1.bf16.msra.mxu0 0
  %3555 = vmatprep.subr.bf16.mxu0 0
  %3556 = vmatpush1.bf16.msra.mxu0 0
  %3557 = vmatprep.subr.bf16.mxu0 0
  %3558 = vmatpush1.bf16.msra.mxu0 0
  %3559 = vmatprep.subr.bf16.mxu0 0
  %3560 = vmatpush1.bf16.msra.mxu0 0
  %3561 = vmatprep.mubr.bf16.mxu0 0
  %3562 = vmatmul.mubr.bf16.gmra.mrb[0].mxu0 %v3527
  %v3563 = vpop.f32.mrb[0].mxu0
  %v3564 = vadd.f32 0.0, %v3563
  %v3565 = vpop.f32.mrb[0].mxu0
  %v3566 = vadd.f32 0.0, %v3565
  %v3567 = vpop.f32.mrb[0].mxu0
  %v3568 = vadd.f32 0.0, %v3567
  %v3569 = vpop.f32.mrb[0].mxu0
  %v3570 = vadd.f32 0.0, %v3569
  %3571 = vdwg.mxu0
  %3572 = vmatprep.subr.bf16.mxu0 %v2140
  %3573 = vmatpush1.bf16.msra.mxu0 %v2139
  %3574 = vmatprep.subr.bf16.mxu0 %v2144
  %3575 = vmatpush1.bf16.msra.mxu0 %v2143
  %3576 = vmatprep.subr.bf16.mxu0 %v2148
  %3577 = vmatpush1.bf16.msra.mxu0 %v2147
  %3578 = vmatprep.subr.bf16.mxu0 %v2152
  %3579 = vmatpush1.bf16.msra.mxu0 %v2151
  %3580 = vmatprep.subr.bf16.mxu0 %v2177
  %3581 = vmatpush1.bf16.msra.mxu0 %v2174
  %3582 = vmatprep.subr.bf16.mxu0 0
  %3583 = vmatpush1.bf16.msra.mxu0 0
  %3584 = vmatprep.subr.bf16.mxu0 0
  %3585 = vmatpush1.bf16.msra.mxu0 0
  %3586 = vmatprep.subr.bf16.mxu0 0
  %3587 = vmatpush1.bf16.msra.mxu0 0
  %3588 = vmatprep.subr.bf16.mxu0 0
  %3589 = vmatpush1.bf16.msra.mxu0 0
  %3590 = vmatprep.subr.bf16.mxu0 0
  %3591 = vmatpush1.bf16.msra.mxu0 0
  %3592 = vmatprep.subr.bf16.mxu0 0
  %3593 = vmatpush1.bf16.msra.mxu0 0
  %3594 = vmatprep.subr.bf16.mxu0 0
  %3595 = vmatpush1.bf16.msra.mxu0 0
  %3596 = vmatprep.subr.bf16.mxu0 0
  %3597 = vmatpush1.bf16.msra.mxu0 0
  %3598 = vmatprep.subr.bf16.mxu0 0
  %3599 = vmatpush1.bf16.msra.mxu0 0
  %3600 = vmatprep.subr.bf16.mxu0 0
  %3601 = vmatpush1.bf16.msra.mxu0 0
  %3602 = vmatprep.subr.bf16.mxu0 0
  %3603 = vmatpush1.bf16.msra.mxu0 0
  %3604 = vmatprep.mubr.bf16.mxu0 0
  %3605 = vmatmul.mubr.bf16.gmra.mrb[0].mxu0 %v3527
  %v3606 = vpop.f32.mrb[0].mxu0
  %v3607 = vadd.f32 0.0, %v3606
  %v3608 = vpop.f32.mrb[0].mxu0
  %v3609 = vadd.f32 0.0, %v3608
  %v3610 = vpop.f32.mrb[0].mxu0
  %v3611 = vadd.f32 0.0, %v3610
  %v3612 = vpop.f32.mrb[0].mxu0
  %v3613 = vadd.f32 0.0, %v3612
  %3614 = vdwg.mxu0
  %v3615 = vld [vmem:[%s19] sm:$0xff]
  %v3616 = vld [vmem:[%s19 + $0x8] sm:$0xff]
  %v3617 = vld [vmem:[%s20] sm:$0xff]
  %v3618 = vld [vmem:[%s20 + $0x8] sm:$0xff]
  %3619 = vmatprep.subr.mxu0 0.0
  %3620 = vmatpush1.msra.mxu0 1.0
  %3621 = vmatprep.subr.mxu0 0.0
  %3622 = vmatpush1.msra.mxu0 1.0
  %3623 = vmatprep.subr.mxu0 0.0
  %3624 = vmatpush1.msra.mxu0 1.0
  %3625 = vmatprep.subr.mxu0 0.0
  %3626 = vmatpush1.msra.mxu0 1.0
  %3627 = vmatprep.subr.mxu0 0.0
  %3628 = vmatpush1.msra.mxu0 1.0
  %3629 = vmatprep.subr.mxu0 0.0
  %3630 = vmatpush1.msra.mxu0 1.0
  %3631 = vmatprep.subr.mxu0 0.0
  %3632 = vmatpush1.msra.mxu0 1.0
  %3633 = vmatprep.subr.mxu0 0.0
  %3634 = vmatpush1.msra.mxu0 1.0
  %3635 = vmatprep.subr.mxu0 0.0
  %3636 = vmatpush1.msra.mxu0 1.0
  %3637 = vmatprep.subr.mxu0 0.0
  %3638 = vmatpush1.msra.mxu0 1.0
  %3639 = vmatprep.subr.mxu0 0.0
  %3640 = vmatpush1.msra.mxu0 1.0
  %3641 = vmatprep.subr.mxu0 0.0
  %3642 = vmatpush1.msra.mxu0 1.0
  %3643 = vmatprep.subr.mxu0 0.0
  %3644 = vmatpush1.msra.mxu0 1.0
  %3645 = vmatprep.subr.mxu0 0.0
  %3646 = vmatpush1.msra.mxu0 1.0
  %3647 = vmatprep.subr.mxu0 0.0
  %3648 = vmatpush1.msra.mxu0 1.0
  %3649 = vmatprep.subr.mxu0 0.0
  %3650 = vmatpush1.msra.mxu0 1.0
  %3651 = vmatprep.subr.mxu0 0.0
  %3652 = vmatpush1.msra.mxu0 1.0
  %3653 = vmatprep.subr.mxu0 0.0
  %3654 = vmatpush1.msra.mxu0 1.0
  %3655 = vmatprep.subr.mxu0 0.0
  %3656 = vmatpush1.msra.mxu0 1.0
  %3657 = vmatprep.subr.mxu0 0.0
  %3658 = vmatpush1.msra.mxu0 1.0
  %3659 = vmatprep.subr.mxu0 0.0
  %3660 = vmatpush1.msra.mxu0 1.0
  %3661 = vmatprep.subr.mxu0 0.0
  %3662 = vmatpush1.msra.mxu0 1.0
  %3663 = vmatprep.subr.mxu0 0.0
  %3664 = vmatpush1.msra.mxu0 1.0
  %3665 = vmatprep.subr.mxu0 0.0
  %3666 = vmatpush1.msra.mxu0 1.0
  %3667 = vmatprep.subr.mxu0 0.0
  %3668 = vmatpush1.msra.mxu0 1.0
  %3669 = vmatprep.subr.mxu0 0.0
  %3670 = vmatpush1.msra.mxu0 1.0
  %3671 = vmatprep.subr.mxu0 0.0
  %3672 = vmatpush1.msra.mxu0 1.0
  %3673 = vmatprep.subr.mxu0 0.0
  %3674 = vmatpush1.msra.mxu0 1.0
  %3675 = vmatprep.subr.mxu0 0.0
  %3676 = vmatpush1.msra.mxu0 1.0
  %3677 = vmatprep.subr.mxu0 0.0
  %3678 = vmatpush1.msra.mxu0 1.0
  %3679 = vmatprep.subr.mxu0 0.0
  %3680 = vmatpush1.msra.mxu0 1.0
  %3681 = vmatprep.subr.mxu0 0.0
  %3682 = vmatpush1.msra.mxu0 1.0
  %3683 = vmatprep.mubr.f32.mxu0 %v3566
  %3684 = vmatmul.mubr.f32.gmra.mrb[0].mxu0 %v3564
  %v3685 = vpop.f32.mrb[0].mxu0
  %v3686 = vadd.f32 0.0, %v3685
  %v3687 = vpop.f32.mrb[0].mxu0
  %3688 = vmatprep.mubr.f32.mxu0 %v3570
  %3689 = vmatmul.mubr.f32.gmra.mrb[0].mxu0 %v3568
  %v3690 = vpop.f32.mrb[0].mxu0
  %v3691 = vadd.f32 0.0, %v3690
  %v3692 = vpop.f32.mrb[0].mxu0
  %3693 = vdwg.mxu0
  %3694 = vmatprep.subr.mxu0 0.0
  %3695 = vmatpush1.msra.mxu0 1.0
  %3696 = vmatprep.subr.mxu0 0.0
  %3697 = vmatpush1.msra.mxu0 1.0
  %3698 = vmatprep.subr.mxu0 0.0
  %3699 = vmatpush1.msra.mxu0 1.0
  %3700 = vmatprep.subr.mxu0 0.0
  %3701 = vmatpush1.msra.mxu0 1.0
  %3702 = vmatprep.subr.mxu0 0.0
  %3703 = vmatpush1.msra.mxu0 1.0
  %3704 = vmatprep.subr.mxu0 0.0
  %3705 = vmatpush1.msra.mxu0 1.0
  %3706 = vmatprep.subr.mxu0 0.0
  %3707 = vmatpush1.msra.mxu0 1.0
  %3708 = vmatprep.subr.mxu0 0.0
  %3709 = vmatpush1.msra.mxu0 1.0
  %3710 = vmatprep.subr.mxu0 0.0
  %3711 = vmatpush1.msra.mxu0 1.0
  %3712 = vmatprep.subr.mxu0 0.0
  %3713 = vmatpush1.msra.mxu0 1.0
  %3714 = vmatprep.subr.mxu0 0.0
  %3715 = vmatpush1.msra.mxu0 1.0
  %3716 = vmatprep.subr.mxu0 0.0
  %3717 = vmatpush1.msra.mxu0 1.0
  %3718 = vmatprep.subr.mxu0 0.0
  %3719 = vmatpush1.msra.mxu0 1.0
  %3720 = vmatprep.subr.mxu0 0.0
  %3721 = vmatpush1.msra.mxu0 1.0
  %3722 = vmatprep.subr.mxu0 0.0
  %3723 = vmatpush1.msra.mxu0 1.0
  %3724 = vmatprep.subr.mxu0 0.0
  %3725 = vmatpush1.msra.mxu0 1.0
  %3726 = vmatprep.subr.mxu0 0.0
  %3727 = vmatpush1.msra.mxu0 1.0
  %3728 = vmatprep.subr.mxu0 0.0
  %3729 = vmatpush1.msra.mxu0 1.0
  %3730 = vmatprep.subr.mxu0 0.0
  %3731 = vmatpush1.msra.mxu0 1.0
  %3732 = vmatprep.subr.mxu0 0.0
  %3733 = vmatpush1.msra.mxu0 1.0
  %3734 = vmatprep.subr.mxu0 0.0
  %3735 = vmatpush1.msra.mxu0 1.0
  %3736 = vmatprep.subr.mxu0 0.0
  %3737 = vmatpush1.msra.mxu0 1.0
  %3738 = vmatprep.subr.mxu0 0.0
  %3739 = vmatpush1.msra.mxu0 1.0
  %3740 = vmatprep.subr.mxu0 0.0
  %3741 = vmatpush1.msra.mxu0 1.0
  %3742 = vmatprep.subr.mxu0 0.0
  %3743 = vmatpush1.msra.mxu0 1.0
  %3744 = vmatprep.subr.mxu0 0.0
  %3745 = vmatpush1.msra.mxu0 1.0
  %3746 = vmatprep.subr.mxu0 0.0
  %3747 = vmatpush1.msra.mxu0 1.0
  %3748 = vmatprep.subr.mxu0 0.0
  %3749 = vmatpush1.msra.mxu0 1.0
  %3750 = vmatprep.subr.mxu0 0.0
  %3751 = vmatpush1.msra.mxu0 1.0
  %3752 = vmatprep.subr.mxu0 0.0
  %3753 = vmatpush1.msra.mxu0 1.0
  %3754 = vmatprep.subr.mxu0 0.0
  %3755 = vmatpush1.msra.mxu0 1.0
  %3756 = vmatprep.subr.mxu0 0.0
  %3757 = vmatpush1.msra.mxu0 1.0
  %3758 = vmatprep.mubr.f32.mxu0 %v3609
  %3759 = vmatmul.mubr.f32.gmra.mrb[0].mxu0 %v3607
  %v3760 = vpop.f32.mrb[0].mxu0
  %v3761 = vadd.f32 %v3686, %v3760
  %v3762 = vpop.f32.mrb[0].mxu0
  %3763 = vmatprep.mubr.f32.mxu0 %v3613
  %3764 = vmatmul.mubr.f32.gmra.mrb[0].mxu0 %v3611
  %v3765 = vpop.f32.mrb[0].mxu0
  %v3766 = vadd.f32 %v3691, %v3765
  %v3767 = vpop.f32.mrb[0].mxu0
  %3768 = vdwg.mxu0
  %v3769 = vmul.f32 %v3761, 0.001953125
  %v3770 = vmul.f32 %v3766, 0.001953125
  %3772 = vset.pattern.permute.xlu0 0
  %3773 = vperm.xlu0 %3772, %v3769
  %v3774 = vpop.permute.xlu0 %3773
  %3777 = vset.pattern.permute.xlu0 0
  %3778 = vperm.xlu0 %3777, %v3770
  %v3779 = vpop.permute.xlu0 %3778
  %v3781 = vsub.f32 %v3564, %v3774
  %v3782 = vsub.f32 %v3566, %v3774
  %v3783 = vsub.f32 %v3607, %v3774
  %v3784 = vsub.f32 %v3609, %v3774
  %v3785 = vsub.f32 %v3568, %v3779
  %v3786 = vsub.f32 %v3570, %v3779
  %v3787 = vsub.f32 %v3611, %v3779
  %v3788 = vsub.f32 %v3613, %v3779
  %v3789 = vmul.f32 %v3781, %v3781
  %v3790 = vmul.f32 %v3782, %v3782
  %v3791 = vmul.f32 %v3783, %v3783
  %v3792 = vmul.f32 %v3784, %v3784
  %v3793 = vmul.f32 %v3785, %v3785
  %v3794 = vmul.f32 %v3786, %v3786
  %v3795 = vmul.f32 %v3787, %v3787
  %v3796 = vmul.f32 %v3788, %v3788
  %3797 = vmatprep.subr.mxu0 0.0
  %3798 = vmatpush1.msra.mxu0 1.0
  %3799 = vmatprep.subr.mxu0 0.0
  %3800 = vmatpush1.msra.mxu0 1.0
  %3801 = vmatprep.subr.mxu0 0.0
  %3802 = vmatpush1.msra.mxu0 1.0
  %3803 = vmatprep.subr.mxu0 0.0
  %3804 = vmatpush1.msra.mxu0 1.0
  %3805 = vmatprep.subr.mxu0 0.0
  %3806 = vmatpush1.msra.mxu0 1.0
  %3807 = vmatprep.subr.mxu0 0.0
  %3808 = vmatpush1.msra.mxu0 1.0
  %3809 = vmatprep.subr.mxu0 0.0
  %3810 = vmatpush1.msra.mxu0 1.0
  %3811 = vmatprep.subr.mxu0 0.0
  %3812 = vmatpush1.msra.mxu0 1.0
  %3813 = vmatprep.subr.mxu0 0.0
  %3814 = vmatpush1.msra.mxu0 1.0
  %3815 = vmatprep.subr.mxu0 0.0
  %3816 = vmatpush1.msra.mxu0 1.0
  %3817 = vmatprep.subr.mxu0 0.0
  %3818 = vmatpush1.msra.mxu0 1.0
  %3819 = vmatprep.subr.mxu0 0.0
  %3820 = vmatpush1.msra.mxu0 1.0
  %3821 = vmatprep.subr.mxu0 0.0
  %3822 = vmatpush1.msra.mxu0 1.0
  %3823 = vmatprep.subr.mxu0 0.0
  %3824 = vmatpush1.msra.mxu0 1.0
  %3825 = vmatprep.subr.mxu0 0.0
  %3826 = vmatpush1.msra.mxu0 1.0
  %3827 = vmatprep.subr.mxu0 0.0
  %3828 = vmatpush1.msra.mxu0 1.0
  %3829 = vmatprep.subr.mxu0 0.0
  %3830 = vmatpush1.msra.mxu0 1.0
  %3831 = vmatprep.subr.mxu0 0.0
  %3832 = vmatpush1.msra.mxu0 1.0
  %3833 = vmatprep.subr.mxu0 0.0
  %3834 = vmatpush1.msra.mxu0 1.0
  %3835 = vmatprep.subr.mxu0 0.0
  %3836 = vmatpush1.msra.mxu0 1.0
  %3837 = vmatprep.subr.mxu0 0.0
  %3838 = vmatpush1.msra.mxu0 1.0
  %3839 = vmatprep.subr.mxu0 0.0
  %3840 = vmatpush1.msra.mxu0 1.0
  %3841 = vmatprep.subr.mxu0 0.0
  %3842 = vmatpush1.msra.mxu0 1.0
  %3843 = vmatprep.subr.mxu0 0.0
  %3844 = vmatpush1.msra.mxu0 1.0
  %3845 = vmatprep.subr.mxu0 0.0
  %3846 = vmatpush1.msra.mxu0 1.0
  %3847 = vmatprep.subr.mxu0 0.0
  %3848 = vmatpush1.msra.mxu0 1.0
  %3849 = vmatprep.subr.mxu0 0.0
  %3850 = vmatpush1.msra.mxu0 1.0
  %3851 = vmatprep.subr.mxu0 0.0
  %3852 = vmatpush1.msra.mxu0 1.0
  %3853 = vmatprep.subr.mxu0 0.0
  %3854 = vmatpush1.msra.mxu0 1.0
  %3855 = vmatprep.subr.mxu0 0.0
  %3856 = vmatpush1.msra.mxu0 1.0
  %3857 = vmatprep.subr.mxu0 0.0
  %3858 = vmatpush1.msra.mxu0 1.0
  %3859 = vmatprep.subr.mxu0 0.0
  %3860 = vmatpush1.msra.mxu0 1.0
  %3861 = vmatprep.mubr.f32.mxu0 %v3790
  %3862 = vmatmul.mubr.f32.gmra.mrb[0].mxu0 %v3789
  %v3863 = vpop.f32.mrb[0].mxu0
  %v3864 = vadd.f32 0.0, %v3863
  %v3865 = vpop.f32.mrb[0].mxu0
  %3866 = vmatprep.mubr.f32.mxu0 %v3794
  %3867 = vmatmul.mubr.f32.gmra.mrb[0].mxu0 %v3793
  %v3868 = vpop.f32.mrb[0].mxu0
  %v3869 = vadd.f32 0.0, %v3868
  %v3870 = vpop.f32.mrb[0].mxu0
  %3871 = vdwg.mxu0
  %3872 = vmatprep.subr.mxu0 0.0
  %3873 = vmatpush1.msra.mxu0 1.0
  %3874 = vmatprep.subr.mxu0 0.0
  %3875 = vmatpush1.msra.mxu0 1.0
  %3876 = vmatprep.subr.mxu0 0.0
  %3877 = vmatpush1.msra.mxu0 1.0
  %3878 = vmatprep.subr.mxu0 0.0
  %3879 = vmatpush1.msra.mxu0 1.0
  %3880 = vmatprep.subr.mxu0 0.0
  %3881 = vmatpush1.msra.mxu0 1.0
  %3882 = vmatprep.subr.mxu0 0.0
  %3883 = vmatpush1.msra.mxu0 1.0
  %3884 = vmatprep.subr.mxu0 0.0
  %3885 = vmatpush1.msra.mxu0 1.0
  %3886 = vmatprep.subr.mxu0 0.0
  %3887 = vmatpush1.msra.mxu0 1.0
  %3888 = vmatprep.subr.mxu0 0.0
  %3889 = vmatpush1.msra.mxu0 1.0
  %3890 = vmatprep.subr.mxu0 0.0
  %3891 = vmatpush1.msra.mxu0 1.0
  %3892 = vmatprep.subr.mxu0 0.0
  %3893 = vmatpush1.msra.mxu0 1.0
  %3894 = vmatprep.subr.mxu0 0.0
  %3895 = vmatpush1.msra.mxu0 1.0
  %3896 = vmatprep.subr.mxu0 0.0
  %3897 = vmatpush1.msra.mxu0 1.0
  %3898 = vmatprep.subr.mxu0 0.0
  %3899 = vmatpush1.msra.mxu0 1.0
  %3900 = vmatprep.subr.mxu0 0.0
  %3901 = vmatpush1.msra.mxu0 1.0
  %3902 = vmatprep.subr.mxu0 0.0
  %3903 = vmatpush1.msra.mxu0 1.0
  %3904 = vmatprep.subr.mxu0 0.0
  %3905 = vmatpush1.msra.mxu0 1.0
  %3906 = vmatprep.subr.mxu0 0.0
  %3907 = vmatpush1.msra.mxu0 1.0
  %3908 = vmatprep.subr.mxu0 0.0
  %3909 = vmatpush1.msra.mxu0 1.0
  %3910 = vmatprep.subr.mxu0 0.0
  %3911 = vmatpush1.msra.mxu0 1.0
  %3912 = vmatprep.subr.mxu0 0.0
  %3913 = vmatpush1.msra.mxu0 1.0
  %3914 = vmatprep.subr.mxu0 0.0
  %3915 = vmatpush1.msra.mxu0 1.0
  %3916 = vmatprep.subr.mxu0 0.0
  %3917 = vmatpush1.msra.mxu0 1.0
  %3918 = vmatprep.subr.mxu0 0.0
  %3919 = vmatpush1.msra.mxu0 1.0
  %3920 = vmatprep.subr.mxu0 0.0
  %3921 = vmatpush1.msra.mxu0 1.0
  %3922 = vmatprep.subr.mxu0 0.0
  %3923 = vmatpush1.msra.mxu0 1.0
  %3924 = vmatprep.subr.mxu0 0.0
  %3925 = vmatpush1.msra.mxu0 1.0
  %3926 = vmatprep.subr.mxu0 0.0
  %3927 = vmatpush1.msra.mxu0 1.0
  %3928 = vmatprep.subr.mxu0 0.0
  %3929 = vmatpush1.msra.mxu0 1.0
  %3930 = vmatprep.subr.mxu0 0.0
  %3931 = vmatpush1.msra.mxu0 1.0
  %3932 = vmatprep.subr.mxu0 0.0
  %3933 = vmatpush1.msra.mxu0 1.0
  %3934 = vmatprep.subr.mxu0 0.0
  %3935 = vmatpush1.msra.mxu0 1.0
  %3936 = vmatprep.mubr.f32.mxu0 %v3792
  %3937 = vmatmul.mubr.f32.gmra.mrb[0].mxu0 %v3791
  %v3938 = vpop.f32.mrb[0].mxu0
  %v3939 = vadd.f32 %v3864, %v3938
  %v3940 = vpop.f32.mrb[0].mxu0
  %3941 = vmatprep.mubr.f32.mxu0 %v3796
  %3942 = vmatmul.mubr.f32.gmra.mrb[0].mxu0 %v3795
  %v3943 = vpop.f32.mrb[0].mxu0
  %v3944 = vadd.f32 %v3869, %v3943
  %v3945 = vpop.f32.mrb[0].mxu0
  %3946 = vdwg.mxu0
  %v3947 = vmul.f32 %v3939, 0.001953125
  %v3948 = vmul.f32 %v3944, 0.001953125
  %v3949 = vadd.f32 %v3947, 1e-05
  %v3950 = vadd.f32 %v3948, 1e-05
  %v3951 = vrsqrt.pop %v3949
  %v3952 = vrsqrt.pop %v3950
  %v3953 = vmul.f32 %v3951, %v3615
  %v3954 = vmul.f32 %v3952, %v3616
  %3956 = vset.pattern.permute.xlu0 0
  %3957 = vperm.xlu0 %3956, %v3953
  %v3958 = vpop.permute.xlu0 %3957
  %3961 = vset.pattern.permute.xlu0 0
  %3962 = vperm.xlu0 %3961, %v3954
  %v3963 = vpop.permute.xlu0 %3962
  %v3965 = vmul.f32 %v3781, %v3958
  %v3966 = vmul.f32 %v3782, %v3958
  %v3967 = vmul.f32 %v3783, %v3958
  %v3968 = vmul.f32 %v3784, %v3958
  %v3969 = vmul.f32 %v3785, %v3963
  %v3970 = vmul.f32 %v3786, %v3963
  %v3971 = vmul.f32 %v3787, %v3963
  %v3972 = vmul.f32 %v3788, %v3963
  %3974 = vset.pattern.permute.xlu0 0
  %3975 = vperm.xlu0 %3974, %v3617
  %v3976 = vpop.permute.xlu0 %3975
  %3979 = vset.pattern.permute.xlu0 0
  %3980 = vperm.xlu0 %3979, %v3618
  %v3981 = vpop.permute.xlu0 %3980
  %v3983 = vadd.f32 %v3965, %v3976
  %v3984 = vadd.f32 %v3966, %v3976
  %v3985 = vadd.f32 %v3967, %v3976
  %v3986 = vadd.f32 %v3968, %v3976
  %v3987 = vadd.f32 %v3969, %v3981
  %v3988 = vadd.f32 %v3970, %v3981
  %v3989 = vadd.f32 %v3971, %v3981
  %v3990 = vadd.f32 %v3972, %v3981
  %v3991 = vadd.f32 %v3511, %v3983
  %v3992 = vadd.f32 %v3512, %v3984
  %v3993 = vadd.f32 %v3513, %v3985
  %v3994 = vadd.f32 %v3514, %v3986
  %v3995 = vadd.f32 %v3515, %v3987
  %v3996 = vadd.f32 %v3516, %v3988
  %v3997 = vadd.f32 %v3517, %v3989
  %v3998 = vadd.f32 %v3518, %v3990
  %v3999 = vmax.f32 %v3991, 0.0
  %v4000 = vmax.f32 %v3992, 0.0
  %v4001 = vmax.f32 %v3993, 0.0
  %v4002 = vmax.f32 %v3994, 0.0
  %v4003 = vmax.f32 %v3995, 0.0
  %v4004 = vmax.f32 %v3996, 0.0
  %v4005 = vmax.f32 %v3997, 0.0
  %v4006 = vmax.f32 %v3998, 0.0
  %v4007 = vpack.c.bf16 %v4003, %v3999
  %v4008 = vpack.c.bf16 %v4004, %v4000
  %v4009 = vpack.c.bf16 %v4005, %v4001
  %v4010 = vpack.c.bf16 %v4006, %v4002
  %v4015 = vunpack.c.l.b16 %v4007
  %v4016 = vunpack.c.l.b16 %v4008
  %v4017 = vunpack.c.l.b16 %v4009
  %v4018 = vunpack.c.l.b16 %v4010
  %v4019 = vunpack.c.h.b16 %v4007
  %v4020 = vunpack.c.h.b16 %v4008
  %v4021 = vunpack.c.h.b16 %v4009
  %v4022 = vunpack.c.h.b16 %v4010
  %v4023 = vpack.c.b16 %v4016, %v4015
  %v4024 = vpack.c.b16 %v4018, %v4017
  %v4025 = vpack.c.b16 %v4020, %v4019
  %v4026 = vpack.c.b16 %v4022, %v4021
  %4031 = vst [vmem:[%s21] sm:$0xff] %v4023
  %4032 = vst [vmem:[%s21 + $0x8] sm:$0xff] %v4024
  %4033 = vst [vmem:[%s21 + $0x10] sm:$0xff] %v4025
  %4034 = vst [vmem:[%s21 + $0x18] sm:$0xff] %v4026
  // Predicated region
  $region86: #{_lambda_.3} parent=0 // pred_check
    _
  $region87: #{_lambda_.3} parent=0 // pred_check_branch
    %4036 = sbr.rel (0) target = $region89
  $region88: #{_lambda_.3} parent=0 // pred_region
    _
  $region89: #{_lambda_.3} parent=0 // pred_fallthru
    _
  // Predicated region
  $region90: #{_lambda_.3} parent=0 // pred_check
    _
  $region91: #{_lambda_.3} parent=0 // pred_check_branch
    %4038 = sbr.rel (0) target = $region93
  $region92: #{_lambda_.3} parent=0 // pred_region
    _
  $region93: #{_lambda_.3} parent=0 // pred_fallthru
    _

</llo_original>
